<compile_context>
chip_gen: v5e
topology: v5e:2x2
jax: 0.10.0
libtpu: 0.0.40
codegen_flags: <defaults>
</compile_context>

<pallas_src>
import numpy as np
import jax
import jax.numpy as jnp
from jax.experimental import pallas as pl
from jax.experimental.pallas import tpu as pltpu


# ----------------------------------------------------------------------------
# Parameter init (PyTorch layouts / uniform bounds)
# ----------------------------------------------------------------------------
def _init_conv(key, cout, cin, k):
    k1, k2 = jax.random.split(key)
    bound = 1.0 / jnp.sqrt(cin * k)
    w = jax.random.uniform(k1, (cout, cin, k), jnp.float32, -bound, bound)
    b = jax.random.uniform(k2, (cout,), jnp.float32, -bound, bound)
    return w, b


def _init_convT(key, cin, cout, k):
    k1, k2 = jax.random.split(key)
    bound = 1.0 / jnp.sqrt(cout * k)
    w = jax.random.uniform(k1, (cin, cout, k), jnp.float32, -bound, bound)
    b = jax.random.uniform(k2, (cout,), jnp.float32, -bound, bound)
    return w, b


def init_params(key, input_dim=1, output_dim=4,
                filters=(8, 16, 32, 64, 128), kernels=(3, 3, 3, 3, 3)):
    keys = iter(jax.random.split(key, 64))
    p = {}

    def enc(cin, cout, k):
        w1, b1 = _init_conv(next(keys), cout, cin, k)
        w2, b2 = _init_conv(next(keys), cout, cout, k)
        return dict(w1=w1, b1=b1, w2=w2, b2=b2)

    def dec(cin, cout, k):
        wt, bt = _init_convT(next(keys), cin, cout, k)
        w1, b1 = _init_conv(next(keys), cout, cin, k)   # after concat, Cin = cin
        w2, b2 = _init_conv(next(keys), cout, cout, k)
        return dict(wt=wt, bt=bt, w1=w1, b1=b1, w2=w2, b2=b2)

    def att(skip_ch, feat_ch):
        wcf, bcf = _init_conv(next(keys), feat_ch, skip_ch, 3)   # stride 2, pad 1
        wfc, bfc = _init_conv(next(keys), skip_ch, 1, 3)         # 'same'
        w1x1, b1x1 = _init_conv(next(keys), 1, feat_ch, 1)
        wr, br = _init_convT(next(keys), skip_ch, skip_ch, 3)
        return dict(wcf=wcf, bcf=bcf, wfc=wfc, bfc=bfc,
                    w1x1=w1x1, b1x1=b1x1, wr=wr, br=br)

    p["down1"] = enc(input_dim, filters[0], kernels[0])
    p["down2"] = enc(filters[0], filters[1], kernels[1])
    p["down3"] = enc(filters[1], filters[2], kernels[2])
    p["down4"] = enc(filters[2], filters[3], kernels[3])
    p["neck"] = enc(filters[3], filters[4], kernels[4])
    p["up1"] = dec(filters[4], filters[3], kernels[4])
    p["up2"] = dec(filters[3], filters[2], kernels[2])
    p["up3"] = dec(filters[2], filters[1], kernels[1])
    p["up4"] = dec(filters[1], filters[0], kernels[0])
    p["att1"] = att(filters[3], filters[4])
    p["att2"] = att(filters[2], filters[3])
    p["att3"] = att(filters[1], filters[2])
    p["att4"] = att(filters[0], filters[1])
    kw, kb = jax.random.split(next(keys))
    bound = 1.0 / jnp.sqrt(filters[0])
    p["cls"] = dict(
        w=jax.random.uniform(kw, (output_dim, filters[0]), jnp.float32, -bound, bound),
        b=jax.random.uniform(kb, (output_dim,), jnp.float32, -bound, bound),
    )
    return p


# ----------------------------------------------------------------------------
# Host-side packing: one weight slab (+offsets) and one geometry slab
# ----------------------------------------------------------------------------
def _pack_slab(entries):
    """Pack [(name, 2-D f32 array), ...] into one row-stacked slab.

    Rows are padded to multiples of 8 (aligned sublane offsets), columns are
    zero-padded to a common lane-aligned width.  offsets[name] = (row0, nr, nc).
    """
    width = max(int(a.shape[1]) for _, a in entries)
    width = -(-width // 128) * 128
    offsets, blocks, row = {}, [], 0
    for name, a in entries:
        a = np.asarray(a, np.float32)
        nr, nc = a.shape
        nrp = -(-nr // 8) * 8
        buf = np.zeros((nrp, width), np.float32)
        buf[:nr, :nc] = a
        blocks.append(buf)
        offsets[name] = (row, nr, nc)
        row += nrp
    return jnp.asarray(np.concatenate(blocks, axis=0)), offsets


def prepare_params(p):
    """PyTorch-layout params -> single packed weight slab + static offsets.

    Conv1d (Cout, Cin, K) -> fused (Cout, K*Cin + 1) with bias as last column,
    columns grouped by tap k (matching the [x[j-1], x[j], x[j+1], ones] stack).
    ConvTranspose1d (Cin, Cout, K=3, s=2, p=1, op=1) -> even phase (Cout, Cin+1)
    = [W1^T | b] and odd phase (Cout, 2*Cin+1) = [W2^T | W0^T | b].
    """
    def fuse_conv(w, b):
        w = np.asarray(w, np.float32)
        b = np.asarray(b, np.float32)
        cout, cin, k = w.shape
        wf = np.transpose(w, (0, 2, 1)).reshape(cout, k * cin)
        return np.concatenate([wf, b.reshape(cout, 1)], axis=1)

    def fuse_convT(w, b):
        w = np.asarray(w, np.float32)
        b = np.asarray(b, np.float32).reshape(-1, 1)
        we = np.concatenate([w[:, :, 1].T, b], axis=1)
        wo = np.concatenate([w[:, :, 2].T, w[:, :, 0].T, b], axis=1)
        return we, wo

    entries = []
    for name in ("down1", "down2", "down3", "down4", "neck"):
        q = p[name]
        entries.append((f"{name}.w1", fuse_conv(q["w1"], q["b1"])))
        entries.append((f"{name}.w2", fuse_conv(q["w2"], q["b2"])))
    for name in ("up1", "up2", "up3", "up4"):
        q = p[name]
        we, wo = fuse_convT(q["wt"], q["bt"])
        entries.append((f"{name}.we", we))
        entries.append((f"{name}.wo", wo))
        entries.append((f"{name}.w1", fuse_conv(q["w1"], q["b1"])))
        entries.append((f"{name}.w2", fuse_conv(q["w2"], q["b2"])))
    for name in ("att1", "att2", "att3", "att4"):
        q = p[name]
        entries.append((f"{name}.wcf", fuse_conv(q["wcf"], q["bcf"])))
        entries.append((f"{name}.w1x1", fuse_conv(q["w1x1"], q["b1x1"])))
        entries.append((f"{name}.wfc", fuse_conv(q["wfc"], q["bfc"])))
        we, wo = fuse_convT(q["wr"], q["br"])
        entries.append((f"{name}.we", we))
        entries.append((f"{name}.wo", wo))
    entries.append(("cls.w", np.concatenate(
        [np.asarray(p["cls"]["w"], np.float32),
         np.asarray(p["cls"]["b"], np.float32).reshape(-1, 1)], axis=1)))

    slab, off = _pack_slab(entries)
    return dict(slab=slab, off=off,
                input_dim=int(np.asarray(p["down1"]["w1"]).shape[1]),
                output_dim=int(np.asarray(p["cls"]["w"]).shape[0]))


def _build_geometry(bt, L):
    """Per-level edge masks, ones rows and 0/1 resampling matrices (host-built)."""
    Ls = [L // (2 ** k) for k in range(5)]
    entries = []
    for k, lk in enumerate(Ls):
        n = bt * lk
        j = np.arange(n)
        entries.append((f"nf{k}", (j % lk != 0).astype(np.float32).reshape(1, n)))
        entries.append((f"nl{k}", (j % lk != lk - 1).astype(np.float32).reshape(1, n)))
        entries.append((f"ones{k}", np.ones((1, n), np.float32)))
    for k in range(4):                         # downsample (even cols) at levels 0..3
        n = bt * Ls[k]
        i = np.arange(n).reshape(n, 1)
        jj = np.arange(n // 2).reshape(1, -1)
        entries.append((f"deven{k}", (i == 2 * jj).astype(np.float32)))
    for k in range(1, 5):                      # scatter from level k up to level k-1
        n = bt * Ls[k]
        i = np.arange(n).reshape(n, 1)
        jj = np.arange(2 * n).reshape(1, -1)
        entries.append((f"seven{k}", (jj == 2 * i).astype(np.float32)))
        entries.append((f"sodd{k}", (jj == 2 * i + 1).astype(np.float32)))
    return _pack_slab(entries)


def _pick_batch_tile(B, L):
    """Largest batch tile with lane-aligned Bt*L, preferring >=2 grid steps (v7x)."""
    cand = [bt for bt in range(B, 0, -1)
            if B % bt == 0 and (bt * L) % 128 == 0 and bt * L <= 2048]
    for bt in cand:
        if B // bt >= 2:
            return bt
    return cand[0] if cand else B


# ----------------------------------------------------------------------------
# Fully fused forward pass: one pallas_call, grid over batch tiles
# ----------------------------------------------------------------------------
def attention_unet_forward(prepared, x):
    """x: (B, L, input_dim) -> (B, output_dim, L)."""
    param_slab, param_off = prepared["slab"], prepared["off"]
    in_dim, out_dim = prepared["input_dim"], prepared["output_dim"]
    B, L, cin = x.shape
    assert cin == in_dim
    assert L % 16 == 0, "sequence length must be divisible by 16 (4 pooling stages)"

    bt = _pick_batch_tile(B, L)
    geom_slab, geom_off = _build_geometry(bt, L)
    nt0 = bt * L
    grid = (B // bt,)

    def kernel(x_ref, ps_ref, gs_ref, o_ref):
        f32 = jnp.float32
        _gcache = {}

        def pw(name):                       # fused weight (bias in last column)
            r0, nr, nc = param_off[name]
            return ps_ref[r0:r0 + nr, 0:nc]

        def geom(name):                     # memoized geometry constant
            if name not in _gcache:
                r0, nr, nc = geom_off[name]
                _gcache[name] = gs_ref[r0:r0 + nr, 0:nc]
            return _gcache[name]

        def mm(a, b):
            return jnp.dot(a, b, preferred_element_type=f32)

        # x[:, j-1] / x[:, j+1] within each length-L_lvl segment, zero at edges.
        # TODO(synk): switch jnp.roll -> pltpu.roll (XLU slot) once the rotate
        # direction is verified on the target jaxlib.
        def shift_m(v, lvl):
            return jnp.roll(v, 1, axis=1) * geom(f"nf{lvl}")

        def shift_p(v, lvl):
            return jnp.roll(v, -1, axis=1) * geom(f"nl{lvl}")

        def conv_same(v, lvl, wname, relu=False):
            # K=3 'same' conv as ONE matmul over channel-stacked taps + ones row.
            xs = jnp.concatenate(
                [shift_m(v, lvl), v, shift_p(v, lvl), geom(f"ones{lvl}")], axis=0)
            y = mm(pw(wname), xs)
            return jnp.maximum(y, 0.0) if relu else y

        def downsample(v, lvl):             # keep even positions of each segment
            return mm(v, geom(f"deven{lvl}"))

        def maxpool2(v, lvl):               # MaxPool1d(kernel=2, stride=2)
            return downsample(jnp.maximum(v, jnp.roll(v, -1, axis=1)), lvl)

        def conv_strided2(v, lvl, wname):   # K=3, stride 2, pad 1
            return downsample(conv_same(v, lvl, wname), lvl)

        def conv_transpose2(v, lvl, we_name, wo_name):
            # ConvTranspose1d K=3, stride 2, pad 1, output_padding 1 : L -> 2L
            ones = geom(f"ones{lvl}")
            even = mm(pw(we_name), jnp.concatenate([v, ones], axis=0))
            odd = mm(pw(wo_name),
                     jnp.concatenate([v, shift_p(v, lvl), ones], axis=0))
            return mm(even, geom(f"seven{lvl}")) + mm(odd, geom(f"sodd{lvl}"))

        def encoder(v, lvl, name):
            f = conv_same(v, lvl, f"{name}.w1", relu=True)
            f = conv_same(f, lvl, f"{name}.w2", relu=True)
            return f, maxpool2(f, lvl)

        def decoder(v, skip, lvl, name):
            xt = conv_transpose2(v, lvl, f"{name}.we", f"{name}.wo")
            h = jnp.concatenate([xt, skip], axis=0)      # channel concat (xt, skip)
            h = conv_same(h, lvl - 1, f"{name}.w1", relu=True)
            return conv_same(h, lvl - 1, f"{name}.w2", relu=True)

        def attention(feat, skip, lvl, name):
            g = conv_strided2(skip, lvl, f"{name}.wcf") + feat
            g = jnp.maximum(g, 0.0)
            a = jax.nn.sigmoid(
                mm(pw(f"{name}.w1x1"),
                   jnp.concatenate([g, geom(f"ones{lvl + 1}")], axis=0)))
            h = conv_same(a, lvl + 1, f"{name}.wfc")
            r = conv_transpose2(h, lvl + 1, f"{name}.we", f"{name}.wo")
            return r * skip

        x0 = x_ref[...].astype(f32)                      # (Cin, bt*L)

        f1, p1 = encoder(x0, 0, "down1")
        f2, p2 = encoder(p1, 1, "down2")
        f3, p3 = encoder(p2, 2, "down3")
        f4, p4 = encoder(p3, 3, "down4")

        nk = conv_same(p4, 4, "neck.w1", relu=True)
        nk = conv_same(nk, 4, "neck.w2", relu=True)

        a4 = attention(nk, f4, 3, "att1")
        u = decoder(nk, a4, 4, "up1")
        a3 = attention(u, f3, 2, "att2")
        u = decoder(u, a3, 3, "up2")
        a2 = attention(u, f2, 1, "att3")
        u = decoder(u, a2, 2, "up3")
        a1 = attention(u, f1, 0, "att4")
        u = decoder(u, a1, 1, "up4")

        out = mm(pw("cls.w"), jnp.concatenate([u, geom("ones0")], axis=0))
        o_ref[...] = out.astype(o_ref.dtype)

    def run(x_in, ps, gs):
        # Lane-dense input/output slabs: (C, B*L), flat column = b*L + l.
        x2d = jnp.transpose(x_in, (2, 0, 1)).reshape(cin, B * L)
        out2d = pl.pallas_call(
            kernel,
            grid=grid,
            in_specs=[
                pl.BlockSpec((cin, nt0), lambda i: (0, i)),    # batch tile
                pl.BlockSpec(ps.shape, lambda i: (0, 0)),      # packed weight slab
                pl.BlockSpec(gs.shape, lambda i: (0, 0)),      # geometry slab
            ],
            out_specs=pl.BlockSpec((out_dim, nt0), lambda i: (0, i)),
            out_shape=jax.ShapeDtypeStruct((out_dim, B * L), jnp.float32),
            compiler_params=pltpu.CompilerParams(
                dimension_semantics=("parallel",)),
        )(x2d, ps, gs)
        return jnp.transpose(out2d.reshape(out_dim, B, L), (1, 0, 2))

    return jax.jit(run)(x, param_slab, geom_slab)


# ----------------------------------------------------------------------------
# Pure-JAX reference (PyTorch semantics, PyTorch weight layouts) for validation
# ----------------------------------------------------------------------------
def _ref_conv1d(x, w, b, stride=1, pad=(1, 1)):
    B, cin, L = x.shape
    cout, _, K = w.shape
    xp = jnp.pad(x, ((0, 0), (0, 0), pad))
    Lp = L + pad[0] + pad[1]
    Lout = (Lp - K) // stride + 1
    cols = jnp.stack([xp[:, :, k:k + stride * Lout:stride] for k in range(K)], axis=2)
    out = jnp.einsum("oik,bikl->bol", w, cols, precision="highest")
    return out + b[None, :, None]


def _ref_zero_stuff(x, s):
    B, C, L = x.shape
    y = jnp.zeros((B, C, L, s), x.dtype).at[..., 0].set(x).reshape(B, C, L * s)
    return y[:, :, : L * s - (s - 1)]


def _ref_conv_transpose1d(x, w, b):
    # ConvTranspose1d K=3, stride 2, padding 1, output_padding 1; w: (Cin, Cout, K)
    K = w.shape[2]
    w_eq = jnp.transpose(jnp.flip(w, axis=2), (1, 0, 2))
    xs = _ref_zero_stuff(x, 2)
    return _ref_conv1d(xs, w_eq, b, stride=1, pad=(K - 2, K - 1))


def attention_unet_reference(params, x):
    xc = jnp.transpose(x, (0, 2, 1))

    def enc(xin, q):
        f = jax.nn.relu(_ref_conv1d(xin, q["w1"], q["b1"]))
        f = jax.nn.relu(_ref_conv1d(f, q["w2"], q["b2"]))
        return f, jnp.maximum(f[:, :, 0::2], f[:, :, 1::2])

    def dec(xin, skip, q):
        xt = _ref_conv_transpose1d(xin, q["wt"], q["bt"])
        h = jnp.concatenate([xt, skip], axis=1)
        h = jax.nn.relu(_ref_conv1d(h, q["w1"], q["b1"]))
        return jax.nn.relu(_ref_conv1d(h, q["w2"], q["b2"]))

    def att(features, skip, q):
        g = jax.nn.relu(_ref_conv1d(skip, q["wcf"], q["bcf"], stride=2) + features)
        a = jax.nn.sigmoid(_ref_conv1d(g, q["w1x1"], q["b1x1"], pad=(0, 0)))
        h = _ref_conv1d(a, q["wfc"], q["bfc"])
        return _ref_conv_transpose1d(h, q["wr"], q["br"]) * skip

    f1, p1 = enc(xc, params["down1"])
    f2, p2 = enc(p1, params["down2"])
    f3, p3 = enc(p2, params["down3"])
    f4, p4 = enc(p3, params["down4"])
    nk = jax.nn.relu(_ref_conv1d(p4, params["neck"]["w1"], params["neck"]["b1"]))
    nk = jax.nn.relu(_ref_conv1d(nk, params["neck"]["w2"], params["neck"]["b2"]))
    a4 = att(nk, f4, params["att1"]); u = dec(nk, a4, params["up1"])
    a3 = att(u, f3, params["att2"]); u = dec(u, a3, params["up2"])
    a2 = att(u, f2, params["att3"]); u = dec(u, a2, params["up3"])
    a1 = att(u, f1, params["att4"]); u = dec(u, a1, params["up4"])
    out = jnp.einsum("oc,bcl->bol", params["cls"]["w"], u, precision="highest")
    return out + params["cls"]["b"][None, :, None]


# ----------------------------------------------------------------------------
if __name__ == "__main__":
    key = jax.random.PRNGKey(0)
    pkey, xkey = jax.random.split(key)

    INPUT_DIM, OUTPUT_DIM = 1, 4
    B, L = 8, 32                     # -> batch tile 4, grid of 2 parallel steps

    params = init_params(pkey, input_dim=INPUT_DIM, output_dim=OUTPUT_DIM)
    prepared = prepare_params(params)
    x = jax.random.normal(xkey, (B, L, INPUT_DIM), dtype=jnp.float32)

    out = attention_unet_forward(prepared, x)
    out = jax.block_until_ready(out)

    assert out.shape == (B, OUTPUT_DIM, L), out.shape
    assert bool(jnp.all(jnp.isfinite(out)))

    ref = attention_unet_reference(params, x)
    max_err = float(jnp.max(jnp.abs(out - ref)))
    assert bool(jnp.allclose(out, ref, atol=2e-2, rtol=2e-2)), max_err

    print("KERNEL_OK")
</pallas_src>

<mosaic_0001>
module attributes {stable_mosaic.version = 11 : i64} {
  func.func @kernel(%arg0: i32, %arg1: memref<1x128xf32, #tpu.memory_space<vmem>>, %arg2: memref<1616x512xf32, #tpu.memory_space<vmem>>, %arg3: memref<600x128xf32, #tpu.memory_space<vmem>>, %arg4: memref<4x128xf32, #tpu.memory_space<vmem>>) attributes {dimension_semantics = [#tpu.dimension_semantics<parallel>], iteration_bounds = array<i64: 2>, scalar_prefetch = 0 : i64, scratch_operands = 0 : i64, tpu.core_type = #tpu.core_type<tc>, window_params = [{transform_indices = @transform_0, window_bounds = array<i64: 1, 128>}, {pipeline_mode = #tpu.pipeline_mode<synchronous>, transform_indices = @transform_1, window_bounds = array<i64: 1616, 512>}, {pipeline_mode = #tpu.pipeline_mode<synchronous>, transform_indices = @transform_2, window_bounds = array<i64: 600, 128>}, {transform_indices = @transform_3, window_bounds = array<i64: 4, 128>}]} {
    %c0 = arith.constant 0 : index
    %c0_0 = arith.constant 0 : index
    %0 = vector.load %arg1[%c0, %c0_0] : memref<1x128xf32, #tpu.memory_space<vmem>>, vector<1x128xf32>
    %1 = vector.extract_strided_slice %0 {offsets = [0, 127], sizes = [1, 1], strides = [1, 1]} : vector<1x128xf32> to vector<1x1xf32>
    %2 = vector.extract_strided_slice %0 {offsets = [0, 0], sizes = [1, 127], strides = [1, 1]} : vector<1x128xf32> to vector<1x127xf32>
    %3 = tpu.concatenate %1, %2 in 1 : vector<1x1xf32>, vector<1x127xf32> -> vector<1x128xf32>
    %c0_1 = arith.constant 0 : index
    %c0_2 = arith.constant 0 : index
    %4 = vector.load %arg3[%c0_1, %c0_2] : memref<600x128xf32, #tpu.memory_space<vmem>>, vector<1x128xf32>
    %5 = arith.mulf %3, %4 : vector<1x128xf32>
    %6 = vector.extract_strided_slice %0 {offsets = [0, 1], sizes = [1, 127], strides = [1, 1]} : vector<1x128xf32> to vector<1x127xf32>
    %7 = vector.extract_strided_slice %0 {offsets = [0, 0], sizes = [1, 1], strides = [1, 1]} : vector<1x128xf32> to vector<1x1xf32>
    %8 = tpu.concatenate %6, %7 in 1 : vector<1x127xf32>, vector<1x1xf32> -> vector<1x128xf32>
    %c8 = arith.constant 8 : index
    %c0_3 = arith.constant 0 : index
    %9 = vector.load %arg3[%c8, %c0_3] : memref<600x128xf32, #tpu.memory_space<vmem>>, vector<1x128xf32>
    %10 = arith.mulf %8, %9 : vector<1x128xf32>
    %c16 = arith.constant 16 : index
    %c0_4 = arith.constant 0 : index
    %11 = vector.load %arg3[%c16, %c0_4] : memref<600x128xf32, #tpu.memory_space<vmem>>, vector<1x128xf32>
    %12 = tpu.concatenate %5, %0, %10, %11 in 0 : vector<1x128xf32>, vector<1x128xf32>, vector<1x128xf32>, vector<1x128xf32> -> vector<4x128xf32>
    %c0_5 = arith.constant 0 : index
    %c0_6 = arith.constant 0 : index
    %13 = vector.load %arg2[%c0_5, %c0_6] : memref<1616x512xf32, #tpu.memory_space<vmem>>, vector<8x4xf32>
    %cst = arith.constant dense<0.000000e+00> : vector<8x128xf32>
    %14 = tpu.matmul %13, %12, %cst {dimension_numbers = #tpu.dot_dimension_numbers<[1], [0], [0], [1], [0, 0, 1, 1], [], []>} : vector<8x4xf32>, vector<4x128xf32>, vector<8x128xf32> -> vector<8x128xf32>
    %cst_7 = arith.constant 0.000000e+00 : f32
    %15 = vector.broadcast %cst_7 : f32 to vector<8x128xf32>
    %16 = arith.maximumf %14, %15 : vector<8x128xf32>
    %17 = vector.extract_strided_slice %16 {offsets = [0, 127], sizes = [8, 1], strides = [1, 1]} : vector<8x128xf32> to vector<8x1xf32>
    %18 = vector.extract_strided_slice %16 {offsets = [0, 0], sizes = [8, 127], strides = [1, 1]} : vector<8x128xf32> to vector<8x127xf32>
    %19 = tpu.concatenate %17, %18 in 1 : vector<8x1xf32>, vector<8x127xf32> -> vector<8x128xf32>
    %20 = vector.broadcast %4 : vector<1x128xf32> to vector<8x128xf32>
    %21 = arith.mulf %19, %20 : vector<8x128xf32>
    %22 = vector.extract_strided_slice %16 {offsets = [0, 1], sizes = [8, 127], strides = [1, 1]} : vector<8x128xf32> to vector<8x127xf32>
    %23 = vector.extract_strided_slice %16 {offsets = [0, 0], sizes = [8, 1], strides = [1, 1]} : vector<8x128xf32> to vector<8x1xf32>
    %24 = tpu.concatenate %22, %23 in 1 : vector<8x127xf32>, vector<8x1xf32> -> vector<8x128xf32>
    %25 = vector.broadcast %9 : vector<1x128xf32> to vector<8x128xf32>
    %26 = arith.mulf %24, %25 : vector<8x128xf32>
    %27 = tpu.concatenate %21, %16, %26, %11 in 0 : vector<8x128xf32>, vector<8x128xf32>, vector<8x128xf32>, vector<1x128xf32> -> vector<25x128xf32>
    %c8_8 = arith.constant 8 : index
    %c0_9 = arith.constant 0 : index
    %28 = vector.load %arg2[%c8_8, %c0_9] : memref<1616x512xf32, #tpu.memory_space<vmem>>, vector<8x25xf32>
    %cst_10 = arith.constant dense<0.000000e+00> : vector<8x128xf32>
    %29 = tpu.matmul %28, %27, %cst_10 {dimension_numbers = #tpu.dot_dimension_numbers<[1], [0], [0], [1], [0, 0, 1, 1], [], []>} : vector<8x25xf32>, vector<25x128xf32>, vector<8x128xf32> -> vector<8x128xf32>
    %cst_11 = arith.constant 0.000000e+00 : f32
    %30 = vector.broadcast %cst_11 : f32 to vector<8x128xf32>
    %31 = arith.maximumf %29, %30 : vector<8x128xf32>
    %32 = vector.extract_strided_slice %31 {offsets = [0, 1], sizes = [8, 127], strides = [1, 1]} : vector<8x128xf32> to vector<8x127xf32>
    %33 = vector.extract_strided_slice %31 {offsets = [0, 0], sizes = [8, 1], strides = [1, 1]} : vector<8x128xf32> to vector<8x1xf32>
    %34 = tpu.concatenate %32, %33 in 1 : vector<8x127xf32>, vector<8x1xf32> -> vector<8x128xf32>
    %35 = arith.maximumf %31, %34 : vector<8x128xf32>
    %c120 = arith.constant 120 : index
    %c0_12 = arith.constant 0 : index
    %36 = vector.load %arg3[%c120, %c0_12] : memref<600x128xf32, #tpu.memory_space<vmem>>, vector<128x64xf32>
    %cst_13 = arith.constant dense<0.000000e+00> : vector<8x64xf32>
    %37 = tpu.matmul %35, %36, %cst_13 {dimension_numbers = #tpu.dot_dimension_numbers<[1], [0], [0], [1], [0, 0, 1, 1], [], []>} : vector<8x128xf32>, vector<128x64xf32>, vector<8x64xf32> -> vector<8x64xf32>
    %38 = vector.extract_strided_slice %37 {offsets = [0, 63], sizes = [8, 1], strides = [1, 1]} : vector<8x64xf32> to vector<8x1xf32>
    %39 = vector.extract_strided_slice %37 {offsets = [0, 0], sizes = [8, 63], strides = [1, 1]} : vector<8x64xf32> to vector<8x63xf32>
    %40 = tpu.concatenate %38, %39 in 1 : vector<8x1xf32>, vector<8x63xf32> -> vector<8x64xf32>
    %c24 = arith.constant 24 : index
    %c0_14 = arith.constant 0 : index
    %41 = vector.load %arg3[%c24, %c0_14] : memref<600x128xf32, #tpu.memory_space<vmem>>, vector<1x64xf32>
    %42 = vector.broadcast %41 : vector<1x64xf32> to vector<8x64xf32>
    %43 = arith.mulf %40, %42 : vector<8x64xf32>
    %44 = vector.extract_strided_slice %37 {offsets = [0, 1], sizes = [8, 63], strides = [1, 1]} : vector<8x64xf32> to vector<8x63xf32>
    %45 = vector.extract_strided_slice %37 {offsets = [0, 0], sizes = [8, 1], strides = [1, 1]} : vector<8x64xf32> to vector<8x1xf32>
    %46 = tpu.concatenate %44, %45 in 1 : vector<8x63xf32>, vector<8x1xf32> -> vector<8x64xf32>
    %c32 = arith.constant 32 : index
    %c0_15 = arith.constant 0 : index
    %47 = vector.load %arg3[%c32, %c0_15] : memref<600x128xf32, #tpu.memory_space<vmem>>, vector<1x64xf32>
    %48 = vector.broadcast %47 : vector<1x64xf32> to vector<8x64xf32>
    %49 = arith.mulf %46, %48 : vector<8x64xf32>
    %c40 = arith.constant 40 : index
    %c0_16 = arith.constant 0 : index
    %50 = vector.load %arg3[%c40, %c0_16] : memref<600x128xf32, #tpu.memory_space<vmem>>, vector<1x64xf32>
    %51 = tpu.concatenate %43, %37, %49, %50 in 0 : vector<8x64xf32>, vector<8x64xf32>, vector<8x64xf32>, vector<1x64xf32> -> vector<25x64xf32>
    %c16_17 = arith.constant 16 : index
    %c0_18 = arith.constant 0 : index
    %52 = vector.load %arg2[%c16_17, %c0_18] : memref<1616x512xf32, #tpu.memory_space<vmem>>, vector<16x25xf32>
    %cst_19 = arith.constant dense<0.000000e+00> : vector<16x64xf32>
    %53 = tpu.matmul %52, %51, %cst_19 {dimension_numbers = #tpu.dot_dimension_numbers<[1], [0], [0], [1], [0, 0, 1, 1], [], []>} : vector<16x25xf32>, vector<25x64xf32>, vector<16x64xf32> -> vector<16x64xf32>
    %cst_20 = arith.constant 0.000000e+00 : f32
    %54 = vector.broadcast %cst_20 : f32 to vector<16x64xf32>
    %55 = arith.maximumf %53, %54 : vector<16x64xf32>
    %56 = vector.extract_strided_slice %55 {offsets = [0, 63], sizes = [16, 1], strides = [1, 1]} : vector<16x64xf32> to vector<16x1xf32>
    %57 = vector.extract_strided_slice %55 {offsets = [0, 0], sizes = [16, 63], strides = [1, 1]} : vector<16x64xf32> to vector<16x63xf32>
    %58 = tpu.concatenate %56, %57 in 1 : vector<16x1xf32>, vector<16x63xf32> -> vector<16x64xf32>
    %59 = vector.broadcast %41 : vector<1x64xf32> to vector<16x64xf32>
    %60 = arith.mulf %58, %59 : vector<16x64xf32>
    %61 = vector.extract_strided_slice %55 {offsets = [0, 1], sizes = [16, 63], strides = [1, 1]} : vector<16x64xf32> to vector<16x63xf32>
    %62 = vector.extract_strided_slice %55 {offsets = [0, 0], sizes = [16, 1], strides = [1, 1]} : vector<16x64xf32> to vector<16x1xf32>
    %63 = tpu.concatenate %61, %62 in 1 : vector<16x63xf32>, vector<16x1xf32> -> vector<16x64xf32>
    %64 = vector.broadcast %47 : vector<1x64xf32> to vector<16x64xf32>
    %65 = arith.mulf %63, %64 : vector<16x64xf32>
    %66 = tpu.concatenate %60, %55, %65, %50 in 0 : vector<16x64xf32>, vector<16x64xf32>, vector<16x64xf32>, vector<1x64xf32> -> vector<49x64xf32>
    %c32_21 = arith.constant 32 : index
    %c0_22 = arith.constant 0 : index
    %67 = vector.load %arg2[%c32_21, %c0_22] : memref<1616x512xf32, #tpu.memory_space<vmem>>, vector<16x49xf32>
    %cst_23 = arith.constant dense<0.000000e+00> : vector<16x64xf32>
    %68 = tpu.matmul %67, %66, %cst_23 {dimension_numbers = #tpu.dot_dimension_numbers<[1], [0], [0], [1], [0, 0, 1, 1], [], []>} : vector<16x49xf32>, vector<49x64xf32>, vector<16x64xf32> -> vector<16x64xf32>
    %cst_24 = arith.constant 0.000000e+00 : f32
    %69 = vector.broadcast %cst_24 : f32 to vector<16x64xf32>
    %70 = arith.maximumf %68, %69 : vector<16x64xf32>
    %71 = vector.extract_strided_slice %70 {offsets = [0, 1], sizes = [16, 63], strides = [1, 1]} : vector<16x64xf32> to vector<16x63xf32>
    %72 = vector.extract_strided_slice %70 {offsets = [0, 0], sizes = [16, 1], strides = [1, 1]} : vector<16x64xf32> to vector<16x1xf32>
    %73 = tpu.concatenate %71, %72 in 1 : vector<16x63xf32>, vector<16x1xf32> -> vector<16x64xf32>
    %74 = arith.maximumf %70, %73 : vector<16x64xf32>
    %c248 = arith.constant 248 : index
    %c0_25 = arith.constant 0 : index
    %75 = vector.load %arg3[%c248, %c0_25] : memref<600x128xf32, #tpu.memory_space<vmem>>, vector<64x32xf32>
    %cst_26 = arith.constant dense<0.000000e+00> : vector<16x32xf32>
    %76 = tpu.matmul %74, %75, %cst_26 {dimension_numbers = #tpu.dot_dimension_numbers<[1], [0], [0], [1], [0, 0, 1, 1], [], []>} : vector<16x64xf32>, vector<64x32xf32>, vector<16x32xf32> -> vector<16x32xf32>
    %77 = vector.extract_strided_slice %76 {offsets = [0, 31], sizes = [16, 1], strides = [1, 1]} : vector<16x32xf32> to vector<16x1xf32>
    %78 = vector.extract_strided_slice %76 {offsets = [0, 0], sizes = [16, 31], strides = [1, 1]} : vector<16x32xf32> to vector<16x31xf32>
    %79 = tpu.concatenate %77, %78 in 1 : vector<16x1xf32>, vector<16x31xf32> -> vector<16x32xf32>
    %c48 = arith.constant 48 : index
    %c0_27 = arith.constant 0 : index
    %80 = vector.load %arg3[%c48, %c0_27] : memref<600x128xf32, #tpu.memory_space<vmem>>, vector<1x32xf32>
    %81 = vector.broadcast %80 : vector<1x32xf32> to vector<16x32xf32>
    %82 = arith.mulf %79, %81 : vector<16x32xf32>
    %83 = vector.extract_strided_slice %76 {offsets = [0, 1], sizes = [16, 31], strides = [1, 1]} : vector<16x32xf32> to vector<16x31xf32>
    %84 = vector.extract_strided_slice %76 {offsets = [0, 0], sizes = [16, 1], strides = [1, 1]} : vector<16x32xf32> to vector<16x1xf32>
    %85 = tpu.concatenate %83, %84 in 1 : vector<16x31xf32>, vector<16x1xf32> -> vector<16x32xf32>
    %c56 = arith.constant 56 : index
    %c0_28 = arith.constant 0 : index
    %86 = vector.load %arg3[%c56, %c0_28] : memref<600x128xf32, #tpu.memory_space<vmem>>, vector<1x32xf32>
    %87 = vector.broadcast %86 : vector<1x32xf32> to vector<16x32xf32>
    %88 = arith.mulf %85, %87 : vector<16x32xf32>
    %c64 = arith.constant 64 : index
    %c0_29 = arith.constant 0 : index
    %89 = vector.load %arg3[%c64, %c0_29] : memref<600x128xf32, #tpu.memory_space<vmem>>, vector<1x32xf32>
    %90 = tpu.concatenate %82, %76, %88, %89 in 0 : vector<16x32xf32>, vector<16x32xf32>, vector<16x32xf32>, vector<1x32xf32> -> vector<49x32xf32>
    %c48_30 = arith.constant 48 : index
    %c0_31 = arith.constant 0 : index
    %91 = vector.load %arg2[%c48_30, %c0_31] : memref<1616x512xf32, #tpu.memory_space<vmem>>, vector<32x49xf32>
    %cst_32 = arith.constant dense<0.000000e+00> : vector<32x32xf32>
    %92 = tpu.matmul %91, %90, %cst_32 {dimension_numbers = #tpu.dot_dimension_numbers<[1], [0], [0], [1], [0, 0, 1, 1], [], []>} : vector<32x49xf32>, vector<49x32xf32>, vector<32x32xf32> -> vector<32x32xf32>
    %cst_33 = arith.constant 0.000000e+00 : f32
    %93 = vector.broadcast %cst_33 : f32 to vector<32x32xf32>
    %94 = arith.maximumf %92, %93 : vector<32x32xf32>
    %95 = vector.extract_strided_slice %94 {offsets = [0, 31], sizes = [32, 1], strides = [1, 1]} : vector<32x32xf32> to vector<32x1xf32>
    %96 = vector.extract_strided_slice %94 {offsets = [0, 0], sizes = [32, 31], strides = [1, 1]} : vector<32x32xf32> to vector<32x31xf32>
    %97 = tpu.concatenate %95, %96 in 1 : vector<32x1xf32>, vector<32x31xf32> -> vector<32x32xf32>
    %98 = vector.broadcast %80 : vector<1x32xf32> to vector<32x32xf32>
    %99 = arith.mulf %97, %98 : vector<32x32xf32>
    %100 = vector.extract_strided_slice %94 {offsets = [0, 1], sizes = [32, 31], strides = [1, 1]} : vector<32x32xf32> to vector<32x31xf32>
    %101 = vector.extract_strided_slice %94 {offsets = [0, 0], sizes = [32, 1], strides = [1, 1]} : vector<32x32xf32> to vector<32x1xf32>
    %102 = tpu.concatenate %100, %101 in 1 : vector<32x31xf32>, vector<32x1xf32> -> vector<32x32xf32>
    %103 = vector.broadcast %86 : vector<1x32xf32> to vector<32x32xf32>
    %104 = arith.mulf %102, %103 : vector<32x32xf32>
    %105 = tpu.concatenate %99, %94, %104, %89 in 0 : vector<32x32xf32>, vector<32x32xf32>, vector<32x32xf32>, vector<1x32xf32> -> vector<97x32xf32>
    %c80 = arith.constant 80 : index
    %c0_34 = arith.constant 0 : index
    %106 = vector.load %arg2[%c80, %c0_34] : memref<1616x512xf32, #tpu.memory_space<vmem>>, vector<32x97xf32>
    %cst_35 = arith.constant dense<0.000000e+00> : vector<32x32xf32>
    %107 = tpu.matmul %106, %105, %cst_35 {dimension_numbers = #tpu.dot_dimension_numbers<[1], [0], [0], [1], [0, 0, 1, 1], [], []>} : vector<32x97xf32>, vector<97x32xf32>, vector<32x32xf32> -> vector<32x32xf32>
    %cst_36 = arith.constant 0.000000e+00 : f32
    %108 = vector.broadcast %cst_36 : f32 to vector<32x32xf32>
    %109 = arith.maximumf %107, %108 : vector<32x32xf32>
    %110 = vector.extract_strided_slice %109 {offsets = [0, 1], sizes = [32, 31], strides = [1, 1]} : vector<32x32xf32> to vector<32x31xf32>
    %111 = vector.extract_strided_slice %109 {offsets = [0, 0], sizes = [32, 1], strides = [1, 1]} : vector<32x32xf32> to vector<32x1xf32>
    %112 = tpu.concatenate %110, %111 in 1 : vector<32x31xf32>, vector<32x1xf32> -> vector<32x32xf32>
    %113 = arith.maximumf %109, %112 : vector<32x32xf32>
    %c312 = arith.constant 312 : index
    %c0_37 = arith.constant 0 : index
    %114 = vector.load %arg3[%c312, %c0_37] : memref<600x128xf32, #tpu.memory_space<vmem>>, vector<32x16xf32>
    %cst_38 = arith.constant dense<0.000000e+00> : vector<32x16xf32>
    %115 = tpu.matmul %113, %114, %cst_38 {dimension_numbers = #tpu.dot_dimension_numbers<[1], [0], [0], [1], [0, 0, 1, 1], [], []>} : vector<32x32xf32>, vector<32x16xf32>, vector<32x16xf32> -> vector<32x16xf32>
    %116 = vector.extract_strided_slice %115 {offsets = [0, 15], sizes = [32, 1], strides = [1, 1]} : vector<32x16xf32> to vector<32x1xf32>
    %117 = vector.extract_strided_slice %115 {offsets = [0, 0], sizes = [32, 15], strides = [1, 1]} : vector<32x16xf32> to vector<32x15xf32>
    %118 = tpu.concatenate %116, %117 in 1 : vector<32x1xf32>, vector<32x15xf32> -> vector<32x16xf32>
    %c72 = arith.constant 72 : index
    %c0_39 = arith.constant 0 : index
    %119 = vector.load %arg3[%c72, %c0_39] : memref<600x128xf32, #tpu.memory_space<vmem>>, vector<1x16xf32>
    %120 = vector.broadcast %119 : vector<1x16xf32> to vector<32x16xf32>
    %121 = arith.mulf %118, %120 : vector<32x16xf32>
    %122 = vector.extract_strided_slice %115 {offsets = [0, 1], sizes = [32, 15], strides = [1, 1]} : vector<32x16xf32> to vector<32x15xf32>
    %123 = vector.extract_strided_slice %115 {offsets = [0, 0], sizes = [32, 1], strides = [1, 1]} : vector<32x16xf32> to vector<32x1xf32>
    %124 = tpu.concatenate %122, %123 in 1 : vector<32x15xf32>, vector<32x1xf32> -> vector<32x16xf32>
    %c80_40 = arith.constant 80 : index
    %c0_41 = arith.constant 0 : index
    %125 = vector.load %arg3[%c80_40, %c0_41] : memref<600x128xf32, #tpu.memory_space<vmem>>, vector<1x16xf32>
    %126 = vector.broadcast %125 : vector<1x16xf32> to vector<32x16xf32>
    %127 = arith.mulf %124, %126 : vector<32x16xf32>
    %c88 = arith.constant 88 : index
    %c0_42 = arith.constant 0 : index
    %128 = vector.load %arg3[%c88, %c0_42] : memref<600x128xf32, #tpu.memory_space<vmem>>, vector<1x16xf32>
    %129 = tpu.concatenate %121, %115, %127, %128 in 0 : vector<32x16xf32>, vector<32x16xf32>, vector<32x16xf32>, vector<1x16xf32> -> vector<97x16xf32>
    %c112 = arith.constant 112 : index
    %c0_43 = arith.constant 0 : index
    %130 = vector.load %arg2[%c112, %c0_43] : memref<1616x512xf32, #tpu.memory_space<vmem>>, vector<64x97xf32>
    %cst_44 = arith.constant dense<0.000000e+00> : vector<64x16xf32>
    %131 = tpu.matmul %130, %129, %cst_44 {dimension_numbers = #tpu.dot_dimension_numbers<[1], [0], [0], [1], [0, 0, 1, 1], [], []>} : vector<64x97xf32>, vector<97x16xf32>, vector<64x16xf32> -> vector<64x16xf32>
    %cst_45 = arith.constant 0.000000e+00 : f32
    %132 = vector.broadcast %cst_45 : f32 to vector<64x16xf32>
    %133 = arith.maximumf %131, %132 : vector<64x16xf32>
    %134 = vector.extract_strided_slice %133 {offsets = [0, 15], sizes = [64, 1], strides = [1, 1]} : vector<64x16xf32> to vector<64x1xf32>
    %135 = vector.extract_strided_slice %133 {offsets = [0, 0], sizes = [64, 15], strides = [1, 1]} : vector<64x16xf32> to vector<64x15xf32>
    %136 = tpu.concatenate %134, %135 in 1 : vector<64x1xf32>, vector<64x15xf32> -> vector<64x16xf32>
    %137 = vector.broadcast %119 : vector<1x16xf32> to vector<64x16xf32>
    %138 = arith.mulf %136, %137 : vector<64x16xf32>
    %139 = vector.extract_strided_slice %133 {offsets = [0, 1], sizes = [64, 15], strides = [1, 1]} : vector<64x16xf32> to vector<64x15xf32>
    %140 = vector.extract_strided_slice %133 {offsets = [0, 0], sizes = [64, 1], strides = [1, 1]} : vector<64x16xf32> to vector<64x1xf32>
    %141 = tpu.concatenate %139, %140 in 1 : vector<64x15xf32>, vector<64x1xf32> -> vector<64x16xf32>
    %142 = vector.broadcast %125 : vector<1x16xf32> to vector<64x16xf32>
    %143 = arith.mulf %141, %142 : vector<64x16xf32>
    %144 = tpu.concatenate %138, %133, %143, %128 in 0 : vector<64x16xf32>, vector<64x16xf32>, vector<64x16xf32>, vector<1x16xf32> -> vector<193x16xf32>
    %c176 = arith.constant 176 : index
    %c0_46 = arith.constant 0 : index
    %145 = vector.load %arg2[%c176, %c0_46] : memref<1616x512xf32, #tpu.memory_space<vmem>>, vector<64x193xf32>
    %cst_47 = arith.constant dense<0.000000e+00> : vector<64x16xf32>
    %146 = tpu.matmul %145, %144, %cst_47 {dimension_numbers = #tpu.dot_dimension_numbers<[1], [0], [0], [1], [0, 0, 1, 1], [], []>} : vector<64x193xf32>, vector<193x16xf32>, vector<64x16xf32> -> vector<64x16xf32>
    %cst_48 = arith.constant 0.000000e+00 : f32
    %147 = vector.broadcast %cst_48 : f32 to vector<64x16xf32>
    %148 = arith.maximumf %146, %147 : vector<64x16xf32>
    %149 = vector.extract_strided_slice %148 {offsets = [0, 1], sizes = [64, 15], strides = [1, 1]} : vector<64x16xf32> to vector<64x15xf32>
    %150 = vector.extract_strided_slice %148 {offsets = [0, 0], sizes = [64, 1], strides = [1, 1]} : vector<64x16xf32> to vector<64x1xf32>
    %151 = tpu.concatenate %149, %150 in 1 : vector<64x15xf32>, vector<64x1xf32> -> vector<64x16xf32>
    %152 = arith.maximumf %148, %151 : vector<64x16xf32>
    %c344 = arith.constant 344 : index
    %c0_49 = arith.constant 0 : index
    %153 = vector.load %arg3[%c344, %c0_49] : memref<600x128xf32, #tpu.memory_space<vmem>>, vector<16x8xf32>
    %cst_50 = arith.constant dense<0.000000e+00> : vector<64x8xf32>
    %154 = tpu.matmul %152, %153, %cst_50 {dimension_numbers = #tpu.dot_dimension_numbers<[1], [0], [0], [1], [0, 0, 1, 1], [], []>} : vector<64x16xf32>, vector<16x8xf32>, vector<64x8xf32> -> vector<64x8xf32>
    %155 = vector.extract_strided_slice %154 {offsets = [0, 7], sizes = [64, 1], strides = [1, 1]} : vector<64x8xf32> to vector<64x1xf32>
    %156 = vector.extract_strided_slice %154 {offsets = [0, 0], sizes = [64, 7], strides = [1, 1]} : vector<64x8xf32> to vector<64x7xf32>
    %157 = tpu.concatenate %155, %156 in 1 : vector<64x1xf32>, vector<64x7xf32> -> vector<64x8xf32>
    %c96 = arith.constant 96 : index
    %c0_51 = arith.constant 0 : index
    %158 = vector.load %arg3[%c96, %c0_51] : memref<600x128xf32, #tpu.memory_space<vmem>>, vector<1x8xf32>
    %159 = vector.broadcast %158 : vector<1x8xf32> to vector<64x8xf32>
    %160 = arith.mulf %157, %159 : vector<64x8xf32>
    %161 = vector.extract_strided_slice %154 {offsets = [0, 1], sizes = [64, 7], strides = [1, 1]} : vector<64x8xf32> to vector<64x7xf32>
    %162 = vector.extract_strided_slice %154 {offsets = [0, 0], sizes = [64, 1], strides = [1, 1]} : vector<64x8xf32> to vector<64x1xf32>
    %163 = tpu.concatenate %161, %162 in 1 : vector<64x7xf32>, vector<64x1xf32> -> vector<64x8xf32>
    %c104 = arith.constant 104 : index
    %c0_52 = arith.constant 0 : index
    %164 = vector.load %arg3[%c104, %c0_52] : memref<600x128xf32, #tpu.memory_space<vmem>>, vector<1x8xf32>
    %165 = vector.broadcast %164 : vector<1x8xf32> to vector<64x8xf32>
    %166 = arith.mulf %163, %165 : vector<64x8xf32>
    %c112_53 = arith.constant 112 : index
    %c0_54 = arith.constant 0 : index
    %167 = vector.load %arg3[%c112_53, %c0_54] : memref<600x128xf32, #tpu.memory_space<vmem>>, vector<1x8xf32>
    %168 = tpu.concatenate %160, %154, %166, %167 in 0 : vector<64x8xf32>, vector<64x8xf32>, vector<64x8xf32>, vector<1x8xf32> -> vector<193x8xf32>
    %c240 = arith.constant 240 : index
    %c0_55 = arith.constant 0 : index
    %169 = vector.load %arg2[%c240, %c0_55] : memref<1616x512xf32, #tpu.memory_space<vmem>>, vector<128x193xf32>
    %cst_56 = arith.constant dense<0.000000e+00> : vector<128x8xf32>
    %170 = tpu.matmul %169, %168, %cst_56 {dimension_numbers = #tpu.dot_dimension_numbers<[1], [0], [0], [1], [0, 0, 1, 1], [], []>} : vector<128x193xf32>, vector<193x8xf32>, vector<128x8xf32> -> vector<128x8xf32>
    %cst_57 = arith.constant 0.000000e+00 : f32
    %171 = vector.broadcast %cst_57 : f32 to vector<128x8xf32>
    %172 = arith.maximumf %170, %171 : vector<128x8xf32>
    %173 = vector.extract_strided_slice %172 {offsets = [0, 7], sizes = [128, 1], strides = [1, 1]} : vector<128x8xf32> to vector<128x1xf32>
    %174 = vector.extract_strided_slice %172 {offsets = [0, 0], sizes = [128, 7], strides = [1, 1]} : vector<128x8xf32> to vector<128x7xf32>
    %175 = tpu.concatenate %173, %174 in 1 : vector<128x1xf32>, vector<128x7xf32> -> vector<128x8xf32>
    %176 = vector.broadcast %158 : vector<1x8xf32> to vector<128x8xf32>
    %177 = arith.mulf %175, %176 : vector<128x8xf32>
    %178 = vector.extract_strided_slice %172 {offsets = [0, 1], sizes = [128, 7], strides = [1, 1]} : vector<128x8xf32> to vector<128x7xf32>
    %179 = vector.extract_strided_slice %172 {offsets = [0, 0], sizes = [128, 1], strides = [1, 1]} : vector<128x8xf32> to vector<128x1xf32>
    %180 = tpu.concatenate %178, %179 in 1 : vector<128x7xf32>, vector<128x1xf32> -> vector<128x8xf32>
    %181 = vector.broadcast %164 : vector<1x8xf32> to vector<128x8xf32>
    %182 = arith.mulf %180, %181 : vector<128x8xf32>
    %183 = tpu.concatenate %177, %172, %182, %167 in 0 : vector<128x8xf32>, vector<128x8xf32>, vector<128x8xf32>, vector<1x8xf32> -> vector<385x8xf32>
    %c368 = arith.constant 368 : index
    %c0_58 = arith.constant 0 : index
    %184 = vector.load %arg2[%c368, %c0_58] : memref<1616x512xf32, #tpu.memory_space<vmem>>, vector<128x385xf32>
    %cst_59 = arith.constant dense<0.000000e+00> : vector<128x8xf32>
    %185 = tpu.matmul %184, %183, %cst_59 {dimension_numbers = #tpu.dot_dimension_numbers<[1], [0], [0], [1], [0, 0, 1, 1], [], []>} : vector<128x385xf32>, vector<385x8xf32>, vector<128x8xf32> -> vector<128x8xf32>
    %cst_60 = arith.constant 0.000000e+00 : f32
    %186 = vector.broadcast %cst_60 : f32 to vector<128x8xf32>
    %187 = arith.maximumf %185, %186 : vector<128x8xf32>
    %188 = vector.extract_strided_slice %148 {offsets = [0, 15], sizes = [64, 1], strides = [1, 1]} : vector<64x16xf32> to vector<64x1xf32>
    %189 = vector.extract_strided_slice %148 {offsets = [0, 0], sizes = [64, 15], strides = [1, 1]} : vector<64x16xf32> to vector<64x15xf32>
    %190 = tpu.concatenate %188, %189 in 1 : vector<64x1xf32>, vector<64x15xf32> -> vector<64x16xf32>
    %191 = vector.broadcast %119 : vector<1x16xf32> to vector<64x16xf32>
    %192 = arith.mulf %190, %191 : vector<64x16xf32>
    %193 = vector.extract_strided_slice %148 {offsets = [0, 1], sizes = [64, 15], strides = [1, 1]} : vector<64x16xf32> to vector<64x15xf32>
    %194 = vector.extract_strided_slice %148 {offsets = [0, 0], sizes = [64, 1], strides = [1, 1]} : vector<64x16xf32> to vector<64x1xf32>
    %195 = tpu.concatenate %193, %194 in 1 : vector<64x15xf32>, vector<64x1xf32> -> vector<64x16xf32>
    %196 = vector.broadcast %125 : vector<1x16xf32> to vector<64x16xf32>
    %197 = arith.mulf %195, %196 : vector<64x16xf32>
    %198 = tpu.concatenate %192, %148, %197, %128 in 0 : vector<64x16xf32>, vector<64x16xf32>, vector<64x16xf32>, vector<1x16xf32> -> vector<193x16xf32>
    %c976 = arith.constant 976 : index
    %c0_61 = arith.constant 0 : index
    %199 = vector.load %arg2[%c976, %c0_61] : memref<1616x512xf32, #tpu.memory_space<vmem>>, vector<128x193xf32>
    %cst_62 = arith.constant dense<0.000000e+00> : vector<128x16xf32>
    %200 = tpu.matmul %199, %198, %cst_62 {dimension_numbers = #tpu.dot_dimension_numbers<[1], [0], [0], [1], [0, 0, 1, 1], [], []>} : vector<128x193xf32>, vector<193x16xf32>, vector<128x16xf32> -> vector<128x16xf32>
    %cst_63 = arith.constant dense<0.000000e+00> : vector<128x8xf32>
    %201 = tpu.matmul %200, %153, %cst_63 {dimension_numbers = #tpu.dot_dimension_numbers<[1], [0], [0], [1], [0, 0, 1, 1], [], []>} : vector<128x16xf32>, vector<16x8xf32>, vector<128x8xf32> -> vector<128x8xf32>
    %202 = arith.addf %201, %187 : vector<128x8xf32>
    %cst_64 = arith.constant 0.000000e+00 : f32
    %203 = vector.broadcast %cst_64 : f32 to vector<128x8xf32>
    %204 = arith.maximumf %202, %203 : vector<128x8xf32>
    %c1104 = arith.constant 1104 : index
    %c0_65 = arith.constant 0 : index
    %205 = vector.load %arg2[%c1104, %c0_65] : memref<1616x512xf32, #tpu.memory_space<vmem>>, vector<1x129xf32>
    %206 = tpu.concatenate %204, %167 in 0 : vector<128x8xf32>, vector<1x8xf32> -> vector<129x8xf32>
    %cst_66 = arith.constant dense<0.000000e+00> : vector<1x8xf32>
    %207 = tpu.matmul %205, %206, %cst_66 {dimension_numbers = #tpu.dot_dimension_numbers<[1], [0], [0], [1], [0, 0, 1, 1], [], []>} : vector<1x129xf32>, vector<129x8xf32>, vector<1x8xf32> -> vector<1x8xf32>
    %208 = arith.negf %207 : vector<1x8xf32>
    %209 = math.exp %208 : vector<1x8xf32>
    %cst_67 = arith.constant 1.000000e+00 : f32
    %210 = vector.broadcast %cst_67 : f32 to vector<1x8xf32>
    %211 = arith.addf %210, %209 : vector<1x8xf32>
    %212 = arith.divf %210, %211 : vector<1x8xf32>
    %213 = vector.extract_strided_slice %212 {offsets = [0, 7], sizes = [1, 1], strides = [1, 1]} : vector<1x8xf32> to vector<1x1xf32>
    %214 = vector.extract_strided_slice %212 {offsets = [0, 0], sizes = [1, 7], strides = [1, 1]} : vector<1x8xf32> to vector<1x7xf32>
    %215 = tpu.concatenate %213, %214 in 1 : vector<1x1xf32>, vector<1x7xf32> -> vector<1x8xf32>
    %216 = arith.mulf %215, %158 : vector<1x8xf32>
    %217 = vector.extract_strided_slice %212 {offsets = [0, 1], sizes = [1, 7], strides = [1, 1]} : vector<1x8xf32> to vector<1x7xf32>
    %218 = vector.extract_strided_slice %212 {offsets = [0, 0], sizes = [1, 1], strides = [1, 1]} : vector<1x8xf32> to vector<1x1xf32>
    %219 = tpu.concatenate %217, %218 in 1 : vector<1x7xf32>, vector<1x1xf32> -> vector<1x8xf32>
    %220 = arith.mulf %219, %164 : vector<1x8xf32>
    %221 = tpu.concatenate %216, %212, %220, %167 in 0 : vector<1x8xf32>, vector<1x8xf32>, vector<1x8xf32>, vector<1x8xf32> -> vector<4x8xf32>
    %c1112 = arith.constant 1112 : index
    %c0_68 = arith.constant 0 : index
    %222 = vector.load %arg2[%c1112, %c0_68] : memref<1616x512xf32, #tpu.memory_space<vmem>>, vector<64x4xf32>
    %cst_69 = arith.constant dense<0.000000e+00> : vector<64x8xf32>
    %223 = tpu.matmul %222, %221, %cst_69 {dimension_numbers = #tpu.dot_dimension_numbers<[1], [0], [0], [1], [0, 0, 1, 1], [], []>} : vector<64x4xf32>, vector<4x8xf32>, vector<64x8xf32> -> vector<64x8xf32>
    %c1176 = arith.constant 1176 : index
    %c0_70 = arith.constant 0 : index
    %224 = vector.load %arg2[%c1176, %c0_70] : memref<1616x512xf32, #tpu.memory_space<vmem>>, vector<64x65xf32>
    %225 = tpu.concatenate %223, %167 in 0 : vector<64x8xf32>, vector<1x8xf32> -> vector<65x8xf32>
    %cst_71 = arith.constant dense<0.000000e+00> : vector<64x8xf32>
    %226 = tpu.matmul %224, %225, %cst_71 {dimension_numbers = #tpu.dot_dimension_numbers<[1], [0], [0], [1], [0, 0, 1, 1], [], []>} : vector<64x65xf32>, vector<65x8xf32>, vector<64x8xf32> -> vector<64x8xf32>
    %c1240 = arith.constant 1240 : index
    %c0_72 = arith.constant 0 : index
    %227 = vector.load %arg2[%c1240, %c0_72] : memref<1616x512xf32, #tpu.memory_space<vmem>>, vector<64x129xf32>
    %228 = vector.extract_strided_slice %223 {offsets = [0, 1], sizes = [64, 7], strides = [1, 1]} : vector<64x8xf32> to vector<64x7xf32>
    %229 = vector.extract_strided_slice %223 {offsets = [0, 0], sizes = [64, 1], strides = [1, 1]} : vector<64x8xf32> to vector<64x1xf32>
    %230 = tpu.concatenate %228, %229 in 1 : vector<64x7xf32>, vector<64x1xf32> -> vector<64x8xf32>
    %231 = vector.broadcast %164 : vector<1x8xf32> to vector<64x8xf32>
    %232 = arith.mulf %230, %231 : vector<64x8xf32>
    %233 = tpu.concatenate %223, %232, %167 in 0 : vector<64x8xf32>, vector<64x8xf32>, vector<1x8xf32> -> vector<129x8xf32>
    %cst_73 = arith.constant dense<0.000000e+00> : vector<64x8xf32>
    %234 = tpu.matmul %227, %233, %cst_73 {dimension_numbers = #tpu.dot_dimension_numbers<[1], [0], [0], [1], [0, 0, 1, 1], [], []>} : vector<64x129xf32>, vector<129x8xf32>, vector<64x8xf32> -> vector<64x8xf32>
    %c584 = arith.constant 584 : index
    %c0_74 = arith.constant 0 : index
    %235 = vector.load %arg3[%c584, %c0_74] : memref<600x128xf32, #tpu.memory_space<vmem>>, vector<8x16xf32>
    %cst_75 = arith.constant dense<0.000000e+00> : vector<64x16xf32>
    %236 = tpu.matmul %226, %235, %cst_75 {dimension_numbers = #tpu.dot_dimension_numbers<[1], [0], [0], [1], [0, 0, 1, 1], [], []>} : vector<64x8xf32>, vector<8x16xf32>, vector<64x16xf32> -> vector<64x16xf32>
    %c592 = arith.constant 592 : index
    %c0_76 = arith.constant 0 : index
    %237 = vector.load %arg3[%c592, %c0_76] : memref<600x128xf32, #tpu.memory_space<vmem>>, vector<8x16xf32>
    %cst_77 = arith.constant dense<0.000000e+00> : vector<64x16xf32>
    %238 = tpu.matmul %234, %237, %cst_77 {dimension_numbers = #tpu.dot_dimension_numbers<[1], [0], [0], [1], [0, 0, 1, 1], [], []>} : vector<64x8xf32>, vector<8x16xf32>, vector<64x16xf32> -> vector<64x16xf32>
    %239 = arith.addf %236, %238 : vector<64x16xf32>
    %240 = arith.mulf %239, %148 : vector<64x16xf32>
    %c496 = arith.constant 496 : index
    %c0_78 = arith.constant 0 : index
    %241 = vector.load %arg2[%c496, %c0_78] : memref<1616x512xf32, #tpu.memory_space<vmem>>, vector<64x129xf32>
    %242 = tpu.concatenate %187, %167 in 0 : vector<128x8xf32>, vector<1x8xf32> -> vector<129x8xf32>
    %cst_79 = arith.constant dense<0.000000e+00> : vector<64x8xf32>
    %243 = tpu.matmul %241, %242, %cst_79 {dimension_numbers = #tpu.dot_dimension_numbers<[1], [0], [0], [1], [0, 0, 1, 1], [], []>} : vector<64x129xf32>, vector<129x8xf32>, vector<64x8xf32> -> vector<64x8xf32>
    %c560 = arith.constant 560 : index
    %c0_80 = arith.constant 0 : index
    %244 = vector.load %arg2[%c560, %c0_80] : memref<1616x512xf32, #tpu.memory_space<vmem>>, vector<64x257xf32>
    %245 = vector.extract_strided_slice %187 {offsets = [0, 1], sizes = [128, 7], strides = [1, 1]} : vector<128x8xf32> to vector<128x7xf32>
    %246 = vector.extract_strided_slice %187 {offsets = [0, 0], sizes = [128, 1], strides = [1, 1]} : vector<128x8xf32> to vector<128x1xf32>
    %247 = tpu.concatenate %245, %246 in 1 : vector<128x7xf32>, vector<128x1xf32> -> vector<128x8xf32>
    %248 = vector.broadcast %164 : vector<1x8xf32> to vector<128x8xf32>
    %249 = arith.mulf %247, %248 : vector<128x8xf32>
    %250 = tpu.concatenate %187, %249, %167 in 0 : vector<128x8xf32>, vector<128x8xf32>, vector<1x8xf32> -> vector<257x8xf32>
    %cst_81 = arith.constant dense<0.000000e+00> : vector<64x8xf32>
    %251 = tpu.matmul %244, %250, %cst_81 {dimension_numbers = #tpu.dot_dimension_numbers<[1], [0], [0], [1], [0, 0, 1, 1], [], []>} : vector<64x257xf32>, vector<257x8xf32>, vector<64x8xf32> -> vector<64x8xf32>
    %cst_82 = arith.constant dense<0.000000e+00> : vector<64x16xf32>
    %252 = tpu.matmul %243, %235, %cst_82 {dimension_numbers = #tpu.dot_dimension_numbers<[1], [0], [0], [1], [0, 0, 1, 1], [], []>} : vector<64x8xf32>, vector<8x16xf32>, vector<64x16xf32> -> vector<64x16xf32>
    %cst_83 = arith.constant dense<0.000000e+00> : vector<64x16xf32>
    %253 = tpu.matmul %251, %237, %cst_83 {dimension_numbers = #tpu.dot_dimension_numbers<[1], [0], [0], [1], [0, 0, 1, 1], [], []>} : vector<64x8xf32>, vector<8x16xf32>, vector<64x16xf32> -> vector<64x16xf32>
    %254 = arith.addf %252, %253 : vector<64x16xf32>
    %255 = tpu.concatenate %254, %240 in 0 : vector<64x16xf32>, vector<64x16xf32> -> vector<128x16xf32>
    %256 = vector.extract_strided_slice %255 {offsets = [0, 15], sizes = [128, 1], strides = [1, 1]} : vector<128x16xf32> to vector<128x1xf32>
    %257 = vector.extract_strided_slice %255 {offsets = [0, 0], sizes = [128, 15], strides = [1, 1]} : vector<128x16xf32> to vector<128x15xf32>
    %258 = tpu.concatenate %256, %257 in 1 : vector<128x1xf32>, vector<128x15xf32> -> vector<128x16xf32>
    %259 = vector.broadcast %119 : vector<1x16xf32> to vector<128x16xf32>
    %260 = arith.mulf %258, %259 : vector<128x16xf32>
    %261 = vector.extract_strided_slice %255 {offsets = [0, 1], sizes = [128, 15], strides = [1, 1]} : vector<128x16xf32> to vector<128x15xf32>
    %262 = vector.extract_strided_slice %255 {offsets = [0, 0], sizes = [128, 1], strides = [1, 1]} : vector<128x16xf32> to vector<128x1xf32>
    %263 = tpu.concatenate %261, %262 in 1 : vector<128x15xf32>, vector<128x1xf32> -> vector<128x16xf32>
    %264 = vector.broadcast %125 : vector<1x16xf32> to vector<128x16xf32>
    %265 = arith.mulf %263, %264 : vector<128x16xf32>
    %266 = tpu.concatenate %260, %255, %265, %128 in 0 : vector<128x16xf32>, vector<128x16xf32>, vector<128x16xf32>, vector<1x16xf32> -> vector<385x16xf32>
    %c624 = arith.constant 624 : index
    %c0_84 = arith.constant 0 : index
    %267 = vector.load %arg2[%c624, %c0_84] : memref<1616x512xf32, #tpu.memory_space<vmem>>, vector<64x385xf32>
    %cst_85 = arith.constant dense<0.000000e+00> : vector<64x16xf32>
    %268 = tpu.matmul %267, %266, %cst_85 {dimension_numbers = #tpu.dot_dimension_numbers<[1], [0], [0], [1], [0, 0, 1, 1], [], []>} : vector<64x385xf32>, vector<385x16xf32>, vector<64x16xf32> -> vector<64x16xf32>
    %cst_86 = arith.constant 0.000000e+00 : f32
    %269 = vector.broadcast %cst_86 : f32 to vector<64x16xf32>
    %270 = arith.maximumf %268, %269 : vector<64x16xf32>
    %271 = vector.extract_strided_slice %270 {offsets = [0, 15], sizes = [64, 1], strides = [1, 1]} : vector<64x16xf32> to vector<64x1xf32>
    %272 = vector.extract_strided_slice %270 {offsets = [0, 0], sizes = [64, 15], strides = [1, 1]} : vector<64x16xf32> to vector<64x15xf32>
    %273 = tpu.concatenate %271, %272 in 1 : vector<64x1xf32>, vector<64x15xf32> -> vector<64x16xf32>
    %274 = vector.broadcast %119 : vector<1x16xf32> to vector<64x16xf32>
    %275 = arith.mulf %273, %274 : vector<64x16xf32>
    %276 = vector.extract_strided_slice %270 {offsets = [0, 1], sizes = [64, 15], strides = [1, 1]} : vector<64x16xf32> to vector<64x15xf32>
    %277 = vector.extract_strided_slice %270 {offsets = [0, 0], sizes = [64, 1], strides = [1, 1]} : vector<64x16xf32> to vector<64x1xf32>
    %278 = tpu.concatenate %276, %277 in 1 : vector<64x15xf32>, vector<64x1xf32> -> vector<64x16xf32>
    %279 = vector.broadcast %125 : vector<1x16xf32> to vector<64x16xf32>
    %280 = arith.mulf %278, %279 : vector<64x16xf32>
    %281 = tpu.concatenate %275, %270, %280, %128 in 0 : vector<64x16xf32>, vector<64x16xf32>, vector<64x16xf32>, vector<1x16xf32> -> vector<193x16xf32>
    %c688 = arith.constant 688 : index
    %c0_87 = arith.constant 0 : index
    %282 = vector.load %arg2[%c688, %c0_87] : memref<1616x512xf32, #tpu.memory_space<vmem>>, vector<64x193xf32>
    %cst_88 = arith.constant dense<0.000000e+00> : vector<64x16xf32>
    %283 = tpu.matmul %282, %281, %cst_88 {dimension_numbers = #tpu.dot_dimension_numbers<[1], [0], [0], [1], [0, 0, 1, 1], [], []>} : vector<64x193xf32>, vector<193x16xf32>, vector<64x16xf32> -> vector<64x16xf32>
    %cst_89 = arith.constant 0.000000e+00 : f32
    %284 = vector.broadcast %cst_89 : f32 to vector<64x16xf32>
    %285 = arith.maximumf %283, %284 : vector<64x16xf32>
    %286 = vector.extract_strided_slice %109 {offsets = [0, 31], sizes = [32, 1], strides = [1, 1]} : vector<32x32xf32> to vector<32x1xf32>
    %287 = vector.extract_strided_slice %109 {offsets = [0, 0], sizes = [32, 31], strides = [1, 1]} : vector<32x32xf32> to vector<32x31xf32>
    %288 = tpu.concatenate %286, %287 in 1 : vector<32x1xf32>, vector<32x31xf32> -> vector<32x32xf32>
    %289 = vector.broadcast %80 : vector<1x32xf32> to vector<32x32xf32>
    %290 = arith.mulf %288, %289 : vector<32x32xf32>
    %291 = vector.extract_strided_slice %109 {offsets = [0, 1], sizes = [32, 31], strides = [1, 1]} : vector<32x32xf32> to vector<32x31xf32>
    %292 = vector.extract_strided_slice %109 {offsets = [0, 0], sizes = [32, 1], strides = [1, 1]} : vector<32x32xf32> to vector<32x1xf32>
    %293 = tpu.concatenate %291, %292 in 1 : vector<32x31xf32>, vector<32x1xf32> -> vector<32x32xf32>
    %294 = vector.broadcast %86 : vector<1x32xf32> to vector<32x32xf32>
    %295 = arith.mulf %293, %294 : vector<32x32xf32>
    %296 = tpu.concatenate %290, %109, %295, %89 in 0 : vector<32x32xf32>, vector<32x32xf32>, vector<32x32xf32>, vector<1x32xf32> -> vector<97x32xf32>
    %c1304 = arith.constant 1304 : index
    %c0_90 = arith.constant 0 : index
    %297 = vector.load %arg2[%c1304, %c0_90] : memref<1616x512xf32, #tpu.memory_space<vmem>>, vector<64x97xf32>
    %cst_91 = arith.constant dense<0.000000e+00> : vector<64x32xf32>
    %298 = tpu.matmul %297, %296, %cst_91 {dimension_numbers = #tpu.dot_dimension_numbers<[1], [0], [0], [1], [0, 0, 1, 1], [], []>} : vector<64x97xf32>, vector<97x32xf32>, vector<64x32xf32> -> vector<64x32xf32>
    %cst_92 = arith.constant dense<0.000000e+00> : vector<64x16xf32>
    %299 = tpu.matmul %298, %114, %cst_92 {dimension_numbers = #tpu.dot_dimension_numbers<[1], [0], [0], [1], [0, 0, 1, 1], [], []>} : vector<64x32xf32>, vector<32x16xf32>, vector<64x16xf32> -> vector<64x16xf32>
    %300 = arith.addf %299, %285 : vector<64x16xf32>
    %cst_93 = arith.constant 0.000000e+00 : f32
    %301 = vector.broadcast %cst_93 : f32 to vector<64x16xf32>
    %302 = arith.maximumf %300, %301 : vector<64x16xf32>
    %c1368 = arith.constant 1368 : index
    %c0_94 = arith.constant 0 : index
    %303 = vector.load %arg2[%c1368, %c0_94] : memref<1616x512xf32, #tpu.memory_space<vmem>>, vector<1x65xf32>
    %304 = tpu.concatenate %302, %128 in 0 : vector<64x16xf32>, vector<1x16xf32> -> vector<65x16xf32>
    %cst_95 = arith.constant dense<0.000000e+00> : vector<1x16xf32>
    %305 = tpu.matmul %303, %304, %cst_95 {dimension_numbers = #tpu.dot_dimension_numbers<[1], [0], [0], [1], [0, 0, 1, 1], [], []>} : vector<1x65xf32>, vector<65x16xf32>, vector<1x16xf32> -> vector<1x16xf32>
    %306 = arith.negf %305 : vector<1x16xf32>
    %307 = math.exp %306 : vector<1x16xf32>
    %cst_96 = arith.constant 1.000000e+00 : f32
    %308 = vector.broadcast %cst_96 : f32 to vector<1x16xf32>
    %309 = arith.addf %308, %307 : vector<1x16xf32>
    %310 = arith.divf %308, %309 : vector<1x16xf32>
    %311 = vector.extract_strided_slice %310 {offsets = [0, 15], sizes = [1, 1], strides = [1, 1]} : vector<1x16xf32> to vector<1x1xf32>
    %312 = vector.extract_strided_slice %310 {offsets = [0, 0], sizes = [1, 15], strides = [1, 1]} : vector<1x16xf32> to vector<1x15xf32>
    %313 = tpu.concatenate %311, %312 in 1 : vector<1x1xf32>, vector<1x15xf32> -> vector<1x16xf32>
    %314 = arith.mulf %313, %119 : vector<1x16xf32>
    %315 = vector.extract_strided_slice %310 {offsets = [0, 1], sizes = [1, 15], strides = [1, 1]} : vector<1x16xf32> to vector<1x15xf32>
    %316 = vector.extract_strided_slice %310 {offsets = [0, 0], sizes = [1, 1], strides = [1, 1]} : vector<1x16xf32> to vector<1x1xf32>
    %317 = tpu.concatenate %315, %316 in 1 : vector<1x15xf32>, vector<1x1xf32> -> vector<1x16xf32>
    %318 = arith.mulf %317, %125 : vector<1x16xf32>
    %319 = tpu.concatenate %314, %310, %318, %128 in 0 : vector<1x16xf32>, vector<1x16xf32>, vector<1x16xf32>, vector<1x16xf32> -> vector<4x16xf32>
    %c1376 = arith.constant 1376 : index
    %c0_97 = arith.constant 0 : index
    %320 = vector.load %arg2[%c1376, %c0_97] : memref<1616x512xf32, #tpu.memory_space<vmem>>, vector<32x4xf32>
    %cst_98 = arith.constant dense<0.000000e+00> : vector<32x16xf32>
    %321 = tpu.matmul %320, %319, %cst_98 {dimension_numbers = #tpu.dot_dimension_numbers<[1], [0], [0], [1], [0, 0, 1, 1], [], []>} : vector<32x4xf32>, vector<4x16xf32>, vector<32x16xf32> -> vector<32x16xf32>
    %c1408 = arith.constant 1408 : index
    %c0_99 = arith.constant 0 : index
    %322 = vector.load %arg2[%c1408, %c0_99] : memref<1616x512xf32, #tpu.memory_space<vmem>>, vector<32x33xf32>
    %323 = tpu.concatenate %321, %128 in 0 : vector<32x16xf32>, vector<1x16xf32> -> vector<33x16xf32>
    %cst_100 = arith.constant dense<0.000000e+00> : vector<32x16xf32>
    %324 = tpu.matmul %322, %323, %cst_100 {dimension_numbers = #tpu.dot_dimension_numbers<[1], [0], [0], [1], [0, 0, 1, 1], [], []>} : vector<32x33xf32>, vector<33x16xf32>, vector<32x16xf32> -> vector<32x16xf32>
    %c1440 = arith.constant 1440 : index
    %c0_101 = arith.constant 0 : index
    %325 = vector.load %arg2[%c1440, %c0_101] : memref<1616x512xf32, #tpu.memory_space<vmem>>, vector<32x65xf32>
    %326 = vector.extract_strided_slice %321 {offsets = [0, 1], sizes = [32, 15], strides = [1, 1]} : vector<32x16xf32> to vector<32x15xf32>
    %327 = vector.extract_strided_slice %321 {offsets = [0, 0], sizes = [32, 1], strides = [1, 1]} : vector<32x16xf32> to vector<32x1xf32>
    %328 = tpu.concatenate %326, %327 in 1 : vector<32x15xf32>, vector<32x1xf32> -> vector<32x16xf32>
    %329 = vector.broadcast %125 : vector<1x16xf32> to vector<32x16xf32>
    %330 = arith.mulf %328, %329 : vector<32x16xf32>
    %331 = tpu.concatenate %321, %330, %128 in 0 : vector<32x16xf32>, vector<32x16xf32>, vector<1x16xf32> -> vector<65x16xf32>
    %cst_102 = arith.constant dense<0.000000e+00> : vector<32x16xf32>
    %332 = tpu.matmul %325, %331, %cst_102 {dimension_numbers = #tpu.dot_dimension_numbers<[1], [0], [0], [1], [0, 0, 1, 1], [], []>} : vector<32x65xf32>, vector<65x16xf32>, vector<32x16xf32> -> vector<32x16xf32>
    %c552 = arith.constant 552 : index
    %c0_103 = arith.constant 0 : index
    %333 = vector.load %arg3[%c552, %c0_103] : memref<600x128xf32, #tpu.memory_space<vmem>>, vector<16x32xf32>
    %cst_104 = arith.constant dense<0.000000e+00> : vector<32x32xf32>
    %334 = tpu.matmul %324, %333, %cst_104 {dimension_numbers = #tpu.dot_dimension_numbers<[1], [0], [0], [1], [0, 0, 1, 1], [], []>} : vector<32x16xf32>, vector<16x32xf32>, vector<32x32xf32> -> vector<32x32xf32>
    %c568 = arith.constant 568 : index
    %c0_105 = arith.constant 0 : index
    %335 = vector.load %arg3[%c568, %c0_105] : memref<600x128xf32, #tpu.memory_space<vmem>>, vector<16x32xf32>
    %cst_106 = arith.constant dense<0.000000e+00> : vector<32x32xf32>
    %336 = tpu.matmul %332, %335, %cst_106 {dimension_numbers = #tpu.dot_dimension_numbers<[1], [0], [0], [1], [0, 0, 1, 1], [], []>} : vector<32x16xf32>, vector<16x32xf32>, vector<32x32xf32> -> vector<32x32xf32>
    %337 = arith.addf %334, %336 : vector<32x32xf32>
    %338 = arith.mulf %337, %109 : vector<32x32xf32>
    %c752 = arith.constant 752 : index
    %c0_107 = arith.constant 0 : index
    %339 = vector.load %arg2[%c752, %c0_107] : memref<1616x512xf32, #tpu.memory_space<vmem>>, vector<32x65xf32>
    %340 = tpu.concatenate %285, %128 in 0 : vector<64x16xf32>, vector<1x16xf32> -> vector<65x16xf32>
    %cst_108 = arith.constant dense<0.000000e+00> : vector<32x16xf32>
    %341 = tpu.matmul %339, %340, %cst_108 {dimension_numbers = #tpu.dot_dimension_numbers<[1], [0], [0], [1], [0, 0, 1, 1], [], []>} : vector<32x65xf32>, vector<65x16xf32>, vector<32x16xf32> -> vector<32x16xf32>
    %c784 = arith.constant 784 : index
    %c0_109 = arith.constant 0 : index
    %342 = vector.load %arg2[%c784, %c0_109] : memref<1616x512xf32, #tpu.memory_space<vmem>>, vector<32x129xf32>
    %343 = vector.extract_strided_slice %285 {offsets = [0, 1], sizes = [64, 15], strides = [1, 1]} : vector<64x16xf32> to vector<64x15xf32>
    %344 = vector.extract_strided_slice %285 {offsets = [0, 0], sizes = [64, 1], strides = [1, 1]} : vector<64x16xf32> to vector<64x1xf32>
    %345 = tpu.concatenate %343, %344 in 1 : vector<64x15xf32>, vector<64x1xf32> -> vector<64x16xf32>
    %346 = vector.broadcast %125 : vector<1x16xf32> to vector<64x16xf32>
    %347 = arith.mulf %345, %346 : vector<64x16xf32>
    %348 = tpu.concatenate %285, %347, %128 in 0 : vector<64x16xf32>, vector<64x16xf32>, vector<1x16xf32> -> vector<129x16xf32>
    %cst_110 = arith.constant dense<0.000000e+00> : vector<32x16xf32>
    %349 = tpu.matmul %342, %348, %cst_110 {dimension_numbers = #tpu.dot_dimension_numbers<[1], [0], [0], [1], [0, 0, 1, 1], [], []>} : vector<32x129xf32>, vector<129x16xf32>, vector<32x16xf32> -> vector<32x16xf32>
    %cst_111 = arith.constant dense<0.000000e+00> : vector<32x32xf32>
    %350 = tpu.matmul %341, %333, %cst_111 {dimension_numbers = #tpu.dot_dimension_numbers<[1], [0], [0], [1], [0, 0, 1, 1], [], []>} : vector<32x16xf32>, vector<16x32xf32>, vector<32x32xf32> -> vector<32x32xf32>
    %cst_112 = arith.constant dense<0.000000e+00> : vector<32x32xf32>
    %351 = tpu.matmul %349, %335, %cst_112 {dimension_numbers = #tpu.dot_dimension_numbers<[1], [0], [0], [1], [0, 0, 1, 1], [], []>} : vector<32x16xf32>, vector<16x32xf32>, vector<32x32xf32> -> vector<32x32xf32>
    %352 = arith.addf %350, %351 : vector<32x32xf32>
    %353 = tpu.concatenate %352, %338 in 0 : vector<32x32xf32>, vector<32x32xf32> -> vector<64x32xf32>
    %354 = vector.extract_strided_slice %353 {offsets = [0, 31], sizes = [64, 1], strides = [1, 1]} : vector<64x32xf32> to vector<64x1xf32>
    %355 = vector.extract_strided_slice %353 {offsets = [0, 0], sizes = [64, 31], strides = [1, 1]} : vector<64x32xf32> to vector<64x31xf32>
    %356 = tpu.concatenate %354, %355 in 1 : vector<64x1xf32>, vector<64x31xf32> -> vector<64x32xf32>
    %357 = vector.broadcast %80 : vector<1x32xf32> to vector<64x32xf32>
    %358 = arith.mulf %356, %357 : vector<64x32xf32>
    %359 = vector.extract_strided_slice %353 {offsets = [0, 1], sizes = [64, 31], strides = [1, 1]} : vector<64x32xf32> to vector<64x31xf32>
    %360 = vector.extract_strided_slice %353 {offsets = [0, 0], sizes = [64, 1], strides = [1, 1]} : vector<64x32xf32> to vector<64x1xf32>
    %361 = tpu.concatenate %359, %360 in 1 : vector<64x31xf32>, vector<64x1xf32> -> vector<64x32xf32>
    %362 = vector.broadcast %86 : vector<1x32xf32> to vector<64x32xf32>
    %363 = arith.mulf %361, %362 : vector<64x32xf32>
    %364 = tpu.concatenate %358, %353, %363, %89 in 0 : vector<64x32xf32>, vector<64x32xf32>, vector<64x32xf32>, vector<1x32xf32> -> vector<193x32xf32>
    %c816 = arith.constant 816 : index
    %c0_113 = arith.constant 0 : index
    %365 = vector.load %arg2[%c816, %c0_113] : memref<1616x512xf32, #tpu.memory_space<vmem>>, vector<32x193xf32>
    %cst_114 = arith.constant dense<0.000000e+00> : vector<32x32xf32>
    %366 = tpu.matmul %365, %364, %cst_114 {dimension_numbers = #tpu.dot_dimension_numbers<[1], [0], [0], [1], [0, 0, 1, 1], [], []>} : vector<32x193xf32>, vector<193x32xf32>, vector<32x32xf32> -> vector<32x32xf32>
    %cst_115 = arith.constant 0.000000e+00 : f32
    %367 = vector.broadcast %cst_115 : f32 to vector<32x32xf32>
    %368 = arith.maximumf %366, %367 : vector<32x32xf32>
    %369 = vector.extract_strided_slice %368 {offsets = [0, 31], sizes = [32, 1], strides = [1, 1]} : vector<32x32xf32> to vector<32x1xf32>
    %370 = vector.extract_strided_slice %368 {offsets = [0, 0], sizes = [32, 31], strides = [1, 1]} : vector<32x32xf32> to vector<32x31xf32>
    %371 = tpu.concatenate %369, %370 in 1 : vector<32x1xf32>, vector<32x31xf32> -> vector<32x32xf32>
    %372 = vector.broadcast %80 : vector<1x32xf32> to vector<32x32xf32>
    %373 = arith.mulf %371, %372 : vector<32x32xf32>
    %374 = vector.extract_strided_slice %368 {offsets = [0, 1], sizes = [32, 31], strides = [1, 1]} : vector<32x32xf32> to vector<32x31xf32>
    %375 = vector.extract_strided_slice %368 {offsets = [0, 0], sizes = [32, 1], strides = [1, 1]} : vector<32x32xf32> to vector<32x1xf32>
    %376 = tpu.concatenate %374, %375 in 1 : vector<32x31xf32>, vector<32x1xf32> -> vector<32x32xf32>
    %377 = vector.broadcast %86 : vector<1x32xf32> to vector<32x32xf32>
    %378 = arith.mulf %376, %377 : vector<32x32xf32>
    %379 = tpu.concatenate %373, %368, %378, %89 in 0 : vector<32x32xf32>, vector<32x32xf32>, vector<32x32xf32>, vector<1x32xf32> -> vector<97x32xf32>
    %c848 = arith.constant 848 : index
    %c0_116 = arith.constant 0 : index
    %380 = vector.load %arg2[%c848, %c0_116] : memref<1616x512xf32, #tpu.memory_space<vmem>>, vector<32x97xf32>
    %cst_117 = arith.constant dense<0.000000e+00> : vector<32x32xf32>
    %381 = tpu.matmul %380, %379, %cst_117 {dimension_numbers = #tpu.dot_dimension_numbers<[1], [0], [0], [1], [0, 0, 1, 1], [], []>} : vector<32x97xf32>, vector<97x32xf32>, vector<32x32xf32> -> vector<32x32xf32>
    %cst_118 = arith.constant 0.000000e+00 : f32
    %382 = vector.broadcast %cst_118 : f32 to vector<32x32xf32>
    %383 = arith.maximumf %381, %382 : vector<32x32xf32>
    %384 = vector.extract_strided_slice %70 {offsets = [0, 63], sizes = [16, 1], strides = [1, 1]} : vector<16x64xf32> to vector<16x1xf32>
    %385 = vector.extract_strided_slice %70 {offsets = [0, 0], sizes = [16, 63], strides = [1, 1]} : vector<16x64xf32> to vector<16x63xf32>
    %386 = tpu.concatenate %384, %385 in 1 : vector<16x1xf32>, vector<16x63xf32> -> vector<16x64xf32>
    %387 = vector.broadcast %41 : vector<1x64xf32> to vector<16x64xf32>
    %388 = arith.mulf %386, %387 : vector<16x64xf32>
    %389 = vector.extract_strided_slice %70 {offsets = [0, 1], sizes = [16, 63], strides = [1, 1]} : vector<16x64xf32> to vector<16x63xf32>
    %390 = vector.extract_strided_slice %70 {offsets = [0, 0], sizes = [16, 1], strides = [1, 1]} : vector<16x64xf32> to vector<16x1xf32>
    %391 = tpu.concatenate %389, %390 in 1 : vector<16x63xf32>, vector<16x1xf32> -> vector<16x64xf32>
    %392 = vector.broadcast %47 : vector<1x64xf32> to vector<16x64xf32>
    %393 = arith.mulf %391, %392 : vector<16x64xf32>
    %394 = tpu.concatenate %388, %70, %393, %50 in 0 : vector<16x64xf32>, vector<16x64xf32>, vector<16x64xf32>, vector<1x64xf32> -> vector<49x64xf32>
    %c1472 = arith.constant 1472 : index
    %c0_119 = arith.constant 0 : index
    %395 = vector.load %arg2[%c1472, %c0_119] : memref<1616x512xf32, #tpu.memory_space<vmem>>, vector<32x49xf32>
    %cst_120 = arith.constant dense<0.000000e+00> : vector<32x64xf32>
    %396 = tpu.matmul %395, %394, %cst_120 {dimension_numbers = #tpu.dot_dimension_numbers<[1], [0], [0], [1], [0, 0, 1, 1], [], []>} : vector<32x49xf32>, vector<49x64xf32>, vector<32x64xf32> -> vector<32x64xf32>
    %cst_121 = arith.constant dense<0.000000e+00> : vector<32x32xf32>
    %397 = tpu.matmul %396, %75, %cst_121 {dimension_numbers = #tpu.dot_dimension_numbers<[1], [0], [0], [1], [0, 0, 1, 1], [], []>} : vector<32x64xf32>, vector<64x32xf32>, vector<32x32xf32> -> vector<32x32xf32>
    %398 = arith.addf %397, %383 : vector<32x32xf32>
    %cst_122 = arith.constant 0.000000e+00 : f32
    %399 = vector.broadcast %cst_122 : f32 to vector<32x32xf32>
    %400 = arith.maximumf %398, %399 : vector<32x32xf32>
    %c1504 = arith.constant 1504 : index
    %c0_123 = arith.constant 0 : index
    %401 = vector.load %arg2[%c1504, %c0_123] : memref<1616x512xf32, #tpu.memory_space<vmem>>, vector<1x33xf32>
    %402 = tpu.concatenate %400, %89 in 0 : vector<32x32xf32>, vector<1x32xf32> -> vector<33x32xf32>
    %cst_124 = arith.constant dense<0.000000e+00> : vector<1x32xf32>
    %403 = tpu.matmul %401, %402, %cst_124 {dimension_numbers = #tpu.dot_dimension_numbers<[1], [0], [0], [1], [0, 0, 1, 1], [], []>} : vector<1x33xf32>, vector<33x32xf32>, vector<1x32xf32> -> vector<1x32xf32>
    %404 = arith.negf %403 : vector<1x32xf32>
    %405 = math.exp %404 : vector<1x32xf32>
    %cst_125 = arith.constant 1.000000e+00 : f32
    %406 = vector.broadcast %cst_125 : f32 to vector<1x32xf32>
    %407 = arith.addf %406, %405 : vector<1x32xf32>
    %408 = arith.divf %406, %407 : vector<1x32xf32>
    %409 = vector.extract_strided_slice %408 {offsets = [0, 31], sizes = [1, 1], strides = [1, 1]} : vector<1x32xf32> to vector<1x1xf32>
    %410 = vector.extract_strided_slice %408 {offsets = [0, 0], sizes = [1, 31], strides = [1, 1]} : vector<1x32xf32> to vector<1x31xf32>
    %411 = tpu.concatenate %409, %410 in 1 : vector<1x1xf32>, vector<1x31xf32> -> vector<1x32xf32>
    %412 = arith.mulf %411, %80 : vector<1x32xf32>
    %413 = vector.extract_strided_slice %408 {offsets = [0, 1], sizes = [1, 31], strides = [1, 1]} : vector<1x32xf32> to vector<1x31xf32>
    %414 = vector.extract_strided_slice %408 {offsets = [0, 0], sizes = [1, 1], strides = [1, 1]} : vector<1x32xf32> to vector<1x1xf32>
    %415 = tpu.concatenate %413, %414 in 1 : vector<1x31xf32>, vector<1x1xf32> -> vector<1x32xf32>
    %416 = arith.mulf %415, %86 : vector<1x32xf32>
    %417 = tpu.concatenate %412, %408, %416, %89 in 0 : vector<1x32xf32>, vector<1x32xf32>, vector<1x32xf32>, vector<1x32xf32> -> vector<4x32xf32>
    %c1512 = arith.constant 1512 : index
    %c0_126 = arith.constant 0 : index
    %418 = vector.load %arg2[%c1512, %c0_126] : memref<1616x512xf32, #tpu.memory_space<vmem>>, vector<16x4xf32>
    %cst_127 = arith.constant dense<0.000000e+00> : vector<16x32xf32>
    %419 = tpu.matmul %418, %417, %cst_127 {dimension_numbers = #tpu.dot_dimension_numbers<[1], [0], [0], [1], [0, 0, 1, 1], [], []>} : vector<16x4xf32>, vector<4x32xf32>, vector<16x32xf32> -> vector<16x32xf32>
    %c1528 = arith.constant 1528 : index
    %c0_128 = arith.constant 0 : index
    %420 = vector.load %arg2[%c1528, %c0_128] : memref<1616x512xf32, #tpu.memory_space<vmem>>, vector<16x17xf32>
    %421 = tpu.concatenate %419, %89 in 0 : vector<16x32xf32>, vector<1x32xf32> -> vector<17x32xf32>
    %cst_129 = arith.constant dense<0.000000e+00> : vector<16x32xf32>
    %422 = tpu.matmul %420, %421, %cst_129 {dimension_numbers = #tpu.dot_dimension_numbers<[1], [0], [0], [1], [0, 0, 1, 1], [], []>} : vector<16x17xf32>, vector<17x32xf32>, vector<16x32xf32> -> vector<16x32xf32>
    %c1544 = arith.constant 1544 : index
    %c0_130 = arith.constant 0 : index
    %423 = vector.load %arg2[%c1544, %c0_130] : memref<1616x512xf32, #tpu.memory_space<vmem>>, vector<16x33xf32>
    %424 = vector.extract_strided_slice %419 {offsets = [0, 1], sizes = [16, 31], strides = [1, 1]} : vector<16x32xf32> to vector<16x31xf32>
    %425 = vector.extract_strided_slice %419 {offsets = [0, 0], sizes = [16, 1], strides = [1, 1]} : vector<16x32xf32> to vector<16x1xf32>
    %426 = tpu.concatenate %424, %425 in 1 : vector<16x31xf32>, vector<16x1xf32> -> vector<16x32xf32>
    %427 = vector.broadcast %86 : vector<1x32xf32> to vector<16x32xf32>
    %428 = arith.mulf %426, %427 : vector<16x32xf32>
    %429 = tpu.concatenate %419, %428, %89 in 0 : vector<16x32xf32>, vector<16x32xf32>, vector<1x32xf32> -> vector<33x32xf32>
    %cst_131 = arith.constant dense<0.000000e+00> : vector<16x32xf32>
    %430 = tpu.matmul %423, %429, %cst_131 {dimension_numbers = #tpu.dot_dimension_numbers<[1], [0], [0], [1], [0, 0, 1, 1], [], []>} : vector<16x33xf32>, vector<33x32xf32>, vector<16x32xf32> -> vector<16x32xf32>
    %c488 = arith.constant 488 : index
    %c0_132 = arith.constant 0 : index
    %431 = vector.load %arg3[%c488, %c0_132] : memref<600x128xf32, #tpu.memory_space<vmem>>, vector<32x64xf32>
    %cst_133 = arith.constant dense<0.000000e+00> : vector<16x64xf32>
    %432 = tpu.matmul %422, %431, %cst_133 {dimension_numbers = #tpu.dot_dimension_numbers<[1], [0], [0], [1], [0, 0, 1, 1], [], []>} : vector<16x32xf32>, vector<32x64xf32>, vector<16x64xf32> -> vector<16x64xf32>
    %c520 = arith.constant 520 : index
    %c0_134 = arith.constant 0 : index
    %433 = vector.load %arg3[%c520, %c0_134] : memref<600x128xf32, #tpu.memory_space<vmem>>, vector<32x64xf32>
    %cst_135 = arith.constant dense<0.000000e+00> : vector<16x64xf32>
    %434 = tpu.matmul %430, %433, %cst_135 {dimension_numbers = #tpu.dot_dimension_numbers<[1], [0], [0], [1], [0, 0, 1, 1], [], []>} : vector<16x32xf32>, vector<32x64xf32>, vector<16x64xf32> -> vector<16x64xf32>
    %435 = arith.addf %432, %434 : vector<16x64xf32>
    %436 = arith.mulf %435, %70 : vector<16x64xf32>
    %c880 = arith.constant 880 : index
    %c0_136 = arith.constant 0 : index
    %437 = vector.load %arg2[%c880, %c0_136] : memref<1616x512xf32, #tpu.memory_space<vmem>>, vector<16x33xf32>
    %438 = tpu.concatenate %383, %89 in 0 : vector<32x32xf32>, vector<1x32xf32> -> vector<33x32xf32>
    %cst_137 = arith.constant dense<0.000000e+00> : vector<16x32xf32>
    %439 = tpu.matmul %437, %438, %cst_137 {dimension_numbers = #tpu.dot_dimension_numbers<[1], [0], [0], [1], [0, 0, 1, 1], [], []>} : vector<16x33xf32>, vector<33x32xf32>, vector<16x32xf32> -> vector<16x32xf32>
    %c896 = arith.constant 896 : index
    %c0_138 = arith.constant 0 : index
    %440 = vector.load %arg2[%c896, %c0_138] : memref<1616x512xf32, #tpu.memory_space<vmem>>, vector<16x65xf32>
    %441 = vector.extract_strided_slice %383 {offsets = [0, 1], sizes = [32, 31], strides = [1, 1]} : vector<32x32xf32> to vector<32x31xf32>
    %442 = vector.extract_strided_slice %383 {offsets = [0, 0], sizes = [32, 1], strides = [1, 1]} : vector<32x32xf32> to vector<32x1xf32>
    %443 = tpu.concatenate %441, %442 in 1 : vector<32x31xf32>, vector<32x1xf32> -> vector<32x32xf32>
    %444 = vector.broadcast %86 : vector<1x32xf32> to vector<32x32xf32>
    %445 = arith.mulf %443, %444 : vector<32x32xf32>
    %446 = tpu.concatenate %383, %445, %89 in 0 : vector<32x32xf32>, vector<32x32xf32>, vector<1x32xf32> -> vector<65x32xf32>
    %cst_139 = arith.constant dense<0.000000e+00> : vector<16x32xf32>
    %447 = tpu.matmul %440, %446, %cst_139 {dimension_numbers = #tpu.dot_dimension_numbers<[1], [0], [0], [1], [0, 0, 1, 1], [], []>} : vector<16x65xf32>, vector<65x32xf32>, vector<16x32xf32> -> vector<16x32xf32>
    %cst_140 = arith.constant dense<0.000000e+00> : vector<16x64xf32>
    %448 = tpu.matmul %439, %431, %cst_140 {dimension_numbers = #tpu.dot_dimension_numbers<[1], [0], [0], [1], [0, 0, 1, 1], [], []>} : vector<16x32xf32>, vector<32x64xf32>, vector<16x64xf32> -> vector<16x64xf32>
    %cst_141 = arith.constant dense<0.000000e+00> : vector<16x64xf32>
    %449 = tpu.matmul %447, %433, %cst_141 {dimension_numbers = #tpu.dot_dimension_numbers<[1], [0], [0], [1], [0, 0, 1, 1], [], []>} : vector<16x32xf32>, vector<32x64xf32>, vector<16x64xf32> -> vector<16x64xf32>
    %450 = arith.addf %448, %449 : vector<16x64xf32>
    %451 = tpu.concatenate %450, %436 in 0 : vector<16x64xf32>, vector<16x64xf32> -> vector<32x64xf32>
    %452 = vector.extract_strided_slice %451 {offsets = [0, 63], sizes = [32, 1], strides = [1, 1]} : vector<32x64xf32> to vector<32x1xf32>
    %453 = vector.extract_strided_slice %451 {offsets = [0, 0], sizes = [32, 63], strides = [1, 1]} : vector<32x64xf32> to vector<32x63xf32>
    %454 = tpu.concatenate %452, %453 in 1 : vector<32x1xf32>, vector<32x63xf32> -> vector<32x64xf32>
    %455 = vector.broadcast %41 : vector<1x64xf32> to vector<32x64xf32>
    %456 = arith.mulf %454, %455 : vector<32x64xf32>
    %457 = vector.extract_strided_slice %451 {offsets = [0, 1], sizes = [32, 63], strides = [1, 1]} : vector<32x64xf32> to vector<32x63xf32>
    %458 = vector.extract_strided_slice %451 {offsets = [0, 0], sizes = [32, 1], strides = [1, 1]} : vector<32x64xf32> to vector<32x1xf32>
    %459 = tpu.concatenate %457, %458 in 1 : vector<32x63xf32>, vector<32x1xf32> -> vector<32x64xf32>
    %460 = vector.broadcast %47 : vector<1x64xf32> to vector<32x64xf32>
    %461 = arith.mulf %459, %460 : vector<32x64xf32>
    %462 = tpu.concatenate %456, %451, %461, %50 in 0 : vector<32x64xf32>, vector<32x64xf32>, vector<32x64xf32>, vector<1x64xf32> -> vector<97x64xf32>
    %c912 = arith.constant 912 : index
    %c0_142 = arith.constant 0 : index
    %463 = vector.load %arg2[%c912, %c0_142] : memref<1616x512xf32, #tpu.memory_space<vmem>>, vector<16x97xf32>
    %cst_143 = arith.constant dense<0.000000e+00> : vector<16x64xf32>
    %464 = tpu.matmul %463, %462, %cst_143 {dimension_numbers = #tpu.dot_dimension_numbers<[1], [0], [0], [1], [0, 0, 1, 1], [], []>} : vector<16x97xf32>, vector<97x64xf32>, vector<16x64xf32> -> vector<16x64xf32>
    %cst_144 = arith.constant 0.000000e+00 : f32
    %465 = vector.broadcast %cst_144 : f32 to vector<16x64xf32>
    %466 = arith.maximumf %464, %465 : vector<16x64xf32>
    %467 = vector.extract_strided_slice %466 {offsets = [0, 63], sizes = [16, 1], strides = [1, 1]} : vector<16x64xf32> to vector<16x1xf32>
    %468 = vector.extract_strided_slice %466 {offsets = [0, 0], sizes = [16, 63], strides = [1, 1]} : vector<16x64xf32> to vector<16x63xf32>
    %469 = tpu.concatenate %467, %468 in 1 : vector<16x1xf32>, vector<16x63xf32> -> vector<16x64xf32>
    %470 = vector.broadcast %41 : vector<1x64xf32> to vector<16x64xf32>
    %471 = arith.mulf %469, %470 : vector<16x64xf32>
    %472 = vector.extract_strided_slice %466 {offsets = [0, 1], sizes = [16, 63], strides = [1, 1]} : vector<16x64xf32> to vector<16x63xf32>
    %473 = vector.extract_strided_slice %466 {offsets = [0, 0], sizes = [16, 1], strides = [1, 1]} : vector<16x64xf32> to vector<16x1xf32>
    %474 = tpu.concatenate %472, %473 in 1 : vector<16x63xf32>, vector<16x1xf32> -> vector<16x64xf32>
    %475 = vector.broadcast %47 : vector<1x64xf32> to vector<16x64xf32>
    %476 = arith.mulf %474, %475 : vector<16x64xf32>
    %477 = tpu.concatenate %471, %466, %476, %50 in 0 : vector<16x64xf32>, vector<16x64xf32>, vector<16x64xf32>, vector<1x64xf32> -> vector<49x64xf32>
    %c928 = arith.constant 928 : index
    %c0_145 = arith.constant 0 : index
    %478 = vector.load %arg2[%c928, %c0_145] : memref<1616x512xf32, #tpu.memory_space<vmem>>, vector<16x49xf32>
    %cst_146 = arith.constant dense<0.000000e+00> : vector<16x64xf32>
    %479 = tpu.matmul %478, %477, %cst_146 {dimension_numbers = #tpu.dot_dimension_numbers<[1], [0], [0], [1], [0, 0, 1, 1], [], []>} : vector<16x49xf32>, vector<49x64xf32>, vector<16x64xf32> -> vector<16x64xf32>
    %cst_147 = arith.constant 0.000000e+00 : f32
    %480 = vector.broadcast %cst_147 : f32 to vector<16x64xf32>
    %481 = arith.maximumf %479, %480 : vector<16x64xf32>
    %482 = vector.extract_strided_slice %31 {offsets = [0, 127], sizes = [8, 1], strides = [1, 1]} : vector<8x128xf32> to vector<8x1xf32>
    %483 = vector.extract_strided_slice %31 {offsets = [0, 0], sizes = [8, 127], strides = [1, 1]} : vector<8x128xf32> to vector<8x127xf32>
    %484 = tpu.concatenate %482, %483 in 1 : vector<8x1xf32>, vector<8x127xf32> -> vector<8x128xf32>
    %485 = vector.broadcast %4 : vector<1x128xf32> to vector<8x128xf32>
    %486 = arith.mulf %484, %485 : vector<8x128xf32>
    %487 = vector.extract_strided_slice %31 {offsets = [0, 1], sizes = [8, 127], strides = [1, 1]} : vector<8x128xf32> to vector<8x127xf32>
    %488 = vector.extract_strided_slice %31 {offsets = [0, 0], sizes = [8, 1], strides = [1, 1]} : vector<8x128xf32> to vector<8x1xf32>
    %489 = tpu.concatenate %487, %488 in 1 : vector<8x127xf32>, vector<8x1xf32> -> vector<8x128xf32>
    %490 = vector.broadcast %9 : vector<1x128xf32> to vector<8x128xf32>
    %491 = arith.mulf %489, %490 : vector<8x128xf32>
    %492 = tpu.concatenate %486, %31, %491, %11 in 0 : vector<8x128xf32>, vector<8x128xf32>, vector<8x128xf32>, vector<1x128xf32> -> vector<25x128xf32>
    %c1560 = arith.constant 1560 : index
    %c0_148 = arith.constant 0 : index
    %493 = vector.load %arg2[%c1560, %c0_148] : memref<1616x512xf32, #tpu.memory_space<vmem>>, vector<16x25xf32>
    %cst_149 = arith.constant dense<0.000000e+00> : vector<16x128xf32>
    %494 = tpu.matmul %493, %492, %cst_149 {dimension_numbers = #tpu.dot_dimension_numbers<[1], [0], [0], [1], [0, 0, 1, 1], [], []>} : vector<16x25xf32>, vector<25x128xf32>, vector<16x128xf32> -> vector<16x128xf32>
    %cst_150 = arith.constant dense<0.000000e+00> : vector<16x64xf32>
    %495 = tpu.matmul %494, %36, %cst_150 {dimension_numbers = #tpu.dot_dimension_numbers<[1], [0], [0], [1], [0, 0, 1, 1], [], []>} : vector<16x128xf32>, vector<128x64xf32>, vector<16x64xf32> -> vector<16x64xf32>
    %496 = arith.addf %495, %481 : vector<16x64xf32>
    %cst_151 = arith.constant 0.000000e+00 : f32
    %497 = vector.broadcast %cst_151 : f32 to vector<16x64xf32>
    %498 = arith.maximumf %496, %497 : vector<16x64xf32>
    %c1576 = arith.constant 1576 : index
    %c0_152 = arith.constant 0 : index
    %499 = vector.load %arg2[%c1576, %c0_152] : memref<1616x512xf32, #tpu.memory_space<vmem>>, vector<1x17xf32>
    %500 = tpu.concatenate %498, %50 in 0 : vector<16x64xf32>, vector<1x64xf32> -> vector<17x64xf32>
    %cst_153 = arith.constant dense<0.000000e+00> : vector<1x64xf32>
    %501 = tpu.matmul %499, %500, %cst_153 {dimension_numbers = #tpu.dot_dimension_numbers<[1], [0], [0], [1], [0, 0, 1, 1], [], []>} : vector<1x17xf32>, vector<17x64xf32>, vector<1x64xf32> -> vector<1x64xf32>
    %502 = arith.negf %501 : vector<1x64xf32>
    %503 = math.exp %502 : vector<1x64xf32>
    %cst_154 = arith.constant 1.000000e+00 : f32
    %504 = vector.broadcast %cst_154 : f32 to vector<1x64xf32>
    %505 = arith.addf %504, %503 : vector<1x64xf32>
    %506 = arith.divf %504, %505 : vector<1x64xf32>
    %507 = vector.extract_strided_slice %506 {offsets = [0, 63], sizes = [1, 1], strides = [1, 1]} : vector<1x64xf32> to vector<1x1xf32>
    %508 = vector.extract_strided_slice %506 {offsets = [0, 0], sizes = [1, 63], strides = [1, 1]} : vector<1x64xf32> to vector<1x63xf32>
    %509 = tpu.concatenate %507, %508 in 1 : vector<1x1xf32>, vector<1x63xf32> -> vector<1x64xf32>
    %510 = arith.mulf %509, %41 : vector<1x64xf32>
    %511 = vector.extract_strided_slice %506 {offsets = [0, 1], sizes = [1, 63], strides = [1, 1]} : vector<1x64xf32> to vector<1x63xf32>
    %512 = vector.extract_strided_slice %506 {offsets = [0, 0], sizes = [1, 1], strides = [1, 1]} : vector<1x64xf32> to vector<1x1xf32>
    %513 = tpu.concatenate %511, %512 in 1 : vector<1x63xf32>, vector<1x1xf32> -> vector<1x64xf32>
    %514 = arith.mulf %513, %47 : vector<1x64xf32>
    %515 = tpu.concatenate %510, %506, %514, %50 in 0 : vector<1x64xf32>, vector<1x64xf32>, vector<1x64xf32>, vector<1x64xf32> -> vector<4x64xf32>
    %c1584 = arith.constant 1584 : index
    %c0_155 = arith.constant 0 : index
    %516 = vector.load %arg2[%c1584, %c0_155] : memref<1616x512xf32, #tpu.memory_space<vmem>>, vector<8x4xf32>
    %cst_156 = arith.constant dense<0.000000e+00> : vector<8x64xf32>
    %517 = tpu.matmul %516, %515, %cst_156 {dimension_numbers = #tpu.dot_dimension_numbers<[1], [0], [0], [1], [0, 0, 1, 1], [], []>} : vector<8x4xf32>, vector<4x64xf32>, vector<8x64xf32> -> vector<8x64xf32>
    %c1592 = arith.constant 1592 : index
    %c0_157 = arith.constant 0 : index
    %518 = vector.load %arg2[%c1592, %c0_157] : memref<1616x512xf32, #tpu.memory_space<vmem>>, vector<8x9xf32>
    %519 = tpu.concatenate %517, %50 in 0 : vector<8x64xf32>, vector<1x64xf32> -> vector<9x64xf32>
    %cst_158 = arith.constant dense<0.000000e+00> : vector<8x64xf32>
    %520 = tpu.matmul %518, %519, %cst_158 {dimension_numbers = #tpu.dot_dimension_numbers<[1], [0], [0], [1], [0, 0, 1, 1], [], []>} : vector<8x9xf32>, vector<9x64xf32>, vector<8x64xf32> -> vector<8x64xf32>
    %c1600 = arith.constant 1600 : index
    %c0_159 = arith.constant 0 : index
    %521 = vector.load %arg2[%c1600, %c0_159] : memref<1616x512xf32, #tpu.memory_space<vmem>>, vector<8x17xf32>
    %522 = vector.extract_strided_slice %517 {offsets = [0, 1], sizes = [8, 63], strides = [1, 1]} : vector<8x64xf32> to vector<8x63xf32>
    %523 = vector.extract_strided_slice %517 {offsets = [0, 0], sizes = [8, 1], strides = [1, 1]} : vector<8x64xf32> to vector<8x1xf32>
    %524 = tpu.concatenate %522, %523 in 1 : vector<8x63xf32>, vector<8x1xf32> -> vector<8x64xf32>
    %525 = vector.broadcast %47 : vector<1x64xf32> to vector<8x64xf32>
    %526 = arith.mulf %524, %525 : vector<8x64xf32>
    %527 = tpu.concatenate %517, %526, %50 in 0 : vector<8x64xf32>, vector<8x64xf32>, vector<1x64xf32> -> vector<17x64xf32>
    %cst_160 = arith.constant dense<0.000000e+00> : vector<8x64xf32>
    %528 = tpu.matmul %521, %527, %cst_160 {dimension_numbers = #tpu.dot_dimension_numbers<[1], [0], [0], [1], [0, 0, 1, 1], [], []>} : vector<8x17xf32>, vector<17x64xf32>, vector<8x64xf32> -> vector<8x64xf32>
    %c360 = arith.constant 360 : index
    %c0_161 = arith.constant 0 : index
    %529 = vector.load %arg3[%c360, %c0_161] : memref<600x128xf32, #tpu.memory_space<vmem>>, vector<64x128xf32>
    %cst_162 = arith.constant dense<0.000000e+00> : vector<8x128xf32>
    %530 = tpu.matmul %520, %529, %cst_162 {dimension_numbers = #tpu.dot_dimension_numbers<[1], [0], [0], [1], [0, 0, 1, 1], [], []>} : vector<8x64xf32>, vector<64x128xf32>, vector<8x128xf32> -> vector<8x128xf32>
    %c424 = arith.constant 424 : index
    %c0_163 = arith.constant 0 : index
    %531 = vector.load %arg3[%c424, %c0_163] : memref<600x128xf32, #tpu.memory_space<vmem>>, vector<64x128xf32>
    %cst_164 = arith.constant dense<0.000000e+00> : vector<8x128xf32>
    %532 = tpu.matmul %528, %531, %cst_164 {dimension_numbers = #tpu.dot_dimension_numbers<[1], [0], [0], [1], [0, 0, 1, 1], [], []>} : vector<8x64xf32>, vector<64x128xf32>, vector<8x128xf32> -> vector<8x128xf32>
    %533 = arith.addf %530, %532 : vector<8x128xf32>
    %534 = arith.mulf %533, %31 : vector<8x128xf32>
    %c944 = arith.constant 944 : index
    %c0_165 = arith.constant 0 : index
    %535 = vector.load %arg2[%c944, %c0_165] : memref<1616x512xf32, #tpu.memory_space<vmem>>, vector<8x17xf32>
    %536 = tpu.concatenate %481, %50 in 0 : vector<16x64xf32>, vector<1x64xf32> -> vector<17x64xf32>
    %cst_166 = arith.constant dense<0.000000e+00> : vector<8x64xf32>
    %537 = tpu.matmul %535, %536, %cst_166 {dimension_numbers = #tpu.dot_dimension_numbers<[1], [0], [0], [1], [0, 0, 1, 1], [], []>} : vector<8x17xf32>, vector<17x64xf32>, vector<8x64xf32> -> vector<8x64xf32>
    %c952 = arith.constant 952 : index
    %c0_167 = arith.constant 0 : index
    %538 = vector.load %arg2[%c952, %c0_167] : memref<1616x512xf32, #tpu.memory_space<vmem>>, vector<8x33xf32>
    %539 = vector.extract_strided_slice %481 {offsets = [0, 1], sizes = [16, 63], strides = [1, 1]} : vector<16x64xf32> to vector<16x63xf32>
    %540 = vector.extract_strided_slice %481 {offsets = [0, 0], sizes = [16, 1], strides = [1, 1]} : vector<16x64xf32> to vector<16x1xf32>
    %541 = tpu.concatenate %539, %540 in 1 : vector<16x63xf32>, vector<16x1xf32> -> vector<16x64xf32>
    %542 = vector.broadcast %47 : vector<1x64xf32> to vector<16x64xf32>
    %543 = arith.mulf %541, %542 : vector<16x64xf32>
    %544 = tpu.concatenate %481, %543, %50 in 0 : vector<16x64xf32>, vector<16x64xf32>, vector<1x64xf32> -> vector<33x64xf32>
    %cst_168 = arith.constant dense<0.000000e+00> : vector<8x64xf32>
    %545 = tpu.matmul %538, %544, %cst_168 {dimension_numbers = #tpu.dot_dimension_numbers<[1], [0], [0], [1], [0, 0, 1, 1], [], []>} : vector<8x33xf32>, vector<33x64xf32>, vector<8x64xf32> -> vector<8x64xf32>
    %cst_169 = arith.constant dense<0.000000e+00> : vector<8x128xf32>
    %546 = tpu.matmul %537, %529, %cst_169 {dimension_numbers = #tpu.dot_dimension_numbers<[1], [0], [0], [1], [0, 0, 1, 1], [], []>} : vector<8x64xf32>, vector<64x128xf32>, vector<8x128xf32> -> vector<8x128xf32>
    %cst_170 = arith.constant dense<0.000000e+00> : vector<8x128xf32>
    %547 = tpu.matmul %545, %531, %cst_170 {dimension_numbers = #tpu.dot_dimension_numbers<[1], [0], [0], [1], [0, 0, 1, 1], [], []>} : vector<8x64xf32>, vector<64x128xf32>, vector<8x128xf32> -> vector<8x128xf32>
    %548 = arith.addf %546, %547 : vector<8x128xf32>
    %549 = tpu.concatenate %548, %534 in 0 : vector<8x128xf32>, vector<8x128xf32> -> vector<16x128xf32>
    %550 = vector.extract_strided_slice %549 {offsets = [0, 127], sizes = [16, 1], strides = [1, 1]} : vector<16x128xf32> to vector<16x1xf32>
    %551 = vector.extract_strided_slice %549 {offsets = [0, 0], sizes = [16, 127], strides = [1, 1]} : vector<16x128xf32> to vector<16x127xf32>
    %552 = tpu.concatenate %550, %551 in 1 : vector<16x1xf32>, vector<16x127xf32> -> vector<16x128xf32>
    %553 = vector.broadcast %4 : vector<1x128xf32> to vector<16x128xf32>
    %554 = arith.mulf %552, %553 : vector<16x128xf32>
    %555 = vector.extract_strided_slice %549 {offsets = [0, 1], sizes = [16, 127], strides = [1, 1]} : vector<16x128xf32> to vector<16x127xf32>
    %556 = vector.extract_strided_slice %549 {offsets = [0, 0], sizes = [16, 1], strides = [1, 1]} : vector<16x128xf32> to vector<16x1xf32>
    %557 = tpu.concatenate %555, %556 in 1 : vector<16x127xf32>, vector<16x1xf32> -> vector<16x128xf32>
    %558 = vector.broadcast %9 : vector<1x128xf32> to vector<16x128xf32>
    %559 = arith.mulf %557, %558 : vector<16x128xf32>
    %560 = tpu.concatenate %554, %549, %559, %11 in 0 : vector<16x128xf32>, vector<16x128xf32>, vector<16x128xf32>, vector<1x128xf32> -> vector<49x128xf32>
    %c960 = arith.constant 960 : index
    %c0_171 = arith.constant 0 : index
    %561 = vector.load %arg2[%c960, %c0_171] : memref<1616x512xf32, #tpu.memory_space<vmem>>, vector<8x49xf32>
    %cst_172 = arith.constant dense<0.000000e+00> : vector<8x128xf32>
    %562 = tpu.matmul %561, %560, %cst_172 {dimension_numbers = #tpu.dot_dimension_numbers<[1], [0], [0], [1], [0, 0, 1, 1], [], []>} : vector<8x49xf32>, vector<49x128xf32>, vector<8x128xf32> -> vector<8x128xf32>
    %cst_173 = arith.constant 0.000000e+00 : f32
    %563 = vector.broadcast %cst_173 : f32 to vector<8x128xf32>
    %564 = arith.maximumf %562, %563 : vector<8x128xf32>
    %565 = vector.extract_strided_slice %564 {offsets = [0, 127], sizes = [8, 1], strides = [1, 1]} : vector<8x128xf32> to vector<8x1xf32>
    %566 = vector.extract_strided_slice %564 {offsets = [0, 0], sizes = [8, 127], strides = [1, 1]} : vector<8x128xf32> to vector<8x127xf32>
    %567 = tpu.concatenate %565, %566 in 1 : vector<8x1xf32>, vector<8x127xf32> -> vector<8x128xf32>
    %568 = vector.broadcast %4 : vector<1x128xf32> to vector<8x128xf32>
    %569 = arith.mulf %567, %568 : vector<8x128xf32>
    %570 = vector.extract_strided_slice %564 {offsets = [0, 1], sizes = [8, 127], strides = [1, 1]} : vector<8x128xf32> to vector<8x127xf32>
    %571 = vector.extract_strided_slice %564 {offsets = [0, 0], sizes = [8, 1], strides = [1, 1]} : vector<8x128xf32> to vector<8x1xf32>
    %572 = tpu.concatenate %570, %571 in 1 : vector<8x127xf32>, vector<8x1xf32> -> vector<8x128xf32>
    %573 = vector.broadcast %9 : vector<1x128xf32> to vector<8x128xf32>
    %574 = arith.mulf %572, %573 : vector<8x128xf32>
    %575 = tpu.concatenate %569, %564, %574, %11 in 0 : vector<8x128xf32>, vector<8x128xf32>, vector<8x128xf32>, vector<1x128xf32> -> vector<25x128xf32>
    %c968 = arith.constant 968 : index
    %c0_174 = arith.constant 0 : index
    %576 = vector.load %arg2[%c968, %c0_174] : memref<1616x512xf32, #tpu.memory_space<vmem>>, vector<8x25xf32>
    %cst_175 = arith.constant dense<0.000000e+00> : vector<8x128xf32>
    %577 = tpu.matmul %576, %575, %cst_175 {dimension_numbers = #tpu.dot_dimension_numbers<[1], [0], [0], [1], [0, 0, 1, 1], [], []>} : vector<8x25xf32>, vector<25x128xf32>, vector<8x128xf32> -> vector<8x128xf32>
    %cst_176 = arith.constant 0.000000e+00 : f32
    %578 = vector.broadcast %cst_176 : f32 to vector<8x128xf32>
    %579 = arith.maximumf %577, %578 : vector<8x128xf32>
    %c1608 = arith.constant 1608 : index
    %c0_177 = arith.constant 0 : index
    %580 = vector.load %arg2[%c1608, %c0_177] : memref<1616x512xf32, #tpu.memory_space<vmem>>, vector<4x9xf32>
    %581 = tpu.concatenate %579, %11 in 0 : vector<8x128xf32>, vector<1x128xf32> -> vector<9x128xf32>
    %cst_178 = arith.constant dense<0.000000e+00> : vector<4x128xf32>
    %582 = tpu.matmul %580, %581, %cst_178 {dimension_numbers = #tpu.dot_dimension_numbers<[1], [0], [0], [1], [0, 0, 1, 1], [], []>} : vector<4x9xf32>, vector<9x128xf32>, vector<4x128xf32> -> vector<4x128xf32>
    %c0_179 = arith.constant 0 : index
    %c0_180 = arith.constant 0 : index
    %583 = vector.load %arg4[%c0_179, %c0_180] : memref<4x128xf32, #tpu.memory_space<vmem>>, vector<4x128xf32>
    tpu.vector_store %arg4[%c0_179, %c0_180], %582 {strides = array<i32>} : memref<4x128xf32, #tpu.memory_space<vmem>>, vector<4x128xf32>,
    return
  }
  func.func @transform_0(%arg0: i32) -> (i32, i32) {
    %c0_i32 = arith.constant 0 : i32
    %c0_i32_0 = arith.constant 0 : i32
    return %c0_i32, %arg0 : i32, i32
  }
  func.func @transform_1(%arg0: i32) -> (i32, i32) {
    %c0_i32 = arith.constant 0 : i32
    %c0_i32_0 = arith.constant 0 : i32
    %c0_i32_1 = arith.constant 0 : i32
    return %c0_i32, %c0_i32_0 : i32, i32
  }
  func.func @transform_2(%arg0: i32) -> (i32, i32) {
    %c0_i32 = arith.constant 0 : i32
    %c0_i32_0 = arith.constant 0 : i32
    %c0_i32_1 = arith.constant 0 : i32
    return %c0_i32, %c0_i32_0 : i32, i32
  }
  func.func @transform_3(%arg0: i32) -> (i32, i32) {
    %c0_i32 = arith.constant 0 : i32
    %c0_i32_0 = arith.constant 0 : i32
    return %c0_i32, %arg0 : i32, i32
  }
}

</mosaic_0001>

<llo_original>
// kernel: run.1
$region0: #{run.1}
  #allocation0 [shape = 'u32[]', space=smem, size = 0x4, offset = 0x4, fixed_abs, tag = 'smem constant byte address 0x4 - core index']
  #allocation1 [shape = 'u32[72,128]{1,0:T(1,128)}', space=vmem, size = 0x9000, scoped, tag = 'internal scratch']
  %s0 = inlined_call_operand.vmem [shape: f32[1,256], index: 0, kind: input, shape index: {}]
  %s1 = inlined_call_operand.hbm [shape: f32[1616,512], index: 1, kind: input, shape index: {}]
  %s2 = inlined_call_operand.hbm [shape: f32[600,128], index: 2, kind: input, shape index: {}]
  %s3 = inlined_call_operand.vmem [shape: f32[4,256], index: 3, kind: output, shape index: {}]
  %s4 = sld [smem:[#allocation0]]
  $region53: #{run.1} parent=0
    _
  %s6 = ssub.s32 1, %s4
  %s7 = scalar_select 0, %s6, %s4
  $region1: #{run.1} parent=0
    #allocation2 [shape = 'u8[3309568]{0}', space=vmem, size = 0x328000, scoped, tag = 'input window, operand 1, single buffered']
    #allocation3 [shape = 's32[2]{0}', space=sflag, size = 0x8, scoped, tag = 'scoped memory for run.1']
    #allocation4 [shape = 'u8[307200]{0}', space=vmem, size = 0x4b000, scoped, tag = 'input window, operand 2, single buffered']
    #allocation5 [shape = 's32[1]{0}', space=sflag, size = 0x4, scoped, tag = 'scoped memory for run.1']
    %8 = vsyncpa [#allocation3], 0
    %9 = vsyncpa [#allocation5], 0
    loop: start=0, step=1, limit=4
    $region2: #{run.1} parent=1 // loop_pre_header
      _
    $region3: #{run.1} parent=1 // loop_header
      %s11 = sphi 0, %s15
      %p12 = scmp.ge.s32.totalorder %s11, 4
      %s21 = sphi 0, %s23
      %s24 = sphi 0, %s21
      %s25 = sphi 0, %s24
      %s41 = sphi 0, %s25
      %s45 = sphi 0, %s45
      %s47 = sphi 0, %s45
      %s48 = sphi 0, %s47
      %s62 = sphi 0, %s48
      %s66 = sphi 0, %s66
      %s68 = sphi 0, %s66
      %s69 = sphi 0, %s68
      %s83 = sphi 0, %s69
      %s89 = sphi 0, %s91
      %s92 = sphi 0, %s89
      %s93 = sphi 0, %s92
      %s109 = sphi 0, %s93
    $region4: #{run.1} parent=1 // loop_header_branch
      %14 = sbr.rel (%p12) target = $region8
    $region5: #{run.1} parent=1 // loop_body
      %s16 = ssub.s32 %s11, 1
      %s17 = ssub.s32 %s11, 2
      %s18 = sadd.s32 %s11, 1
      %s19 = ssub.s32 %s11, %s18
      %p20 = scmp.eq.s32.totalorder %s19, 0
      %s22 = sadd.s32 %s21, 1
      %s23 = scalar_select %p20, %s21, %s22
      %p26 = pneg %p20
      %p27 = scmp.eq.s32.totalorder %s11, 1
      %p28 = por %p26, %p27
      %p29 = scmp.ne.s32.totalorder %s21, %s24
      %p30 = scmp.eq.s32.totalorder %s11, 0
      %p31 = por %p29, %p30
      %p32 = scmp.ne.s32.totalorder %s21, %s24
      %p33 = scmp.eq.s32.totalorder %s16, 1
      %p34 = por %p32, %p33
      %p35 = scmp.ne.s32.totalorder %s24, %s25
      %p36 = scmp.eq.s32.totalorder %s16, 0
      %p37 = por %p35, %p36
      %p38 = scmp.ne.s32.totalorder %s24, %s25
      %p39 = scmp.eq.s32.totalorder %s17, 1
      %p40 = por %p38, %p39
      %p42 = scmp.ne.s32.totalorder %s25, %s41
      %p43 = scmp.eq.s32.totalorder %s17, 0
      %p44 = por %p42, %p43
      %s46 = sadd.s32 %s45, 1
      %p49 = scmp.eq.s32.totalorder %s11, 1
      %p50 = scmp.ne.s32.totalorder %s45, %s47
      %p51 = scmp.eq.s32.totalorder %s11, 0
      %p52 = por %p50, %p51
      %p53 = scmp.ne.s32.totalorder %s45, %s47
      %p54 = scmp.eq.s32.totalorder %s16, 1
      %p55 = por %p53, %p54
      %p56 = scmp.ne.s32.totalorder %s47, %s48
      %p57 = scmp.eq.s32.totalorder %s16, 0
      %p58 = por %p56, %p57
      %p59 = scmp.ne.s32.totalorder %s47, %s48
      %p60 = scmp.eq.s32.totalorder %s17, 1
      %p61 = por %p59, %p60
      %p63 = scmp.ne.s32.totalorder %s48, %s62
      %p64 = scmp.eq.s32.totalorder %s17, 0
      %p65 = por %p63, %p64
      %s67 = sadd.s32 %s66, 1
      %p70 = scmp.eq.s32.totalorder %s11, 1
      %p71 = scmp.ne.s32.totalorder %s66, %s68
      %p72 = scmp.eq.s32.totalorder %s11, 0
      %p73 = por %p71, %p72
      %p74 = scmp.ne.s32.totalorder %s66, %s68
      %p75 = scmp.eq.s32.totalorder %s16, 1
      %p76 = por %p74, %p75
      %p77 = scmp.ne.s32.totalorder %s68, %s69
      %p78 = scmp.eq.s32.totalorder %s16, 0
      %p79 = por %p77, %p78
      %p80 = scmp.ne.s32.totalorder %s68, %s69
      %p81 = scmp.eq.s32.totalorder %s17, 1
      %p82 = por %p80, %p81
      %p84 = scmp.ne.s32.totalorder %s69, %s83
      %p85 = scmp.eq.s32.totalorder %s17, 0
      %p86 = por %p84, %p85
      %s87 = ssub.s32 %s11, %s18
      %p88 = scmp.eq.s32.totalorder %s87, 0
      %s90 = sadd.s32 %s89, 1
      %s91 = scalar_select %p88, %s89, %s90
      %p94 = pneg %p88
      %p95 = scmp.eq.s32.totalorder %s11, 1
      %p96 = por %p94, %p95
      %p97 = scmp.ne.s32.totalorder %s89, %s92
      %p98 = scmp.eq.s32.totalorder %s11, 0
      %p99 = por %p97, %p98
      %p100 = scmp.ne.s32.totalorder %s89, %s92
      %p101 = scmp.eq.s32.totalorder %s16, 1
      %p102 = por %p100, %p101
      %p103 = scmp.ne.s32.totalorder %s92, %s93
      %p104 = scmp.eq.s32.totalorder %s16, 0
      %p105 = por %p103, %p104
      %p106 = scmp.ne.s32.totalorder %s92, %s93
      %p107 = scmp.eq.s32.totalorder %s17, 1
      %p108 = por %p106, %p107
      %p110 = scmp.ne.s32.totalorder %s93, %s109
      %p111 = scmp.eq.s32.totalorder %s17, 0
      %p112 = por %p110, %p111
      %p113 = scmp.le.s32.totalorder 1, %s11
      %p114 = scmp.lt.s32.totalorder %s11, 3
      %p115 = pnand %p113, %p114
      %p116 = pneg %p115
      // Predicated region
      $region9: #{run.1} parent=5 // pred_check
        _
      $region10: #{run.1} parent=5 // pred_check_branch
        %118 = sbr.rel (%p115) target = $region12
      $region11: #{run.1} parent=5 // pred_region
        %s119 = ssub.s32 %s11, 1
        // Predicated region
        $region13: #{run.1} parent=11 // pred_check
          %p120 = pneg %p58
        $region14: #{run.1} parent=11 // pred_check_branch
          %122 = sbr.rel (%p120) target = $region16
        $region15: #{run.1} parent=11 // pred_region
          %124 = vsyncadd [#allocation3], 0
          %s125 = sshll.u32 %s1, 4
          %s126 = int_to_ptr.hbm [resolvable:$true] %s125
          %s127 = sshll.u32 [#allocation2], 4
          %s128 = int_to_ptr.vmem [resolvable:$true] %s127
          %133 = dma.hbm_to_vmem [thread:$0]  %s126, 103424, %s128, [#allocation3], 512, 512, 32
        $region16: #{run.1} parent=11 // pred_fallthru
          _
        // Predicated region
        $region17: #{run.1} parent=11 // pred_check
          %p134 = pneg %p79
        $region18: #{run.1} parent=11 // pred_check_branch
          %136 = sbr.rel (%p134) target = $region20
        $region19: #{run.1} parent=11 // pred_region
          %138 = vsyncadd [#allocation5], 0
          %s139 = sshll.u32 %s2, 4
          %s140 = int_to_ptr.hbm [resolvable:$true] %s139
          %s141 = sshll.u32 [#allocation4], 4
          %s142 = int_to_ptr.vmem [resolvable:$true] %s141
          %147 = dma.hbm_to_vmem [thread:$0]  %s140, 9600, %s142, [#allocation5], 128, 128, 8
        $region20: #{run.1} parent=11 // pred_fallthru
          _
      $region12: #{run.1} parent=5 // pred_fallthru
        _
      %p148 = scmp.lt.s32.totalorder %s11, 2
      // Predicated region
      $region21: #{run.1} parent=5 // pred_check
        %p149 = pneg %p148
      $region22: #{run.1} parent=5 // pred_check_branch
        %151 = sbr.rel (%p149) target = $region24
      $region23: #{run.1} parent=5 // pred_region
        // Predicated region
        $region25: #{run.1} parent=23 // pred_check
          %p152 = pneg %p31
        $region26: #{run.1} parent=23 // pred_check_branch
          %154 = sbr.rel (%p152) target = $region28
        $region27: #{run.1} parent=23 // pred_region
          %p155 = scmp.lt.s32.totalorder %s11, 1
          %s156 = scalar_select %p155, %s11, 1
          %s157 = scalar_lea.vmem %s0, %s156
        $region28: #{run.1} parent=23 // pred_fallthru
          _
      $region24: #{run.1} parent=5 // pred_fallthru
        _
      %p158 = scmp.le.s32.totalorder 1, %s11
      %p159 = scmp.lt.s32.totalorder %s11, 3
      %p160 = pnand %p158, %p159
      %p161 = pneg %p160
      // Predicated region
      $region29: #{run.1} parent=5 // pred_check
        _
      $region30: #{run.1} parent=5 // pred_check_branch
        %163 = sbr.rel (%p160) target = $region32
      $region31: #{run.1} parent=5 // pred_region
        %s164 = ssub.s32 %s11, 1
        // Predicated region
        $region33: #{run.1} parent=31 // pred_check
          %p165 = pneg %p58
        $region34: #{run.1} parent=31 // pred_check_branch
          %167 = sbr.rel (%p165) target = $region36
        $region35: #{run.1} parent=31 // pred_region
          %169 = dma.done [#allocation3], 103424
        $region36: #{run.1} parent=31 // pred_fallthru
          _
        // Predicated region
        $region37: #{run.1} parent=31 // pred_check
          %p170 = pneg %p79
        $region38: #{run.1} parent=31 // pred_check_branch
          %172 = sbr.rel (%p170) target = $region40
        $region39: #{run.1} parent=31 // pred_region
          %174 = dma.done [#allocation5], 9600
        $region40: #{run.1} parent=31 // pred_fallthru
          _
        %p175 = scmp.lt.s32.totalorder %s16, 1
        %s176 = scalar_select %p175, %s16, 1
        %s177 = scalar_lea.vmem %s0, %s176
        %p178 = pneg %p37
        %p179 = pneg %p34
        %p180 = pneg %p58
        %p181 = pneg %p55
        %p182 = pneg %p79
        %p183 = pneg %p76
        %p184 = pneg %p105
        %p185 = pneg %p102
        %p186 = scmp.lt.s32.totalorder %s16, 1
        %s187 = scalar_select %p186, %s16, 1
        %s188 = smul.addr %s187, 4
        %s189 = scalar_lea.vmem %s3, %s188
        %p190 = scmp.lt.s32.totalorder %s16, 1
        %s191 = scalar_select %p190, %s16, 1
        %s192 = scalar_lea.vmem %s0, %s191
        %p193 = scmp.lt.s32.totalorder %s16, 1
        %s194 = scalar_select %p193, %s16, 1
        %s195 = smul.addr %s194, 4
        %s196 = scalar_lea.vmem %s3, %s195
        %v197 = vld [vmem:[%s192] sm:$0x1]
        %v199 = vperm.slane %v197, 0
        %200 = vrot.lane.b32.xlu0 %v199, 1
        %v201 = vpop.permute.xlu0 %200
        %vm203 = vcmask 7168
        %v204 = vld [vmem:[#allocation4] sm:$0x1]
        %v205 = vmul.f32 %v201, %v204
        %206 = vrot.lane.b32.xlu0 %v199, 127
        %v207 = vpop.permute.xlu0 %206
        %v209 = vld [vmem:[#allocation4 + $0x8] sm:$0x1]
        %v210 = vmul.f32 %v207, %v209
        %v211 = vld [vmem:[#allocation4 + $0x10] sm:$0x1]
        %v214 = vrot.slane %v210, 6
        %v217 = vrot.slane %v211, 5
        %vm219 = vcmask 1040384
        %v220 = vsel %vm219, %v205, %v199
        %vm221 = vcmask 1041408
        %v222 = vsel %vm221, %v220, %v214
        %vm223 = vcmask 1042432
        %v224 = vsel %vm223, %v222, %v217
        %v225 = vld [vmem:[#allocation2] sm:$0xff]
        %vm226 = vcmask 31744
        %v228 = vsel %vm226, %v225, 0
        %vm230 = vcmask 1043456
        %v232 = vsel %vm230, %v224, 0
        %234 = vmatpush.msra.mxu0 0.0
        %235 = vmatpush.msra.mxu0 0.0
        %236 = vmatpush.msra.mxu0 0.0
        %237 = vmatpush.msra.mxu0 0.0
        %238 = vmatpush.msra.mxu0 0.0
        %239 = vmatpush.msra.mxu0 0.0
        %240 = vmatpush.msra.mxu0 0.0
        %241 = vmatpush.msra.mxu0 0.0
        %242 = vmatpush.msra.mxu0 0.0
        %243 = vmatpush.msra.mxu0 0.0
        %244 = vmatpush.msra.mxu0 0.0
        %245 = vmatpush.msra.mxu0 0.0
        %246 = vmatpush.msra.mxu0 0.0
        %247 = vmatpush.msra.mxu0 0.0
        %248 = vmatpush.msra.mxu0 0.0
        %249 = vmatpush.msra.mxu0 %v232
        %250 = vmatmul.f32.gmra.mxu0 %v228
        %v251 = vpop.f32.mrf.mxu0
        %v252 = vadd.f32 0.0, %v251
        %253 = vdwg.mxu0
        %v254 = vmax.f32 %v252, 0.0
        %256 = vrot.lane.b32.xlu0 %v254, 1
        %v257 = vpop.permute.xlu0 %256
        %v259 = vperm.slane %v204, 0
        %v260 = vmul.f32 %v257, %v259
        %261 = vrot.lane.b32.xlu0 %v254, 127
        %v262 = vpop.permute.xlu0 %261
        %v264 = vperm.slane %v209, 0
        %v265 = vmul.f32 %v262, %v264
        %v266 = vld [vmem:[#allocation2 + $0x20] sm:$0xff]
        %vm267 = vcmask 203776
        %v269 = vsel %vm267, %v266, 0
        %v271 = vsel %vm219, %v211, 0
        %273 = vmatpush.msra.mxu0 0.0
        %274 = vmatpush.msra.mxu0 0.0
        %275 = vmatpush.msra.mxu0 0.0
        %276 = vmatpush.msra.mxu0 0.0
        %277 = vmatpush.msra.mxu0 0.0
        %278 = vmatpush.msra.mxu0 0.0
        %279 = vmatpush.msra.mxu0 0.0
        %280 = vmatpush.msra.mxu0 0.0
        %281 = vmatpush.msra.mxu0 0.0
        %282 = vmatpush.msra.mxu0 0.0
        %283 = vmatpush.msra.mxu0 0.0
        %284 = vmatpush.msra.mxu0 0.0
        %285 = vmatpush.msra.mxu0 %v271
        %286 = vmatpush.msra.mxu0 %v265
        %287 = vmatpush.msra.mxu0 %v254
        %288 = vmatpush.msra.mxu0 %v260
        %289 = vmatmul.f32.gmra.mxu0 %v269
        %v290 = vpop.f32.mrf.mxu0
        %v291 = vadd.f32 0.0, %v290
        %292 = vdwg.mxu0
        %v293 = vmax.f32 %v291, 0.0
        %295 = vrot.lane.b32.xlu0 %v293, 127
        %v296 = vpop.permute.xlu0 %295
        %v298 = vmax.f32 %v293, %v296
        %v299 = vld [vmem:[#allocation4 + $0x78] sm:$0xff]
        %v300 = vld [vmem:[#allocation4 + $0x80] sm:$0xff]
        %v301 = vld [vmem:[#allocation4 + $0x88] sm:$0xff]
        %v302 = vld [vmem:[#allocation4 + $0x90] sm:$0xff]
        %v303 = vld [vmem:[#allocation4 + $0x98] sm:$0xff]
        %v304 = vld [vmem:[#allocation4 + $0xa0] sm:$0xff]
        %v305 = vld [vmem:[#allocation4 + $0xa8] sm:$0xff]
        %v306 = vld [vmem:[#allocation4 + $0xb0] sm:$0xff]
        %v307 = vld [vmem:[#allocation4 + $0xb8] sm:$0xff]
        %v308 = vld [vmem:[#allocation4 + $0xc0] sm:$0xff]
        %v309 = vld [vmem:[#allocation4 + $0xc8] sm:$0xff]
        %v310 = vld [vmem:[#allocation4 + $0xd0] sm:$0xff]
        %v311 = vld [vmem:[#allocation4 + $0xd8] sm:$0xff]
        %v312 = vld [vmem:[#allocation4 + $0xe0] sm:$0xff]
        %v313 = vld [vmem:[#allocation4 + $0xe8] sm:$0xff]
        %v314 = vld [vmem:[#allocation4 + $0xf0] sm:$0xff]
        %315 = vmatpush.msra.mxu0 %v314
        %316 = vmatpush.msra.mxu0 %v313
        %317 = vmatpush.msra.mxu0 %v312
        %318 = vmatpush.msra.mxu0 %v311
        %319 = vmatpush.msra.mxu0 %v310
        %320 = vmatpush.msra.mxu0 %v309
        %321 = vmatpush.msra.mxu0 %v308
        %322 = vmatpush.msra.mxu0 %v307
        %323 = vmatpush.msra.mxu0 %v306
        %324 = vmatpush.msra.mxu0 %v305
        %325 = vmatpush.msra.mxu0 %v304
        %326 = vmatpush.msra.mxu0 %v303
        %327 = vmatpush.msra.mxu0 %v302
        %328 = vmatpush.msra.mxu0 %v301
        %329 = vmatpush.msra.mxu0 %v300
        %330 = vmatpush.msra.mxu0 %v299
        %331 = vmatmul.f32.gmra.mxu0 %v298
        %v332 = vpop.f32.mrf.mxu0
        %v333 = vadd.f32 0.0, %v332
        %334 = vdwg.mxu0
        %336 = vrot.lane.b32.xlu0 %v333, 65
        %v337 = vpop.permute.xlu0 %336
        %339 = vrot.lane.b32.xlu0 %v333, 1
        %v340 = vpop.permute.xlu0 %339
        %v342 = vsel %vm203, %v337, %v340
        %v343 = vld [vmem:[#allocation4 + $0x18] sm:$0x1]
        %v344 = vperm.slane %v343, 0
        %v345 = vmul.f32 %v342, %v344
        %346 = vrot.lane.b32.xlu0 %v333, 127
        %v347 = vpop.permute.xlu0 %346
        %349 = vrot.lane.b32.xlu0 %v333, 63
        %v350 = vpop.permute.xlu0 %349
        %vm352 = vcmask 515072
        %v353 = vsel %vm352, %v347, %v350
        %v354 = vld [vmem:[#allocation4 + $0x20] sm:$0x1]
        %v355 = vperm.slane %v354, 0
        %v356 = vmul.f32 %v353, %v355
        %v357 = vld [vmem:[#allocation4 + $0x28] sm:$0x1]
        %v358 = vld [vmem:[#allocation2 + $0x40] sm:$0xff]
        %v359 = vld [vmem:[#allocation2 + $0x60] sm:$0xff]
        %v361 = vsel %vm267, %v358, 0
        %v364 = vsel %vm267, %v359, 0
        %v367 = vsel %vm219, %v357, 0
        %369 = vmatpush.msra.mxu0 0.0
        %370 = vmatpush.msra.mxu0 0.0
        %371 = vmatpush.msra.mxu0 0.0
        %372 = vmatpush.msra.mxu0 0.0
        %373 = vmatpush.msra.mxu0 0.0
        %374 = vmatpush.msra.mxu0 0.0
        %375 = vmatpush.msra.mxu0 0.0
        %376 = vmatpush.msra.mxu0 0.0
        %377 = vmatpush.msra.mxu0 0.0
        %378 = vmatpush.msra.mxu0 0.0
        %379 = vmatpush.msra.mxu0 0.0
        %380 = vmatpush.msra.mxu0 0.0
        %381 = vmatpush.msra.mxu0 %v367
        %382 = vmatpush.msra.mxu0 %v356
        %383 = vmatpush.msra.mxu0 %v333
        %384 = vmatpush.msra.mxu0 %v345
        %385 = vmatmul.f32.gmra.mxu0 %v361
        %v386 = vpop.f32.mrf.mxu0
        %v387 = vadd.f32 0.0, %v386
        %388 = vmatmul.f32.gmra.mxu0 %v364
        %v389 = vpop.f32.mrf.mxu0
        %v390 = vadd.f32 0.0, %v389
        %391 = vdwg.mxu0
        %v392 = vmax.f32 %v387, 0.0
        %v393 = vmax.f32 %v390, 0.0
        %396 = vrot.lane.b32.xlu0 %v392, 65
        %v397 = vpop.permute.xlu0 %396
        %398 = vrot.lane.b32.xlu0 %v393, 65
        %v399 = vpop.permute.xlu0 %398
        %402 = vrot.lane.b32.xlu0 %v392, 1
        %v403 = vpop.permute.xlu0 %402
        %404 = vrot.lane.b32.xlu0 %v393, 1
        %v405 = vpop.permute.xlu0 %404
        %v408 = vsel %vm203, %v397, %v403
        %v409 = vsel %vm203, %v399, %v405
        %v410 = vmul.f32 %v408, %v344
        %v411 = vmul.f32 %v409, %v344
        %412 = vrot.lane.b32.xlu0 %v392, 127
        %v413 = vpop.permute.xlu0 %412
        %414 = vrot.lane.b32.xlu0 %v393, 127
        %v415 = vpop.permute.xlu0 %414
        %418 = vrot.lane.b32.xlu0 %v392, 63
        %v419 = vpop.permute.xlu0 %418
        %420 = vrot.lane.b32.xlu0 %v393, 63
        %v421 = vpop.permute.xlu0 %420
        %v424 = vsel %vm352, %v413, %v419
        %v425 = vsel %vm352, %v415, %v421
        %v426 = vmul.f32 %v424, %v355
        %v427 = vmul.f32 %v425, %v355
        %v428 = vld [vmem:[#allocation2 + $0x80] sm:$0xff]
        %v429 = vld [vmem:[#allocation2 + $0xa0] sm:$0xff]
        %vm430 = vcmask 400384
        %v432 = vsel %vm430, %v428, 0
        %v435 = vsel %vm430, %v429, 0
        %437 = vmatpush.msra.mxu0 0.0
        %438 = vmatpush.msra.mxu0 0.0
        %439 = vmatpush.msra.mxu0 0.0
        %440 = vmatpush.msra.mxu0 0.0
        %441 = vmatpush.msra.mxu0 0.0
        %442 = vmatpush.msra.mxu0 0.0
        %443 = vmatpush.msra.mxu0 0.0
        %444 = vmatpush.msra.mxu0 0.0
        %445 = vmatpush.msra.mxu0 0.0
        %446 = vmatpush.msra.mxu0 %v367
        %447 = vmatpush.msra.mxu0 %v427
        %448 = vmatpush.msra.mxu0 %v426
        %449 = vmatpush.msra.mxu0 %v393
        %450 = vmatpush.msra.mxu0 %v392
        %451 = vmatpush.msra.mxu0 %v411
        %452 = vmatpush.msra.mxu0 %v410
        %453 = vmatmul.f32.gmra.mxu0 %v432
        %v454 = vpop.f32.mrf.mxu0
        %v455 = vadd.f32 0.0, %v454
        %456 = vmatmul.f32.gmra.mxu0 %v435
        %v457 = vpop.f32.mrf.mxu0
        %v458 = vadd.f32 0.0, %v457
        %459 = vdwg.mxu0
        %v460 = vmax.f32 %v455, 0.0
        %v461 = vmax.f32 %v458, 0.0
        %464 = vrot.lane.b32.xlu0 %v460, 127
        %v465 = vpop.permute.xlu0 %464
        %466 = vrot.lane.b32.xlu0 %v461, 127
        %v467 = vpop.permute.xlu0 %466
        %470 = vrot.lane.b32.xlu0 %v460, 63
        %v471 = vpop.permute.xlu0 %470
        %472 = vrot.lane.b32.xlu0 %v461, 63
        %v473 = vpop.permute.xlu0 %472
        %v476 = vsel %vm352, %v465, %v471
        %v477 = vsel %vm352, %v467, %v473
        %v478 = vmax.f32 %v460, %v476
        %v479 = vmax.f32 %v461, %v477
        %v480 = vld [vmem:[#allocation4 + $0xf8] sm:$0xff]
        %v481 = vld [vmem:[#allocation4 + $0x100] sm:$0xff]
        %v482 = vld [vmem:[#allocation4 + $0x108] sm:$0xff]
        %v483 = vld [vmem:[#allocation4 + $0x110] sm:$0xff]
        %v484 = vld [vmem:[#allocation4 + $0x118] sm:$0xff]
        %v485 = vld [vmem:[#allocation4 + $0x120] sm:$0xff]
        %v486 = vld [vmem:[#allocation4 + $0x128] sm:$0xff]
        %v487 = vld [vmem:[#allocation4 + $0x130] sm:$0xff]
        %vm488 = vcmask 523264
        %v490 = vsel %vm488, %v478, 0
        %v493 = vsel %vm488, %v479, 0
        %495 = vmatpush.msra.mxu0 0.0
        %496 = vmatpush.msra.mxu0 0.0
        %497 = vmatpush.msra.mxu0 0.0
        %498 = vmatpush.msra.mxu0 0.0
        %499 = vmatpush.msra.mxu0 0.0
        %500 = vmatpush.msra.mxu0 0.0
        %501 = vmatpush.msra.mxu0 0.0
        %502 = vmatpush.msra.mxu0 0.0
        %503 = vmatpush.msra.mxu0 %v487
        %504 = vmatpush.msra.mxu0 %v486
        %505 = vmatpush.msra.mxu0 %v485
        %506 = vmatpush.msra.mxu0 %v484
        %507 = vmatpush.msra.mxu0 %v483
        %508 = vmatpush.msra.mxu0 %v482
        %509 = vmatpush.msra.mxu0 %v481
        %510 = vmatpush.msra.mxu0 %v480
        %511 = vmatmul.f32.gmra.mxu0 %v490
        %v512 = vpop.f32.mrf.mxu0
        %v513 = vadd.f32 0.0, %v512
        %514 = vmatmul.f32.gmra.mxu0 %v493
        %v515 = vpop.f32.mrf.mxu0
        %v516 = vadd.f32 0.0, %v515
        %517 = vdwg.mxu0
        %520 = vrot.lane.b32.xlu0 %v513, 97
        %v521 = vpop.permute.xlu0 %520
        %522 = vrot.lane.b32.xlu0 %v516, 97
        %v523 = vpop.permute.xlu0 %522
        %526 = vrot.lane.b32.xlu0 %v513, 1
        %v527 = vpop.permute.xlu0 %526
        %528 = vrot.lane.b32.xlu0 %v516, 1
        %v529 = vpop.permute.xlu0 %528
        %v532 = vsel %vm203, %v521, %v527
        %v533 = vsel %vm203, %v523, %v529
        %v534 = vld [vmem:[#allocation4 + $0x30] sm:$0x1]
        %v535 = vperm.slane %v534, 0
        %v536 = vmul.f32 %v532, %v535
        %v537 = vmul.f32 %v533, %v535
        %538 = vrot.lane.b32.xlu0 %v513, 127
        %v539 = vpop.permute.xlu0 %538
        %540 = vrot.lane.b32.xlu0 %v516, 127
        %v541 = vpop.permute.xlu0 %540
        %544 = vrot.lane.b32.xlu0 %v513, 31
        %v545 = vpop.permute.xlu0 %544
        %546 = vrot.lane.b32.xlu0 %v516, 31
        %v547 = vpop.permute.xlu0 %546
        %vm550 = vcmask 252928
        %v551 = vsel %vm550, %v539, %v545
        %v552 = vsel %vm550, %v541, %v547
        %v553 = vld [vmem:[#allocation4 + $0x38] sm:$0x1]
        %v554 = vperm.slane %v553, 0
        %v555 = vmul.f32 %v551, %v554
        %v556 = vmul.f32 %v552, %v554
        %v557 = vld [vmem:[#allocation4 + $0x40] sm:$0x1]
        %v558 = vld [vmem:[#allocation2 + $0xc0] sm:$0xff]
        %v559 = vld [vmem:[#allocation2 + $0xe0] sm:$0xff]
        %v560 = vld [vmem:[#allocation2 + $0x100] sm:$0xff]
        %v561 = vld [vmem:[#allocation2 + $0x120] sm:$0xff]
        %v563 = vsel %vm430, %v558, 0
        %v566 = vsel %vm430, %v559, 0
        %v569 = vsel %vm430, %v560, 0
        %v572 = vsel %vm430, %v561, 0
        %v575 = vsel %vm219, %v557, 0
        %577 = vmatpush.msra.mxu0 0.0
        %578 = vmatpush.msra.mxu0 0.0
        %579 = vmatpush.msra.mxu0 0.0
        %580 = vmatpush.msra.mxu0 0.0
        %581 = vmatpush.msra.mxu0 0.0
        %582 = vmatpush.msra.mxu0 0.0
        %583 = vmatpush.msra.mxu0 0.0
        %584 = vmatpush.msra.mxu0 0.0
        %585 = vmatpush.msra.mxu0 0.0
        %586 = vmatpush.msra.mxu0 %v575
        %587 = vmatpush.msra.mxu0 %v556
        %588 = vmatpush.msra.mxu0 %v555
        %589 = vmatpush.msra.mxu0 %v516
        %590 = vmatpush.msra.mxu0 %v513
        %591 = vmatpush.msra.mxu0 %v537
        %592 = vmatpush.msra.mxu0 %v536
        %593 = vmatmul.f32.gmra.mxu0 %v563
        %v594 = vpop.f32.mrf.mxu0
        %v595 = vadd.f32 0.0, %v594
        %596 = vmatmul.f32.gmra.mxu0 %v566
        %v597 = vpop.f32.mrf.mxu0
        %v598 = vadd.f32 0.0, %v597
        %599 = vmatmul.f32.gmra.mxu0 %v569
        %v600 = vpop.f32.mrf.mxu0
        %v601 = vadd.f32 0.0, %v600
        %602 = vmatmul.f32.gmra.mxu0 %v572
        %v603 = vpop.f32.mrf.mxu0
        %v604 = vadd.f32 0.0, %v603
        %605 = vdwg.mxu0
        %v606 = vmax.f32 %v595, 0.0
        %v607 = vmax.f32 %v598, 0.0
        %v608 = vmax.f32 %v601, 0.0
        %v609 = vmax.f32 %v604, 0.0
        %614 = vrot.lane.b32.xlu0 %v606, 97
        %v615 = vpop.permute.xlu0 %614
        %616 = vrot.lane.b32.xlu0 %v607, 97
        %v617 = vpop.permute.xlu0 %616
        %618 = vrot.lane.b32.xlu0 %v608, 97
        %v619 = vpop.permute.xlu0 %618
        %620 = vrot.lane.b32.xlu0 %v609, 97
        %v621 = vpop.permute.xlu0 %620
        %626 = vrot.lane.b32.xlu0 %v606, 1
        %v627 = vpop.permute.xlu0 %626
        %628 = vrot.lane.b32.xlu0 %v607, 1
        %v629 = vpop.permute.xlu0 %628
        %630 = vrot.lane.b32.xlu0 %v608, 1
        %v631 = vpop.permute.xlu0 %630
        %632 = vrot.lane.b32.xlu0 %v609, 1
        %v633 = vpop.permute.xlu0 %632
        %v638 = vsel %vm203, %v615, %v627
        %v639 = vsel %vm203, %v617, %v629
        %v640 = vsel %vm203, %v619, %v631
        %v641 = vsel %vm203, %v621, %v633
        %v642 = vmul.f32 %v638, %v535
        %v643 = vmul.f32 %v639, %v535
        %v644 = vmul.f32 %v640, %v535
        %v645 = vmul.f32 %v641, %v535
        %646 = vrot.lane.b32.xlu0 %v606, 127
        %v647 = vpop.permute.xlu0 %646
        %648 = vrot.lane.b32.xlu0 %v607, 127
        %v649 = vpop.permute.xlu0 %648
        %650 = vrot.lane.b32.xlu0 %v608, 127
        %v651 = vpop.permute.xlu0 %650
        %652 = vrot.lane.b32.xlu0 %v609, 127
        %v653 = vpop.permute.xlu0 %652
        %658 = vrot.lane.b32.xlu0 %v606, 31
        %v659 = vpop.permute.xlu0 %658
        %660 = vrot.lane.b32.xlu0 %v607, 31
        %v661 = vpop.permute.xlu0 %660
        %662 = vrot.lane.b32.xlu0 %v608, 31
        %v663 = vpop.permute.xlu0 %662
        %664 = vrot.lane.b32.xlu0 %v609, 31
        %v665 = vpop.permute.xlu0 %664
        %v670 = vsel %vm550, %v647, %v659
        %v671 = vsel %vm550, %v649, %v661
        %v672 = vsel %vm550, %v651, %v663
        %v673 = vsel %vm550, %v653, %v665
        %v674 = vmul.f32 %v670, %v554
        %v675 = vmul.f32 %v671, %v554
        %v676 = vmul.f32 %v672, %v554
        %v677 = vmul.f32 %v673, %v554
        %v678 = vld [vmem:[#allocation2 + $0x140] sm:$0xff]
        %v679 = vld [vmem:[#allocation2 + $0x160] sm:$0xff]
        %v680 = vld [vmem:[#allocation2 + $0x180] sm:$0xff]
        %v681 = vld [vmem:[#allocation2 + $0x1a0] sm:$0xff]
        %vm682 = vcmask 793600
        %v684 = vsel %vm682, %v678, 0
        %v687 = vsel %vm682, %v679, 0
        %v690 = vsel %vm682, %v680, 0
        %v693 = vsel %vm682, %v681, 0
        %695 = vmatpush.msra.mxu0 0.0
        %696 = vmatpush.msra.mxu0 0.0
        %697 = vmatpush.msra.mxu0 0.0
        %698 = vmatpush.msra.mxu0 %v575
        %699 = vmatpush.msra.mxu0 %v677
        %700 = vmatpush.msra.mxu0 %v676
        %701 = vmatpush.msra.mxu0 %v675
        %702 = vmatpush.msra.mxu0 %v674
        %703 = vmatpush.msra.mxu0 %v609
        %704 = vmatpush.msra.mxu0 %v608
        %705 = vmatpush.msra.mxu0 %v607
        %706 = vmatpush.msra.mxu0 %v606
        %707 = vmatpush.msra.mxu0 %v645
        %708 = vmatpush.msra.mxu0 %v644
        %709 = vmatpush.msra.mxu0 %v643
        %710 = vmatpush.msra.mxu0 %v642
        %711 = vmatmul.f32.gmra.mxu0 %v684
        %v712 = vpop.f32.mrf.mxu0
        %v713 = vadd.f32 0.0, %v712
        %714 = vmatmul.f32.gmra.mxu0 %v687
        %v715 = vpop.f32.mrf.mxu0
        %v716 = vadd.f32 0.0, %v715
        %717 = vmatmul.f32.gmra.mxu0 %v690
        %v718 = vpop.f32.mrf.mxu0
        %v719 = vadd.f32 0.0, %v718
        %720 = vmatmul.f32.gmra.mxu0 %v693
        %v721 = vpop.f32.mrf.mxu0
        %v722 = vadd.f32 0.0, %v721
        %723 = vdwg.mxu0
        %v724 = vmax.f32 %v713, 0.0
        %v725 = vmax.f32 %v716, 0.0
        %v726 = vmax.f32 %v719, 0.0
        %v727 = vmax.f32 %v722, 0.0
        %732 = vrot.lane.b32.xlu0 %v724, 127
        %v733 = vpop.permute.xlu0 %732
        %734 = vrot.lane.b32.xlu0 %v725, 127
        %v735 = vpop.permute.xlu0 %734
        %736 = vrot.lane.b32.xlu0 %v726, 127
        %v737 = vpop.permute.xlu0 %736
        %738 = vrot.lane.b32.xlu0 %v727, 127
        %v739 = vpop.permute.xlu0 %738
        %744 = vrot.lane.b32.xlu0 %v724, 31
        %v745 = vpop.permute.xlu0 %744
        %746 = vrot.lane.b32.xlu0 %v725, 31
        %v747 = vpop.permute.xlu0 %746
        %748 = vrot.lane.b32.xlu0 %v726, 31
        %v749 = vpop.permute.xlu0 %748
        %750 = vrot.lane.b32.xlu0 %v727, 31
        %v751 = vpop.permute.xlu0 %750
        %v756 = vsel %vm550, %v733, %v745
        %v757 = vsel %vm550, %v735, %v747
        %v758 = vsel %vm550, %v737, %v749
        %v759 = vsel %vm550, %v739, %v751
        %v760 = vmax.f32 %v724, %v756
        %v761 = vmax.f32 %v725, %v757
        %v762 = vmax.f32 %v726, %v758
        %v763 = vmax.f32 %v727, %v759
        %v764 = vld [vmem:[#allocation4 + $0x138] sm:$0xff]
        %v765 = vld [vmem:[#allocation4 + $0x140] sm:$0xff]
        %v766 = vld [vmem:[#allocation4 + $0x148] sm:$0xff]
        %v767 = vld [vmem:[#allocation4 + $0x150] sm:$0xff]
        %vm768 = vcmask 261120
        %v770 = vsel %vm768, %v760, 0
        %v773 = vsel %vm768, %v761, 0
        %v776 = vsel %vm768, %v762, 0
        %v779 = vsel %vm768, %v763, 0
        %781 = vmatpush.msra.mxu0 0.0
        %782 = vmatpush.msra.mxu0 0.0
        %783 = vmatpush.msra.mxu0 0.0
        %784 = vmatpush.msra.mxu0 0.0
        %785 = vmatpush.msra.mxu0 0.0
        %786 = vmatpush.msra.mxu0 0.0
        %787 = vmatpush.msra.mxu0 0.0
        %788 = vmatpush.msra.mxu0 0.0
        %789 = vmatpush.msra.mxu0 0.0
        %790 = vmatpush.msra.mxu0 0.0
        %791 = vmatpush.msra.mxu0 0.0
        %792 = vmatpush.msra.mxu0 0.0
        %793 = vmatpush.msra.mxu0 %v767
        %794 = vmatpush.msra.mxu0 %v766
        %795 = vmatpush.msra.mxu0 %v765
        %796 = vmatpush.msra.mxu0 %v764
        %797 = vmatmul.f32.gmra.mxu0 %v770
        %v798 = vpop.f32.mrf.mxu0
        %v799 = vadd.f32 0.0, %v798
        %800 = vmatmul.f32.gmra.mxu0 %v773
        %v801 = vpop.f32.mrf.mxu0
        %v802 = vadd.f32 0.0, %v801
        %803 = vmatmul.f32.gmra.mxu0 %v776
        %v804 = vpop.f32.mrf.mxu0
        %v805 = vadd.f32 0.0, %v804
        %806 = vmatmul.f32.gmra.mxu0 %v779
        %v807 = vpop.f32.mrf.mxu0
        %v808 = vadd.f32 0.0, %v807
        %809 = vdwg.mxu0
        %814 = vrot.lane.b32.xlu0 %v799, 113
        %v815 = vpop.permute.xlu0 %814
        %816 = vrot.lane.b32.xlu0 %v802, 113
        %v817 = vpop.permute.xlu0 %816
        %818 = vrot.lane.b32.xlu0 %v805, 113
        %v819 = vpop.permute.xlu0 %818
        %820 = vrot.lane.b32.xlu0 %v808, 113
        %v821 = vpop.permute.xlu0 %820
        %826 = vrot.lane.b32.xlu0 %v799, 1
        %v827 = vpop.permute.xlu0 %826
        %828 = vrot.lane.b32.xlu0 %v802, 1
        %v829 = vpop.permute.xlu0 %828
        %830 = vrot.lane.b32.xlu0 %v805, 1
        %v831 = vpop.permute.xlu0 %830
        %832 = vrot.lane.b32.xlu0 %v808, 1
        %v833 = vpop.permute.xlu0 %832
        %v838 = vsel %vm203, %v815, %v827
        %v839 = vsel %vm203, %v817, %v829
        %v840 = vsel %vm203, %v819, %v831
        %v841 = vsel %vm203, %v821, %v833
        %v842 = vld [vmem:[#allocation4 + $0x48] sm:$0x1]
        %v843 = vperm.slane %v842, 0
        %v844 = vmul.f32 %v838, %v843
        %v845 = vmul.f32 %v839, %v843
        %v846 = vmul.f32 %v840, %v843
        %v847 = vmul.f32 %v841, %v843
        %848 = vrot.lane.b32.xlu0 %v799, 127
        %v849 = vpop.permute.xlu0 %848
        %850 = vrot.lane.b32.xlu0 %v802, 127
        %v851 = vpop.permute.xlu0 %850
        %852 = vrot.lane.b32.xlu0 %v805, 127
        %v853 = vpop.permute.xlu0 %852
        %854 = vrot.lane.b32.xlu0 %v808, 127
        %v855 = vpop.permute.xlu0 %854
        %860 = vrot.lane.b32.xlu0 %v799, 15
        %v861 = vpop.permute.xlu0 %860
        %862 = vrot.lane.b32.xlu0 %v802, 15
        %v863 = vpop.permute.xlu0 %862
        %864 = vrot.lane.b32.xlu0 %v805, 15
        %v865 = vpop.permute.xlu0 %864
        %866 = vrot.lane.b32.xlu0 %v808, 15
        %v867 = vpop.permute.xlu0 %866
        %vm872 = vcmask 121856
        %v873 = vsel %vm872, %v849, %v861
        %v874 = vsel %vm872, %v851, %v863
        %v875 = vsel %vm872, %v853, %v865
        %v876 = vsel %vm872, %v855, %v867
        %v877 = vld [vmem:[#allocation4 + $0x50] sm:$0x1]
        %v878 = vperm.slane %v877, 0
        %v879 = vmul.f32 %v873, %v878
        %v880 = vmul.f32 %v874, %v878
        %v881 = vmul.f32 %v875, %v878
        %v882 = vmul.f32 %v876, %v878
        %v883 = vld [vmem:[#allocation4 + $0x58] sm:$0x1]
        %v884 = vld [vmem:[#allocation2 + $0x1c0] sm:$0xff]
        %v885 = vld [vmem:[#allocation2 + $0x1e0] sm:$0xff]
        %v886 = vld [vmem:[#allocation2 + $0x200] sm:$0xff]
        %v887 = vld [vmem:[#allocation2 + $0x220] sm:$0xff]
        %v888 = vld [vmem:[#allocation2 + $0x240] sm:$0xff]
        %v889 = vld [vmem:[#allocation2 + $0x260] sm:$0xff]
        %v890 = vld [vmem:[#allocation2 + $0x280] sm:$0xff]
        %v891 = vld [vmem:[#allocation2 + $0x2a0] sm:$0xff]
        %v893 = vsel %vm682, %v884, 0
        %v896 = vsel %vm682, %v885, 0
        %v899 = vsel %vm682, %v886, 0
        %v902 = vsel %vm682, %v887, 0
        %v905 = vsel %vm682, %v888, 0
        %v908 = vsel %vm682, %v889, 0
        %v911 = vsel %vm682, %v890, 0
        %v914 = vsel %vm682, %v891, 0
        %v917 = vsel %vm219, %v883, 0
        %919 = vmatpush.msra.mxu0 0.0
        %920 = vmatpush.msra.mxu0 0.0
        %921 = vmatpush.msra.mxu0 0.0
        %922 = vmatpush.msra.mxu0 %v917
        %923 = vmatpush.msra.mxu0 %v882
        %924 = vmatpush.msra.mxu0 %v881
        %925 = vmatpush.msra.mxu0 %v880
        %926 = vmatpush.msra.mxu0 %v879
        %927 = vmatpush.msra.mxu0 %v808
        %928 = vmatpush.msra.mxu0 %v805
        %929 = vmatpush.msra.mxu0 %v802
        %930 = vmatpush.msra.mxu0 %v799
        %931 = vmatpush.msra.mxu0 %v847
        %932 = vmatpush.msra.mxu0 %v846
        %933 = vmatpush.msra.mxu0 %v845
        %934 = vmatpush.msra.mxu0 %v844
        %935 = vmatmul.f32.gmra.mxu0 %v893
        %v936 = vpop.f32.mrf.mxu0
        %v937 = vadd.f32 0.0, %v936
        %938 = vmatmul.f32.gmra.mxu0 %v896
        %v939 = vpop.f32.mrf.mxu0
        %v940 = vadd.f32 0.0, %v939
        %941 = vmatmul.f32.gmra.mxu0 %v899
        %v942 = vpop.f32.mrf.mxu0
        %v943 = vadd.f32 0.0, %v942
        %944 = vmatmul.f32.gmra.mxu0 %v902
        %v945 = vpop.f32.mrf.mxu0
        %v946 = vadd.f32 0.0, %v945
        %947 = vmatmul.f32.gmra.mxu0 %v905
        %v948 = vpop.f32.mrf.mxu0
        %v949 = vadd.f32 0.0, %v948
        %950 = vmatmul.f32.gmra.mxu0 %v908
        %v951 = vpop.f32.mrf.mxu0
        %v952 = vadd.f32 0.0, %v951
        %953 = vmatmul.f32.gmra.mxu0 %v911
        %v954 = vpop.f32.mrf.mxu0
        %v955 = vadd.f32 0.0, %v954
        %956 = vmatmul.f32.gmra.mxu0 %v914
        %v957 = vpop.f32.mrf.mxu0
        %v958 = vadd.f32 0.0, %v957
        %959 = vdwg.mxu0
        %v960 = vmax.f32 %v937, 0.0
        %v961 = vmax.f32 %v940, 0.0
        %v962 = vmax.f32 %v943, 0.0
        %v963 = vmax.f32 %v946, 0.0
        %v964 = vmax.f32 %v949, 0.0
        %v965 = vmax.f32 %v952, 0.0
        %v966 = vmax.f32 %v955, 0.0
        %v967 = vmax.f32 %v958, 0.0
        %976 = vrot.lane.b32.xlu0 %v960, 113
        %v977 = vpop.permute.xlu0 %976
        %978 = vrot.lane.b32.xlu0 %v961, 113
        %v979 = vpop.permute.xlu0 %978
        %980 = vrot.lane.b32.xlu0 %v962, 113
        %v981 = vpop.permute.xlu0 %980
        %982 = vrot.lane.b32.xlu0 %v963, 113
        %v983 = vpop.permute.xlu0 %982
        %984 = vrot.lane.b32.xlu0 %v964, 113
        %v985 = vpop.permute.xlu0 %984
        %986 = vrot.lane.b32.xlu0 %v965, 113
        %v987 = vpop.permute.xlu0 %986
        %988 = vrot.lane.b32.xlu0 %v966, 113
        %v989 = vpop.permute.xlu0 %988
        %990 = vrot.lane.b32.xlu0 %v967, 113
        %v991 = vpop.permute.xlu0 %990
        %1000 = vrot.lane.b32.xlu0 %v960, 1
        %v1001 = vpop.permute.xlu0 %1000
        %1002 = vrot.lane.b32.xlu0 %v961, 1
        %v1003 = vpop.permute.xlu0 %1002
        %1004 = vrot.lane.b32.xlu0 %v962, 1
        %v1005 = vpop.permute.xlu0 %1004
        %1006 = vrot.lane.b32.xlu0 %v963, 1
        %v1007 = vpop.permute.xlu0 %1006
        %1008 = vrot.lane.b32.xlu0 %v964, 1
        %v1009 = vpop.permute.xlu0 %1008
        %1010 = vrot.lane.b32.xlu0 %v965, 1
        %v1011 = vpop.permute.xlu0 %1010
        %1012 = vrot.lane.b32.xlu0 %v966, 1
        %v1013 = vpop.permute.xlu0 %1012
        %1014 = vrot.lane.b32.xlu0 %v967, 1
        %v1015 = vpop.permute.xlu0 %1014
        %v1024 = vsel %vm203, %v977, %v1001
        %v1025 = vsel %vm203, %v979, %v1003
        %v1026 = vsel %vm203, %v981, %v1005
        %v1027 = vsel %vm203, %v983, %v1007
        %v1028 = vsel %vm203, %v985, %v1009
        %v1029 = vsel %vm203, %v987, %v1011
        %v1030 = vsel %vm203, %v989, %v1013
        %v1031 = vsel %vm203, %v991, %v1015
        %v1032 = vmul.f32 %v1024, %v843
        %v1033 = vmul.f32 %v1025, %v843
        %v1034 = vmul.f32 %v1026, %v843
        %v1035 = vmul.f32 %v1027, %v843
        %v1036 = vmul.f32 %v1028, %v843
        %v1037 = vmul.f32 %v1029, %v843
        %v1038 = vmul.f32 %v1030, %v843
        %v1039 = vmul.f32 %v1031, %v843
        %1040 = vrot.lane.b32.xlu0 %v960, 127
        %v1041 = vpop.permute.xlu0 %1040
        %1042 = vrot.lane.b32.xlu0 %v961, 127
        %v1043 = vpop.permute.xlu0 %1042
        %1044 = vrot.lane.b32.xlu0 %v962, 127
        %v1045 = vpop.permute.xlu0 %1044
        %1046 = vrot.lane.b32.xlu0 %v963, 127
        %v1047 = vpop.permute.xlu0 %1046
        %1048 = vrot.lane.b32.xlu0 %v964, 127
        %v1049 = vpop.permute.xlu0 %1048
        %1050 = vrot.lane.b32.xlu0 %v965, 127
        %v1051 = vpop.permute.xlu0 %1050
        %1052 = vrot.lane.b32.xlu0 %v966, 127
        %v1053 = vpop.permute.xlu0 %1052
        %1054 = vrot.lane.b32.xlu0 %v967, 127
        %v1055 = vpop.permute.xlu0 %1054
        %1064 = vrot.lane.b32.xlu0 %v960, 15
        %v1065 = vpop.permute.xlu0 %1064
        %1066 = vrot.lane.b32.xlu0 %v961, 15
        %v1067 = vpop.permute.xlu0 %1066
        %1068 = vrot.lane.b32.xlu0 %v962, 15
        %v1069 = vpop.permute.xlu0 %1068
        %1070 = vrot.lane.b32.xlu0 %v963, 15
        %v1071 = vpop.permute.xlu0 %1070
        %1072 = vrot.lane.b32.xlu0 %v964, 15
        %v1073 = vpop.permute.xlu0 %1072
        %1074 = vrot.lane.b32.xlu0 %v965, 15
        %v1075 = vpop.permute.xlu0 %1074
        %1076 = vrot.lane.b32.xlu0 %v966, 15
        %v1077 = vpop.permute.xlu0 %1076
        %1078 = vrot.lane.b32.xlu0 %v967, 15
        %v1079 = vpop.permute.xlu0 %1078
        %v1088 = vsel %vm872, %v1041, %v1065
        %v1089 = vsel %vm872, %v1043, %v1067
        %v1090 = vsel %vm872, %v1045, %v1069
        %v1091 = vsel %vm872, %v1047, %v1071
        %v1092 = vsel %vm872, %v1049, %v1073
        %v1093 = vsel %vm872, %v1051, %v1075
        %v1094 = vsel %vm872, %v1053, %v1077
        %v1095 = vsel %vm872, %v1055, %v1079
        %v1096 = vmul.f32 %v1088, %v878
        %v1097 = vmul.f32 %v1089, %v878
        %v1098 = vmul.f32 %v1090, %v878
        %v1099 = vmul.f32 %v1091, %v878
        %v1100 = vmul.f32 %v1092, %v878
        %v1101 = vmul.f32 %v1093, %v878
        %v1102 = vmul.f32 %v1094, %v878
        %v1103 = vmul.f32 %v1095, %v878
        %v1104 = vld [vmem:[#allocation2 + $0x2c0] sm:$0xff]
        %v1105 = vld [vmem:[#allocation2 + $0x2c8] sm:$0xff]
        %v1106 = vld [vmem:[#allocation2 + $0x2e0] sm:$0xff]
        %v1107 = vld [vmem:[#allocation2 + $0x2e8] sm:$0xff]
        %v1108 = vld [vmem:[#allocation2 + $0x300] sm:$0xff]
        %v1109 = vld [vmem:[#allocation2 + $0x308] sm:$0xff]
        %v1110 = vld [vmem:[#allocation2 + $0x320] sm:$0xff]
        %v1111 = vld [vmem:[#allocation2 + $0x328] sm:$0xff]
        %v1112 = vld [vmem:[#allocation2 + $0x340] sm:$0xff]
        %v1113 = vld [vmem:[#allocation2 + $0x348] sm:$0xff]
        %v1114 = vld [vmem:[#allocation2 + $0x360] sm:$0xff]
        %v1115 = vld [vmem:[#allocation2 + $0x368] sm:$0xff]
        %v1116 = vld [vmem:[#allocation2 + $0x380] sm:$0xff]
        %v1117 = vld [vmem:[#allocation2 + $0x388] sm:$0xff]
        %v1118 = vld [vmem:[#allocation2 + $0x3a0] sm:$0xff]
        %v1119 = vld [vmem:[#allocation2 + $0x3a8] sm:$0xff]
        %vm1120 = vcmask 531456
        %v1122 = vsel %vm1120, %v1105, 0
        %v1125 = vsel %vm1120, %v1107, 0
        %v1128 = vsel %vm1120, %v1109, 0
        %v1131 = vsel %vm1120, %v1111, 0
        %v1134 = vsel %vm1120, %v1113, 0
        %v1137 = vsel %vm1120, %v1115, 0
        %v1140 = vsel %vm1120, %v1117, 0
        %v1143 = vsel %vm1120, %v1119, 0
        %1145 = vmatpush.msra.mxu0 %v967
        %1146 = vmatpush.msra.mxu0 %v966
        %1147 = vmatpush.msra.mxu0 %v965
        %1148 = vmatpush.msra.mxu0 %v964
        %1149 = vmatpush.msra.mxu0 %v963
        %1150 = vmatpush.msra.mxu0 %v962
        %1151 = vmatpush.msra.mxu0 %v961
        %1152 = vmatpush.msra.mxu0 %v960
        %1153 = vmatpush.msra.mxu0 %v1039
        %1154 = vmatpush.msra.mxu0 %v1038
        %1155 = vmatpush.msra.mxu0 %v1037
        %1156 = vmatpush.msra.mxu0 %v1036
        %1157 = vmatpush.msra.mxu0 %v1035
        %1158 = vmatpush.msra.mxu0 %v1034
        %1159 = vmatpush.msra.mxu0 %v1033
        %1160 = vmatpush.msra.mxu0 %v1032
        %1161 = vmatmul.f32.gmra.mxu0 %v1104
        %v1162 = vpop.f32.mrf.mxu0
        %v1163 = vadd.f32 0.0, %v1162
        %1164 = vmatmul.f32.gmra.mxu0 %v1106
        %v1165 = vpop.f32.mrf.mxu0
        %v1166 = vadd.f32 0.0, %v1165
        %1167 = vmatmul.f32.gmra.mxu0 %v1108
        %v1168 = vpop.f32.mrf.mxu0
        %v1169 = vadd.f32 0.0, %v1168
        %1170 = vmatmul.f32.gmra.mxu0 %v1110
        %v1171 = vpop.f32.mrf.mxu0
        %v1172 = vadd.f32 0.0, %v1171
        %1173 = vmatmul.f32.gmra.mxu0 %v1112
        %v1174 = vpop.f32.mrf.mxu0
        %v1175 = vadd.f32 0.0, %v1174
        %1176 = vmatmul.f32.gmra.mxu0 %v1114
        %v1177 = vpop.f32.mrf.mxu0
        %v1178 = vadd.f32 0.0, %v1177
        %1179 = vmatmul.f32.gmra.mxu0 %v1116
        %v1180 = vpop.f32.mrf.mxu0
        %v1181 = vadd.f32 0.0, %v1180
        %1182 = vmatmul.f32.gmra.mxu0 %v1118
        %v1183 = vpop.f32.mrf.mxu0
        %v1184 = vadd.f32 0.0, %v1183
        %1185 = vdwg.mxu0
        %1186 = vmatpush.msra.mxu0 0.0
        %1187 = vmatpush.msra.mxu0 0.0
        %1188 = vmatpush.msra.mxu0 0.0
        %1189 = vmatpush.msra.mxu0 0.0
        %1190 = vmatpush.msra.mxu0 0.0
        %1191 = vmatpush.msra.mxu0 0.0
        %1192 = vmatpush.msra.mxu0 0.0
        %1193 = vmatpush.msra.mxu0 %v917
        %1194 = vmatpush.msra.mxu0 %v1103
        %1195 = vmatpush.msra.mxu0 %v1102
        %1196 = vmatpush.msra.mxu0 %v1101
        %1197 = vmatpush.msra.mxu0 %v1100
        %1198 = vmatpush.msra.mxu0 %v1099
        %1199 = vmatpush.msra.mxu0 %v1098
        %1200 = vmatpush.msra.mxu0 %v1097
        %1201 = vmatpush.msra.mxu0 %v1096
        %1202 = vmatmul.f32.gmra.mxu0 %v1122
        %v1203 = vpop.f32.mrf.mxu0
        %v1204 = vadd.f32 %v1163, %v1203
        %1205 = vmatmul.f32.gmra.mxu0 %v1125
        %v1206 = vpop.f32.mrf.mxu0
        %v1207 = vadd.f32 %v1166, %v1206
        %1208 = vmatmul.f32.gmra.mxu0 %v1128
        %v1209 = vpop.f32.mrf.mxu0
        %v1210 = vadd.f32 %v1169, %v1209
        %1211 = vmatmul.f32.gmra.mxu0 %v1131
        %v1212 = vpop.f32.mrf.mxu0
        %v1213 = vadd.f32 %v1172, %v1212
        %1214 = vmatmul.f32.gmra.mxu0 %v1134
        %v1215 = vpop.f32.mrf.mxu0
        %v1216 = vadd.f32 %v1175, %v1215
        %1217 = vmatmul.f32.gmra.mxu0 %v1137
        %v1218 = vpop.f32.mrf.mxu0
        %v1219 = vadd.f32 %v1178, %v1218
        %1220 = vmatmul.f32.gmra.mxu0 %v1140
        %v1221 = vpop.f32.mrf.mxu0
        %v1222 = vadd.f32 %v1181, %v1221
        %1223 = vmatmul.f32.gmra.mxu0 %v1143
        %v1224 = vpop.f32.mrf.mxu0
        %v1225 = vadd.f32 %v1184, %v1224
        %1226 = vdwg.mxu0
        %v1227 = vmax.f32 %v1204, 0.0
        %v1228 = vmax.f32 %v1207, 0.0
        %v1229 = vmax.f32 %v1210, 0.0
        %v1230 = vmax.f32 %v1213, 0.0
        %v1231 = vmax.f32 %v1216, 0.0
        %v1232 = vmax.f32 %v1219, 0.0
        %v1233 = vmax.f32 %v1222, 0.0
        %v1234 = vmax.f32 %v1225, 0.0
        %1243 = vrot.lane.b32.xlu0 %v1227, 127
        %v1244 = vpop.permute.xlu0 %1243
        %1245 = vrot.lane.b32.xlu0 %v1228, 127
        %v1246 = vpop.permute.xlu0 %1245
        %1247 = vrot.lane.b32.xlu0 %v1229, 127
        %v1248 = vpop.permute.xlu0 %1247
        %1249 = vrot.lane.b32.xlu0 %v1230, 127
        %v1250 = vpop.permute.xlu0 %1249
        %1251 = vrot.lane.b32.xlu0 %v1231, 127
        %v1252 = vpop.permute.xlu0 %1251
        %1253 = vrot.lane.b32.xlu0 %v1232, 127
        %v1254 = vpop.permute.xlu0 %1253
        %1255 = vrot.lane.b32.xlu0 %v1233, 127
        %v1256 = vpop.permute.xlu0 %1255
        %1257 = vrot.lane.b32.xlu0 %v1234, 127
        %v1258 = vpop.permute.xlu0 %1257
        %1267 = vrot.lane.b32.xlu0 %v1227, 15
        %v1268 = vpop.permute.xlu0 %1267
        %1269 = vrot.lane.b32.xlu0 %v1228, 15
        %v1270 = vpop.permute.xlu0 %1269
        %1271 = vrot.lane.b32.xlu0 %v1229, 15
        %v1272 = vpop.permute.xlu0 %1271
        %1273 = vrot.lane.b32.xlu0 %v1230, 15
        %v1274 = vpop.permute.xlu0 %1273
        %1275 = vrot.lane.b32.xlu0 %v1231, 15
        %v1276 = vpop.permute.xlu0 %1275
        %1277 = vrot.lane.b32.xlu0 %v1232, 15
        %v1278 = vpop.permute.xlu0 %1277
        %1279 = vrot.lane.b32.xlu0 %v1233, 15
        %v1280 = vpop.permute.xlu0 %1279
        %1281 = vrot.lane.b32.xlu0 %v1234, 15
        %v1282 = vpop.permute.xlu0 %1281
        %v1291 = vsel %vm872, %v1244, %v1268
        %v1292 = vsel %vm872, %v1246, %v1270
        %v1293 = vsel %vm872, %v1248, %v1272
        %v1294 = vsel %vm872, %v1250, %v1274
        %v1295 = vsel %vm872, %v1252, %v1276
        %v1296 = vsel %vm872, %v1254, %v1278
        %v1297 = vsel %vm872, %v1256, %v1280
        %v1298 = vsel %vm872, %v1258, %v1282
        %v1299 = vmax.f32 %v1227, %v1291
        %v1300 = vmax.f32 %v1228, %v1292
        %v1301 = vmax.f32 %v1229, %v1293
        %v1302 = vmax.f32 %v1230, %v1294
        %v1303 = vmax.f32 %v1231, %v1295
        %v1304 = vmax.f32 %v1232, %v1296
        %v1305 = vmax.f32 %v1233, %v1297
        %v1306 = vmax.f32 %v1234, %v1298
        %v1307 = vld [vmem:[#allocation4 + $0x158] sm:$0xff]
        %v1308 = vld [vmem:[#allocation4 + $0x160] sm:$0xff]
        %vm1309 = vcmask 130048
        %v1311 = vsel %vm1309, %v1299, 0
        %v1314 = vsel %vm1309, %v1300, 0
        %v1317 = vsel %vm1309, %v1301, 0
        %v1320 = vsel %vm1309, %v1302, 0
        %v1323 = vsel %vm1309, %v1303, 0
        %v1326 = vsel %vm1309, %v1304, 0
        %v1329 = vsel %vm1309, %v1305, 0
        %v1332 = vsel %vm1309, %v1306, 0
        %1334 = vmatpush.msra.mxu0 0.0
        %1335 = vmatpush.msra.mxu0 0.0
        %1336 = vmatpush.msra.mxu0 0.0
        %1337 = vmatpush.msra.mxu0 0.0
        %1338 = vmatpush.msra.mxu0 0.0
        %1339 = vmatpush.msra.mxu0 0.0
        %1340 = vmatpush.msra.mxu0 0.0
        %1341 = vmatpush.msra.mxu0 0.0
        %1342 = vmatpush.msra.mxu0 0.0
        %1343 = vmatpush.msra.mxu0 0.0
        %1344 = vmatpush.msra.mxu0 0.0
        %1345 = vmatpush.msra.mxu0 0.0
        %1346 = vmatpush.msra.mxu0 0.0
        %1347 = vmatpush.msra.mxu0 0.0
        %1348 = vmatpush.msra.mxu0 %v1308
        %1349 = vmatpush.msra.mxu0 %v1307
        %1350 = vmatmul.f32.gmra.mxu0 %v1311
        %v1351 = vpop.f32.mrf.mxu0
        %v1352 = vadd.f32 0.0, %v1351
        %1353 = vmatmul.f32.gmra.mxu0 %v1314
        %v1354 = vpop.f32.mrf.mxu0
        %v1355 = vadd.f32 0.0, %v1354
        %1356 = vmatmul.f32.gmra.mxu0 %v1317
        %v1357 = vpop.f32.mrf.mxu0
        %v1358 = vadd.f32 0.0, %v1357
        %1359 = vmatmul.f32.gmra.mxu0 %v1320
        %v1360 = vpop.f32.mrf.mxu0
        %v1361 = vadd.f32 0.0, %v1360
        %1362 = vmatmul.f32.gmra.mxu0 %v1323
        %v1363 = vpop.f32.mrf.mxu0
        %v1364 = vadd.f32 0.0, %v1363
        %1365 = vmatmul.f32.gmra.mxu0 %v1326
        %v1366 = vpop.f32.mrf.mxu0
        %v1367 = vadd.f32 0.0, %v1366
        %1368 = vmatmul.f32.gmra.mxu0 %v1329
        %v1369 = vpop.f32.mrf.mxu0
        %v1370 = vadd.f32 0.0, %v1369
        %1371 = vmatmul.f32.gmra.mxu0 %v1332
        %v1372 = vpop.f32.mrf.mxu0
        %v1373 = vadd.f32 0.0, %v1372
        %1374 = vdwg.mxu0
        %1383 = vrot.lane.b32.xlu0 %v1352, 121
        %v1384 = vpop.permute.xlu0 %1383
        %1385 = vrot.lane.b32.xlu0 %v1355, 121
        %v1386 = vpop.permute.xlu0 %1385
        %1387 = vrot.lane.b32.xlu0 %v1358, 121
        %v1388 = vpop.permute.xlu0 %1387
        %1389 = vrot.lane.b32.xlu0 %v1361, 121
        %v1390 = vpop.permute.xlu0 %1389
        %1391 = vrot.lane.b32.xlu0 %v1364, 121
        %v1392 = vpop.permute.xlu0 %1391
        %1393 = vrot.lane.b32.xlu0 %v1367, 121
        %v1394 = vpop.permute.xlu0 %1393
        %1395 = vrot.lane.b32.xlu0 %v1370, 121
        %v1396 = vpop.permute.xlu0 %1395
        %1397 = vrot.lane.b32.xlu0 %v1373, 121
        %v1398 = vpop.permute.xlu0 %1397
        %1407 = vrot.lane.b32.xlu0 %v1352, 1
        %v1408 = vpop.permute.xlu0 %1407
        %1409 = vrot.lane.b32.xlu0 %v1355, 1
        %v1410 = vpop.permute.xlu0 %1409
        %1411 = vrot.lane.b32.xlu0 %v1358, 1
        %v1412 = vpop.permute.xlu0 %1411
        %1413 = vrot.lane.b32.xlu0 %v1361, 1
        %v1414 = vpop.permute.xlu0 %1413
        %1415 = vrot.lane.b32.xlu0 %v1364, 1
        %v1416 = vpop.permute.xlu0 %1415
        %1417 = vrot.lane.b32.xlu0 %v1367, 1
        %v1418 = vpop.permute.xlu0 %1417
        %1419 = vrot.lane.b32.xlu0 %v1370, 1
        %v1420 = vpop.permute.xlu0 %1419
        %1421 = vrot.lane.b32.xlu0 %v1373, 1
        %v1422 = vpop.permute.xlu0 %1421
        %v1431 = vsel %vm203, %v1384, %v1408
        %v1432 = vsel %vm203, %v1386, %v1410
        %v1433 = vsel %vm203, %v1388, %v1412
        %v1434 = vsel %vm203, %v1390, %v1414
        %v1435 = vsel %vm203, %v1392, %v1416
        %v1436 = vsel %vm203, %v1394, %v1418
        %v1437 = vsel %vm203, %v1396, %v1420
        %v1438 = vsel %vm203, %v1398, %v1422
        %v1439 = vld [vmem:[#allocation4 + $0x60] sm:$0x1]
        %v1440 = vperm.slane %v1439, 0
        %v1441 = vmul.f32 %v1431, %v1440
        %v1442 = vmul.f32 %v1432, %v1440
        %v1443 = vmul.f32 %v1433, %v1440
        %v1444 = vmul.f32 %v1434, %v1440
        %v1445 = vmul.f32 %v1435, %v1440
        %v1446 = vmul.f32 %v1436, %v1440
        %v1447 = vmul.f32 %v1437, %v1440
        %v1448 = vmul.f32 %v1438, %v1440
        %1449 = vrot.lane.b32.xlu0 %v1352, 127
        %v1450 = vpop.permute.xlu0 %1449
        %1451 = vrot.lane.b32.xlu0 %v1355, 127
        %v1452 = vpop.permute.xlu0 %1451
        %1453 = vrot.lane.b32.xlu0 %v1358, 127
        %v1454 = vpop.permute.xlu0 %1453
        %1455 = vrot.lane.b32.xlu0 %v1361, 127
        %v1456 = vpop.permute.xlu0 %1455
        %1457 = vrot.lane.b32.xlu0 %v1364, 127
        %v1458 = vpop.permute.xlu0 %1457
        %1459 = vrot.lane.b32.xlu0 %v1367, 127
        %v1460 = vpop.permute.xlu0 %1459
        %1461 = vrot.lane.b32.xlu0 %v1370, 127
        %v1462 = vpop.permute.xlu0 %1461
        %1463 = vrot.lane.b32.xlu0 %v1373, 127
        %v1464 = vpop.permute.xlu0 %1463
        %1473 = vrot.lane.b32.xlu0 %v1352, 7
        %v1474 = vpop.permute.xlu0 %1473
        %1475 = vrot.lane.b32.xlu0 %v1355, 7
        %v1476 = vpop.permute.xlu0 %1475
        %1477 = vrot.lane.b32.xlu0 %v1358, 7
        %v1478 = vpop.permute.xlu0 %1477
        %1479 = vrot.lane.b32.xlu0 %v1361, 7
        %v1480 = vpop.permute.xlu0 %1479
        %1481 = vrot.lane.b32.xlu0 %v1364, 7
        %v1482 = vpop.permute.xlu0 %1481
        %1483 = vrot.lane.b32.xlu0 %v1367, 7
        %v1484 = vpop.permute.xlu0 %1483
        %1485 = vrot.lane.b32.xlu0 %v1370, 7
        %v1486 = vpop.permute.xlu0 %1485
        %1487 = vrot.lane.b32.xlu0 %v1373, 7
        %v1488 = vpop.permute.xlu0 %1487
        %vm1497 = vcmask 56320
        %v1498 = vsel %vm1497, %v1450, %v1474
        %v1499 = vsel %vm1497, %v1452, %v1476
        %v1500 = vsel %vm1497, %v1454, %v1478
        %v1501 = vsel %vm1497, %v1456, %v1480
        %v1502 = vsel %vm1497, %v1458, %v1482
        %v1503 = vsel %vm1497, %v1460, %v1484
        %v1504 = vsel %vm1497, %v1462, %v1486
        %v1505 = vsel %vm1497, %v1464, %v1488
        %v1506 = vld [vmem:[#allocation4 + $0x68] sm:$0x1]
        %v1507 = vperm.slane %v1506, 0
        %v1508 = vmul.f32 %v1498, %v1507
        %v1509 = vmul.f32 %v1499, %v1507
        %v1510 = vmul.f32 %v1500, %v1507
        %v1511 = vmul.f32 %v1501, %v1507
        %v1512 = vmul.f32 %v1502, %v1507
        %v1513 = vmul.f32 %v1503, %v1507
        %v1514 = vmul.f32 %v1504, %v1507
        %v1515 = vmul.f32 %v1505, %v1507
        %v1516 = vld [vmem:[#allocation4 + $0x70] sm:$0x1]
        %v1517 = vld [vmem:[#allocation2 + $0x3c0] sm:$0xff]
        %v1518 = vld [vmem:[#allocation2 + $0x3c8] sm:$0xff]
        %v1519 = vld [vmem:[#allocation2 + $0x3e0] sm:$0xff]
        %v1520 = vld [vmem:[#allocation2 + $0x3e8] sm:$0xff]
        %v1521 = vld [vmem:[#allocation2 + $0x400] sm:$0xff]
        %v1522 = vld [vmem:[#allocation2 + $0x408] sm:$0xff]
        %v1523 = vld [vmem:[#allocation2 + $0x420] sm:$0xff]
        %v1524 = vld [vmem:[#allocation2 + $0x428] sm:$0xff]
        %v1525 = vld [vmem:[#allocation2 + $0x440] sm:$0xff]
        %v1526 = vld [vmem:[#allocation2 + $0x448] sm:$0xff]
        %v1527 = vld [vmem:[#allocation2 + $0x460] sm:$0xff]
        %v1528 = vld [vmem:[#allocation2 + $0x468] sm:$0xff]
        %v1529 = vld [vmem:[#allocation2 + $0x480] sm:$0xff]
        %v1530 = vld [vmem:[#allocation2 + $0x488] sm:$0xff]
        %v1531 = vld [vmem:[#allocation2 + $0x4a0] sm:$0xff]
        %v1532 = vld [vmem:[#allocation2 + $0x4a8] sm:$0xff]
        %v1533 = vld [vmem:[#allocation2 + $0x4c0] sm:$0xff]
        %v1534 = vld [vmem:[#allocation2 + $0x4c8] sm:$0xff]
        %v1535 = vld [vmem:[#allocation2 + $0x4e0] sm:$0xff]
        %v1536 = vld [vmem:[#allocation2 + $0x4e8] sm:$0xff]
        %v1537 = vld [vmem:[#allocation2 + $0x500] sm:$0xff]
        %v1538 = vld [vmem:[#allocation2 + $0x508] sm:$0xff]
        %v1539 = vld [vmem:[#allocation2 + $0x520] sm:$0xff]
        %v1540 = vld [vmem:[#allocation2 + $0x528] sm:$0xff]
        %v1541 = vld [vmem:[#allocation2 + $0x540] sm:$0xff]
        %v1542 = vld [vmem:[#allocation2 + $0x548] sm:$0xff]
        %v1543 = vld [vmem:[#allocation2 + $0x560] sm:$0xff]
        %v1544 = vld [vmem:[#allocation2 + $0x568] sm:$0xff]
        %v1545 = vld [vmem:[#allocation2 + $0x580] sm:$0xff]
        %v1546 = vld [vmem:[#allocation2 + $0x588] sm:$0xff]
        %v1547 = vld [vmem:[#allocation2 + $0x5a0] sm:$0xff]
        %v1548 = vld [vmem:[#allocation2 + $0x5a8] sm:$0xff]
        %v1550 = vsel %vm1120, %v1518, 0
        %v1553 = vsel %vm1120, %v1520, 0
        %v1556 = vsel %vm1120, %v1522, 0
        %v1559 = vsel %vm1120, %v1524, 0
        %v1562 = vsel %vm1120, %v1526, 0
        %v1565 = vsel %vm1120, %v1528, 0
        %v1568 = vsel %vm1120, %v1530, 0
        %v1571 = vsel %vm1120, %v1532, 0
        %v1574 = vsel %vm1120, %v1534, 0
        %v1577 = vsel %vm1120, %v1536, 0
        %v1580 = vsel %vm1120, %v1538, 0
        %v1583 = vsel %vm1120, %v1540, 0
        %v1586 = vsel %vm1120, %v1542, 0
        %v1589 = vsel %vm1120, %v1544, 0
        %v1592 = vsel %vm1120, %v1546, 0
        %v1595 = vsel %vm1120, %v1548, 0
        %v1598 = vsel %vm219, %v1516, 0
        %1600 = vmatpush.msra.mxu0 %v1373
        %1601 = vmatpush.msra.mxu0 %v1370
        %1602 = vmatpush.msra.mxu0 %v1367
        %1603 = vmatpush.msra.mxu0 %v1364
        %1604 = vmatpush.msra.mxu0 %v1361
        %1605 = vmatpush.msra.mxu0 %v1358
        %1606 = vmatpush.msra.mxu0 %v1355
        %1607 = vmatpush.msra.mxu0 %v1352
        %1608 = vmatpush.msra.mxu0 %v1448
        %1609 = vmatpush.msra.mxu0 %v1447
        %1610 = vmatpush.msra.mxu0 %v1446
        %1611 = vmatpush.msra.mxu0 %v1445
        %1612 = vmatpush.msra.mxu0 %v1444
        %1613 = vmatpush.msra.mxu0 %v1443
        %1614 = vmatpush.msra.mxu0 %v1442
        %1615 = vmatpush.msra.mxu0 %v1441
        %1616 = vmatmul.f32.gmra.mxu0 %v1517
        %v1617 = vpop.f32.mrf.mxu0
        %v1618 = vadd.f32 0.0, %v1617
        %1619 = vmatmul.f32.gmra.mxu0 %v1519
        %v1620 = vpop.f32.mrf.mxu0
        %v1621 = vadd.f32 0.0, %v1620
        %1622 = vmatmul.f32.gmra.mxu0 %v1521
        %v1623 = vpop.f32.mrf.mxu0
        %v1624 = vadd.f32 0.0, %v1623
        %1625 = vmatmul.f32.gmra.mxu0 %v1523
        %v1626 = vpop.f32.mrf.mxu0
        %v1627 = vadd.f32 0.0, %v1626
        %1628 = vmatmul.f32.gmra.mxu0 %v1525
        %v1629 = vpop.f32.mrf.mxu0
        %v1630 = vadd.f32 0.0, %v1629
        %1631 = vmatmul.f32.gmra.mxu0 %v1527
        %v1632 = vpop.f32.mrf.mxu0
        %v1633 = vadd.f32 0.0, %v1632
        %1634 = vmatmul.f32.gmra.mxu0 %v1529
        %v1635 = vpop.f32.mrf.mxu0
        %v1636 = vadd.f32 0.0, %v1635
        %1637 = vmatmul.f32.gmra.mxu0 %v1531
        %v1638 = vpop.f32.mrf.mxu0
        %v1639 = vadd.f32 0.0, %v1638
        %1640 = vmatmul.f32.gmra.mxu0 %v1533
        %v1641 = vpop.f32.mrf.mxu0
        %v1642 = vadd.f32 0.0, %v1641
        %1643 = vmatmul.f32.gmra.mxu0 %v1535
        %v1644 = vpop.f32.mrf.mxu0
        %v1645 = vadd.f32 0.0, %v1644
        %1646 = vmatmul.f32.gmra.mxu0 %v1537
        %v1647 = vpop.f32.mrf.mxu0
        %v1648 = vadd.f32 0.0, %v1647
        %1649 = vmatmul.f32.gmra.mxu0 %v1539
        %v1650 = vpop.f32.mrf.mxu0
        %v1651 = vadd.f32 0.0, %v1650
        %1652 = vmatmul.f32.gmra.mxu0 %v1541
        %v1653 = vpop.f32.mrf.mxu0
        %v1654 = vadd.f32 0.0, %v1653
        %1655 = vmatmul.f32.gmra.mxu0 %v1543
        %v1656 = vpop.f32.mrf.mxu0
        %v1657 = vadd.f32 0.0, %v1656
        %1658 = vmatmul.f32.gmra.mxu0 %v1545
        %v1659 = vpop.f32.mrf.mxu0
        %v1660 = vadd.f32 0.0, %v1659
        %1661 = vmatmul.f32.gmra.mxu0 %v1547
        %v1662 = vpop.f32.mrf.mxu0
        %v1663 = vadd.f32 0.0, %v1662
        %1664 = vdwg.mxu0
        %1665 = vmatpush.msra.mxu0 0.0
        %1666 = vmatpush.msra.mxu0 0.0
        %1667 = vmatpush.msra.mxu0 0.0
        %1668 = vmatpush.msra.mxu0 0.0
        %1669 = vmatpush.msra.mxu0 0.0
        %1670 = vmatpush.msra.mxu0 0.0
        %1671 = vmatpush.msra.mxu0 0.0
        %1672 = vmatpush.msra.mxu0 %v1598
        %1673 = vmatpush.msra.mxu0 %v1515
        %1674 = vmatpush.msra.mxu0 %v1514
        %1675 = vmatpush.msra.mxu0 %v1513
        %1676 = vmatpush.msra.mxu0 %v1512
        %1677 = vmatpush.msra.mxu0 %v1511
        %1678 = vmatpush.msra.mxu0 %v1510
        %1679 = vmatpush.msra.mxu0 %v1509
        %1680 = vmatpush.msra.mxu0 %v1508
        %1681 = vmatmul.f32.gmra.mxu0 %v1550
        %v1682 = vpop.f32.mrf.mxu0
        %v1683 = vadd.f32 %v1618, %v1682
        %1684 = vmatmul.f32.gmra.mxu0 %v1553
        %v1685 = vpop.f32.mrf.mxu0
        %v1686 = vadd.f32 %v1621, %v1685
        %1687 = vmatmul.f32.gmra.mxu0 %v1556
        %v1688 = vpop.f32.mrf.mxu0
        %v1689 = vadd.f32 %v1624, %v1688
        %1690 = vmatmul.f32.gmra.mxu0 %v1559
        %v1691 = vpop.f32.mrf.mxu0
        %v1692 = vadd.f32 %v1627, %v1691
        %1693 = vmatmul.f32.gmra.mxu0 %v1562
        %v1694 = vpop.f32.mrf.mxu0
        %v1695 = vadd.f32 %v1630, %v1694
        %1696 = vmatmul.f32.gmra.mxu0 %v1565
        %v1697 = vpop.f32.mrf.mxu0
        %v1698 = vadd.f32 %v1633, %v1697
        %1699 = vmatmul.f32.gmra.mxu0 %v1568
        %v1700 = vpop.f32.mrf.mxu0
        %v1701 = vadd.f32 %v1636, %v1700
        %1702 = vmatmul.f32.gmra.mxu0 %v1571
        %v1703 = vpop.f32.mrf.mxu0
        %v1704 = vadd.f32 %v1639, %v1703
        %1705 = vmatmul.f32.gmra.mxu0 %v1574
        %v1706 = vpop.f32.mrf.mxu0
        %v1707 = vadd.f32 %v1642, %v1706
        %1708 = vmatmul.f32.gmra.mxu0 %v1577
        %v1709 = vpop.f32.mrf.mxu0
        %v1710 = vadd.f32 %v1645, %v1709
        %1711 = vmatmul.f32.gmra.mxu0 %v1580
        %v1712 = vpop.f32.mrf.mxu0
        %v1713 = vadd.f32 %v1648, %v1712
        %1714 = vmatmul.f32.gmra.mxu0 %v1583
        %v1715 = vpop.f32.mrf.mxu0
        %v1716 = vadd.f32 %v1651, %v1715
        %1717 = vmatmul.f32.gmra.mxu0 %v1586
        %v1718 = vpop.f32.mrf.mxu0
        %v1719 = vadd.f32 %v1654, %v1718
        %1720 = vmatmul.f32.gmra.mxu0 %v1589
        %v1721 = vpop.f32.mrf.mxu0
        %v1722 = vadd.f32 %v1657, %v1721
        %1723 = vmatmul.f32.gmra.mxu0 %v1592
        %v1724 = vpop.f32.mrf.mxu0
        %v1725 = vadd.f32 %v1660, %v1724
        %1726 = vmatmul.f32.gmra.mxu0 %v1595
        %v1727 = vpop.f32.mrf.mxu0
        %v1728 = vadd.f32 %v1663, %v1727
        %1729 = vdwg.mxu0
        %v1730 = vmax.f32 %v1683, 0.0
        %v1731 = vmax.f32 %v1686, 0.0
        %v1732 = vmax.f32 %v1689, 0.0
        %v1733 = vmax.f32 %v1692, 0.0
        %v1734 = vmax.f32 %v1695, 0.0
        %v1735 = vmax.f32 %v1698, 0.0
        %v1736 = vmax.f32 %v1701, 0.0
        %v1737 = vmax.f32 %v1704, 0.0
        %v1738 = vmax.f32 %v1707, 0.0
        %v1739 = vmax.f32 %v1710, 0.0
        %v1740 = vmax.f32 %v1713, 0.0
        %v1741 = vmax.f32 %v1716, 0.0
        %v1742 = vmax.f32 %v1719, 0.0
        %v1743 = vmax.f32 %v1722, 0.0
        %v1744 = vmax.f32 %v1725, 0.0
        %v1745 = vmax.f32 %v1728, 0.0
        %1762 = vrot.lane.b32.xlu0 %v1730, 121
        %v1763 = vpop.permute.xlu0 %1762
        %1764 = vrot.lane.b32.xlu0 %v1731, 121
        %v1765 = vpop.permute.xlu0 %1764
        %1766 = vrot.lane.b32.xlu0 %v1732, 121
        %v1767 = vpop.permute.xlu0 %1766
        %1768 = vrot.lane.b32.xlu0 %v1733, 121
        %v1769 = vpop.permute.xlu0 %1768
        %1770 = vrot.lane.b32.xlu0 %v1734, 121
        %v1771 = vpop.permute.xlu0 %1770
        %1772 = vrot.lane.b32.xlu0 %v1735, 121
        %v1773 = vpop.permute.xlu0 %1772
        %1774 = vrot.lane.b32.xlu0 %v1736, 121
        %v1775 = vpop.permute.xlu0 %1774
        %1776 = vrot.lane.b32.xlu0 %v1737, 121
        %v1777 = vpop.permute.xlu0 %1776
        %1778 = vrot.lane.b32.xlu0 %v1738, 121
        %v1779 = vpop.permute.xlu0 %1778
        %1780 = vrot.lane.b32.xlu0 %v1739, 121
        %v1781 = vpop.permute.xlu0 %1780
        %1782 = vrot.lane.b32.xlu0 %v1740, 121
        %v1783 = vpop.permute.xlu0 %1782
        %1784 = vrot.lane.b32.xlu0 %v1741, 121
        %v1785 = vpop.permute.xlu0 %1784
        %1786 = vrot.lane.b32.xlu0 %v1742, 121
        %v1787 = vpop.permute.xlu0 %1786
        %1788 = vrot.lane.b32.xlu0 %v1743, 121
        %v1789 = vpop.permute.xlu0 %1788
        %1790 = vrot.lane.b32.xlu0 %v1744, 121
        %v1791 = vpop.permute.xlu0 %1790
        %1792 = vrot.lane.b32.xlu0 %v1745, 121
        %v1793 = vpop.permute.xlu0 %1792
        %1810 = vrot.lane.b32.xlu0 %v1730, 1
        %v1811 = vpop.permute.xlu0 %1810
        %1812 = vrot.lane.b32.xlu0 %v1731, 1
        %v1813 = vpop.permute.xlu0 %1812
        %1814 = vrot.lane.b32.xlu0 %v1732, 1
        %v1815 = vpop.permute.xlu0 %1814
        %1816 = vrot.lane.b32.xlu0 %v1733, 1
        %v1817 = vpop.permute.xlu0 %1816
        %1818 = vrot.lane.b32.xlu0 %v1734, 1
        %v1819 = vpop.permute.xlu0 %1818
        %1820 = vrot.lane.b32.xlu0 %v1735, 1
        %v1821 = vpop.permute.xlu0 %1820
        %1822 = vrot.lane.b32.xlu0 %v1736, 1
        %v1823 = vpop.permute.xlu0 %1822
        %1824 = vrot.lane.b32.xlu0 %v1737, 1
        %v1825 = vpop.permute.xlu0 %1824
        %1826 = vrot.lane.b32.xlu0 %v1738, 1
        %v1827 = vpop.permute.xlu0 %1826
        %1828 = vrot.lane.b32.xlu0 %v1739, 1
        %v1829 = vpop.permute.xlu0 %1828
        %1830 = vrot.lane.b32.xlu0 %v1740, 1
        %v1831 = vpop.permute.xlu0 %1830
        %1832 = vrot.lane.b32.xlu0 %v1741, 1
        %v1833 = vpop.permute.xlu0 %1832
        %1834 = vrot.lane.b32.xlu0 %v1742, 1
        %v1835 = vpop.permute.xlu0 %1834
        %1836 = vrot.lane.b32.xlu0 %v1743, 1
        %v1837 = vpop.permute.xlu0 %1836
        %1838 = vrot.lane.b32.xlu0 %v1744, 1
        %v1839 = vpop.permute.xlu0 %1838
        %1840 = vrot.lane.b32.xlu0 %v1745, 1
        %v1841 = vpop.permute.xlu0 %1840
        %v1858 = vsel %vm203, %v1763, %v1811
        %v1859 = vsel %vm203, %v1765, %v1813
        %v1860 = vsel %vm203, %v1767, %v1815
        %v1861 = vsel %vm203, %v1769, %v1817
        %v1862 = vsel %vm203, %v1771, %v1819
        %v1863 = vsel %vm203, %v1773, %v1821
        %v1864 = vsel %vm203, %v1775, %v1823
        %v1865 = vsel %vm203, %v1777, %v1825
        %v1866 = vsel %vm203, %v1779, %v1827
        %v1867 = vsel %vm203, %v1781, %v1829
        %v1868 = vsel %vm203, %v1783, %v1831
        %v1869 = vsel %vm203, %v1785, %v1833
        %v1870 = vsel %vm203, %v1787, %v1835
        %v1871 = vsel %vm203, %v1789, %v1837
        %v1872 = vsel %vm203, %v1791, %v1839
        %v1873 = vsel %vm203, %v1793, %v1841
        %v1874 = vmul.f32 %v1858, %v1440
        %v1875 = vmul.f32 %v1859, %v1440
        %v1876 = vmul.f32 %v1860, %v1440
        %v1877 = vmul.f32 %v1861, %v1440
        %v1878 = vmul.f32 %v1862, %v1440
        %v1879 = vmul.f32 %v1863, %v1440
        %v1880 = vmul.f32 %v1864, %v1440
        %v1881 = vmul.f32 %v1865, %v1440
        %v1882 = vmul.f32 %v1866, %v1440
        %v1883 = vmul.f32 %v1867, %v1440
        %v1884 = vmul.f32 %v1868, %v1440
        %v1885 = vmul.f32 %v1869, %v1440
        %v1886 = vmul.f32 %v1870, %v1440
        %v1887 = vmul.f32 %v1871, %v1440
        %v1888 = vmul.f32 %v1872, %v1440
        %v1889 = vmul.f32 %v1873, %v1440
        %1890 = vrot.lane.b32.xlu0 %v1730, 127
        %v1891 = vpop.permute.xlu0 %1890
        %1892 = vrot.lane.b32.xlu0 %v1731, 127
        %v1893 = vpop.permute.xlu0 %1892
        %1894 = vrot.lane.b32.xlu0 %v1732, 127
        %v1895 = vpop.permute.xlu0 %1894
        %1896 = vrot.lane.b32.xlu0 %v1733, 127
        %v1897 = vpop.permute.xlu0 %1896
        %1898 = vrot.lane.b32.xlu0 %v1734, 127
        %v1899 = vpop.permute.xlu0 %1898
        %1900 = vrot.lane.b32.xlu0 %v1735, 127
        %v1901 = vpop.permute.xlu0 %1900
        %1902 = vrot.lane.b32.xlu0 %v1736, 127
        %v1903 = vpop.permute.xlu0 %1902
        %1904 = vrot.lane.b32.xlu0 %v1737, 127
        %v1905 = vpop.permute.xlu0 %1904
        %1906 = vrot.lane.b32.xlu0 %v1738, 127
        %v1907 = vpop.permute.xlu0 %1906
        %1908 = vrot.lane.b32.xlu0 %v1739, 127
        %v1909 = vpop.permute.xlu0 %1908
        %1910 = vrot.lane.b32.xlu0 %v1740, 127
        %v1911 = vpop.permute.xlu0 %1910
        %1912 = vrot.lane.b32.xlu0 %v1741, 127
        %v1913 = vpop.permute.xlu0 %1912
        %1914 = vrot.lane.b32.xlu0 %v1742, 127
        %v1915 = vpop.permute.xlu0 %1914
        %1916 = vrot.lane.b32.xlu0 %v1743, 127
        %v1917 = vpop.permute.xlu0 %1916
        %1918 = vrot.lane.b32.xlu0 %v1744, 127
        %v1919 = vpop.permute.xlu0 %1918
        %1920 = vrot.lane.b32.xlu0 %v1745, 127
        %v1921 = vpop.permute.xlu0 %1920
        %1938 = vrot.lane.b32.xlu0 %v1730, 7
        %v1939 = vpop.permute.xlu0 %1938
        %1940 = vrot.lane.b32.xlu0 %v1731, 7
        %v1941 = vpop.permute.xlu0 %1940
        %1942 = vrot.lane.b32.xlu0 %v1732, 7
        %v1943 = vpop.permute.xlu0 %1942
        %1944 = vrot.lane.b32.xlu0 %v1733, 7
        %v1945 = vpop.permute.xlu0 %1944
        %1946 = vrot.lane.b32.xlu0 %v1734, 7
        %v1947 = vpop.permute.xlu0 %1946
        %1948 = vrot.lane.b32.xlu0 %v1735, 7
        %v1949 = vpop.permute.xlu0 %1948
        %1950 = vrot.lane.b32.xlu0 %v1736, 7
        %v1951 = vpop.permute.xlu0 %1950
        %1952 = vrot.lane.b32.xlu0 %v1737, 7
        %v1953 = vpop.permute.xlu0 %1952
        %1954 = vrot.lane.b32.xlu0 %v1738, 7
        %v1955 = vpop.permute.xlu0 %1954
        %1956 = vrot.lane.b32.xlu0 %v1739, 7
        %v1957 = vpop.permute.xlu0 %1956
        %1958 = vrot.lane.b32.xlu0 %v1740, 7
        %v1959 = vpop.permute.xlu0 %1958
        %1960 = vrot.lane.b32.xlu0 %v1741, 7
        %v1961 = vpop.permute.xlu0 %1960
        %1962 = vrot.lane.b32.xlu0 %v1742, 7
        %v1963 = vpop.permute.xlu0 %1962
        %1964 = vrot.lane.b32.xlu0 %v1743, 7
        %v1965 = vpop.permute.xlu0 %1964
        %1966 = vrot.lane.b32.xlu0 %v1744, 7
        %v1967 = vpop.permute.xlu0 %1966
        %1968 = vrot.lane.b32.xlu0 %v1745, 7
        %v1969 = vpop.permute.xlu0 %1968
        %v1986 = vsel %vm1497, %v1891, %v1939
        %v1987 = vsel %vm1497, %v1893, %v1941
        %v1988 = vsel %vm1497, %v1895, %v1943
        %v1989 = vsel %vm1497, %v1897, %v1945
        %v1990 = vsel %vm1497, %v1899, %v1947
        %v1991 = vsel %vm1497, %v1901, %v1949
        %v1992 = vsel %vm1497, %v1903, %v1951
        %v1993 = vsel %vm1497, %v1905, %v1953
        %v1994 = vsel %vm1497, %v1907, %v1955
        %v1995 = vsel %vm1497, %v1909, %v1957
        %v1996 = vsel %vm1497, %v1911, %v1959
        %v1997 = vsel %vm1497, %v1913, %v1961
        %v1998 = vsel %vm1497, %v1915, %v1963
        %v1999 = vsel %vm1497, %v1917, %v1965
        %v2000 = vsel %vm1497, %v1919, %v1967
        %v2001 = vsel %vm1497, %v1921, %v1969
        %v2002 = vmul.f32 %v1986, %v1507
        %v2003 = vmul.f32 %v1987, %v1507
        %v2004 = vmul.f32 %v1988, %v1507
        %v2005 = vmul.f32 %v1989, %v1507
        %v2006 = vmul.f32 %v1990, %v1507
        %v2007 = vmul.f32 %v1991, %v1507
        %v2008 = vmul.f32 %v1992, %v1507
        %v2009 = vmul.f32 %v1993, %v1507
        %v2010 = vmul.f32 %v1994, %v1507
        %v2011 = vmul.f32 %v1995, %v1507
        %v2012 = vmul.f32 %v1996, %v1507
        %v2013 = vmul.f32 %v1997, %v1507
        %v2014 = vmul.f32 %v1998, %v1507
        %v2015 = vmul.f32 %v1999, %v1507
        %v2016 = vmul.f32 %v2000, %v1507
        %v2017 = vmul.f32 %v2001, %v1507
        %v2018 = vld [vmem:[#allocation2 + $0x5c0] sm:$0xff]
        %v2019 = vld [vmem:[#allocation2 + $0x5c8] sm:$0xff]
        %v2020 = vld [vmem:[#allocation2 + $0x5d0] sm:$0xff]
        %v2021 = vld [vmem:[#allocation2 + $0x5d8] sm:$0xff]
        %v2022 = vld [vmem:[#allocation2 + $0x5e0] sm:$0xff]
        %v2023 = vld [vmem:[#allocation2 + $0x5e8] sm:$0xff]
        %v2024 = vld [vmem:[#allocation2 + $0x5f0] sm:$0xff]
        %v2025 = vld [vmem:[#allocation2 + $0x5f8] sm:$0xff]
        %v2026 = vld [vmem:[#allocation2 + $0x600] sm:$0xff]
        %v2027 = vld [vmem:[#allocation2 + $0x608] sm:$0xff]
        %v2028 = vld [vmem:[#allocation2 + $0x610] sm:$0xff]
        %v2029 = vld [vmem:[#allocation2 + $0x618] sm:$0xff]
        %v2030 = vld [vmem:[#allocation2 + $0x620] sm:$0xff]
        %v2031 = vld [vmem:[#allocation2 + $0x628] sm:$0xff]
        %v2032 = vld [vmem:[#allocation2 + $0x630] sm:$0xff]
        %v2033 = vld [vmem:[#allocation2 + $0x638] sm:$0xff]
        %v2034 = vld [vmem:[#allocation2 + $0x640] sm:$0xff]
        %v2035 = vld [vmem:[#allocation2 + $0x648] sm:$0xff]
        %v2036 = vld [vmem:[#allocation2 + $0x650] sm:$0xff]
        %v2037 = vld [vmem:[#allocation2 + $0x658] sm:$0xff]
        %v2038 = vld [vmem:[#allocation2 + $0x660] sm:$0xff]
        %v2039 = vld [vmem:[#allocation2 + $0x668] sm:$0xff]
        %v2040 = vld [vmem:[#allocation2 + $0x670] sm:$0xff]
        %v2041 = vld [vmem:[#allocation2 + $0x678] sm:$0xff]
        %v2042 = vld [vmem:[#allocation2 + $0x680] sm:$0xff]
        %v2043 = vld [vmem:[#allocation2 + $0x688] sm:$0xff]
        %v2044 = vld [vmem:[#allocation2 + $0x690] sm:$0xff]
        %v2045 = vld [vmem:[#allocation2 + $0x698] sm:$0xff]
        %v2046 = vld [vmem:[#allocation2 + $0x6a0] sm:$0xff]
        %v2047 = vld [vmem:[#allocation2 + $0x6a8] sm:$0xff]
        %v2048 = vld [vmem:[#allocation2 + $0x6b0] sm:$0xff]
        %v2049 = vld [vmem:[#allocation2 + $0x6b8] sm:$0xff]
        %v2050 = vld [vmem:[#allocation2 + $0x6c0] sm:$0xff]
        %v2051 = vld [vmem:[#allocation2 + $0x6c8] sm:$0xff]
        %v2052 = vld [vmem:[#allocation2 + $0x6d0] sm:$0xff]
        %v2053 = vld [vmem:[#allocation2 + $0x6d8] sm:$0xff]
        %v2054 = vld [vmem:[#allocation2 + $0x6e0] sm:$0xff]
        %v2055 = vld [vmem:[#allocation2 + $0x6e8] sm:$0xff]
        %v2056 = vld [vmem:[#allocation2 + $0x6f0] sm:$0xff]
        %v2057 = vld [vmem:[#allocation2 + $0x6f8] sm:$0xff]
        %v2058 = vld [vmem:[#allocation2 + $0x700] sm:$0xff]
        %v2059 = vld [vmem:[#allocation2 + $0x708] sm:$0xff]
        %v2060 = vld [vmem:[#allocation2 + $0x710] sm:$0xff]
        %v2061 = vld [vmem:[#allocation2 + $0x718] sm:$0xff]
        %v2062 = vld [vmem:[#allocation2 + $0x720] sm:$0xff]
        %v2063 = vld [vmem:[#allocation2 + $0x728] sm:$0xff]
        %v2064 = vld [vmem:[#allocation2 + $0x730] sm:$0xff]
        %v2065 = vld [vmem:[#allocation2 + $0x738] sm:$0xff]
        %v2066 = vld [vmem:[#allocation2 + $0x740] sm:$0xff]
        %v2067 = vld [vmem:[#allocation2 + $0x748] sm:$0xff]
        %v2068 = vld [vmem:[#allocation2 + $0x750] sm:$0xff]
        %v2069 = vld [vmem:[#allocation2 + $0x758] sm:$0xff]
        %v2070 = vld [vmem:[#allocation2 + $0x760] sm:$0xff]
        %v2071 = vld [vmem:[#allocation2 + $0x768] sm:$0xff]
        %v2072 = vld [vmem:[#allocation2 + $0x770] sm:$0xff]
        %v2073 = vld [vmem:[#allocation2 + $0x778] sm:$0xff]
        %v2074 = vld [vmem:[#allocation2 + $0x780] sm:$0xff]
        %v2075 = vld [vmem:[#allocation2 + $0x788] sm:$0xff]
        %v2076 = vld [vmem:[#allocation2 + $0x790] sm:$0xff]
        %v2077 = vld [vmem:[#allocation2 + $0x798] sm:$0xff]
        %v2078 = vld [vmem:[#allocation2 + $0x7a0] sm:$0xff]
        %v2079 = vld [vmem:[#allocation2 + $0x7a8] sm:$0xff]
        %v2080 = vld [vmem:[#allocation2 + $0x7b0] sm:$0xff]
        %v2081 = vld [vmem:[#allocation2 + $0x7b8] sm:$0xff]
        %v2083 = vsel %vm203, %v2021, 0
        %v2086 = vsel %vm203, %v2025, 0
        %v2089 = vsel %vm203, %v2029, 0
        %v2092 = vsel %vm203, %v2033, 0
        %v2095 = vsel %vm203, %v2037, 0
        %v2098 = vsel %vm203, %v2041, 0
        %v2101 = vsel %vm203, %v2045, 0
        %v2104 = vsel %vm203, %v2049, 0
        %v2107 = vsel %vm203, %v2053, 0
        %v2110 = vsel %vm203, %v2057, 0
        %v2113 = vsel %vm203, %v2061, 0
        %v2116 = vsel %vm203, %v2065, 0
        %v2119 = vsel %vm203, %v2069, 0
        %v2122 = vsel %vm203, %v2073, 0
        %v2125 = vsel %vm203, %v2077, 0
        %v2128 = vsel %vm203, %v2081, 0
        %2130 = vmatpush.msra.mxu0 %v1889
        %2131 = vmatpush.msra.mxu0 %v1888
        %2132 = vmatpush.msra.mxu0 %v1887
        %2133 = vmatpush.msra.mxu0 %v1886
        %2134 = vmatpush.msra.mxu0 %v1885
        %2135 = vmatpush.msra.mxu0 %v1884
        %2136 = vmatpush.msra.mxu0 %v1883
        %2137 = vmatpush.msra.mxu0 %v1882
        %2138 = vmatpush.msra.mxu0 %v1881
        %2139 = vmatpush.msra.mxu0 %v1880
        %2140 = vmatpush.msra.mxu0 %v1879
        %2141 = vmatpush.msra.mxu0 %v1878
        %2142 = vmatpush.msra.mxu0 %v1877
        %2143 = vmatpush.msra.mxu0 %v1876
        %2144 = vmatpush.msra.mxu0 %v1875
        %2145 = vmatpush.msra.mxu0 %v1874
        %2146 = vmatmul.f32.gmra.mxu0 %v2018
        %v2147 = vpop.f32.mrf.mxu0
        %v2148 = vadd.f32 0.0, %v2147
        %2149 = vmatmul.f32.gmra.mxu0 %v2022
        %v2150 = vpop.f32.mrf.mxu0
        %v2151 = vadd.f32 0.0, %v2150
        %2152 = vmatmul.f32.gmra.mxu0 %v2026
        %v2153 = vpop.f32.mrf.mxu0
        %v2154 = vadd.f32 0.0, %v2153
        %2155 = vmatmul.f32.gmra.mxu0 %v2030
        %v2156 = vpop.f32.mrf.mxu0
        %v2157 = vadd.f32 0.0, %v2156
        %2158 = vmatmul.f32.gmra.mxu0 %v2034
        %v2159 = vpop.f32.mrf.mxu0
        %v2160 = vadd.f32 0.0, %v2159
        %2161 = vmatmul.f32.gmra.mxu0 %v2038
        %v2162 = vpop.f32.mrf.mxu0
        %v2163 = vadd.f32 0.0, %v2162
        %2164 = vmatmul.f32.gmra.mxu0 %v2042
        %v2165 = vpop.f32.mrf.mxu0
        %v2166 = vadd.f32 0.0, %v2165
        %2167 = vmatmul.f32.gmra.mxu0 %v2046
        %v2168 = vpop.f32.mrf.mxu0
        %v2169 = vadd.f32 0.0, %v2168
        %2170 = vmatmul.f32.gmra.mxu0 %v2050
        %v2171 = vpop.f32.mrf.mxu0
        %v2172 = vadd.f32 0.0, %v2171
        %2173 = vmatmul.f32.gmra.mxu0 %v2054
        %v2174 = vpop.f32.mrf.mxu0
        %v2175 = vadd.f32 0.0, %v2174
        %2176 = vmatmul.f32.gmra.mxu0 %v2058
        %v2177 = vpop.f32.mrf.mxu0
        %v2178 = vadd.f32 0.0, %v2177
        %2179 = vmatmul.f32.gmra.mxu0 %v2062
        %v2180 = vpop.f32.mrf.mxu0
        %v2181 = vadd.f32 0.0, %v2180
        %2182 = vmatmul.f32.gmra.mxu0 %v2066
        %v2183 = vpop.f32.mrf.mxu0
        %v2184 = vadd.f32 0.0, %v2183
        %2185 = vmatmul.f32.gmra.mxu0 %v2070
        %v2186 = vpop.f32.mrf.mxu0
        %v2187 = vadd.f32 0.0, %v2186
        %2188 = vmatmul.f32.gmra.mxu0 %v2074
        %v2189 = vpop.f32.mrf.mxu0
        %v2190 = vadd.f32 0.0, %v2189
        %2191 = vmatmul.f32.gmra.mxu0 %v2078
        %v2192 = vpop.f32.mrf.mxu0
        %v2193 = vadd.f32 0.0, %v2192
        %2194 = vdwg.mxu0
        %2195 = vmatpush.msra.mxu0 %v1745
        %2196 = vmatpush.msra.mxu0 %v1744
        %2197 = vmatpush.msra.mxu0 %v1743
        %2198 = vmatpush.msra.mxu0 %v1742
        %2199 = vmatpush.msra.mxu0 %v1741
        %2200 = vmatpush.msra.mxu0 %v1740
        %2201 = vmatpush.msra.mxu0 %v1739
        %2202 = vmatpush.msra.mxu0 %v1738
        %2203 = vmatpush.msra.mxu0 %v1737
        %2204 = vmatpush.msra.mxu0 %v1736
        %2205 = vmatpush.msra.mxu0 %v1735
        %2206 = vmatpush.msra.mxu0 %v1734
        %2207 = vmatpush.msra.mxu0 %v1733
        %2208 = vmatpush.msra.mxu0 %v1732
        %2209 = vmatpush.msra.mxu0 %v1731
        %2210 = vmatpush.msra.mxu0 %v1730
        %2211 = vmatmul.f32.gmra.mxu0 %v2019
        %v2212 = vpop.f32.mrf.mxu0
        %v2213 = vadd.f32 %v2148, %v2212
        %2214 = vmatmul.f32.gmra.mxu0 %v2023
        %v2215 = vpop.f32.mrf.mxu0
        %v2216 = vadd.f32 %v2151, %v2215
        %2217 = vmatmul.f32.gmra.mxu0 %v2027
        %v2218 = vpop.f32.mrf.mxu0
        %v2219 = vadd.f32 %v2154, %v2218
        %2220 = vmatmul.f32.gmra.mxu0 %v2031
        %v2221 = vpop.f32.mrf.mxu0
        %v2222 = vadd.f32 %v2157, %v2221
        %2223 = vmatmul.f32.gmra.mxu0 %v2035
        %v2224 = vpop.f32.mrf.mxu0
        %v2225 = vadd.f32 %v2160, %v2224
        %2226 = vmatmul.f32.gmra.mxu0 %v2039
        %v2227 = vpop.f32.mrf.mxu0
        %v2228 = vadd.f32 %v2163, %v2227
        %2229 = vmatmul.f32.gmra.mxu0 %v2043
        %v2230 = vpop.f32.mrf.mxu0
        %v2231 = vadd.f32 %v2166, %v2230
        %2232 = vmatmul.f32.gmra.mxu0 %v2047
        %v2233 = vpop.f32.mrf.mxu0
        %v2234 = vadd.f32 %v2169, %v2233
        %2235 = vmatmul.f32.gmra.mxu0 %v2051
        %v2236 = vpop.f32.mrf.mxu0
        %v2237 = vadd.f32 %v2172, %v2236
        %2238 = vmatmul.f32.gmra.mxu0 %v2055
        %v2239 = vpop.f32.mrf.mxu0
        %v2240 = vadd.f32 %v2175, %v2239
        %2241 = vmatmul.f32.gmra.mxu0 %v2059
        %v2242 = vpop.f32.mrf.mxu0
        %v2243 = vadd.f32 %v2178, %v2242
        %2244 = vmatmul.f32.gmra.mxu0 %v2063
        %v2245 = vpop.f32.mrf.mxu0
        %v2246 = vadd.f32 %v2181, %v2245
        %2247 = vmatmul.f32.gmra.mxu0 %v2067
        %v2248 = vpop.f32.mrf.mxu0
        %v2249 = vadd.f32 %v2184, %v2248
        %2250 = vmatmul.f32.gmra.mxu0 %v2071
        %v2251 = vpop.f32.mrf.mxu0
        %v2252 = vadd.f32 %v2187, %v2251
        %2253 = vmatmul.f32.gmra.mxu0 %v2075
        %v2254 = vpop.f32.mrf.mxu0
        %v2255 = vadd.f32 %v2190, %v2254
        %2256 = vmatmul.f32.gmra.mxu0 %v2079
        %v2257 = vpop.f32.mrf.mxu0
        %v2258 = vadd.f32 %v2193, %v2257
        %2259 = vdwg.mxu0
        %2260 = vmatpush.msra.mxu0 %v2017
        %2261 = vmatpush.msra.mxu0 %v2016
        %2262 = vmatpush.msra.mxu0 %v2015
        %2263 = vmatpush.msra.mxu0 %v2014
        %2264 = vmatpush.msra.mxu0 %v2013
        %2265 = vmatpush.msra.mxu0 %v2012
        %2266 = vmatpush.msra.mxu0 %v2011
        %2267 = vmatpush.msra.mxu0 %v2010
        %2268 = vmatpush.msra.mxu0 %v2009
        %2269 = vmatpush.msra.mxu0 %v2008
        %2270 = vmatpush.msra.mxu0 %v2007
        %2271 = vmatpush.msra.mxu0 %v2006
        %2272 = vmatpush.msra.mxu0 %v2005
        %2273 = vmatpush.msra.mxu0 %v2004
        %2274 = vmatpush.msra.mxu0 %v2003
        %2275 = vmatpush.msra.mxu0 %v2002
        %2276 = vmatmul.f32.gmra.mxu0 %v2020
        %v2277 = vpop.f32.mrf.mxu0
        %v2278 = vadd.f32 %v2213, %v2277
        %2279 = vmatmul.f32.gmra.mxu0 %v2024
        %v2280 = vpop.f32.mrf.mxu0
        %v2281 = vadd.f32 %v2216, %v2280
        %2282 = vmatmul.f32.gmra.mxu0 %v2028
        %v2283 = vpop.f32.mrf.mxu0
        %v2284 = vadd.f32 %v2219, %v2283
        %2285 = vmatmul.f32.gmra.mxu0 %v2032
        %v2286 = vpop.f32.mrf.mxu0
        %v2287 = vadd.f32 %v2222, %v2286
        %2288 = vmatmul.f32.gmra.mxu0 %v2036
        %v2289 = vpop.f32.mrf.mxu0
        %v2290 = vadd.f32 %v2225, %v2289
        %2291 = vmatmul.f32.gmra.mxu0 %v2040
        %v2292 = vpop.f32.mrf.mxu0
        %v2293 = vadd.f32 %v2228, %v2292
        %2294 = vmatmul.f32.gmra.mxu0 %v2044
        %v2295 = vpop.f32.mrf.mxu0
        %v2296 = vadd.f32 %v2231, %v2295
        %2297 = vmatmul.f32.gmra.mxu0 %v2048
        %v2298 = vpop.f32.mrf.mxu0
        %v2299 = vadd.f32 %v2234, %v2298
        %2300 = vmatmul.f32.gmra.mxu0 %v2052
        %v2301 = vpop.f32.mrf.mxu0
        %v2302 = vadd.f32 %v2237, %v2301
        %2303 = vmatmul.f32.gmra.mxu0 %v2056
        %v2304 = vpop.f32.mrf.mxu0
        %v2305 = vadd.f32 %v2240, %v2304
        %2306 = vmatmul.f32.gmra.mxu0 %v2060
        %v2307 = vpop.f32.mrf.mxu0
        %v2308 = vadd.f32 %v2243, %v2307
        %2309 = vmatmul.f32.gmra.mxu0 %v2064
        %v2310 = vpop.f32.mrf.mxu0
        %v2311 = vadd.f32 %v2246, %v2310
        %2312 = vmatmul.f32.gmra.mxu0 %v2068
        %v2313 = vpop.f32.mrf.mxu0
        %v2314 = vadd.f32 %v2249, %v2313
        %2315 = vmatmul.f32.gmra.mxu0 %v2072
        %v2316 = vpop.f32.mrf.mxu0
        %v2317 = vadd.f32 %v2252, %v2316
        %2318 = vmatmul.f32.gmra.mxu0 %v2076
        %v2319 = vpop.f32.mrf.mxu0
        %v2320 = vadd.f32 %v2255, %v2319
        %2321 = vmatmul.f32.gmra.mxu0 %v2080
        %v2322 = vpop.f32.mrf.mxu0
        %v2323 = vadd.f32 %v2258, %v2322
        %2324 = vdwg.mxu0
        %2325 = vmatpush.msra.mxu0 0.0
        %2326 = vmatpush.msra.mxu0 0.0
        %2327 = vmatpush.msra.mxu0 0.0
        %2328 = vmatpush.msra.mxu0 0.0
        %2329 = vmatpush.msra.mxu0 0.0
        %2330 = vmatpush.msra.mxu0 0.0
        %2331 = vmatpush.msra.mxu0 0.0
        %2332 = vmatpush.msra.mxu0 0.0
        %2333 = vmatpush.msra.mxu0 0.0
        %2334 = vmatpush.msra.mxu0 0.0
        %2335 = vmatpush.msra.mxu0 0.0
        %2336 = vmatpush.msra.mxu0 0.0
        %2337 = vmatpush.msra.mxu0 0.0
        %2338 = vmatpush.msra.mxu0 0.0
        %2339 = vmatpush.msra.mxu0 0.0
        %2340 = vmatpush.msra.mxu0 %v1598
        %2341 = vmatmul.f32.gmra.mxu0 %v2083
        %v2342 = vpop.f32.mrf.mxu0
        %v2343 = vadd.f32 %v2278, %v2342
        %2344 = vmatmul.f32.gmra.mxu0 %v2086
        %v2345 = vpop.f32.mrf.mxu0
        %v2346 = vadd.f32 %v2281, %v2345
        %2347 = vmatmul.f32.gmra.mxu0 %v2089
        %v2348 = vpop.f32.mrf.mxu0
        %v2349 = vadd.f32 %v2284, %v2348
        %2350 = vmatmul.f32.gmra.mxu0 %v2092
        %v2351 = vpop.f32.mrf.mxu0
        %v2352 = vadd.f32 %v2287, %v2351
        %2353 = vmatmul.f32.gmra.mxu0 %v2095
        %v2354 = vpop.f32.mrf.mxu0
        %v2355 = vadd.f32 %v2290, %v2354
        %2356 = vmatmul.f32.gmra.mxu0 %v2098
        %v2357 = vpop.f32.mrf.mxu0
        %v2358 = vadd.f32 %v2293, %v2357
        %2359 = vmatmul.f32.gmra.mxu0 %v2101
        %v2360 = vpop.f32.mrf.mxu0
        %v2361 = vadd.f32 %v2296, %v2360
        %2362 = vmatmul.f32.gmra.mxu0 %v2104
        %v2363 = vpop.f32.mrf.mxu0
        %v2364 = vadd.f32 %v2299, %v2363
        %2365 = vmatmul.f32.gmra.mxu0 %v2107
        %v2366 = vpop.f32.mrf.mxu0
        %v2367 = vadd.f32 %v2302, %v2366
        %2368 = vmatmul.f32.gmra.mxu0 %v2110
        %v2369 = vpop.f32.mrf.mxu0
        %v2370 = vadd.f32 %v2305, %v2369
        %2371 = vmatmul.f32.gmra.mxu0 %v2113
        %v2372 = vpop.f32.mrf.mxu0
        %v2373 = vadd.f32 %v2308, %v2372
        %2374 = vmatmul.f32.gmra.mxu0 %v2116
        %v2375 = vpop.f32.mrf.mxu0
        %v2376 = vadd.f32 %v2311, %v2375
        %2377 = vmatmul.f32.gmra.mxu0 %v2119
        %v2378 = vpop.f32.mrf.mxu0
        %v2379 = vadd.f32 %v2314, %v2378
        %2380 = vmatmul.f32.gmra.mxu0 %v2122
        %v2381 = vpop.f32.mrf.mxu0
        %v2382 = vadd.f32 %v2317, %v2381
        %2383 = vmatmul.f32.gmra.mxu0 %v2125
        %v2384 = vpop.f32.mrf.mxu0
        %v2385 = vadd.f32 %v2320, %v2384
        %2386 = vmatmul.f32.gmra.mxu0 %v2128
        %v2387 = vpop.f32.mrf.mxu0
        %v2388 = vadd.f32 %v2323, %v2387
        %2389 = vdwg.mxu0
        %v2390 = vmax.f32 %v2343, 0.0
        %v2391 = vmax.f32 %v2346, 0.0
        %v2392 = vmax.f32 %v2349, 0.0
        %v2393 = vmax.f32 %v2352, 0.0
        %v2394 = vmax.f32 %v2355, 0.0
        %v2395 = vmax.f32 %v2358, 0.0
        %v2396 = vmax.f32 %v2361, 0.0
        %v2397 = vmax.f32 %v2364, 0.0
        %v2398 = vmax.f32 %v2367, 0.0
        %v2399 = vmax.f32 %v2370, 0.0
        %v2400 = vmax.f32 %v2373, 0.0
        %v2401 = vmax.f32 %v2376, 0.0
        %v2402 = vmax.f32 %v2379, 0.0
        %v2403 = vmax.f32 %v2382, 0.0
        %v2404 = vmax.f32 %v2385, 0.0
        %v2405 = vmax.f32 %v2388, 0.0
        %2406 = vrot.lane.b32.xlu0 %v1227, 113
        %v2407 = vpop.permute.xlu0 %2406
        %2408 = vrot.lane.b32.xlu0 %v1228, 113
        %v2409 = vpop.permute.xlu0 %2408
        %2410 = vrot.lane.b32.xlu0 %v1229, 113
        %v2411 = vpop.permute.xlu0 %2410
        %2412 = vrot.lane.b32.xlu0 %v1230, 113
        %v2413 = vpop.permute.xlu0 %2412
        %2414 = vrot.lane.b32.xlu0 %v1231, 113
        %v2415 = vpop.permute.xlu0 %2414
        %2416 = vrot.lane.b32.xlu0 %v1232, 113
        %v2417 = vpop.permute.xlu0 %2416
        %2418 = vrot.lane.b32.xlu0 %v1233, 113
        %v2419 = vpop.permute.xlu0 %2418
        %2420 = vrot.lane.b32.xlu0 %v1234, 113
        %v2421 = vpop.permute.xlu0 %2420
        %2430 = vrot.lane.b32.xlu0 %v1227, 1
        %v2431 = vpop.permute.xlu0 %2430
        %2432 = vrot.lane.b32.xlu0 %v1228, 1
        %v2433 = vpop.permute.xlu0 %2432
        %2434 = vrot.lane.b32.xlu0 %v1229, 1
        %v2435 = vpop.permute.xlu0 %2434
        %2436 = vrot.lane.b32.xlu0 %v1230, 1
        %v2437 = vpop.permute.xlu0 %2436
        %2438 = vrot.lane.b32.xlu0 %v1231, 1
        %v2439 = vpop.permute.xlu0 %2438
        %2440 = vrot.lane.b32.xlu0 %v1232, 1
        %v2441 = vpop.permute.xlu0 %2440
        %2442 = vrot.lane.b32.xlu0 %v1233, 1
        %v2443 = vpop.permute.xlu0 %2442
        %2444 = vrot.lane.b32.xlu0 %v1234, 1
        %v2445 = vpop.permute.xlu0 %2444
        %v2454 = vsel %vm203, %v2407, %v2431
        %v2455 = vsel %vm203, %v2409, %v2433
        %v2456 = vsel %vm203, %v2411, %v2435
        %v2457 = vsel %vm203, %v2413, %v2437
        %v2458 = vsel %vm203, %v2415, %v2439
        %v2459 = vsel %vm203, %v2417, %v2441
        %v2460 = vsel %vm203, %v2419, %v2443
        %v2461 = vsel %vm203, %v2421, %v2445
        %v2462 = vmul.f32 %v2454, %v843
        %v2463 = vmul.f32 %v2455, %v843
        %v2464 = vmul.f32 %v2456, %v843
        %v2465 = vmul.f32 %v2457, %v843
        %v2466 = vmul.f32 %v2458, %v843
        %v2467 = vmul.f32 %v2459, %v843
        %v2468 = vmul.f32 %v2460, %v843
        %v2469 = vmul.f32 %v2461, %v843
        %v2470 = vmul.f32 %v1291, %v878
        %v2471 = vmul.f32 %v1292, %v878
        %v2472 = vmul.f32 %v1293, %v878
        %v2473 = vmul.f32 %v1294, %v878
        %v2474 = vmul.f32 %v1295, %v878
        %v2475 = vmul.f32 %v1296, %v878
        %v2476 = vmul.f32 %v1297, %v878
        %v2477 = vmul.f32 %v1298, %v878
        %v2478 = vld [vmem:[#allocation2 + $0xf40] sm:$0xff]
        %v2479 = vld [vmem:[#allocation2 + $0xf48] sm:$0xff]
        %v2480 = vld [vmem:[#allocation2 + $0xf60] sm:$0xff]
        %v2481 = vld [vmem:[#allocation2 + $0xf68] sm:$0xff]
        %v2482 = vld [vmem:[#allocation2 + $0xf80] sm:$0xff]
        %v2483 = vld [vmem:[#allocation2 + $0xf88] sm:$0xff]
        %v2484 = vld [vmem:[#allocation2 + $0xfa0] sm:$0xff]
        %v2485 = vld [vmem:[#allocation2 + $0xfa8] sm:$0xff]
        %v2486 = vld [vmem:[#allocation2 + $0xfc0] sm:$0xff]
        %v2487 = vld [vmem:[#allocation2 + $0xfc8] sm:$0xff]
        %v2488 = vld [vmem:[#allocation2 + $0xfe0] sm:$0xff]
        %v2489 = vld [vmem:[#allocation2 + $0xfe8] sm:$0xff]
        %v2490 = vld [vmem:[#allocation2 + $0x1000] sm:$0xff]
        %v2491 = vld [vmem:[#allocation2 + $0x1008] sm:$0xff]
        %v2492 = vld [vmem:[#allocation2 + $0x1020] sm:$0xff]
        %v2493 = vld [vmem:[#allocation2 + $0x1028] sm:$0xff]
        %v2494 = vld [vmem:[#allocation2 + $0x1040] sm:$0xff]
        %v2495 = vld [vmem:[#allocation2 + $0x1048] sm:$0xff]
        %v2496 = vld [vmem:[#allocation2 + $0x1060] sm:$0xff]
        %v2497 = vld [vmem:[#allocation2 + $0x1068] sm:$0xff]
        %v2498 = vld [vmem:[#allocation2 + $0x1080] sm:$0xff]
        %v2499 = vld [vmem:[#allocation2 + $0x1088] sm:$0xff]
        %v2500 = vld [vmem:[#allocation2 + $0x10a0] sm:$0xff]
        %v2501 = vld [vmem:[#allocation2 + $0x10a8] sm:$0xff]
        %v2502 = vld [vmem:[#allocation2 + $0x10c0] sm:$0xff]
        %v2503 = vld [vmem:[#allocation2 + $0x10c8] sm:$0xff]
        %v2504 = vld [vmem:[#allocation2 + $0x10e0] sm:$0xff]
        %v2505 = vld [vmem:[#allocation2 + $0x10e8] sm:$0xff]
        %v2506 = vld [vmem:[#allocation2 + $0x1100] sm:$0xff]
        %v2507 = vld [vmem:[#allocation2 + $0x1108] sm:$0xff]
        %v2508 = vld [vmem:[#allocation2 + $0x1120] sm:$0xff]
        %v2509 = vld [vmem:[#allocation2 + $0x1128] sm:$0xff]
        %v2511 = vsel %vm1120, %v2479, 0
        %v2514 = vsel %vm1120, %v2481, 0
        %v2517 = vsel %vm1120, %v2483, 0
        %v2520 = vsel %vm1120, %v2485, 0
        %v2523 = vsel %vm1120, %v2487, 0
        %v2526 = vsel %vm1120, %v2489, 0
        %v2529 = vsel %vm1120, %v2491, 0
        %v2532 = vsel %vm1120, %v2493, 0
        %v2535 = vsel %vm1120, %v2495, 0
        %v2538 = vsel %vm1120, %v2497, 0
        %v2541 = vsel %vm1120, %v2499, 0
        %v2544 = vsel %vm1120, %v2501, 0
        %v2547 = vsel %vm1120, %v2503, 0
        %v2550 = vsel %vm1120, %v2505, 0
        %v2553 = vsel %vm1120, %v2507, 0
        %v2556 = vsel %vm1120, %v2509, 0
        %2558 = vmatpush.msra.mxu0 %v1234
        %2559 = vmatpush.msra.mxu0 %v1233
        %2560 = vmatpush.msra.mxu0 %v1232
        %2561 = vmatpush.msra.mxu0 %v1231
        %2562 = vmatpush.msra.mxu0 %v1230
        %2563 = vmatpush.msra.mxu0 %v1229
        %2564 = vmatpush.msra.mxu0 %v1228
        %2565 = vmatpush.msra.mxu0 %v1227
        %2566 = vmatpush.msra.mxu0 %v2469
        %2567 = vmatpush.msra.mxu0 %v2468
        %2568 = vmatpush.msra.mxu0 %v2467
        %2569 = vmatpush.msra.mxu0 %v2466
        %2570 = vmatpush.msra.mxu0 %v2465
        %2571 = vmatpush.msra.mxu0 %v2464
        %2572 = vmatpush.msra.mxu0 %v2463
        %2573 = vmatpush.msra.mxu0 %v2462
        %2574 = vmatmul.f32.gmra.mxu0 %v2478
        %v2575 = vpop.f32.mrf.mxu0
        %v2576 = vadd.f32 0.0, %v2575
        %2577 = vmatmul.f32.gmra.mxu0 %v2480
        %v2578 = vpop.f32.mrf.mxu0
        %v2579 = vadd.f32 0.0, %v2578
        %2580 = vmatmul.f32.gmra.mxu0 %v2482
        %v2581 = vpop.f32.mrf.mxu0
        %v2582 = vadd.f32 0.0, %v2581
        %2583 = vmatmul.f32.gmra.mxu0 %v2484
        %v2584 = vpop.f32.mrf.mxu0
        %v2585 = vadd.f32 0.0, %v2584
        %2586 = vmatmul.f32.gmra.mxu0 %v2486
        %v2587 = vpop.f32.mrf.mxu0
        %v2588 = vadd.f32 0.0, %v2587
        %2589 = vmatmul.f32.gmra.mxu0 %v2488
        %v2590 = vpop.f32.mrf.mxu0
        %v2591 = vadd.f32 0.0, %v2590
        %2592 = vmatmul.f32.gmra.mxu0 %v2490
        %v2593 = vpop.f32.mrf.mxu0
        %v2594 = vadd.f32 0.0, %v2593
        %2595 = vmatmul.f32.gmra.mxu0 %v2492
        %v2596 = vpop.f32.mrf.mxu0
        %v2597 = vadd.f32 0.0, %v2596
        %2598 = vmatmul.f32.gmra.mxu0 %v2494
        %v2599 = vpop.f32.mrf.mxu0
        %v2600 = vadd.f32 0.0, %v2599
        %2601 = vmatmul.f32.gmra.mxu0 %v2496
        %v2602 = vpop.f32.mrf.mxu0
        %v2603 = vadd.f32 0.0, %v2602
        %2604 = vmatmul.f32.gmra.mxu0 %v2498
        %v2605 = vpop.f32.mrf.mxu0
        %v2606 = vadd.f32 0.0, %v2605
        %2607 = vmatmul.f32.gmra.mxu0 %v2500
        %v2608 = vpop.f32.mrf.mxu0
        %v2609 = vadd.f32 0.0, %v2608
        %2610 = vmatmul.f32.gmra.mxu0 %v2502
        %v2611 = vpop.f32.mrf.mxu0
        %v2612 = vadd.f32 0.0, %v2611
        %2613 = vmatmul.f32.gmra.mxu0 %v2504
        %v2614 = vpop.f32.mrf.mxu0
        %v2615 = vadd.f32 0.0, %v2614
        %2616 = vmatmul.f32.gmra.mxu0 %v2506
        %v2617 = vpop.f32.mrf.mxu0
        %v2618 = vadd.f32 0.0, %v2617
        %2619 = vmatmul.f32.gmra.mxu0 %v2508
        %v2620 = vpop.f32.mrf.mxu0
        %v2621 = vadd.f32 0.0, %v2620
        %2622 = vdwg.mxu0
        %2623 = vmatpush.msra.mxu0 0.0
        %2624 = vmatpush.msra.mxu0 0.0
        %2625 = vmatpush.msra.mxu0 0.0
        %2626 = vmatpush.msra.mxu0 0.0
        %2627 = vmatpush.msra.mxu0 0.0
        %2628 = vmatpush.msra.mxu0 0.0
        %2629 = vmatpush.msra.mxu0 0.0
        %2630 = vmatpush.msra.mxu0 %v917
        %2631 = vmatpush.msra.mxu0 %v2477
        %2632 = vmatpush.msra.mxu0 %v2476
        %2633 = vmatpush.msra.mxu0 %v2475
        %2634 = vmatpush.msra.mxu0 %v2474
        %2635 = vmatpush.msra.mxu0 %v2473
        %2636 = vmatpush.msra.mxu0 %v2472
        %2637 = vmatpush.msra.mxu0 %v2471
        %2638 = vmatpush.msra.mxu0 %v2470
        %2639 = vmatmul.f32.gmra.mxu0 %v2511
        %v2640 = vpop.f32.mrf.mxu0
        %v2641 = vadd.f32 %v2576, %v2640
        %2642 = vmatmul.f32.gmra.mxu0 %v2514
        %v2643 = vpop.f32.mrf.mxu0
        %v2644 = vadd.f32 %v2579, %v2643
        %2645 = vmatmul.f32.gmra.mxu0 %v2517
        %v2646 = vpop.f32.mrf.mxu0
        %v2647 = vadd.f32 %v2582, %v2646
        %2648 = vmatmul.f32.gmra.mxu0 %v2520
        %v2649 = vpop.f32.mrf.mxu0
        %v2650 = vadd.f32 %v2585, %v2649
        %2651 = vmatmul.f32.gmra.mxu0 %v2523
        %v2652 = vpop.f32.mrf.mxu0
        %v2653 = vadd.f32 %v2588, %v2652
        %2654 = vmatmul.f32.gmra.mxu0 %v2526
        %v2655 = vpop.f32.mrf.mxu0
        %v2656 = vadd.f32 %v2591, %v2655
        %2657 = vmatmul.f32.gmra.mxu0 %v2529
        %v2658 = vpop.f32.mrf.mxu0
        %v2659 = vadd.f32 %v2594, %v2658
        %2660 = vmatmul.f32.gmra.mxu0 %v2532
        %v2661 = vpop.f32.mrf.mxu0
        %v2662 = vadd.f32 %v2597, %v2661
        %2663 = vmatmul.f32.gmra.mxu0 %v2535
        %v2664 = vpop.f32.mrf.mxu0
        %v2665 = vadd.f32 %v2600, %v2664
        %2666 = vmatmul.f32.gmra.mxu0 %v2538
        %v2667 = vpop.f32.mrf.mxu0
        %v2668 = vadd.f32 %v2603, %v2667
        %2669 = vmatmul.f32.gmra.mxu0 %v2541
        %v2670 = vpop.f32.mrf.mxu0
        %v2671 = vadd.f32 %v2606, %v2670
        %2672 = vmatmul.f32.gmra.mxu0 %v2544
        %v2673 = vpop.f32.mrf.mxu0
        %v2674 = vadd.f32 %v2609, %v2673
        %2675 = vmatmul.f32.gmra.mxu0 %v2547
        %v2676 = vpop.f32.mrf.mxu0
        %v2677 = vadd.f32 %v2612, %v2676
        %2678 = vmatmul.f32.gmra.mxu0 %v2550
        %v2679 = vpop.f32.mrf.mxu0
        %v2680 = vadd.f32 %v2615, %v2679
        %2681 = vmatmul.f32.gmra.mxu0 %v2553
        %v2682 = vpop.f32.mrf.mxu0
        %v2683 = vadd.f32 %v2618, %v2682
        %2684 = vmatmul.f32.gmra.mxu0 %v2556
        %v2685 = vpop.f32.mrf.mxu0
        %v2686 = vadd.f32 %v2621, %v2685
        %2687 = vdwg.mxu0
        %v2689 = vsel %vm1309, %v2641, 0
        %v2692 = vsel %vm1309, %v2644, 0
        %v2695 = vsel %vm1309, %v2647, 0
        %v2698 = vsel %vm1309, %v2650, 0
        %v2701 = vsel %vm1309, %v2653, 0
        %v2704 = vsel %vm1309, %v2656, 0
        %v2707 = vsel %vm1309, %v2659, 0
        %v2710 = vsel %vm1309, %v2662, 0
        %v2713 = vsel %vm1309, %v2665, 0
        %v2716 = vsel %vm1309, %v2668, 0
        %v2719 = vsel %vm1309, %v2671, 0
        %v2722 = vsel %vm1309, %v2674, 0
        %v2725 = vsel %vm1309, %v2677, 0
        %v2728 = vsel %vm1309, %v2680, 0
        %v2731 = vsel %vm1309, %v2683, 0
        %v2734 = vsel %vm1309, %v2686, 0
        %2736 = vmatpush.msra.mxu0 0.0
        %2737 = vmatpush.msra.mxu0 0.0
        %2738 = vmatpush.msra.mxu0 0.0
        %2739 = vmatpush.msra.mxu0 0.0
        %2740 = vmatpush.msra.mxu0 0.0
        %2741 = vmatpush.msra.mxu0 0.0
        %2742 = vmatpush.msra.mxu0 0.0
        %2743 = vmatpush.msra.mxu0 0.0
        %2744 = vmatpush.msra.mxu0 0.0
        %2745 = vmatpush.msra.mxu0 0.0
        %2746 = vmatpush.msra.mxu0 0.0
        %2747 = vmatpush.msra.mxu0 0.0
        %2748 = vmatpush.msra.mxu0 0.0
        %2749 = vmatpush.msra.mxu0 0.0
        %2750 = vmatpush.msra.mxu0 %v1308
        %2751 = vmatpush.msra.mxu0 %v1307
        %2752 = vmatmul.f32.gmra.mxu0 %v2689
        %v2753 = vpop.f32.mrf.mxu0
        %v2754 = vadd.f32 %v2390, %v2753
        %2755 = vmatmul.f32.gmra.mxu0 %v2692
        %v2756 = vpop.f32.mrf.mxu0
        %v2757 = vadd.f32 %v2391, %v2756
        %2758 = vmatmul.f32.gmra.mxu0 %v2695
        %v2759 = vpop.f32.mrf.mxu0
        %v2760 = vadd.f32 %v2392, %v2759
        %2761 = vmatmul.f32.gmra.mxu0 %v2698
        %v2762 = vpop.f32.mrf.mxu0
        %v2763 = vadd.f32 %v2393, %v2762
        %2764 = vmatmul.f32.gmra.mxu0 %v2701
        %v2765 = vpop.f32.mrf.mxu0
        %v2766 = vadd.f32 %v2394, %v2765
        %2767 = vmatmul.f32.gmra.mxu0 %v2704
        %v2768 = vpop.f32.mrf.mxu0
        %v2769 = vadd.f32 %v2395, %v2768
        %2770 = vmatmul.f32.gmra.mxu0 %v2707
        %v2771 = vpop.f32.mrf.mxu0
        %v2772 = vadd.f32 %v2396, %v2771
        %2773 = vmatmul.f32.gmra.mxu0 %v2710
        %v2774 = vpop.f32.mrf.mxu0
        %v2775 = vadd.f32 %v2397, %v2774
        %2776 = vmatmul.f32.gmra.mxu0 %v2713
        %v2777 = vpop.f32.mrf.mxu0
        %v2778 = vadd.f32 %v2398, %v2777
        %2779 = vmatmul.f32.gmra.mxu0 %v2716
        %v2780 = vpop.f32.mrf.mxu0
        %v2781 = vadd.f32 %v2399, %v2780
        %2782 = vmatmul.f32.gmra.mxu0 %v2719
        %v2783 = vpop.f32.mrf.mxu0
        %v2784 = vadd.f32 %v2400, %v2783
        %2785 = vmatmul.f32.gmra.mxu0 %v2722
        %v2786 = vpop.f32.mrf.mxu0
        %v2787 = vadd.f32 %v2401, %v2786
        %2788 = vmatmul.f32.gmra.mxu0 %v2725
        %v2789 = vpop.f32.mrf.mxu0
        %v2790 = vadd.f32 %v2402, %v2789
        %2791 = vmatmul.f32.gmra.mxu0 %v2728
        %v2792 = vpop.f32.mrf.mxu0
        %v2793 = vadd.f32 %v2403, %v2792
        %2794 = vmatmul.f32.gmra.mxu0 %v2731
        %v2795 = vpop.f32.mrf.mxu0
        %v2796 = vadd.f32 %v2404, %v2795
        %2797 = vmatmul.f32.gmra.mxu0 %v2734
        %v2798 = vpop.f32.mrf.mxu0
        %v2799 = vadd.f32 %v2405, %v2798
        %2800 = vdwg.mxu0
        %v2801 = vmax.f32 %v2754, 0.0
        %v2802 = vmax.f32 %v2757, 0.0
        %v2803 = vmax.f32 %v2760, 0.0
        %v2804 = vmax.f32 %v2763, 0.0
        %v2805 = vmax.f32 %v2766, 0.0
        %v2806 = vmax.f32 %v2769, 0.0
        %v2807 = vmax.f32 %v2772, 0.0
        %v2808 = vmax.f32 %v2775, 0.0
        %v2809 = vmax.f32 %v2778, 0.0
        %v2810 = vmax.f32 %v2781, 0.0
        %v2811 = vmax.f32 %v2784, 0.0
        %v2812 = vmax.f32 %v2787, 0.0
        %v2813 = vmax.f32 %v2790, 0.0
        %v2814 = vmax.f32 %v2793, 0.0
        %v2815 = vmax.f32 %v2796, 0.0
        %v2816 = vmax.f32 %v2799, 0.0
        %s2817 = scalar_lea.vmem [#allocation2], 4416
        %v2818 = vld [vmem:[%s2817] ss:$8 sm:$0x3]
        %v2820 = vperm.slane %v2818, 0
        %v2821 = vperm.slane %v2818, 1
        %v2823 = vsel %vm203, %v2821, 0
        %2825 = vmatpush.msra.mxu0 %v2816
        %2826 = vmatpush.msra.mxu0 %v2815
        %2827 = vmatpush.msra.mxu0 %v2814
        %2828 = vmatpush.msra.mxu0 %v2813
        %2829 = vmatpush.msra.mxu0 %v2812
        %2830 = vmatpush.msra.mxu0 %v2811
        %2831 = vmatpush.msra.mxu0 %v2810
        %2832 = vmatpush.msra.mxu0 %v2809
        %2833 = vmatpush.msra.mxu0 %v2808
        %2834 = vmatpush.msra.mxu0 %v2807
        %2835 = vmatpush.msra.mxu0 %v2806
        %2836 = vmatpush.msra.mxu0 %v2805
        %2837 = vmatpush.msra.mxu0 %v2804
        %2838 = vmatpush.msra.mxu0 %v2803
        %2839 = vmatpush.msra.mxu0 %v2802
        %2840 = vmatpush.msra.mxu0 %v2801
        %2841 = vmatmul.f32.gmra.mxu0 %v2820
        %v2842 = vpop.f32.mrf.mxu0
        %v2843 = vadd.f32 0.0, %v2842
        %2844 = vdwg.mxu0
        %2845 = vmatpush.msra.mxu0 0.0
        %2846 = vmatpush.msra.mxu0 0.0
        %2847 = vmatpush.msra.mxu0 0.0
        %2848 = vmatpush.msra.mxu0 0.0
        %2849 = vmatpush.msra.mxu0 0.0
        %2850 = vmatpush.msra.mxu0 0.0
        %2851 = vmatpush.msra.mxu0 0.0
        %2852 = vmatpush.msra.mxu0 0.0
        %2853 = vmatpush.msra.mxu0 0.0
        %2854 = vmatpush.msra.mxu0 0.0
        %2855 = vmatpush.msra.mxu0 0.0
        %2856 = vmatpush.msra.mxu0 0.0
        %2857 = vmatpush.msra.mxu0 0.0
        %2858 = vmatpush.msra.mxu0 0.0
        %2859 = vmatpush.msra.mxu0 0.0
        %2860 = vmatpush.msra.mxu0 %v1598
        %2861 = vmatmul.f32.gmra.mxu0 %v2823
        %v2862 = vpop.f32.mrf.mxu0
        %v2863 = vadd.f32 %v2843, %v2862
        %2864 = vdwg.mxu0
        %v2865 = vxor.u32 %v2863, 2147483648
        %v2866 = vmul.f32 %v2865, 1.442695
        %v2867 = vpow.pop %v2866
        %v2868 = vadd.f32 %v2867, 1.0
        %v2869 = vrcp.pop %v2868
        %v2870 = vmul.f32 %v2868, %v2869
        %v2871 = vsub.f32 1.0, %v2870
        %v2872 = vmul.f32 %v2869, %v2871
        %v2873 = vadd.f32 %v2869, %v2872
        %vm2874 = vweird.f32 %v2868
        %vm2875 = vweird.f32 %v2869
        %vm2876 = vmor %vm2874, %vm2875
        %v2877 = vsel %vm2876, %v2869, %v2873
        %v2878 = vand.u32 2147483647, %v2868
        %vm2879 = vcmp.eq.f32.partialorder %v2878, 8.507059e+37
        %v2880 = vand.u32 %v2868, 2147483648
        %v2881 = vor.u32 1.1754944e-38, %v2880
        %v2882 = vsel %vm2879, %v2881, %v2877
        %v2883 = vmul.f32 1.0, %v2882
        %2885 = vrot.lane.b32.xlu0 %v2883, 121
        %v2886 = vpop.permute.xlu0 %2885
        %2888 = vrot.lane.b32.xlu0 %v2883, 1
        %v2889 = vpop.permute.xlu0 %2888
        %v2891 = vsel %vm203, %v2886, %v2889
        %v2892 = vmul.f32 %v2891, %v1439
        %2893 = vrot.lane.b32.xlu0 %v2883, 127
        %v2894 = vpop.permute.xlu0 %2893
        %2896 = vrot.lane.b32.xlu0 %v2883, 7
        %v2897 = vpop.permute.xlu0 %2896
        %v2899 = vsel %vm1497, %v2894, %v2897
        %v2900 = vmul.f32 %v2899, %v1506
        %v2901 = vrot.slane %v2883, 7
        %v2904 = vrot.slane %v2900, 6
        %v2906 = vrot.slane %v1516, 5
        %v2908 = vsel %vm219, %v2892, %v2901
        %v2909 = vsel %vm221, %v2908, %v2904
        %v2910 = vsel %vm223, %v2909, %v2906
        %v2911 = vld [vmem:[#allocation2 + $0x1160] sm:$0xff]
        %v2912 = vld [vmem:[#allocation2 + $0x1180] sm:$0xff]
        %v2913 = vld [vmem:[#allocation2 + $0x11a0] sm:$0xff]
        %v2914 = vld [vmem:[#allocation2 + $0x11c0] sm:$0xff]
        %v2915 = vld [vmem:[#allocation2 + $0x11e0] sm:$0xff]
        %v2916 = vld [vmem:[#allocation2 + $0x1200] sm:$0xff]
        %v2917 = vld [vmem:[#allocation2 + $0x1220] sm:$0xff]
        %v2918 = vld [vmem:[#allocation2 + $0x1240] sm:$0xff]
        %v2920 = vsel %vm226, %v2911, 0
        %v2923 = vsel %vm226, %v2912, 0
        %v2926 = vsel %vm226, %v2913, 0
        %v2929 = vsel %vm226, %v2914, 0
        %v2932 = vsel %vm226, %v2915, 0
        %v2935 = vsel %vm226, %v2916, 0
        %v2938 = vsel %vm226, %v2917, 0
        %v2941 = vsel %vm226, %v2918, 0
        %v2944 = vsel %vm230, %v2910, 0
        %2946 = vmatpush.msra.mxu0 0.0
        %2947 = vmatpush.msra.mxu0 0.0
        %2948 = vmatpush.msra.mxu0 0.0
        %2949 = vmatpush.msra.mxu0 0.0
        %2950 = vmatpush.msra.mxu0 0.0
        %2951 = vmatpush.msra.mxu0 0.0
        %2952 = vmatpush.msra.mxu0 0.0
        %2953 = vmatpush.msra.mxu0 0.0
        %2954 = vmatpush.msra.mxu0 0.0
        %2955 = vmatpush.msra.mxu0 0.0
        %2956 = vmatpush.msra.mxu0 0.0
        %2957 = vmatpush.msra.mxu0 0.0
        %2958 = vmatpush.msra.mxu0 0.0
        %2959 = vmatpush.msra.mxu0 0.0
        %2960 = vmatpush.msra.mxu0 0.0
        %2961 = vmatpush.msra.mxu0 %v2944
        %2962 = vmatmul.f32.gmra.mxu0 %v2920
        %v2963 = vpop.f32.mrf.mxu0
        %v2964 = vadd.f32 0.0, %v2963
        %2965 = vmatmul.f32.gmra.mxu0 %v2923
        %v2966 = vpop.f32.mrf.mxu0
        %v2967 = vadd.f32 0.0, %v2966
        %2968 = vmatmul.f32.gmra.mxu0 %v2926
        %v2969 = vpop.f32.mrf.mxu0
        %v2970 = vadd.f32 0.0, %v2969
        %2971 = vmatmul.f32.gmra.mxu0 %v2929
        %v2972 = vpop.f32.mrf.mxu0
        %v2973 = vadd.f32 0.0, %v2972
        %2974 = vmatmul.f32.gmra.mxu0 %v2932
        %v2975 = vpop.f32.mrf.mxu0
        %v2976 = vadd.f32 0.0, %v2975
        %2977 = vmatmul.f32.gmra.mxu0 %v2935
        %v2978 = vpop.f32.mrf.mxu0
        %v2979 = vadd.f32 0.0, %v2978
        %2980 = vmatmul.f32.gmra.mxu0 %v2938
        %v2981 = vpop.f32.mrf.mxu0
        %v2982 = vadd.f32 0.0, %v2981
        %2983 = vmatmul.f32.gmra.mxu0 %v2941
        %v2984 = vpop.f32.mrf.mxu0
        %v2985 = vadd.f32 0.0, %v2984
        %2986 = vdwg.mxu0
        %v2987 = vld [vmem:[#allocation2 + $0x1260] sm:$0xff]
        %v2988 = vld [vmem:[#allocation2 + $0x1280] sm:$0xff]
        %v2989 = vld [vmem:[#allocation2 + $0x12a0] sm:$0xff]
        %v2990 = vld [vmem:[#allocation2 + $0x12c0] sm:$0xff]
        %v2991 = vld [vmem:[#allocation2 + $0x12e0] sm:$0xff]
        %v2992 = vld [vmem:[#allocation2 + $0x1300] sm:$0xff]
        %v2993 = vld [vmem:[#allocation2 + $0x1320] sm:$0xff]
        %v2994 = vld [vmem:[#allocation2 + $0x1340] sm:$0xff]
        %v2996 = vsel %vm1120, %v2987, 0
        %v2999 = vsel %vm1120, %v2988, 0
        %v3002 = vsel %vm1120, %v2989, 0
        %v3005 = vsel %vm1120, %v2990, 0
        %v3008 = vsel %vm1120, %v2991, 0
        %v3011 = vsel %vm1120, %v2992, 0
        %v3014 = vsel %vm1120, %v2993, 0
        %v3017 = vsel %vm1120, %v2994, 0
        %3019 = vmatpush.msra.mxu0 0.0
        %3020 = vmatpush.msra.mxu0 0.0
        %3021 = vmatpush.msra.mxu0 0.0
        %3022 = vmatpush.msra.mxu0 0.0
        %3023 = vmatpush.msra.mxu0 0.0
        %3024 = vmatpush.msra.mxu0 0.0
        %3025 = vmatpush.msra.mxu0 0.0
        %3026 = vmatpush.msra.mxu0 %v1598
        %3027 = vmatpush.msra.mxu0 %v2985
        %3028 = vmatpush.msra.mxu0 %v2982
        %3029 = vmatpush.msra.mxu0 %v2979
        %3030 = vmatpush.msra.mxu0 %v2976
        %3031 = vmatpush.msra.mxu0 %v2973
        %3032 = vmatpush.msra.mxu0 %v2970
        %3033 = vmatpush.msra.mxu0 %v2967
        %3034 = vmatpush.msra.mxu0 %v2964
        %3035 = vmatmul.f32.gmra.mxu0 %v2996
        %v3036 = vpop.f32.mrf.mxu0
        %v3037 = vadd.f32 0.0, %v3036
        %3038 = vmatmul.f32.gmra.mxu0 %v2999
        %v3039 = vpop.f32.mrf.mxu0
        %v3040 = vadd.f32 0.0, %v3039
        %3041 = vmatmul.f32.gmra.mxu0 %v3002
        %v3042 = vpop.f32.mrf.mxu0
        %v3043 = vadd.f32 0.0, %v3042
        %3044 = vmatmul.f32.gmra.mxu0 %v3005
        %v3045 = vpop.f32.mrf.mxu0
        %v3046 = vadd.f32 0.0, %v3045
        %3047 = vmatmul.f32.gmra.mxu0 %v3008
        %v3048 = vpop.f32.mrf.mxu0
        %v3049 = vadd.f32 0.0, %v3048
        %3050 = vmatmul.f32.gmra.mxu0 %v3011
        %v3051 = vpop.f32.mrf.mxu0
        %v3052 = vadd.f32 0.0, %v3051
        %3053 = vmatmul.f32.gmra.mxu0 %v3014
        %v3054 = vpop.f32.mrf.mxu0
        %v3055 = vadd.f32 0.0, %v3054
        %3056 = vmatmul.f32.gmra.mxu0 %v3017
        %v3057 = vpop.f32.mrf.mxu0
        %v3058 = vadd.f32 0.0, %v3057
        %3059 = vdwg.mxu0
        %v3060 = vld [vmem:[#allocation2 + $0x1360] sm:$0xff]
        %v3061 = vld [vmem:[#allocation2 + $0x1368] sm:$0xff]
        %v3062 = vld [vmem:[#allocation2 + $0x1380] sm:$0xff]
        %v3063 = vld [vmem:[#allocation2 + $0x1388] sm:$0xff]
        %v3064 = vld [vmem:[#allocation2 + $0x13a0] sm:$0xff]
        %v3065 = vld [vmem:[#allocation2 + $0x13a8] sm:$0xff]
        %v3066 = vld [vmem:[#allocation2 + $0x13c0] sm:$0xff]
        %v3067 = vld [vmem:[#allocation2 + $0x13c8] sm:$0xff]
        %v3068 = vld [vmem:[#allocation2 + $0x13e0] sm:$0xff]
        %v3069 = vld [vmem:[#allocation2 + $0x13e8] sm:$0xff]
        %v3070 = vld [vmem:[#allocation2 + $0x1400] sm:$0xff]
        %v3071 = vld [vmem:[#allocation2 + $0x1408] sm:$0xff]
        %v3072 = vld [vmem:[#allocation2 + $0x1420] sm:$0xff]
        %v3073 = vld [vmem:[#allocation2 + $0x1428] sm:$0xff]
        %v3074 = vld [vmem:[#allocation2 + $0x1440] sm:$0xff]
        %v3075 = vld [vmem:[#allocation2 + $0x1448] sm:$0xff]
        %3084 = vrot.lane.b32.xlu0 %v2964, 127
        %v3085 = vpop.permute.xlu0 %3084
        %3086 = vrot.lane.b32.xlu0 %v2967, 127
        %v3087 = vpop.permute.xlu0 %3086
        %3088 = vrot.lane.b32.xlu0 %v2970, 127
        %v3089 = vpop.permute.xlu0 %3088
        %3090 = vrot.lane.b32.xlu0 %v2973, 127
        %v3091 = vpop.permute.xlu0 %3090
        %3092 = vrot.lane.b32.xlu0 %v2976, 127
        %v3093 = vpop.permute.xlu0 %3092
        %3094 = vrot.lane.b32.xlu0 %v2979, 127
        %v3095 = vpop.permute.xlu0 %3094
        %3096 = vrot.lane.b32.xlu0 %v2982, 127
        %v3097 = vpop.permute.xlu0 %3096
        %3098 = vrot.lane.b32.xlu0 %v2985, 127
        %v3099 = vpop.permute.xlu0 %3098
        %3108 = vrot.lane.b32.xlu0 %v2964, 7
        %v3109 = vpop.permute.xlu0 %3108
        %3110 = vrot.lane.b32.xlu0 %v2967, 7
        %v3111 = vpop.permute.xlu0 %3110
        %3112 = vrot.lane.b32.xlu0 %v2970, 7
        %v3113 = vpop.permute.xlu0 %3112
        %3114 = vrot.lane.b32.xlu0 %v2973, 7
        %v3115 = vpop.permute.xlu0 %3114
        %3116 = vrot.lane.b32.xlu0 %v2976, 7
        %v3117 = vpop.permute.xlu0 %3116
        %3118 = vrot.lane.b32.xlu0 %v2979, 7
        %v3119 = vpop.permute.xlu0 %3118
        %3120 = vrot.lane.b32.xlu0 %v2982, 7
        %v3121 = vpop.permute.xlu0 %3120
        %3122 = vrot.lane.b32.xlu0 %v2985, 7
        %v3123 = vpop.permute.xlu0 %3122
        %v3132 = vsel %vm1497, %v3085, %v3109
        %v3133 = vsel %vm1497, %v3087, %v3111
        %v3134 = vsel %vm1497, %v3089, %v3113
        %v3135 = vsel %vm1497, %v3091, %v3115
        %v3136 = vsel %vm1497, %v3093, %v3117
        %v3137 = vsel %vm1497, %v3095, %v3119
        %v3138 = vsel %vm1497, %v3097, %v3121
        %v3139 = vsel %vm1497, %v3099, %v3123
        %v3140 = vmul.f32 %v3132, %v1507
        %v3141 = vmul.f32 %v3133, %v1507
        %v3142 = vmul.f32 %v3134, %v1507
        %v3143 = vmul.f32 %v3135, %v1507
        %v3144 = vmul.f32 %v3136, %v1507
        %v3145 = vmul.f32 %v3137, %v1507
        %v3146 = vmul.f32 %v3138, %v1507
        %v3147 = vmul.f32 %v3139, %v1507
        %v3149 = vsel %vm203, %v3061, 0
        %v3152 = vsel %vm203, %v3063, 0
        %v3155 = vsel %vm203, %v3065, 0
        %v3158 = vsel %vm203, %v3067, 0
        %v3161 = vsel %vm203, %v3069, 0
        %v3164 = vsel %vm203, %v3071, 0
        %v3167 = vsel %vm203, %v3073, 0
        %v3170 = vsel %vm203, %v3075, 0
        %3172 = vmatpush.msra.mxu0 %v3147
        %3173 = vmatpush.msra.mxu0 %v3146
        %3174 = vmatpush.msra.mxu0 %v3145
        %3175 = vmatpush.msra.mxu0 %v3144
        %3176 = vmatpush.msra.mxu0 %v3143
        %3177 = vmatpush.msra.mxu0 %v3142
        %3178 = vmatpush.msra.mxu0 %v3141
        %3179 = vmatpush.msra.mxu0 %v3140
        %3180 = vmatpush.msra.mxu0 %v2985
        %3181 = vmatpush.msra.mxu0 %v2982
        %3182 = vmatpush.msra.mxu0 %v2979
        %3183 = vmatpush.msra.mxu0 %v2976
        %3184 = vmatpush.msra.mxu0 %v2973
        %3185 = vmatpush.msra.mxu0 %v2970
        %3186 = vmatpush.msra.mxu0 %v2967
        %3187 = vmatpush.msra.mxu0 %v2964
        %3188 = vmatmul.f32.gmra.mxu0 %v3060
        %v3189 = vpop.f32.mrf.mxu0
        %v3190 = vadd.f32 0.0, %v3189
        %3191 = vmatmul.f32.gmra.mxu0 %v3062
        %v3192 = vpop.f32.mrf.mxu0
        %v3193 = vadd.f32 0.0, %v3192
        %3194 = vmatmul.f32.gmra.mxu0 %v3064
        %v3195 = vpop.f32.mrf.mxu0
        %v3196 = vadd.f32 0.0, %v3195
        %3197 = vmatmul.f32.gmra.mxu0 %v3066
        %v3198 = vpop.f32.mrf.mxu0
        %v3199 = vadd.f32 0.0, %v3198
        %3200 = vmatmul.f32.gmra.mxu0 %v3068
        %v3201 = vpop.f32.mrf.mxu0
        %v3202 = vadd.f32 0.0, %v3201
        %3203 = vmatmul.f32.gmra.mxu0 %v3070
        %v3204 = vpop.f32.mrf.mxu0
        %v3205 = vadd.f32 0.0, %v3204
        %3206 = vmatmul.f32.gmra.mxu0 %v3072
        %v3207 = vpop.f32.mrf.mxu0
        %v3208 = vadd.f32 0.0, %v3207
        %3209 = vmatmul.f32.gmra.mxu0 %v3074
        %v3210 = vpop.f32.mrf.mxu0
        %v3211 = vadd.f32 0.0, %v3210
        %3212 = vdwg.mxu0
        %3213 = vmatpush.msra.mxu0 0.0
        %3214 = vmatpush.msra.mxu0 0.0
        %3215 = vmatpush.msra.mxu0 0.0
        %3216 = vmatpush.msra.mxu0 0.0
        %3217 = vmatpush.msra.mxu0 0.0
        %3218 = vmatpush.msra.mxu0 0.0
        %3219 = vmatpush.msra.mxu0 0.0
        %3220 = vmatpush.msra.mxu0 0.0
        %3221 = vmatpush.msra.mxu0 0.0
        %3222 = vmatpush.msra.mxu0 0.0
        %3223 = vmatpush.msra.mxu0 0.0
        %3224 = vmatpush.msra.mxu0 0.0
        %3225 = vmatpush.msra.mxu0 0.0
        %3226 = vmatpush.msra.mxu0 0.0
        %3227 = vmatpush.msra.mxu0 0.0
        %3228 = vmatpush.msra.mxu0 %v1598
        %3229 = vmatmul.f32.gmra.mxu0 %v3149
        %v3230 = vpop.f32.mrf.mxu0
        %v3231 = vadd.f32 %v3190, %v3230
        %3232 = vmatmul.f32.gmra.mxu0 %v3152
        %v3233 = vpop.f32.mrf.mxu0
        %v3234 = vadd.f32 %v3193, %v3233
        %3235 = vmatmul.f32.gmra.mxu0 %v3155
        %v3236 = vpop.f32.mrf.mxu0
        %v3237 = vadd.f32 %v3196, %v3236
        %3238 = vmatmul.f32.gmra.mxu0 %v3158
        %v3239 = vpop.f32.mrf.mxu0
        %v3240 = vadd.f32 %v3199, %v3239
        %3241 = vmatmul.f32.gmra.mxu0 %v3161
        %v3242 = vpop.f32.mrf.mxu0
        %v3243 = vadd.f32 %v3202, %v3242
        %3244 = vmatmul.f32.gmra.mxu0 %v3164
        %v3245 = vpop.f32.mrf.mxu0
        %v3246 = vadd.f32 %v3205, %v3245
        %3247 = vmatmul.f32.gmra.mxu0 %v3167
        %v3248 = vpop.f32.mrf.mxu0
        %v3249 = vadd.f32 %v3208, %v3248
        %3250 = vmatmul.f32.gmra.mxu0 %v3170
        %v3251 = vpop.f32.mrf.mxu0
        %v3252 = vadd.f32 %v3211, %v3251
        %3253 = vdwg.mxu0
        %v3254 = vld [vmem:[#allocation4 + $0x248] sm:$0xff]
        %v3255 = vld [vmem:[#allocation4 + $0x250] sm:$0xff]
        %vm3256 = vcmask 64512
        %v3258 = vsel %vm3256, %v3231, 0
        %v3261 = vsel %vm3256, %v3234, 0
        %v3264 = vsel %vm3256, %v3237, 0
        %v3267 = vsel %vm3256, %v3240, 0
        %v3270 = vsel %vm3256, %v3243, 0
        %v3273 = vsel %vm3256, %v3246, 0
        %v3276 = vsel %vm3256, %v3249, 0
        %v3279 = vsel %vm3256, %v3252, 0
        %3281 = vmatpush.msra.mxu0 0.0
        %3282 = vmatpush.msra.mxu0 0.0
        %3283 = vmatpush.msra.mxu0 0.0
        %3284 = vmatpush.msra.mxu0 0.0
        %3285 = vmatpush.msra.mxu0 0.0
        %3286 = vmatpush.msra.mxu0 0.0
        %3287 = vmatpush.msra.mxu0 0.0
        %3288 = vmatpush.msra.mxu0 0.0
        %3289 = vmatpush.msra.mxu0 0.0
        %3290 = vmatpush.msra.mxu0 0.0
        %3291 = vmatpush.msra.mxu0 0.0
        %3292 = vmatpush.msra.mxu0 0.0
        %3293 = vmatpush.msra.mxu0 0.0
        %3294 = vmatpush.msra.mxu0 0.0
        %3295 = vmatpush.msra.mxu0 0.0
        %3296 = vmatpush.msra.mxu0 %v3255
        %3297 = vmatmul.f32.gmra.mxu0 %v3258
        %v3298 = vpop.f32.mrf.mxu0
        %v3299 = vadd.f32 0.0, %v3298
        %3300 = vmatmul.f32.gmra.mxu0 %v3261
        %v3301 = vpop.f32.mrf.mxu0
        %v3302 = vadd.f32 0.0, %v3301
        %3303 = vmatmul.f32.gmra.mxu0 %v3264
        %v3304 = vpop.f32.mrf.mxu0
        %v3305 = vadd.f32 0.0, %v3304
        %3306 = vmatmul.f32.gmra.mxu0 %v3267
        %v3307 = vpop.f32.mrf.mxu0
        %v3308 = vadd.f32 0.0, %v3307
        %3309 = vmatmul.f32.gmra.mxu0 %v3270
        %v3310 = vpop.f32.mrf.mxu0
        %v3311 = vadd.f32 0.0, %v3310
        %3312 = vmatmul.f32.gmra.mxu0 %v3273
        %v3313 = vpop.f32.mrf.mxu0
        %v3314 = vadd.f32 0.0, %v3313
        %3315 = vmatmul.f32.gmra.mxu0 %v3276
        %v3316 = vpop.f32.mrf.mxu0
        %v3317 = vadd.f32 0.0, %v3316
        %3318 = vmatmul.f32.gmra.mxu0 %v3279
        %v3319 = vpop.f32.mrf.mxu0
        %v3320 = vadd.f32 0.0, %v3319
        %3321 = vdwg.mxu0
        %v3323 = vsel %vm3256, %v3037, 0
        %v3326 = vsel %vm3256, %v3040, 0
        %v3329 = vsel %vm3256, %v3043, 0
        %v3332 = vsel %vm3256, %v3046, 0
        %v3335 = vsel %vm3256, %v3049, 0
        %v3338 = vsel %vm3256, %v3052, 0
        %v3341 = vsel %vm3256, %v3055, 0
        %v3344 = vsel %vm3256, %v3058, 0
        %3346 = vmatpush.msra.mxu0 0.0
        %3347 = vmatpush.msra.mxu0 0.0
        %3348 = vmatpush.msra.mxu0 0.0
        %3349 = vmatpush.msra.mxu0 0.0
        %3350 = vmatpush.msra.mxu0 0.0
        %3351 = vmatpush.msra.mxu0 0.0
        %3352 = vmatpush.msra.mxu0 0.0
        %3353 = vmatpush.msra.mxu0 0.0
        %3354 = vmatpush.msra.mxu0 0.0
        %3355 = vmatpush.msra.mxu0 0.0
        %3356 = vmatpush.msra.mxu0 0.0
        %3357 = vmatpush.msra.mxu0 0.0
        %3358 = vmatpush.msra.mxu0 0.0
        %3359 = vmatpush.msra.mxu0 0.0
        %3360 = vmatpush.msra.mxu0 0.0
        %3361 = vmatpush.msra.mxu0 %v3254
        %3362 = vmatmul.f32.gmra.mxu0 %v3323
        %v3363 = vpop.f32.mrf.mxu0
        %v3364 = vadd.f32 %v3299, %v3363
        %3365 = vmatmul.f32.gmra.mxu0 %v3326
        %v3366 = vpop.f32.mrf.mxu0
        %v3367 = vadd.f32 %v3302, %v3366
        %3368 = vmatmul.f32.gmra.mxu0 %v3329
        %v3369 = vpop.f32.mrf.mxu0
        %v3370 = vadd.f32 %v3305, %v3369
        %3371 = vmatmul.f32.gmra.mxu0 %v3332
        %v3372 = vpop.f32.mrf.mxu0
        %v3373 = vadd.f32 %v3308, %v3372
        %3374 = vmatmul.f32.gmra.mxu0 %v3335
        %v3375 = vpop.f32.mrf.mxu0
        %v3376 = vadd.f32 %v3311, %v3375
        %3377 = vmatmul.f32.gmra.mxu0 %v3338
        %v3378 = vpop.f32.mrf.mxu0
        %v3379 = vadd.f32 %v3314, %v3378
        %3380 = vmatmul.f32.gmra.mxu0 %v3341
        %v3381 = vpop.f32.mrf.mxu0
        %v3382 = vadd.f32 %v3317, %v3381
        %3383 = vmatmul.f32.gmra.mxu0 %v3344
        %v3384 = vpop.f32.mrf.mxu0
        %v3385 = vadd.f32 %v3320, %v3384
        %3386 = vdwg.mxu0
        %v3387 = vmul.f32 %v3364, %v1227
        %v3388 = vmul.f32 %v3367, %v1228
        %v3389 = vmul.f32 %v3370, %v1229
        %v3390 = vmul.f32 %v3373, %v1230
        %v3391 = vmul.f32 %v3376, %v1231
        %v3392 = vmul.f32 %v3379, %v1232
        %v3393 = vmul.f32 %v3382, %v1233
        %v3394 = vmul.f32 %v3385, %v1234
        %v3395 = vld [vmem:[#allocation2 + $0x7c0] sm:$0xff]
        %v3396 = vld [vmem:[#allocation2 + $0x7c8] sm:$0xff]
        %v3397 = vld [vmem:[#allocation2 + $0x7e0] sm:$0xff]
        %v3398 = vld [vmem:[#allocation2 + $0x7e8] sm:$0xff]
        %v3399 = vld [vmem:[#allocation2 + $0x800] sm:$0xff]
        %v3400 = vld [vmem:[#allocation2 + $0x808] sm:$0xff]
        %v3401 = vld [vmem:[#allocation2 + $0x820] sm:$0xff]
        %v3402 = vld [vmem:[#allocation2 + $0x828] sm:$0xff]
        %v3403 = vld [vmem:[#allocation2 + $0x840] sm:$0xff]
        %v3404 = vld [vmem:[#allocation2 + $0x848] sm:$0xff]
        %v3405 = vld [vmem:[#allocation2 + $0x860] sm:$0xff]
        %v3406 = vld [vmem:[#allocation2 + $0x868] sm:$0xff]
        %v3407 = vld [vmem:[#allocation2 + $0x880] sm:$0xff]
        %v3408 = vld [vmem:[#allocation2 + $0x888] sm:$0xff]
        %v3409 = vld [vmem:[#allocation2 + $0x8a0] sm:$0xff]
        %v3410 = vld [vmem:[#allocation2 + $0x8a8] sm:$0xff]
        %v3412 = vsel %vm203, %v3396, 0
        %v3415 = vsel %vm203, %v3398, 0
        %v3418 = vsel %vm203, %v3400, 0
        %v3421 = vsel %vm203, %v3402, 0
        %v3424 = vsel %vm203, %v3404, 0
        %v3427 = vsel %vm203, %v3406, 0
        %v3430 = vsel %vm203, %v3408, 0
        %v3433 = vsel %vm203, %v3410, 0
        %3435 = vmatpush.msra.mxu0 %v2405
        %3436 = vmatpush.msra.mxu0 %v2404
        %3437 = vmatpush.msra.mxu0 %v2403
        %3438 = vmatpush.msra.mxu0 %v2402
        %3439 = vmatpush.msra.mxu0 %v2401
        %3440 = vmatpush.msra.mxu0 %v2400
        %3441 = vmatpush.msra.mxu0 %v2399
        %3442 = vmatpush.msra.mxu0 %v2398
        %3443 = vmatpush.msra.mxu0 %v2397
        %3444 = vmatpush.msra.mxu0 %v2396
        %3445 = vmatpush.msra.mxu0 %v2395
        %3446 = vmatpush.msra.mxu0 %v2394
        %3447 = vmatpush.msra.mxu0 %v2393
        %3448 = vmatpush.msra.mxu0 %v2392
        %3449 = vmatpush.msra.mxu0 %v2391
        %3450 = vmatpush.msra.mxu0 %v2390
        %3451 = vmatmul.f32.gmra.mxu0 %v3395
        %v3452 = vpop.f32.mrf.mxu0
        %v3453 = vadd.f32 0.0, %v3452
        %3454 = vmatmul.f32.gmra.mxu0 %v3397
        %v3455 = vpop.f32.mrf.mxu0
        %v3456 = vadd.f32 0.0, %v3455
        %3457 = vmatmul.f32.gmra.mxu0 %v3399
        %v3458 = vpop.f32.mrf.mxu0
        %v3459 = vadd.f32 0.0, %v3458
        %3460 = vmatmul.f32.gmra.mxu0 %v3401
        %v3461 = vpop.f32.mrf.mxu0
        %v3462 = vadd.f32 0.0, %v3461
        %3463 = vmatmul.f32.gmra.mxu0 %v3403
        %v3464 = vpop.f32.mrf.mxu0
        %v3465 = vadd.f32 0.0, %v3464
        %3466 = vmatmul.f32.gmra.mxu0 %v3405
        %v3467 = vpop.f32.mrf.mxu0
        %v3468 = vadd.f32 0.0, %v3467
        %3469 = vmatmul.f32.gmra.mxu0 %v3407
        %v3470 = vpop.f32.mrf.mxu0
        %v3471 = vadd.f32 0.0, %v3470
        %3472 = vmatmul.f32.gmra.mxu0 %v3409
        %v3473 = vpop.f32.mrf.mxu0
        %v3474 = vadd.f32 0.0, %v3473
        %3475 = vdwg.mxu0
        %3476 = vmatpush.msra.mxu0 0.0
        %3477 = vmatpush.msra.mxu0 0.0
        %3478 = vmatpush.msra.mxu0 0.0
        %3479 = vmatpush.msra.mxu0 0.0
        %3480 = vmatpush.msra.mxu0 0.0
        %3481 = vmatpush.msra.mxu0 0.0
        %3482 = vmatpush.msra.mxu0 0.0
        %3483 = vmatpush.msra.mxu0 0.0
        %3484 = vmatpush.msra.mxu0 0.0
        %3485 = vmatpush.msra.mxu0 0.0
        %3486 = vmatpush.msra.mxu0 0.0
        %3487 = vmatpush.msra.mxu0 0.0
        %3488 = vmatpush.msra.mxu0 0.0
        %3489 = vmatpush.msra.mxu0 0.0
        %3490 = vmatpush.msra.mxu0 0.0
        %3491 = vmatpush.msra.mxu0 %v1598
        %3492 = vmatmul.f32.gmra.mxu0 %v3412
        %v3493 = vpop.f32.mrf.mxu0
        %v3494 = vadd.f32 %v3453, %v3493
        %3495 = vmatmul.f32.gmra.mxu0 %v3415
        %v3496 = vpop.f32.mrf.mxu0
        %v3497 = vadd.f32 %v3456, %v3496
        %3498 = vmatmul.f32.gmra.mxu0 %v3418
        %v3499 = vpop.f32.mrf.mxu0
        %v3500 = vadd.f32 %v3459, %v3499
        %3501 = vmatmul.f32.gmra.mxu0 %v3421
        %v3502 = vpop.f32.mrf.mxu0
        %v3503 = vadd.f32 %v3462, %v3502
        %3504 = vmatmul.f32.gmra.mxu0 %v3424
        %v3505 = vpop.f32.mrf.mxu0
        %v3506 = vadd.f32 %v3465, %v3505
        %3507 = vmatmul.f32.gmra.mxu0 %v3427
        %v3508 = vpop.f32.mrf.mxu0
        %v3509 = vadd.f32 %v3468, %v3508
        %3510 = vmatmul.f32.gmra.mxu0 %v3430
        %v3511 = vpop.f32.mrf.mxu0
        %v3512 = vadd.f32 %v3471, %v3511
        %3513 = vmatmul.f32.gmra.mxu0 %v3433
        %v3514 = vpop.f32.mrf.mxu0
        %v3515 = vadd.f32 %v3474, %v3514
        %3516 = vdwg.mxu0
        %v3517 = vld [vmem:[#allocation2 + $0x8c0] sm:$0xff]
        %v3518 = vld [vmem:[#allocation2 + $0x8c8] sm:$0xff]
        %v3519 = vld [vmem:[#allocation2 + $0x8d0] sm:$0xff]
        %v3520 = vld [vmem:[#allocation2 + $0x8e0] sm:$0xff]
        %v3521 = vld [vmem:[#allocation2 + $0x8e8] sm:$0xff]
        %v3522 = vld [vmem:[#allocation2 + $0x8f0] sm:$0xff]
        %v3523 = vld [vmem:[#allocation2 + $0x900] sm:$0xff]
        %v3524 = vld [vmem:[#allocation2 + $0x908] sm:$0xff]
        %v3525 = vld [vmem:[#allocation2 + $0x910] sm:$0xff]
        %v3526 = vld [vmem:[#allocation2 + $0x920] sm:$0xff]
        %v3527 = vld [vmem:[#allocation2 + $0x928] sm:$0xff]
        %v3528 = vld [vmem:[#allocation2 + $0x930] sm:$0xff]
        %v3529 = vld [vmem:[#allocation2 + $0x940] sm:$0xff]
        %v3530 = vld [vmem:[#allocation2 + $0x948] sm:$0xff]
        %v3531 = vld [vmem:[#allocation2 + $0x950] sm:$0xff]
        %v3532 = vld [vmem:[#allocation2 + $0x960] sm:$0xff]
        %v3533 = vld [vmem:[#allocation2 + $0x968] sm:$0xff]
        %v3534 = vld [vmem:[#allocation2 + $0x970] sm:$0xff]
        %v3535 = vld [vmem:[#allocation2 + $0x980] sm:$0xff]
        %v3536 = vld [vmem:[#allocation2 + $0x988] sm:$0xff]
        %v3537 = vld [vmem:[#allocation2 + $0x990] sm:$0xff]
        %v3538 = vld [vmem:[#allocation2 + $0x9a0] sm:$0xff]
        %v3539 = vld [vmem:[#allocation2 + $0x9a8] sm:$0xff]
        %v3540 = vld [vmem:[#allocation2 + $0x9b0] sm:$0xff]
        %3557 = vrot.lane.b32.xlu0 %v2390, 127
        %v3558 = vpop.permute.xlu0 %3557
        %3559 = vrot.lane.b32.xlu0 %v2391, 127
        %v3560 = vpop.permute.xlu0 %3559
        %3561 = vrot.lane.b32.xlu0 %v2392, 127
        %v3562 = vpop.permute.xlu0 %3561
        %3563 = vrot.lane.b32.xlu0 %v2393, 127
        %v3564 = vpop.permute.xlu0 %3563
        %3565 = vrot.lane.b32.xlu0 %v2394, 127
        %v3566 = vpop.permute.xlu0 %3565
        %3567 = vrot.lane.b32.xlu0 %v2395, 127
        %v3568 = vpop.permute.xlu0 %3567
        %3569 = vrot.lane.b32.xlu0 %v2396, 127
        %v3570 = vpop.permute.xlu0 %3569
        %3571 = vrot.lane.b32.xlu0 %v2397, 127
        %v3572 = vpop.permute.xlu0 %3571
        %3573 = vrot.lane.b32.xlu0 %v2398, 127
        %v3574 = vpop.permute.xlu0 %3573
        %3575 = vrot.lane.b32.xlu0 %v2399, 127
        %v3576 = vpop.permute.xlu0 %3575
        %3577 = vrot.lane.b32.xlu0 %v2400, 127
        %v3578 = vpop.permute.xlu0 %3577
        %3579 = vrot.lane.b32.xlu0 %v2401, 127
        %v3580 = vpop.permute.xlu0 %3579
        %3581 = vrot.lane.b32.xlu0 %v2402, 127
        %v3582 = vpop.permute.xlu0 %3581
        %3583 = vrot.lane.b32.xlu0 %v2403, 127
        %v3584 = vpop.permute.xlu0 %3583
        %3585 = vrot.lane.b32.xlu0 %v2404, 127
        %v3586 = vpop.permute.xlu0 %3585
        %3587 = vrot.lane.b32.xlu0 %v2405, 127
        %v3588 = vpop.permute.xlu0 %3587
        %3605 = vrot.lane.b32.xlu0 %v2390, 7
        %v3606 = vpop.permute.xlu0 %3605
        %3607 = vrot.lane.b32.xlu0 %v2391, 7
        %v3608 = vpop.permute.xlu0 %3607
        %3609 = vrot.lane.b32.xlu0 %v2392, 7
        %v3610 = vpop.permute.xlu0 %3609
        %3611 = vrot.lane.b32.xlu0 %v2393, 7
        %v3612 = vpop.permute.xlu0 %3611
        %3613 = vrot.lane.b32.xlu0 %v2394, 7
        %v3614 = vpop.permute.xlu0 %3613
        %3615 = vrot.lane.b32.xlu0 %v2395, 7
        %v3616 = vpop.permute.xlu0 %3615
        %3617 = vrot.lane.b32.xlu0 %v2396, 7
        %v3618 = vpop.permute.xlu0 %3617
        %3619 = vrot.lane.b32.xlu0 %v2397, 7
        %v3620 = vpop.permute.xlu0 %3619
        %3621 = vrot.lane.b32.xlu0 %v2398, 7
        %v3622 = vpop.permute.xlu0 %3621
        %3623 = vrot.lane.b32.xlu0 %v2399, 7
        %v3624 = vpop.permute.xlu0 %3623
        %3625 = vrot.lane.b32.xlu0 %v2400, 7
        %v3626 = vpop.permute.xlu0 %3625
        %3627 = vrot.lane.b32.xlu0 %v2401, 7
        %v3628 = vpop.permute.xlu0 %3627
        %3629 = vrot.lane.b32.xlu0 %v2402, 7
        %v3630 = vpop.permute.xlu0 %3629
        %3631 = vrot.lane.b32.xlu0 %v2403, 7
        %v3632 = vpop.permute.xlu0 %3631
        %3633 = vrot.lane.b32.xlu0 %v2404, 7
        %v3634 = vpop.permute.xlu0 %3633
        %3635 = vrot.lane.b32.xlu0 %v2405, 7
        %v3636 = vpop.permute.xlu0 %3635
        %v3653 = vsel %vm1497, %v3558, %v3606
        %v3654 = vsel %vm1497, %v3560, %v3608
        %v3655 = vsel %vm1497, %v3562, %v3610
        %v3656 = vsel %vm1497, %v3564, %v3612
        %v3657 = vsel %vm1497, %v3566, %v3614
        %v3658 = vsel %vm1497, %v3568, %v3616
        %v3659 = vsel %vm1497, %v3570, %v3618
        %v3660 = vsel %vm1497, %v3572, %v3620
        %v3661 = vsel %vm1497, %v3574, %v3622
        %v3662 = vsel %vm1497, %v3576, %v3624
        %v3663 = vsel %vm1497, %v3578, %v3626
        %v3664 = vsel %vm1497, %v3580, %v3628
        %v3665 = vsel %vm1497, %v3582, %v3630
        %v3666 = vsel %vm1497, %v3584, %v3632
        %v3667 = vsel %vm1497, %v3586, %v3634
        %v3668 = vsel %vm1497, %v3588, %v3636
        %v3669 = vmul.f32 %v3653, %v1507
        %v3670 = vmul.f32 %v3654, %v1507
        %v3671 = vmul.f32 %v3655, %v1507
        %v3672 = vmul.f32 %v3656, %v1507
        %v3673 = vmul.f32 %v3657, %v1507
        %v3674 = vmul.f32 %v3658, %v1507
        %v3675 = vmul.f32 %v3659, %v1507
        %v3676 = vmul.f32 %v3660, %v1507
        %v3677 = vmul.f32 %v3661, %v1507
        %v3678 = vmul.f32 %v3662, %v1507
        %v3679 = vmul.f32 %v3663, %v1507
        %v3680 = vmul.f32 %v3664, %v1507
        %v3681 = vmul.f32 %v3665, %v1507
        %v3682 = vmul.f32 %v3666, %v1507
        %v3683 = vmul.f32 %v3667, %v1507
        %v3684 = vmul.f32 %v3668, %v1507
        %v3686 = vsel %vm203, %v3519, 0
        %v3689 = vsel %vm203, %v3522, 0
        %v3692 = vsel %vm203, %v3525, 0
        %v3695 = vsel %vm203, %v3528, 0
        %v3698 = vsel %vm203, %v3531, 0
        %v3701 = vsel %vm203, %v3534, 0
        %v3704 = vsel %vm203, %v3537, 0
        %v3707 = vsel %vm203, %v3540, 0
        %3709 = vmatpush.msra.mxu0 %v2405
        %3710 = vmatpush.msra.mxu0 %v2404
        %3711 = vmatpush.msra.mxu0 %v2403
        %3712 = vmatpush.msra.mxu0 %v2402
        %3713 = vmatpush.msra.mxu0 %v2401
        %3714 = vmatpush.msra.mxu0 %v2400
        %3715 = vmatpush.msra.mxu0 %v2399
        %3716 = vmatpush.msra.mxu0 %v2398
        %3717 = vmatpush.msra.mxu0 %v2397
        %3718 = vmatpush.msra.mxu0 %v2396
        %3719 = vmatpush.msra.mxu0 %v2395
        %3720 = vmatpush.msra.mxu0 %v2394
        %3721 = vmatpush.msra.mxu0 %v2393
        %3722 = vmatpush.msra.mxu0 %v2392
        %3723 = vmatpush.msra.mxu0 %v2391
        %3724 = vmatpush.msra.mxu0 %v2390
        %3725 = vmatmul.f32.gmra.mxu0 %v3517
        %v3726 = vpop.f32.mrf.mxu0
        %v3727 = vadd.f32 0.0, %v3726
        %3728 = vmatmul.f32.gmra.mxu0 %v3520
        %v3729 = vpop.f32.mrf.mxu0
        %v3730 = vadd.f32 0.0, %v3729
        %3731 = vmatmul.f32.gmra.mxu0 %v3523
        %v3732 = vpop.f32.mrf.mxu0
        %v3733 = vadd.f32 0.0, %v3732
        %3734 = vmatmul.f32.gmra.mxu0 %v3526
        %v3735 = vpop.f32.mrf.mxu0
        %v3736 = vadd.f32 0.0, %v3735
        %3737 = vmatmul.f32.gmra.mxu0 %v3529
        %v3738 = vpop.f32.mrf.mxu0
        %v3739 = vadd.f32 0.0, %v3738
        %3740 = vmatmul.f32.gmra.mxu0 %v3532
        %v3741 = vpop.f32.mrf.mxu0
        %v3742 = vadd.f32 0.0, %v3741
        %3743 = vmatmul.f32.gmra.mxu0 %v3535
        %v3744 = vpop.f32.mrf.mxu0
        %v3745 = vadd.f32 0.0, %v3744
        %3746 = vmatmul.f32.gmra.mxu0 %v3538
        %v3747 = vpop.f32.mrf.mxu0
        %v3748 = vadd.f32 0.0, %v3747
        %3749 = vdwg.mxu0
        %3750 = vmatpush.msra.mxu0 %v3684
        %3751 = vmatpush.msra.mxu0 %v3683
        %3752 = vmatpush.msra.mxu0 %v3682
        %3753 = vmatpush.msra.mxu0 %v3681
        %3754 = vmatpush.msra.mxu0 %v3680
        %3755 = vmatpush.msra.mxu0 %v3679
        %3756 = vmatpush.msra.mxu0 %v3678
        %3757 = vmatpush.msra.mxu0 %v3677
        %3758 = vmatpush.msra.mxu0 %v3676
        %3759 = vmatpush.msra.mxu0 %v3675
        %3760 = vmatpush.msra.mxu0 %v3674
        %3761 = vmatpush.msra.mxu0 %v3673
        %3762 = vmatpush.msra.mxu0 %v3672
        %3763 = vmatpush.msra.mxu0 %v3671
        %3764 = vmatpush.msra.mxu0 %v3670
        %3765 = vmatpush.msra.mxu0 %v3669
        %3766 = vmatmul.f32.gmra.mxu0 %v3518
        %v3767 = vpop.f32.mrf.mxu0
        %v3768 = vadd.f32 %v3727, %v3767
        %3769 = vmatmul.f32.gmra.mxu0 %v3521
        %v3770 = vpop.f32.mrf.mxu0
        %v3771 = vadd.f32 %v3730, %v3770
        %3772 = vmatmul.f32.gmra.mxu0 %v3524
        %v3773 = vpop.f32.mrf.mxu0
        %v3774 = vadd.f32 %v3733, %v3773
        %3775 = vmatmul.f32.gmra.mxu0 %v3527
        %v3776 = vpop.f32.mrf.mxu0
        %v3777 = vadd.f32 %v3736, %v3776
        %3778 = vmatmul.f32.gmra.mxu0 %v3530
        %v3779 = vpop.f32.mrf.mxu0
        %v3780 = vadd.f32 %v3739, %v3779
        %3781 = vmatmul.f32.gmra.mxu0 %v3533
        %v3782 = vpop.f32.mrf.mxu0
        %v3783 = vadd.f32 %v3742, %v3782
        %3784 = vmatmul.f32.gmra.mxu0 %v3536
        %v3785 = vpop.f32.mrf.mxu0
        %v3786 = vadd.f32 %v3745, %v3785
        %3787 = vmatmul.f32.gmra.mxu0 %v3539
        %v3788 = vpop.f32.mrf.mxu0
        %v3789 = vadd.f32 %v3748, %v3788
        %3790 = vdwg.mxu0
        %3791 = vmatpush.msra.mxu0 0.0
        %3792 = vmatpush.msra.mxu0 0.0
        %3793 = vmatpush.msra.mxu0 0.0
        %3794 = vmatpush.msra.mxu0 0.0
        %3795 = vmatpush.msra.mxu0 0.0
        %3796 = vmatpush.msra.mxu0 0.0
        %3797 = vmatpush.msra.mxu0 0.0
        %3798 = vmatpush.msra.mxu0 0.0
        %3799 = vmatpush.msra.mxu0 0.0
        %3800 = vmatpush.msra.mxu0 0.0
        %3801 = vmatpush.msra.mxu0 0.0
        %3802 = vmatpush.msra.mxu0 0.0
        %3803 = vmatpush.msra.mxu0 0.0
        %3804 = vmatpush.msra.mxu0 0.0
        %3805 = vmatpush.msra.mxu0 0.0
        %3806 = vmatpush.msra.mxu0 %v1598
        %3807 = vmatmul.f32.gmra.mxu0 %v3686
        %v3808 = vpop.f32.mrf.mxu0
        %v3809 = vadd.f32 %v3768, %v3808
        %3810 = vmatmul.f32.gmra.mxu0 %v3689
        %v3811 = vpop.f32.mrf.mxu0
        %v3812 = vadd.f32 %v3771, %v3811
        %3813 = vmatmul.f32.gmra.mxu0 %v3692
        %v3814 = vpop.f32.mrf.mxu0
        %v3815 = vadd.f32 %v3774, %v3814
        %3816 = vmatmul.f32.gmra.mxu0 %v3695
        %v3817 = vpop.f32.mrf.mxu0
        %v3818 = vadd.f32 %v3777, %v3817
        %3819 = vmatmul.f32.gmra.mxu0 %v3698
        %v3820 = vpop.f32.mrf.mxu0
        %v3821 = vadd.f32 %v3780, %v3820
        %3822 = vmatmul.f32.gmra.mxu0 %v3701
        %v3823 = vpop.f32.mrf.mxu0
        %v3824 = vadd.f32 %v3783, %v3823
        %3825 = vmatmul.f32.gmra.mxu0 %v3704
        %v3826 = vpop.f32.mrf.mxu0
        %v3827 = vadd.f32 %v3786, %v3826
        %3828 = vmatmul.f32.gmra.mxu0 %v3707
        %v3829 = vpop.f32.mrf.mxu0
        %v3830 = vadd.f32 %v3789, %v3829
        %3831 = vdwg.mxu0
        %v3833 = vsel %vm3256, %v3809, 0
        %v3836 = vsel %vm3256, %v3812, 0
        %v3839 = vsel %vm3256, %v3815, 0
        %v3842 = vsel %vm3256, %v3818, 0
        %v3845 = vsel %vm3256, %v3821, 0
        %v3848 = vsel %vm3256, %v3824, 0
        %v3851 = vsel %vm3256, %v3827, 0
        %v3854 = vsel %vm3256, %v3830, 0
        %3856 = vmatpush.msra.mxu0 0.0
        %3857 = vmatpush.msra.mxu0 0.0
        %3858 = vmatpush.msra.mxu0 0.0
        %3859 = vmatpush.msra.mxu0 0.0
        %3860 = vmatpush.msra.mxu0 0.0
        %3861 = vmatpush.msra.mxu0 0.0
        %3862 = vmatpush.msra.mxu0 0.0
        %3863 = vmatpush.msra.mxu0 0.0
        %3864 = vmatpush.msra.mxu0 0.0
        %3865 = vmatpush.msra.mxu0 0.0
        %3866 = vmatpush.msra.mxu0 0.0
        %3867 = vmatpush.msra.mxu0 0.0
        %3868 = vmatpush.msra.mxu0 0.0
        %3869 = vmatpush.msra.mxu0 0.0
        %3870 = vmatpush.msra.mxu0 0.0
        %3871 = vmatpush.msra.mxu0 %v3255
        %3872 = vmatmul.f32.gmra.mxu0 %v3833
        %v3873 = vpop.f32.mrf.mxu0
        %v3874 = vadd.f32 0.0, %v3873
        %3875 = vmatmul.f32.gmra.mxu0 %v3836
        %v3876 = vpop.f32.mrf.mxu0
        %v3877 = vadd.f32 0.0, %v3876
        %3878 = vmatmul.f32.gmra.mxu0 %v3839
        %v3879 = vpop.f32.mrf.mxu0
        %v3880 = vadd.f32 0.0, %v3879
        %3881 = vmatmul.f32.gmra.mxu0 %v3842
        %v3882 = vpop.f32.mrf.mxu0
        %v3883 = vadd.f32 0.0, %v3882
        %3884 = vmatmul.f32.gmra.mxu0 %v3845
        %v3885 = vpop.f32.mrf.mxu0
        %v3886 = vadd.f32 0.0, %v3885
        %3887 = vmatmul.f32.gmra.mxu0 %v3848
        %v3888 = vpop.f32.mrf.mxu0
        %v3889 = vadd.f32 0.0, %v3888
        %3890 = vmatmul.f32.gmra.mxu0 %v3851
        %v3891 = vpop.f32.mrf.mxu0
        %v3892 = vadd.f32 0.0, %v3891
        %3893 = vmatmul.f32.gmra.mxu0 %v3854
        %v3894 = vpop.f32.mrf.mxu0
        %v3895 = vadd.f32 0.0, %v3894
        %3896 = vdwg.mxu0
        %v3898 = vsel %vm3256, %v3494, 0
        %v3901 = vsel %vm3256, %v3497, 0
        %v3904 = vsel %vm3256, %v3500, 0
        %v3907 = vsel %vm3256, %v3503, 0
        %v3910 = vsel %vm3256, %v3506, 0
        %v3913 = vsel %vm3256, %v3509, 0
        %v3916 = vsel %vm3256, %v3512, 0
        %v3919 = vsel %vm3256, %v3515, 0
        %3921 = vmatpush.msra.mxu0 0.0
        %3922 = vmatpush.msra.mxu0 0.0
        %3923 = vmatpush.msra.mxu0 0.0
        %3924 = vmatpush.msra.mxu0 0.0
        %3925 = vmatpush.msra.mxu0 0.0
        %3926 = vmatpush.msra.mxu0 0.0
        %3927 = vmatpush.msra.mxu0 0.0
        %3928 = vmatpush.msra.mxu0 0.0
        %3929 = vmatpush.msra.mxu0 0.0
        %3930 = vmatpush.msra.mxu0 0.0
        %3931 = vmatpush.msra.mxu0 0.0
        %3932 = vmatpush.msra.mxu0 0.0
        %3933 = vmatpush.msra.mxu0 0.0
        %3934 = vmatpush.msra.mxu0 0.0
        %3935 = vmatpush.msra.mxu0 0.0
        %3936 = vmatpush.msra.mxu0 %v3254
        %3937 = vmatmul.f32.gmra.mxu0 %v3898
        %v3938 = vpop.f32.mrf.mxu0
        %v3939 = vadd.f32 %v3874, %v3938
        %3940 = vmatmul.f32.gmra.mxu0 %v3901
        %v3941 = vpop.f32.mrf.mxu0
        %v3942 = vadd.f32 %v3877, %v3941
        %3943 = vmatmul.f32.gmra.mxu0 %v3904
        %v3944 = vpop.f32.mrf.mxu0
        %v3945 = vadd.f32 %v3880, %v3944
        %3946 = vmatmul.f32.gmra.mxu0 %v3907
        %v3947 = vpop.f32.mrf.mxu0
        %v3948 = vadd.f32 %v3883, %v3947
        %3949 = vmatmul.f32.gmra.mxu0 %v3910
        %v3950 = vpop.f32.mrf.mxu0
        %v3951 = vadd.f32 %v3886, %v3950
        %3952 = vmatmul.f32.gmra.mxu0 %v3913
        %v3953 = vpop.f32.mrf.mxu0
        %v3954 = vadd.f32 %v3889, %v3953
        %3955 = vmatmul.f32.gmra.mxu0 %v3916
        %v3956 = vpop.f32.mrf.mxu0
        %v3957 = vadd.f32 %v3892, %v3956
        %3958 = vmatmul.f32.gmra.mxu0 %v3919
        %v3959 = vpop.f32.mrf.mxu0
        %v3960 = vadd.f32 %v3895, %v3959
        %3961 = vdwg.mxu0
        %3978 = vrot.lane.b32.xlu0 %v3939, 113
        %v3979 = vpop.permute.xlu0 %3978
        %3980 = vrot.lane.b32.xlu0 %v3942, 113
        %v3981 = vpop.permute.xlu0 %3980
        %3982 = vrot.lane.b32.xlu0 %v3945, 113
        %v3983 = vpop.permute.xlu0 %3982
        %3984 = vrot.lane.b32.xlu0 %v3948, 113
        %v3985 = vpop.permute.xlu0 %3984
        %3986 = vrot.lane.b32.xlu0 %v3951, 113
        %v3987 = vpop.permute.xlu0 %3986
        %3988 = vrot.lane.b32.xlu0 %v3954, 113
        %v3989 = vpop.permute.xlu0 %3988
        %3990 = vrot.lane.b32.xlu0 %v3957, 113
        %v3991 = vpop.permute.xlu0 %3990
        %3992 = vrot.lane.b32.xlu0 %v3960, 113
        %v3993 = vpop.permute.xlu0 %3992
        %3994 = vrot.lane.b32.xlu0 %v3387, 113
        %v3995 = vpop.permute.xlu0 %3994
        %3996 = vrot.lane.b32.xlu0 %v3388, 113
        %v3997 = vpop.permute.xlu0 %3996
        %3998 = vrot.lane.b32.xlu0 %v3389, 113
        %v3999 = vpop.permute.xlu0 %3998
        %4000 = vrot.lane.b32.xlu0 %v3390, 113
        %v4001 = vpop.permute.xlu0 %4000
        %4002 = vrot.lane.b32.xlu0 %v3391, 113
        %v4003 = vpop.permute.xlu0 %4002
        %4004 = vrot.lane.b32.xlu0 %v3392, 113
        %v4005 = vpop.permute.xlu0 %4004
        %4006 = vrot.lane.b32.xlu0 %v3393, 113
        %v4007 = vpop.permute.xlu0 %4006
        %4008 = vrot.lane.b32.xlu0 %v3394, 113
        %v4009 = vpop.permute.xlu0 %4008
        %4026 = vrot.lane.b32.xlu0 %v3939, 1
        %v4027 = vpop.permute.xlu0 %4026
        %4028 = vrot.lane.b32.xlu0 %v3942, 1
        %v4029 = vpop.permute.xlu0 %4028
        %4030 = vrot.lane.b32.xlu0 %v3945, 1
        %v4031 = vpop.permute.xlu0 %4030
        %4032 = vrot.lane.b32.xlu0 %v3948, 1
        %v4033 = vpop.permute.xlu0 %4032
        %4034 = vrot.lane.b32.xlu0 %v3951, 1
        %v4035 = vpop.permute.xlu0 %4034
        %4036 = vrot.lane.b32.xlu0 %v3954, 1
        %v4037 = vpop.permute.xlu0 %4036
        %4038 = vrot.lane.b32.xlu0 %v3957, 1
        %v4039 = vpop.permute.xlu0 %4038
        %4040 = vrot.lane.b32.xlu0 %v3960, 1
        %v4041 = vpop.permute.xlu0 %4040
        %4042 = vrot.lane.b32.xlu0 %v3387, 1
        %v4043 = vpop.permute.xlu0 %4042
        %4044 = vrot.lane.b32.xlu0 %v3388, 1
        %v4045 = vpop.permute.xlu0 %4044
        %4046 = vrot.lane.b32.xlu0 %v3389, 1
        %v4047 = vpop.permute.xlu0 %4046
        %4048 = vrot.lane.b32.xlu0 %v3390, 1
        %v4049 = vpop.permute.xlu0 %4048
        %4050 = vrot.lane.b32.xlu0 %v3391, 1
        %v4051 = vpop.permute.xlu0 %4050
        %4052 = vrot.lane.b32.xlu0 %v3392, 1
        %v4053 = vpop.permute.xlu0 %4052
        %4054 = vrot.lane.b32.xlu0 %v3393, 1
        %v4055 = vpop.permute.xlu0 %4054
        %4056 = vrot.lane.b32.xlu0 %v3394, 1
        %v4057 = vpop.permute.xlu0 %4056
        %v4074 = vsel %vm203, %v3979, %v4027
        %v4075 = vsel %vm203, %v3981, %v4029
        %v4076 = vsel %vm203, %v3983, %v4031
        %v4077 = vsel %vm203, %v3985, %v4033
        %v4078 = vsel %vm203, %v3987, %v4035
        %v4079 = vsel %vm203, %v3989, %v4037
        %v4080 = vsel %vm203, %v3991, %v4039
        %v4081 = vsel %vm203, %v3993, %v4041
        %v4082 = vsel %vm203, %v3995, %v4043
        %v4083 = vsel %vm203, %v3997, %v4045
        %v4084 = vsel %vm203, %v3999, %v4047
        %v4085 = vsel %vm203, %v4001, %v4049
        %v4086 = vsel %vm203, %v4003, %v4051
        %v4087 = vsel %vm203, %v4005, %v4053
        %v4088 = vsel %vm203, %v4007, %v4055
        %v4089 = vsel %vm203, %v4009, %v4057
        %v4090 = vmul.f32 %v4074, %v843
        %v4091 = vmul.f32 %v4075, %v843
        %v4092 = vmul.f32 %v4076, %v843
        %v4093 = vmul.f32 %v4077, %v843
        %v4094 = vmul.f32 %v4078, %v843
        %v4095 = vmul.f32 %v4079, %v843
        %v4096 = vmul.f32 %v4080, %v843
        %v4097 = vmul.f32 %v4081, %v843
        %v4098 = vmul.f32 %v4082, %v843
        %v4099 = vmul.f32 %v4083, %v843
        %v4100 = vmul.f32 %v4084, %v843
        %v4101 = vmul.f32 %v4085, %v843
        %v4102 = vmul.f32 %v4086, %v843
        %v4103 = vmul.f32 %v4087, %v843
        %v4104 = vmul.f32 %v4088, %v843
        %v4105 = vmul.f32 %v4089, %v843
        %4106 = vrot.lane.b32.xlu0 %v3939, 127
        %v4107 = vpop.permute.xlu0 %4106
        %4108 = vrot.lane.b32.xlu0 %v3942, 127
        %v4109 = vpop.permute.xlu0 %4108
        %4110 = vrot.lane.b32.xlu0 %v3945, 127
        %v4111 = vpop.permute.xlu0 %4110
        %4112 = vrot.lane.b32.xlu0 %v3948, 127
        %v4113 = vpop.permute.xlu0 %4112
        %4114 = vrot.lane.b32.xlu0 %v3951, 127
        %v4115 = vpop.permute.xlu0 %4114
        %4116 = vrot.lane.b32.xlu0 %v3954, 127
        %v4117 = vpop.permute.xlu0 %4116
        %4118 = vrot.lane.b32.xlu0 %v3957, 127
        %v4119 = vpop.permute.xlu0 %4118
        %4120 = vrot.lane.b32.xlu0 %v3960, 127
        %v4121 = vpop.permute.xlu0 %4120
        %4122 = vrot.lane.b32.xlu0 %v3387, 127
        %v4123 = vpop.permute.xlu0 %4122
        %4124 = vrot.lane.b32.xlu0 %v3388, 127
        %v4125 = vpop.permute.xlu0 %4124
        %4126 = vrot.lane.b32.xlu0 %v3389, 127
        %v4127 = vpop.permute.xlu0 %4126
        %4128 = vrot.lane.b32.xlu0 %v3390, 127
        %v4129 = vpop.permute.xlu0 %4128
        %4130 = vrot.lane.b32.xlu0 %v3391, 127
        %v4131 = vpop.permute.xlu0 %4130
        %4132 = vrot.lane.b32.xlu0 %v3392, 127
        %v4133 = vpop.permute.xlu0 %4132
        %4134 = vrot.lane.b32.xlu0 %v3393, 127
        %v4135 = vpop.permute.xlu0 %4134
        %4136 = vrot.lane.b32.xlu0 %v3394, 127
        %v4137 = vpop.permute.xlu0 %4136
        %4154 = vrot.lane.b32.xlu0 %v3939, 15
        %v4155 = vpop.permute.xlu0 %4154
        %4156 = vrot.lane.b32.xlu0 %v3942, 15
        %v4157 = vpop.permute.xlu0 %4156
        %4158 = vrot.lane.b32.xlu0 %v3945, 15
        %v4159 = vpop.permute.xlu0 %4158
        %4160 = vrot.lane.b32.xlu0 %v3948, 15
        %v4161 = vpop.permute.xlu0 %4160
        %4162 = vrot.lane.b32.xlu0 %v3951, 15
        %v4163 = vpop.permute.xlu0 %4162
        %4164 = vrot.lane.b32.xlu0 %v3954, 15
        %v4165 = vpop.permute.xlu0 %4164
        %4166 = vrot.lane.b32.xlu0 %v3957, 15
        %v4167 = vpop.permute.xlu0 %4166
        %4168 = vrot.lane.b32.xlu0 %v3960, 15
        %v4169 = vpop.permute.xlu0 %4168
        %4170 = vrot.lane.b32.xlu0 %v3387, 15
        %v4171 = vpop.permute.xlu0 %4170
        %4172 = vrot.lane.b32.xlu0 %v3388, 15
        %v4173 = vpop.permute.xlu0 %4172
        %4174 = vrot.lane.b32.xlu0 %v3389, 15
        %v4175 = vpop.permute.xlu0 %4174
        %4176 = vrot.lane.b32.xlu0 %v3390, 15
        %v4177 = vpop.permute.xlu0 %4176
        %4178 = vrot.lane.b32.xlu0 %v3391, 15
        %v4179 = vpop.permute.xlu0 %4178
        %4180 = vrot.lane.b32.xlu0 %v3392, 15
        %v4181 = vpop.permute.xlu0 %4180
        %4182 = vrot.lane.b32.xlu0 %v3393, 15
        %v4183 = vpop.permute.xlu0 %4182
        %4184 = vrot.lane.b32.xlu0 %v3394, 15
        %v4185 = vpop.permute.xlu0 %4184
        %v4202 = vsel %vm872, %v4107, %v4155
        %v4203 = vsel %vm872, %v4109, %v4157
        %v4204 = vsel %vm872, %v4111, %v4159
        %v4205 = vsel %vm872, %v4113, %v4161
        %v4206 = vsel %vm872, %v4115, %v4163
        %v4207 = vsel %vm872, %v4117, %v4165
        %v4208 = vsel %vm872, %v4119, %v4167
        %v4209 = vsel %vm872, %v4121, %v4169
        %v4210 = vsel %vm872, %v4123, %v4171
        %v4211 = vsel %vm872, %v4125, %v4173
        %v4212 = vsel %vm872, %v4127, %v4175
        %v4213 = vsel %vm872, %v4129, %v4177
        %v4214 = vsel %vm872, %v4131, %v4179
        %v4215 = vsel %vm872, %v4133, %v4181
        %v4216 = vsel %vm872, %v4135, %v4183
        %v4217 = vsel %vm872, %v4137, %v4185
        %v4218 = vmul.f32 %v4202, %v878
        %v4219 = vmul.f32 %v4203, %v878
        %v4220 = vmul.f32 %v4204, %v878
        %v4221 = vmul.f32 %v4205, %v878
        %v4222 = vmul.f32 %v4206, %v878
        %v4223 = vmul.f32 %v4207, %v878
        %v4224 = vmul.f32 %v4208, %v878
        %v4225 = vmul.f32 %v4209, %v878
        %v4226 = vmul.f32 %v4210, %v878
        %v4227 = vmul.f32 %v4211, %v878
        %v4228 = vmul.f32 %v4212, %v878
        %v4229 = vmul.f32 %v4213, %v878
        %v4230 = vmul.f32 %v4214, %v878
        %v4231 = vmul.f32 %v4215, %v878
        %v4232 = vmul.f32 %v4216, %v878
        %v4233 = vmul.f32 %v4217, %v878
        %v4234 = vld [vmem:[#allocation2 + $0x9c0] sm:$0xff]
        %v4235 = vld [vmem:[#allocation2 + $0x9c8] sm:$0xff]
        %v4236 = vld [vmem:[#allocation2 + $0x9d0] sm:$0xff]
        %v4237 = vld [vmem:[#allocation2 + $0x9d8] sm:$0xff]
        %v4238 = vld [vmem:[#allocation2 + $0x9e0] sm:$0xff]
        %v4239 = vld [vmem:[#allocation2 + $0x9e8] sm:$0xff]
        %v4240 = vld [vmem:[#allocation2 + $0x9f0] sm:$0xff]
        %v4241 = vld [vmem:[#allocation2 + $0x9f8] sm:$0xff]
        %v4242 = vld [vmem:[#allocation2 + $0xa00] sm:$0xff]
        %v4243 = vld [vmem:[#allocation2 + $0xa08] sm:$0xff]
        %v4244 = vld [vmem:[#allocation2 + $0xa10] sm:$0xff]
        %v4245 = vld [vmem:[#allocation2 + $0xa18] sm:$0xff]
        %v4246 = vld [vmem:[#allocation2 + $0xa20] sm:$0xff]
        %v4247 = vld [vmem:[#allocation2 + $0xa28] sm:$0xff]
        %v4248 = vld [vmem:[#allocation2 + $0xa30] sm:$0xff]
        %v4249 = vld [vmem:[#allocation2 + $0xa38] sm:$0xff]
        %v4250 = vld [vmem:[#allocation2 + $0xa40] sm:$0xff]
        %v4251 = vld [vmem:[#allocation2 + $0xa48] sm:$0xff]
        %v4252 = vld [vmem:[#allocation2 + $0xa50] sm:$0xff]
        %v4253 = vld [vmem:[#allocation2 + $0xa58] sm:$0xff]
        %v4254 = vld [vmem:[#allocation2 + $0xa60] sm:$0xff]
        %v4255 = vld [vmem:[#allocation2 + $0xa68] sm:$0xff]
        %v4256 = vld [vmem:[#allocation2 + $0xa70] sm:$0xff]
        %v4257 = vld [vmem:[#allocation2 + $0xa78] sm:$0xff]
        %v4258 = vld [vmem:[#allocation2 + $0xa80] sm:$0xff]
        %v4259 = vld [vmem:[#allocation2 + $0xa88] sm:$0xff]
        %v4260 = vld [vmem:[#allocation2 + $0xa90] sm:$0xff]
        %v4261 = vld [vmem:[#allocation2 + $0xa98] sm:$0xff]
        %v4262 = vld [vmem:[#allocation2 + $0xaa0] sm:$0xff]
        %v4263 = vld [vmem:[#allocation2 + $0xaa8] sm:$0xff]
        %v4264 = vld [vmem:[#allocation2 + $0xab0] sm:$0xff]
        %v4265 = vld [vmem:[#allocation2 + $0xab8] sm:$0xff]
        %v4267 = vsel %vm203, %v4237, 0
        %v4270 = vsel %vm203, %v4241, 0
        %v4273 = vsel %vm203, %v4245, 0
        %v4276 = vsel %vm203, %v4249, 0
        %v4279 = vsel %vm203, %v4253, 0
        %v4282 = vsel %vm203, %v4257, 0
        %v4285 = vsel %vm203, %v4261, 0
        %v4288 = vsel %vm203, %v4265, 0
        %4290 = vmatpush.msra.mxu0 %v4105
        %4291 = vmatpush.msra.mxu0 %v4104
        %4292 = vmatpush.msra.mxu0 %v4103
        %4293 = vmatpush.msra.mxu0 %v4102
        %4294 = vmatpush.msra.mxu0 %v4101
        %4295 = vmatpush.msra.mxu0 %v4100
        %4296 = vmatpush.msra.mxu0 %v4099
        %4297 = vmatpush.msra.mxu0 %v4098
        %4298 = vmatpush.msra.mxu0 %v4097
        %4299 = vmatpush.msra.mxu0 %v4096
        %4300 = vmatpush.msra.mxu0 %v4095
        %4301 = vmatpush.msra.mxu0 %v4094
        %4302 = vmatpush.msra.mxu0 %v4093
        %4303 = vmatpush.msra.mxu0 %v4092
        %4304 = vmatpush.msra.mxu0 %v4091
        %4305 = vmatpush.msra.mxu0 %v4090
        %4306 = vmatmul.f32.gmra.mxu0 %v4234
        %v4307 = vpop.f32.mrf.mxu0
        %v4308 = vadd.f32 0.0, %v4307
        %4309 = vmatmul.f32.gmra.mxu0 %v4238
        %v4310 = vpop.f32.mrf.mxu0
        %v4311 = vadd.f32 0.0, %v4310
        %4312 = vmatmul.f32.gmra.mxu0 %v4242
        %v4313 = vpop.f32.mrf.mxu0
        %v4314 = vadd.f32 0.0, %v4313
        %4315 = vmatmul.f32.gmra.mxu0 %v4246
        %v4316 = vpop.f32.mrf.mxu0
        %v4317 = vadd.f32 0.0, %v4316
        %4318 = vmatmul.f32.gmra.mxu0 %v4250
        %v4319 = vpop.f32.mrf.mxu0
        %v4320 = vadd.f32 0.0, %v4319
        %4321 = vmatmul.f32.gmra.mxu0 %v4254
        %v4322 = vpop.f32.mrf.mxu0
        %v4323 = vadd.f32 0.0, %v4322
        %4324 = vmatmul.f32.gmra.mxu0 %v4258
        %v4325 = vpop.f32.mrf.mxu0
        %v4326 = vadd.f32 0.0, %v4325
        %4327 = vmatmul.f32.gmra.mxu0 %v4262
        %v4328 = vpop.f32.mrf.mxu0
        %v4329 = vadd.f32 0.0, %v4328
        %4330 = vdwg.mxu0
        %4331 = vmatpush.msra.mxu0 %v3394
        %4332 = vmatpush.msra.mxu0 %v3393
        %4333 = vmatpush.msra.mxu0 %v3392
        %4334 = vmatpush.msra.mxu0 %v3391
        %4335 = vmatpush.msra.mxu0 %v3390
        %4336 = vmatpush.msra.mxu0 %v3389
        %4337 = vmatpush.msra.mxu0 %v3388
        %4338 = vmatpush.msra.mxu0 %v3387
        %4339 = vmatpush.msra.mxu0 %v3960
        %4340 = vmatpush.msra.mxu0 %v3957
        %4341 = vmatpush.msra.mxu0 %v3954
        %4342 = vmatpush.msra.mxu0 %v3951
        %4343 = vmatpush.msra.mxu0 %v3948
        %4344 = vmatpush.msra.mxu0 %v3945
        %4345 = vmatpush.msra.mxu0 %v3942
        %4346 = vmatpush.msra.mxu0 %v3939
        %4347 = vmatmul.f32.gmra.mxu0 %v4235
        %v4348 = vpop.f32.mrf.mxu0
        %v4349 = vadd.f32 %v4308, %v4348
        %4350 = vmatmul.f32.gmra.mxu0 %v4239
        %v4351 = vpop.f32.mrf.mxu0
        %v4352 = vadd.f32 %v4311, %v4351
        %4353 = vmatmul.f32.gmra.mxu0 %v4243
        %v4354 = vpop.f32.mrf.mxu0
        %v4355 = vadd.f32 %v4314, %v4354
        %4356 = vmatmul.f32.gmra.mxu0 %v4247
        %v4357 = vpop.f32.mrf.mxu0
        %v4358 = vadd.f32 %v4317, %v4357
        %4359 = vmatmul.f32.gmra.mxu0 %v4251
        %v4360 = vpop.f32.mrf.mxu0
        %v4361 = vadd.f32 %v4320, %v4360
        %4362 = vmatmul.f32.gmra.mxu0 %v4255
        %v4363 = vpop.f32.mrf.mxu0
        %v4364 = vadd.f32 %v4323, %v4363
        %4365 = vmatmul.f32.gmra.mxu0 %v4259
        %v4366 = vpop.f32.mrf.mxu0
        %v4367 = vadd.f32 %v4326, %v4366
        %4368 = vmatmul.f32.gmra.mxu0 %v4263
        %v4369 = vpop.f32.mrf.mxu0
        %v4370 = vadd.f32 %v4329, %v4369
        %4371 = vdwg.mxu0
        %4372 = vmatpush.msra.mxu0 %v4233
        %4373 = vmatpush.msra.mxu0 %v4232
        %4374 = vmatpush.msra.mxu0 %v4231
        %4375 = vmatpush.msra.mxu0 %v4230
        %4376 = vmatpush.msra.mxu0 %v4229
        %4377 = vmatpush.msra.mxu0 %v4228
        %4378 = vmatpush.msra.mxu0 %v4227
        %4379 = vmatpush.msra.mxu0 %v4226
        %4380 = vmatpush.msra.mxu0 %v4225
        %4381 = vmatpush.msra.mxu0 %v4224
        %4382 = vmatpush.msra.mxu0 %v4223
        %4383 = vmatpush.msra.mxu0 %v4222
        %4384 = vmatpush.msra.mxu0 %v4221
        %4385 = vmatpush.msra.mxu0 %v4220
        %4386 = vmatpush.msra.mxu0 %v4219
        %4387 = vmatpush.msra.mxu0 %v4218
        %4388 = vmatmul.f32.gmra.mxu0 %v4236
        %v4389 = vpop.f32.mrf.mxu0
        %v4390 = vadd.f32 %v4349, %v4389
        %4391 = vmatmul.f32.gmra.mxu0 %v4240
        %v4392 = vpop.f32.mrf.mxu0
        %v4393 = vadd.f32 %v4352, %v4392
        %4394 = vmatmul.f32.gmra.mxu0 %v4244
        %v4395 = vpop.f32.mrf.mxu0
        %v4396 = vadd.f32 %v4355, %v4395
        %4397 = vmatmul.f32.gmra.mxu0 %v4248
        %v4398 = vpop.f32.mrf.mxu0
        %v4399 = vadd.f32 %v4358, %v4398
        %4400 = vmatmul.f32.gmra.mxu0 %v4252
        %v4401 = vpop.f32.mrf.mxu0
        %v4402 = vadd.f32 %v4361, %v4401
        %4403 = vmatmul.f32.gmra.mxu0 %v4256
        %v4404 = vpop.f32.mrf.mxu0
        %v4405 = vadd.f32 %v4364, %v4404
        %4406 = vmatmul.f32.gmra.mxu0 %v4260
        %v4407 = vpop.f32.mrf.mxu0
        %v4408 = vadd.f32 %v4367, %v4407
        %4409 = vmatmul.f32.gmra.mxu0 %v4264
        %v4410 = vpop.f32.mrf.mxu0
        %v4411 = vadd.f32 %v4370, %v4410
        %4412 = vdwg.mxu0
        %4413 = vmatpush.msra.mxu0 0.0
        %4414 = vmatpush.msra.mxu0 0.0
        %4415 = vmatpush.msra.mxu0 0.0
        %4416 = vmatpush.msra.mxu0 0.0
        %4417 = vmatpush.msra.mxu0 0.0
        %4418 = vmatpush.msra.mxu0 0.0
        %4419 = vmatpush.msra.mxu0 0.0
        %4420 = vmatpush.msra.mxu0 0.0
        %4421 = vmatpush.msra.mxu0 0.0
        %4422 = vmatpush.msra.mxu0 0.0
        %4423 = vmatpush.msra.mxu0 0.0
        %4424 = vmatpush.msra.mxu0 0.0
        %4425 = vmatpush.msra.mxu0 0.0
        %4426 = vmatpush.msra.mxu0 0.0
        %4427 = vmatpush.msra.mxu0 0.0
        %4428 = vmatpush.msra.mxu0 %v917
        %4429 = vmatmul.f32.gmra.mxu0 %v4267
        %v4430 = vpop.f32.mrf.mxu0
        %v4431 = vadd.f32 %v4390, %v4430
        %4432 = vmatmul.f32.gmra.mxu0 %v4270
        %v4433 = vpop.f32.mrf.mxu0
        %v4434 = vadd.f32 %v4393, %v4433
        %4435 = vmatmul.f32.gmra.mxu0 %v4273
        %v4436 = vpop.f32.mrf.mxu0
        %v4437 = vadd.f32 %v4396, %v4436
        %4438 = vmatmul.f32.gmra.mxu0 %v4276
        %v4439 = vpop.f32.mrf.mxu0
        %v4440 = vadd.f32 %v4399, %v4439
        %4441 = vmatmul.f32.gmra.mxu0 %v4279
        %v4442 = vpop.f32.mrf.mxu0
        %v4443 = vadd.f32 %v4402, %v4442
        %4444 = vmatmul.f32.gmra.mxu0 %v4282
        %v4445 = vpop.f32.mrf.mxu0
        %v4446 = vadd.f32 %v4405, %v4445
        %4447 = vmatmul.f32.gmra.mxu0 %v4285
        %v4448 = vpop.f32.mrf.mxu0
        %v4449 = vadd.f32 %v4408, %v4448
        %4450 = vmatmul.f32.gmra.mxu0 %v4288
        %v4451 = vpop.f32.mrf.mxu0
        %v4452 = vadd.f32 %v4411, %v4451
        %4453 = vdwg.mxu0
        %v4454 = vmax.f32 %v4431, 0.0
        %v4455 = vmax.f32 %v4434, 0.0
        %v4456 = vmax.f32 %v4437, 0.0
        %v4457 = vmax.f32 %v4440, 0.0
        %v4458 = vmax.f32 %v4443, 0.0
        %v4459 = vmax.f32 %v4446, 0.0
        %v4460 = vmax.f32 %v4449, 0.0
        %v4461 = vmax.f32 %v4452, 0.0
        %4470 = vrot.lane.b32.xlu0 %v4454, 113
        %v4471 = vpop.permute.xlu0 %4470
        %4472 = vrot.lane.b32.xlu0 %v4455, 113
        %v4473 = vpop.permute.xlu0 %4472
        %4474 = vrot.lane.b32.xlu0 %v4456, 113
        %v4475 = vpop.permute.xlu0 %4474
        %4476 = vrot.lane.b32.xlu0 %v4457, 113
        %v4477 = vpop.permute.xlu0 %4476
        %4478 = vrot.lane.b32.xlu0 %v4458, 113
        %v4479 = vpop.permute.xlu0 %4478
        %4480 = vrot.lane.b32.xlu0 %v4459, 113
        %v4481 = vpop.permute.xlu0 %4480
        %4482 = vrot.lane.b32.xlu0 %v4460, 113
        %v4483 = vpop.permute.xlu0 %4482
        %4484 = vrot.lane.b32.xlu0 %v4461, 113
        %v4485 = vpop.permute.xlu0 %4484
        %4494 = vrot.lane.b32.xlu0 %v4454, 1
        %v4495 = vpop.permute.xlu0 %4494
        %4496 = vrot.lane.b32.xlu0 %v4455, 1
        %v4497 = vpop.permute.xlu0 %4496
        %4498 = vrot.lane.b32.xlu0 %v4456, 1
        %v4499 = vpop.permute.xlu0 %4498
        %4500 = vrot.lane.b32.xlu0 %v4457, 1
        %v4501 = vpop.permute.xlu0 %4500
        %4502 = vrot.lane.b32.xlu0 %v4458, 1
        %v4503 = vpop.permute.xlu0 %4502
        %4504 = vrot.lane.b32.xlu0 %v4459, 1
        %v4505 = vpop.permute.xlu0 %4504
        %4506 = vrot.lane.b32.xlu0 %v4460, 1
        %v4507 = vpop.permute.xlu0 %4506
        %4508 = vrot.lane.b32.xlu0 %v4461, 1
        %v4509 = vpop.permute.xlu0 %4508
        %v4518 = vsel %vm203, %v4471, %v4495
        %v4519 = vsel %vm203, %v4473, %v4497
        %v4520 = vsel %vm203, %v4475, %v4499
        %v4521 = vsel %vm203, %v4477, %v4501
        %v4522 = vsel %vm203, %v4479, %v4503
        %v4523 = vsel %vm203, %v4481, %v4505
        %v4524 = vsel %vm203, %v4483, %v4507
        %v4525 = vsel %vm203, %v4485, %v4509
        %v4526 = vmul.f32 %v4518, %v843
        %v4527 = vmul.f32 %v4519, %v843
        %v4528 = vmul.f32 %v4520, %v843
        %v4529 = vmul.f32 %v4521, %v843
        %v4530 = vmul.f32 %v4522, %v843
        %v4531 = vmul.f32 %v4523, %v843
        %v4532 = vmul.f32 %v4524, %v843
        %v4533 = vmul.f32 %v4525, %v843
        %4534 = vrot.lane.b32.xlu0 %v4454, 127
        %v4535 = vpop.permute.xlu0 %4534
        %4536 = vrot.lane.b32.xlu0 %v4455, 127
        %v4537 = vpop.permute.xlu0 %4536
        %4538 = vrot.lane.b32.xlu0 %v4456, 127
        %v4539 = vpop.permute.xlu0 %4538
        %4540 = vrot.lane.b32.xlu0 %v4457, 127
        %v4541 = vpop.permute.xlu0 %4540
        %4542 = vrot.lane.b32.xlu0 %v4458, 127
        %v4543 = vpop.permute.xlu0 %4542
        %4544 = vrot.lane.b32.xlu0 %v4459, 127
        %v4545 = vpop.permute.xlu0 %4544
        %4546 = vrot.lane.b32.xlu0 %v4460, 127
        %v4547 = vpop.permute.xlu0 %4546
        %4548 = vrot.lane.b32.xlu0 %v4461, 127
        %v4549 = vpop.permute.xlu0 %4548
        %4558 = vrot.lane.b32.xlu0 %v4454, 15
        %v4559 = vpop.permute.xlu0 %4558
        %4560 = vrot.lane.b32.xlu0 %v4455, 15
        %v4561 = vpop.permute.xlu0 %4560
        %4562 = vrot.lane.b32.xlu0 %v4456, 15
        %v4563 = vpop.permute.xlu0 %4562
        %4564 = vrot.lane.b32.xlu0 %v4457, 15
        %v4565 = vpop.permute.xlu0 %4564
        %4566 = vrot.lane.b32.xlu0 %v4458, 15
        %v4567 = vpop.permute.xlu0 %4566
        %4568 = vrot.lane.b32.xlu0 %v4459, 15
        %v4569 = vpop.permute.xlu0 %4568
        %4570 = vrot.lane.b32.xlu0 %v4460, 15
        %v4571 = vpop.permute.xlu0 %4570
        %4572 = vrot.lane.b32.xlu0 %v4461, 15
        %v4573 = vpop.permute.xlu0 %4572
        %v4582 = vsel %vm872, %v4535, %v4559
        %v4583 = vsel %vm872, %v4537, %v4561
        %v4584 = vsel %vm872, %v4539, %v4563
        %v4585 = vsel %vm872, %v4541, %v4565
        %v4586 = vsel %vm872, %v4543, %v4567
        %v4587 = vsel %vm872, %v4545, %v4569
        %v4588 = vsel %vm872, %v4547, %v4571
        %v4589 = vsel %vm872, %v4549, %v4573
        %v4590 = vmul.f32 %v4582, %v878
        %v4591 = vmul.f32 %v4583, %v878
        %v4592 = vmul.f32 %v4584, %v878
        %v4593 = vmul.f32 %v4585, %v878
        %v4594 = vmul.f32 %v4586, %v878
        %v4595 = vmul.f32 %v4587, %v878
        %v4596 = vmul.f32 %v4588, %v878
        %v4597 = vmul.f32 %v4589, %v878
        %v4598 = vld [vmem:[#allocation2 + $0xac0] sm:$0xff]
        %v4599 = vld [vmem:[#allocation2 + $0xac8] sm:$0xff]
        %v4600 = vld [vmem:[#allocation2 + $0xae0] sm:$0xff]
        %v4601 = vld [vmem:[#allocation2 + $0xae8] sm:$0xff]
        %v4602 = vld [vmem:[#allocation2 + $0xb00] sm:$0xff]
        %v4603 = vld [vmem:[#allocation2 + $0xb08] sm:$0xff]
        %v4604 = vld [vmem:[#allocation2 + $0xb20] sm:$0xff]
        %v4605 = vld [vmem:[#allocation2 + $0xb28] sm:$0xff]
        %v4606 = vld [vmem:[#allocation2 + $0xb40] sm:$0xff]
        %v4607 = vld [vmem:[#allocation2 + $0xb48] sm:$0xff]
        %v4608 = vld [vmem:[#allocation2 + $0xb60] sm:$0xff]
        %v4609 = vld [vmem:[#allocation2 + $0xb68] sm:$0xff]
        %v4610 = vld [vmem:[#allocation2 + $0xb80] sm:$0xff]
        %v4611 = vld [vmem:[#allocation2 + $0xb88] sm:$0xff]
        %v4612 = vld [vmem:[#allocation2 + $0xba0] sm:$0xff]
        %v4613 = vld [vmem:[#allocation2 + $0xba8] sm:$0xff]
        %v4615 = vsel %vm1120, %v4599, 0
        %v4618 = vsel %vm1120, %v4601, 0
        %v4621 = vsel %vm1120, %v4603, 0
        %v4624 = vsel %vm1120, %v4605, 0
        %v4627 = vsel %vm1120, %v4607, 0
        %v4630 = vsel %vm1120, %v4609, 0
        %v4633 = vsel %vm1120, %v4611, 0
        %v4636 = vsel %vm1120, %v4613, 0
        %4638 = vmatpush.msra.mxu0 %v4461
        %4639 = vmatpush.msra.mxu0 %v4460
        %4640 = vmatpush.msra.mxu0 %v4459
        %4641 = vmatpush.msra.mxu0 %v4458
        %4642 = vmatpush.msra.mxu0 %v4457
        %4643 = vmatpush.msra.mxu0 %v4456
        %4644 = vmatpush.msra.mxu0 %v4455
        %4645 = vmatpush.msra.mxu0 %v4454
        %4646 = vmatpush.msra.mxu0 %v4533
        %4647 = vmatpush.msra.mxu0 %v4532
        %4648 = vmatpush.msra.mxu0 %v4531
        %4649 = vmatpush.msra.mxu0 %v4530
        %4650 = vmatpush.msra.mxu0 %v4529
        %4651 = vmatpush.msra.mxu0 %v4528
        %4652 = vmatpush.msra.mxu0 %v4527
        %4653 = vmatpush.msra.mxu0 %v4526
        %4654 = vmatmul.f32.gmra.mxu0 %v4598
        %v4655 = vpop.f32.mrf.mxu0
        %v4656 = vadd.f32 0.0, %v4655
        %4657 = vmatmul.f32.gmra.mxu0 %v4600
        %v4658 = vpop.f32.mrf.mxu0
        %v4659 = vadd.f32 0.0, %v4658
        %4660 = vmatmul.f32.gmra.mxu0 %v4602
        %v4661 = vpop.f32.mrf.mxu0
        %v4662 = vadd.f32 0.0, %v4661
        %4663 = vmatmul.f32.gmra.mxu0 %v4604
        %v4664 = vpop.f32.mrf.mxu0
        %v4665 = vadd.f32 0.0, %v4664
        %4666 = vmatmul.f32.gmra.mxu0 %v4606
        %v4667 = vpop.f32.mrf.mxu0
        %v4668 = vadd.f32 0.0, %v4667
        %4669 = vmatmul.f32.gmra.mxu0 %v4608
        %v4670 = vpop.f32.mrf.mxu0
        %v4671 = vadd.f32 0.0, %v4670
        %4672 = vmatmul.f32.gmra.mxu0 %v4610
        %v4673 = vpop.f32.mrf.mxu0
        %v4674 = vadd.f32 0.0, %v4673
        %4675 = vmatmul.f32.gmra.mxu0 %v4612
        %v4676 = vpop.f32.mrf.mxu0
        %v4677 = vadd.f32 0.0, %v4676
        %4678 = vdwg.mxu0
        %4679 = vmatpush.msra.mxu0 0.0
        %4680 = vmatpush.msra.mxu0 0.0
        %4681 = vmatpush.msra.mxu0 0.0
        %4682 = vmatpush.msra.mxu0 0.0
        %4683 = vmatpush.msra.mxu0 0.0
        %4684 = vmatpush.msra.mxu0 0.0
        %4685 = vmatpush.msra.mxu0 0.0
        %4686 = vmatpush.msra.mxu0 %v917
        %4687 = vmatpush.msra.mxu0 %v4597
        %4688 = vmatpush.msra.mxu0 %v4596
        %4689 = vmatpush.msra.mxu0 %v4595
        %4690 = vmatpush.msra.mxu0 %v4594
        %4691 = vmatpush.msra.mxu0 %v4593
        %4692 = vmatpush.msra.mxu0 %v4592
        %4693 = vmatpush.msra.mxu0 %v4591
        %4694 = vmatpush.msra.mxu0 %v4590
        %4695 = vmatmul.f32.gmra.mxu0 %v4615
        %v4696 = vpop.f32.mrf.mxu0
        %v4697 = vadd.f32 %v4656, %v4696
        %4698 = vmatmul.f32.gmra.mxu0 %v4618
        %v4699 = vpop.f32.mrf.mxu0
        %v4700 = vadd.f32 %v4659, %v4699
        %4701 = vmatmul.f32.gmra.mxu0 %v4621
        %v4702 = vpop.f32.mrf.mxu0
        %v4703 = vadd.f32 %v4662, %v4702
        %4704 = vmatmul.f32.gmra.mxu0 %v4624
        %v4705 = vpop.f32.mrf.mxu0
        %v4706 = vadd.f32 %v4665, %v4705
        %4707 = vmatmul.f32.gmra.mxu0 %v4627
        %v4708 = vpop.f32.mrf.mxu0
        %v4709 = vadd.f32 %v4668, %v4708
        %4710 = vmatmul.f32.gmra.mxu0 %v4630
        %v4711 = vpop.f32.mrf.mxu0
        %v4712 = vadd.f32 %v4671, %v4711
        %4713 = vmatmul.f32.gmra.mxu0 %v4633
        %v4714 = vpop.f32.mrf.mxu0
        %v4715 = vadd.f32 %v4674, %v4714
        %4716 = vmatmul.f32.gmra.mxu0 %v4636
        %v4717 = vpop.f32.mrf.mxu0
        %v4718 = vadd.f32 %v4677, %v4717
        %4719 = vdwg.mxu0
        %v4720 = vmax.f32 %v4697, 0.0
        %v4721 = vmax.f32 %v4700, 0.0
        %v4722 = vmax.f32 %v4703, 0.0
        %v4723 = vmax.f32 %v4706, 0.0
        %v4724 = vmax.f32 %v4709, 0.0
        %v4725 = vmax.f32 %v4712, 0.0
        %v4726 = vmax.f32 %v4715, 0.0
        %v4727 = vmax.f32 %v4718, 0.0
        %4728 = vrot.lane.b32.xlu0 %v724, 97
        %v4729 = vpop.permute.xlu0 %4728
        %4730 = vrot.lane.b32.xlu0 %v725, 97
        %v4731 = vpop.permute.xlu0 %4730
        %4732 = vrot.lane.b32.xlu0 %v726, 97
        %v4733 = vpop.permute.xlu0 %4732
        %4734 = vrot.lane.b32.xlu0 %v727, 97
        %v4735 = vpop.permute.xlu0 %4734
        %4740 = vrot.lane.b32.xlu0 %v724, 1
        %v4741 = vpop.permute.xlu0 %4740
        %4742 = vrot.lane.b32.xlu0 %v725, 1
        %v4743 = vpop.permute.xlu0 %4742
        %4744 = vrot.lane.b32.xlu0 %v726, 1
        %v4745 = vpop.permute.xlu0 %4744
        %4746 = vrot.lane.b32.xlu0 %v727, 1
        %v4747 = vpop.permute.xlu0 %4746
        %v4752 = vsel %vm203, %v4729, %v4741
        %v4753 = vsel %vm203, %v4731, %v4743
        %v4754 = vsel %vm203, %v4733, %v4745
        %v4755 = vsel %vm203, %v4735, %v4747
        %v4756 = vmul.f32 %v4752, %v535
        %v4757 = vmul.f32 %v4753, %v535
        %v4758 = vmul.f32 %v4754, %v535
        %v4759 = vmul.f32 %v4755, %v535
        %v4760 = vmul.f32 %v756, %v554
        %v4761 = vmul.f32 %v757, %v554
        %v4762 = vmul.f32 %v758, %v554
        %v4763 = vmul.f32 %v759, %v554
        %v4764 = vld [vmem:[#allocation2 + $0x1460] sm:$0xff]
        %v4765 = vld [vmem:[#allocation2 + $0x1480] sm:$0xff]
        %v4766 = vld [vmem:[#allocation2 + $0x14a0] sm:$0xff]
        %v4767 = vld [vmem:[#allocation2 + $0x14c0] sm:$0xff]
        %v4768 = vld [vmem:[#allocation2 + $0x14e0] sm:$0xff]
        %v4769 = vld [vmem:[#allocation2 + $0x1500] sm:$0xff]
        %v4770 = vld [vmem:[#allocation2 + $0x1520] sm:$0xff]
        %v4771 = vld [vmem:[#allocation2 + $0x1540] sm:$0xff]
        %v4773 = vsel %vm682, %v4764, 0
        %v4776 = vsel %vm682, %v4765, 0
        %v4779 = vsel %vm682, %v4766, 0
        %v4782 = vsel %vm682, %v4767, 0
        %v4785 = vsel %vm682, %v4768, 0
        %v4788 = vsel %vm682, %v4769, 0
        %v4791 = vsel %vm682, %v4770, 0
        %v4794 = vsel %vm682, %v4771, 0
        %4796 = vmatpush.msra.mxu0 0.0
        %4797 = vmatpush.msra.mxu0 0.0
        %4798 = vmatpush.msra.mxu0 0.0
        %4799 = vmatpush.msra.mxu0 %v575
        %4800 = vmatpush.msra.mxu0 %v4763
        %4801 = vmatpush.msra.mxu0 %v4762
        %4802 = vmatpush.msra.mxu0 %v4761
        %4803 = vmatpush.msra.mxu0 %v4760
        %4804 = vmatpush.msra.mxu0 %v727
        %4805 = vmatpush.msra.mxu0 %v726
        %4806 = vmatpush.msra.mxu0 %v725
        %4807 = vmatpush.msra.mxu0 %v724
        %4808 = vmatpush.msra.mxu0 %v4759
        %4809 = vmatpush.msra.mxu0 %v4758
        %4810 = vmatpush.msra.mxu0 %v4757
        %4811 = vmatpush.msra.mxu0 %v4756
        %4812 = vmatmul.f32.gmra.mxu0 %v4773
        %v4813 = vpop.f32.mrf.mxu0
        %v4814 = vadd.f32 0.0, %v4813
        %4815 = vmatmul.f32.gmra.mxu0 %v4776
        %v4816 = vpop.f32.mrf.mxu0
        %v4817 = vadd.f32 0.0, %v4816
        %4818 = vmatmul.f32.gmra.mxu0 %v4779
        %v4819 = vpop.f32.mrf.mxu0
        %v4820 = vadd.f32 0.0, %v4819
        %4821 = vmatmul.f32.gmra.mxu0 %v4782
        %v4822 = vpop.f32.mrf.mxu0
        %v4823 = vadd.f32 0.0, %v4822
        %4824 = vmatmul.f32.gmra.mxu0 %v4785
        %v4825 = vpop.f32.mrf.mxu0
        %v4826 = vadd.f32 0.0, %v4825
        %4827 = vmatmul.f32.gmra.mxu0 %v4788
        %v4828 = vpop.f32.mrf.mxu0
        %v4829 = vadd.f32 0.0, %v4828
        %4830 = vmatmul.f32.gmra.mxu0 %v4791
        %v4831 = vpop.f32.mrf.mxu0
        %v4832 = vadd.f32 0.0, %v4831
        %4833 = vmatmul.f32.gmra.mxu0 %v4794
        %v4834 = vpop.f32.mrf.mxu0
        %v4835 = vadd.f32 0.0, %v4834
        %4836 = vdwg.mxu0
        %v4838 = vsel %vm768, %v4814, 0
        %v4841 = vsel %vm768, %v4817, 0
        %v4844 = vsel %vm768, %v4820, 0
        %v4847 = vsel %vm768, %v4823, 0
        %v4850 = vsel %vm768, %v4826, 0
        %v4853 = vsel %vm768, %v4829, 0
        %v4856 = vsel %vm768, %v4832, 0
        %v4859 = vsel %vm768, %v4835, 0
        %4861 = vmatpush.msra.mxu0 0.0
        %4862 = vmatpush.msra.mxu0 0.0
        %4863 = vmatpush.msra.mxu0 0.0
        %4864 = vmatpush.msra.mxu0 0.0
        %4865 = vmatpush.msra.mxu0 0.0
        %4866 = vmatpush.msra.mxu0 0.0
        %4867 = vmatpush.msra.mxu0 0.0
        %4868 = vmatpush.msra.mxu0 0.0
        %4869 = vmatpush.msra.mxu0 0.0
        %4870 = vmatpush.msra.mxu0 0.0
        %4871 = vmatpush.msra.mxu0 0.0
        %4872 = vmatpush.msra.mxu0 0.0
        %4873 = vmatpush.msra.mxu0 %v767
        %4874 = vmatpush.msra.mxu0 %v766
        %4875 = vmatpush.msra.mxu0 %v765
        %4876 = vmatpush.msra.mxu0 %v764
        %4877 = vmatmul.f32.gmra.mxu0 %v4838
        %v4878 = vpop.f32.mrf.mxu0
        %v4879 = vadd.f32 %v4720, %v4878
        %4880 = vmatmul.f32.gmra.mxu0 %v4841
        %v4881 = vpop.f32.mrf.mxu0
        %v4882 = vadd.f32 %v4721, %v4881
        %4883 = vmatmul.f32.gmra.mxu0 %v4844
        %v4884 = vpop.f32.mrf.mxu0
        %v4885 = vadd.f32 %v4722, %v4884
        %4886 = vmatmul.f32.gmra.mxu0 %v4847
        %v4887 = vpop.f32.mrf.mxu0
        %v4888 = vadd.f32 %v4723, %v4887
        %4889 = vmatmul.f32.gmra.mxu0 %v4850
        %v4890 = vpop.f32.mrf.mxu0
        %v4891 = vadd.f32 %v4724, %v4890
        %4892 = vmatmul.f32.gmra.mxu0 %v4853
        %v4893 = vpop.f32.mrf.mxu0
        %v4894 = vadd.f32 %v4725, %v4893
        %4895 = vmatmul.f32.gmra.mxu0 %v4856
        %v4896 = vpop.f32.mrf.mxu0
        %v4897 = vadd.f32 %v4726, %v4896
        %4898 = vmatmul.f32.gmra.mxu0 %v4859
        %v4899 = vpop.f32.mrf.mxu0
        %v4900 = vadd.f32 %v4727, %v4899
        %4901 = vdwg.mxu0
        %v4902 = vmax.f32 %v4879, 0.0
        %v4903 = vmax.f32 %v4882, 0.0
        %v4904 = vmax.f32 %v4885, 0.0
        %v4905 = vmax.f32 %v4888, 0.0
        %v4906 = vmax.f32 %v4891, 0.0
        %v4907 = vmax.f32 %v4894, 0.0
        %v4908 = vmax.f32 %v4897, 0.0
        %v4909 = vmax.f32 %v4900, 0.0
        %v4910 = vld [vmem:[#allocation2 + $0x1560] ss:$0 sm:$0xff]
        %v4912 = vsel %vm1120, %v4910, 0
        %4914 = vmatpush.msra.mxu0 0.0
        %4915 = vmatpush.msra.mxu0 0.0
        %4916 = vmatpush.msra.mxu0 0.0
        %4917 = vmatpush.msra.mxu0 0.0
        %4918 = vmatpush.msra.mxu0 0.0
        %4919 = vmatpush.msra.mxu0 0.0
        %4920 = vmatpush.msra.mxu0 0.0
        %4921 = vmatpush.msra.mxu0 %v917
        %4922 = vmatpush.msra.mxu0 %v4909
        %4923 = vmatpush.msra.mxu0 %v4908
        %4924 = vmatpush.msra.mxu0 %v4907
        %4925 = vmatpush.msra.mxu0 %v4906
        %4926 = vmatpush.msra.mxu0 %v4905
        %4927 = vmatpush.msra.mxu0 %v4904
        %4928 = vmatpush.msra.mxu0 %v4903
        %4929 = vmatpush.msra.mxu0 %v4902
        %4930 = vmatmul.f32.gmra.mxu0 %v4912
        %v4931 = vpop.f32.mrf.mxu0
        %v4932 = vadd.f32 0.0, %v4931
        %4933 = vdwg.mxu0
        %v4934 = vxor.u32 %v4932, 2147483648
        %v4935 = vmul.f32 %v4934, 1.442695
        %v4936 = vpow.pop %v4935
        %v4937 = vadd.f32 %v4936, 1.0
        %v4938 = vrcp.pop %v4937
        %v4939 = vmul.f32 %v4937, %v4938
        %v4940 = vsub.f32 1.0, %v4939
        %v4941 = vmul.f32 %v4938, %v4940
        %v4942 = vadd.f32 %v4938, %v4941
        %vm4943 = vweird.f32 %v4937
        %vm4944 = vweird.f32 %v4938
        %vm4945 = vmor %vm4943, %vm4944
        %v4946 = vsel %vm4945, %v4938, %v4942
        %v4947 = vand.u32 2147483647, %v4937
        %vm4948 = vcmp.eq.f32.partialorder %v4947, 8.507059e+37
        %v4949 = vand.u32 %v4937, 2147483648
        %v4950 = vor.u32 1.1754944e-38, %v4949
        %v4951 = vsel %vm4948, %v4950, %v4946
        %v4952 = vmul.f32 1.0, %v4951
        %4954 = vrot.lane.b32.xlu0 %v4952, 113
        %v4955 = vpop.permute.xlu0 %4954
        %4957 = vrot.lane.b32.xlu0 %v4952, 1
        %v4958 = vpop.permute.xlu0 %4957
        %v4960 = vsel %vm203, %v4955, %v4958
        %v4961 = vmul.f32 %v4960, %v842
        %4962 = vrot.lane.b32.xlu0 %v4952, 127
        %v4963 = vpop.permute.xlu0 %4962
        %4965 = vrot.lane.b32.xlu0 %v4952, 15
        %v4966 = vpop.permute.xlu0 %4965
        %v4968 = vsel %vm872, %v4963, %v4966
        %v4969 = vmul.f32 %v4968, %v877
        %v4970 = vrot.slane %v4952, 7
        %v4973 = vrot.slane %v4969, 6
        %v4975 = vrot.slane %v883, 5
        %v4977 = vsel %vm219, %v4961, %v4970
        %v4978 = vsel %vm221, %v4977, %v4973
        %v4979 = vsel %vm223, %v4978, %v4975
        %v4980 = vld [vmem:[#allocation2 + $0x1580] sm:$0xff]
        %v4981 = vld [vmem:[#allocation2 + $0x15a0] sm:$0xff]
        %v4982 = vld [vmem:[#allocation2 + $0x15c0] sm:$0xff]
        %v4983 = vld [vmem:[#allocation2 + $0x15e0] sm:$0xff]
        %v4985 = vsel %vm226, %v4980, 0
        %v4988 = vsel %vm226, %v4981, 0
        %v4991 = vsel %vm226, %v4982, 0
        %v4994 = vsel %vm226, %v4983, 0
        %v4997 = vsel %vm230, %v4979, 0
        %4999 = vmatpush.msra.mxu0 0.0
        %5000 = vmatpush.msra.mxu0 0.0
        %5001 = vmatpush.msra.mxu0 0.0
        %5002 = vmatpush.msra.mxu0 0.0
        %5003 = vmatpush.msra.mxu0 0.0
        %5004 = vmatpush.msra.mxu0 0.0
        %5005 = vmatpush.msra.mxu0 0.0
        %5006 = vmatpush.msra.mxu0 0.0
        %5007 = vmatpush.msra.mxu0 0.0
        %5008 = vmatpush.msra.mxu0 0.0
        %5009 = vmatpush.msra.mxu0 0.0
        %5010 = vmatpush.msra.mxu0 0.0
        %5011 = vmatpush.msra.mxu0 0.0
        %5012 = vmatpush.msra.mxu0 0.0
        %5013 = vmatpush.msra.mxu0 0.0
        %5014 = vmatpush.msra.mxu0 %v4997
        %5015 = vmatmul.f32.gmra.mxu0 %v4985
        %v5016 = vpop.f32.mrf.mxu0
        %v5017 = vadd.f32 0.0, %v5016
        %5018 = vmatmul.f32.gmra.mxu0 %v4988
        %v5019 = vpop.f32.mrf.mxu0
        %v5020 = vadd.f32 0.0, %v5019
        %5021 = vmatmul.f32.gmra.mxu0 %v4991
        %v5022 = vpop.f32.mrf.mxu0
        %v5023 = vadd.f32 0.0, %v5022
        %5024 = vmatmul.f32.gmra.mxu0 %v4994
        %v5025 = vpop.f32.mrf.mxu0
        %v5026 = vadd.f32 0.0, %v5025
        %5027 = vdwg.mxu0
        %v5028 = vld [vmem:[#allocation2 + $0x1600] sm:$0xff]
        %v5029 = vld [vmem:[#allocation2 + $0x1620] sm:$0xff]
        %v5030 = vld [vmem:[#allocation2 + $0x1640] sm:$0xff]
        %v5031 = vld [vmem:[#allocation2 + $0x1660] sm:$0xff]
        %vm5032 = vcmask 269312
        %v5034 = vsel %vm5032, %v5028, 0
        %v5037 = vsel %vm5032, %v5029, 0
        %v5040 = vsel %vm5032, %v5030, 0
        %v5043 = vsel %vm5032, %v5031, 0
        %5045 = vmatpush.msra.mxu0 0.0
        %5046 = vmatpush.msra.mxu0 0.0
        %5047 = vmatpush.msra.mxu0 0.0
        %5048 = vmatpush.msra.mxu0 0.0
        %5049 = vmatpush.msra.mxu0 0.0
        %5050 = vmatpush.msra.mxu0 0.0
        %5051 = vmatpush.msra.mxu0 0.0
        %5052 = vmatpush.msra.mxu0 0.0
        %5053 = vmatpush.msra.mxu0 0.0
        %5054 = vmatpush.msra.mxu0 0.0
        %5055 = vmatpush.msra.mxu0 0.0
        %5056 = vmatpush.msra.mxu0 %v917
        %5057 = vmatpush.msra.mxu0 %v5026
        %5058 = vmatpush.msra.mxu0 %v5023
        %5059 = vmatpush.msra.mxu0 %v5020
        %5060 = vmatpush.msra.mxu0 %v5017
        %5061 = vmatmul.f32.gmra.mxu0 %v5034
        %v5062 = vpop.f32.mrf.mxu0
        %v5063 = vadd.f32 0.0, %v5062
        %5064 = vmatmul.f32.gmra.mxu0 %v5037
        %v5065 = vpop.f32.mrf.mxu0
        %v5066 = vadd.f32 0.0, %v5065
        %5067 = vmatmul.f32.gmra.mxu0 %v5040
        %v5068 = vpop.f32.mrf.mxu0
        %v5069 = vadd.f32 0.0, %v5068
        %5070 = vmatmul.f32.gmra.mxu0 %v5043
        %v5071 = vpop.f32.mrf.mxu0
        %v5072 = vadd.f32 0.0, %v5071
        %5073 = vdwg.mxu0
        %v5074 = vld [vmem:[#allocation2 + $0x1680] sm:$0xff]
        %v5075 = vld [vmem:[#allocation2 + $0x16a0] sm:$0xff]
        %v5076 = vld [vmem:[#allocation2 + $0x16c0] sm:$0xff]
        %v5077 = vld [vmem:[#allocation2 + $0x16e0] sm:$0xff]
        %5082 = vrot.lane.b32.xlu0 %v5017, 127
        %v5083 = vpop.permute.xlu0 %5082
        %5084 = vrot.lane.b32.xlu0 %v5020, 127
        %v5085 = vpop.permute.xlu0 %5084
        %5086 = vrot.lane.b32.xlu0 %v5023, 127
        %v5087 = vpop.permute.xlu0 %5086
        %5088 = vrot.lane.b32.xlu0 %v5026, 127
        %v5089 = vpop.permute.xlu0 %5088
        %5094 = vrot.lane.b32.xlu0 %v5017, 15
        %v5095 = vpop.permute.xlu0 %5094
        %5096 = vrot.lane.b32.xlu0 %v5020, 15
        %v5097 = vpop.permute.xlu0 %5096
        %5098 = vrot.lane.b32.xlu0 %v5023, 15
        %v5099 = vpop.permute.xlu0 %5098
        %5100 = vrot.lane.b32.xlu0 %v5026, 15
        %v5101 = vpop.permute.xlu0 %5100
        %v5106 = vsel %vm872, %v5083, %v5095
        %v5107 = vsel %vm872, %v5085, %v5097
        %v5108 = vsel %vm872, %v5087, %v5099
        %v5109 = vsel %vm872, %v5089, %v5101
        %v5110 = vmul.f32 %v5106, %v878
        %v5111 = vmul.f32 %v5107, %v878
        %v5112 = vmul.f32 %v5108, %v878
        %v5113 = vmul.f32 %v5109, %v878
        %v5115 = vsel %vm1120, %v5074, 0
        %v5118 = vsel %vm1120, %v5075, 0
        %v5121 = vsel %vm1120, %v5076, 0
        %v5124 = vsel %vm1120, %v5077, 0
        %5126 = vmatpush.msra.mxu0 0.0
        %5127 = vmatpush.msra.mxu0 0.0
        %5128 = vmatpush.msra.mxu0 0.0
        %5129 = vmatpush.msra.mxu0 0.0
        %5130 = vmatpush.msra.mxu0 0.0
        %5131 = vmatpush.msra.mxu0 0.0
        %5132 = vmatpush.msra.mxu0 0.0
        %5133 = vmatpush.msra.mxu0 %v917
        %5134 = vmatpush.msra.mxu0 %v5113
        %5135 = vmatpush.msra.mxu0 %v5112
        %5136 = vmatpush.msra.mxu0 %v5111
        %5137 = vmatpush.msra.mxu0 %v5110
        %5138 = vmatpush.msra.mxu0 %v5026
        %5139 = vmatpush.msra.mxu0 %v5023
        %5140 = vmatpush.msra.mxu0 %v5020
        %5141 = vmatpush.msra.mxu0 %v5017
        %5142 = vmatmul.f32.gmra.mxu0 %v5115
        %v5143 = vpop.f32.mrf.mxu0
        %v5144 = vadd.f32 0.0, %v5143
        %5145 = vmatmul.f32.gmra.mxu0 %v5118
        %v5146 = vpop.f32.mrf.mxu0
        %v5147 = vadd.f32 0.0, %v5146
        %5148 = vmatmul.f32.gmra.mxu0 %v5121
        %v5149 = vpop.f32.mrf.mxu0
        %v5150 = vadd.f32 0.0, %v5149
        %5151 = vmatmul.f32.gmra.mxu0 %v5124
        %v5152 = vpop.f32.mrf.mxu0
        %v5153 = vadd.f32 0.0, %v5152
        %5154 = vdwg.mxu0
        %v5155 = vld [vmem:[#allocation4 + $0x228] sm:$0xff]
        %v5156 = vld [vmem:[#allocation4 + $0x230] sm:$0xff]
        %v5157 = vld [vmem:[#allocation4 + $0x238] sm:$0xff]
        %v5158 = vld [vmem:[#allocation4 + $0x240] sm:$0xff]
        %v5160 = vsel %vm1309, %v5144, 0
        %v5163 = vsel %vm1309, %v5147, 0
        %v5166 = vsel %vm1309, %v5150, 0
        %v5169 = vsel %vm1309, %v5153, 0
        %5171 = vmatpush.msra.mxu0 0.0
        %5172 = vmatpush.msra.mxu0 0.0
        %5173 = vmatpush.msra.mxu0 0.0
        %5174 = vmatpush.msra.mxu0 0.0
        %5175 = vmatpush.msra.mxu0 0.0
        %5176 = vmatpush.msra.mxu0 0.0
        %5177 = vmatpush.msra.mxu0 0.0
        %5178 = vmatpush.msra.mxu0 0.0
        %5179 = vmatpush.msra.mxu0 0.0
        %5180 = vmatpush.msra.mxu0 0.0
        %5181 = vmatpush.msra.mxu0 0.0
        %5182 = vmatpush.msra.mxu0 0.0
        %5183 = vmatpush.msra.mxu0 0.0
        %5184 = vmatpush.msra.mxu0 0.0
        %5185 = vmatpush.msra.mxu0 %v5158
        %5186 = vmatpush.msra.mxu0 %v5157
        %5187 = vmatmul.f32.gmra.mxu0 %v5160
        %v5188 = vpop.f32.mrf.mxu0
        %v5189 = vadd.f32 0.0, %v5188
        %5190 = vmatmul.f32.gmra.mxu0 %v5163
        %v5191 = vpop.f32.mrf.mxu0
        %v5192 = vadd.f32 0.0, %v5191
        %5193 = vmatmul.f32.gmra.mxu0 %v5166
        %v5194 = vpop.f32.mrf.mxu0
        %v5195 = vadd.f32 0.0, %v5194
        %5196 = vmatmul.f32.gmra.mxu0 %v5169
        %v5197 = vpop.f32.mrf.mxu0
        %v5198 = vadd.f32 0.0, %v5197
        %5199 = vdwg.mxu0
        %v5201 = vsel %vm1309, %v5063, 0
        %v5204 = vsel %vm1309, %v5066, 0
        %v5207 = vsel %vm1309, %v5069, 0
        %v5210 = vsel %vm1309, %v5072, 0
        %5212 = vmatpush.msra.mxu0 0.0
        %5213 = vmatpush.msra.mxu0 0.0
        %5214 = vmatpush.msra.mxu0 0.0
        %5215 = vmatpush.msra.mxu0 0.0
        %5216 = vmatpush.msra.mxu0 0.0
        %5217 = vmatpush.msra.mxu0 0.0
        %5218 = vmatpush.msra.mxu0 0.0
        %5219 = vmatpush.msra.mxu0 0.0
        %5220 = vmatpush.msra.mxu0 0.0
        %5221 = vmatpush.msra.mxu0 0.0
        %5222 = vmatpush.msra.mxu0 0.0
        %5223 = vmatpush.msra.mxu0 0.0
        %5224 = vmatpush.msra.mxu0 0.0
        %5225 = vmatpush.msra.mxu0 0.0
        %5226 = vmatpush.msra.mxu0 %v5156
        %5227 = vmatpush.msra.mxu0 %v5155
        %5228 = vmatmul.f32.gmra.mxu0 %v5201
        %v5229 = vpop.f32.mrf.mxu0
        %v5230 = vadd.f32 %v5189, %v5229
        %5231 = vmatmul.f32.gmra.mxu0 %v5204
        %v5232 = vpop.f32.mrf.mxu0
        %v5233 = vadd.f32 %v5192, %v5232
        %5234 = vmatmul.f32.gmra.mxu0 %v5207
        %v5235 = vpop.f32.mrf.mxu0
        %v5236 = vadd.f32 %v5195, %v5235
        %5237 = vmatmul.f32.gmra.mxu0 %v5210
        %v5238 = vpop.f32.mrf.mxu0
        %v5239 = vadd.f32 %v5198, %v5238
        %5240 = vdwg.mxu0
        %v5241 = vmul.f32 %v5230, %v724
        %v5242 = vmul.f32 %v5233, %v725
        %v5243 = vmul.f32 %v5236, %v726
        %v5244 = vmul.f32 %v5239, %v727
        %v5245 = vld [vmem:[#allocation2 + $0xbc0] sm:$0xff]
        %v5246 = vld [vmem:[#allocation2 + $0xbe0] sm:$0xff]
        %v5247 = vld [vmem:[#allocation2 + $0xc00] sm:$0xff]
        %v5248 = vld [vmem:[#allocation2 + $0xc20] sm:$0xff]
        %v5250 = vsel %vm1120, %v5245, 0
        %v5253 = vsel %vm1120, %v5246, 0
        %v5256 = vsel %vm1120, %v5247, 0
        %v5259 = vsel %vm1120, %v5248, 0
        %5261 = vmatpush.msra.mxu0 0.0
        %5262 = vmatpush.msra.mxu0 0.0
        %5263 = vmatpush.msra.mxu0 0.0
        %5264 = vmatpush.msra.mxu0 0.0
        %5265 = vmatpush.msra.mxu0 0.0
        %5266 = vmatpush.msra.mxu0 0.0
        %5267 = vmatpush.msra.mxu0 0.0
        %5268 = vmatpush.msra.mxu0 %v917
        %5269 = vmatpush.msra.mxu0 %v4727
        %5270 = vmatpush.msra.mxu0 %v4726
        %5271 = vmatpush.msra.mxu0 %v4725
        %5272 = vmatpush.msra.mxu0 %v4724
        %5273 = vmatpush.msra.mxu0 %v4723
        %5274 = vmatpush.msra.mxu0 %v4722
        %5275 = vmatpush.msra.mxu0 %v4721
        %5276 = vmatpush.msra.mxu0 %v4720
        %5277 = vmatmul.f32.gmra.mxu0 %v5250
        %v5278 = vpop.f32.mrf.mxu0
        %v5279 = vadd.f32 0.0, %v5278
        %5280 = vmatmul.f32.gmra.mxu0 %v5253
        %v5281 = vpop.f32.mrf.mxu0
        %v5282 = vadd.f32 0.0, %v5281
        %5283 = vmatmul.f32.gmra.mxu0 %v5256
        %v5284 = vpop.f32.mrf.mxu0
        %v5285 = vadd.f32 0.0, %v5284
        %5286 = vmatmul.f32.gmra.mxu0 %v5259
        %v5287 = vpop.f32.mrf.mxu0
        %v5288 = vadd.f32 0.0, %v5287
        %5289 = vdwg.mxu0
        %v5290 = vld [vmem:[#allocation2 + $0xc40] sm:$0xff]
        %v5291 = vld [vmem:[#allocation2 + $0xc48] sm:$0xff]
        %v5292 = vld [vmem:[#allocation2 + $0xc60] sm:$0xff]
        %v5293 = vld [vmem:[#allocation2 + $0xc68] sm:$0xff]
        %v5294 = vld [vmem:[#allocation2 + $0xc80] sm:$0xff]
        %v5295 = vld [vmem:[#allocation2 + $0xc88] sm:$0xff]
        %v5296 = vld [vmem:[#allocation2 + $0xca0] sm:$0xff]
        %v5297 = vld [vmem:[#allocation2 + $0xca8] sm:$0xff]
        %5306 = vrot.lane.b32.xlu0 %v4720, 127
        %v5307 = vpop.permute.xlu0 %5306
        %5308 = vrot.lane.b32.xlu0 %v4721, 127
        %v5309 = vpop.permute.xlu0 %5308
        %5310 = vrot.lane.b32.xlu0 %v4722, 127
        %v5311 = vpop.permute.xlu0 %5310
        %5312 = vrot.lane.b32.xlu0 %v4723, 127
        %v5313 = vpop.permute.xlu0 %5312
        %5314 = vrot.lane.b32.xlu0 %v4724, 127
        %v5315 = vpop.permute.xlu0 %5314
        %5316 = vrot.lane.b32.xlu0 %v4725, 127
        %v5317 = vpop.permute.xlu0 %5316
        %5318 = vrot.lane.b32.xlu0 %v4726, 127
        %v5319 = vpop.permute.xlu0 %5318
        %5320 = vrot.lane.b32.xlu0 %v4727, 127
        %v5321 = vpop.permute.xlu0 %5320
        %5330 = vrot.lane.b32.xlu0 %v4720, 15
        %v5331 = vpop.permute.xlu0 %5330
        %5332 = vrot.lane.b32.xlu0 %v4721, 15
        %v5333 = vpop.permute.xlu0 %5332
        %5334 = vrot.lane.b32.xlu0 %v4722, 15
        %v5335 = vpop.permute.xlu0 %5334
        %5336 = vrot.lane.b32.xlu0 %v4723, 15
        %v5337 = vpop.permute.xlu0 %5336
        %5338 = vrot.lane.b32.xlu0 %v4724, 15
        %v5339 = vpop.permute.xlu0 %5338
        %5340 = vrot.lane.b32.xlu0 %v4725, 15
        %v5341 = vpop.permute.xlu0 %5340
        %5342 = vrot.lane.b32.xlu0 %v4726, 15
        %v5343 = vpop.permute.xlu0 %5342
        %5344 = vrot.lane.b32.xlu0 %v4727, 15
        %v5345 = vpop.permute.xlu0 %5344
        %v5354 = vsel %vm872, %v5307, %v5331
        %v5355 = vsel %vm872, %v5309, %v5333
        %v5356 = vsel %vm872, %v5311, %v5335
        %v5357 = vsel %vm872, %v5313, %v5337
        %v5358 = vsel %vm872, %v5315, %v5339
        %v5359 = vsel %vm872, %v5317, %v5341
        %v5360 = vsel %vm872, %v5319, %v5343
        %v5361 = vsel %vm872, %v5321, %v5345
        %v5362 = vmul.f32 %v5354, %v878
        %v5363 = vmul.f32 %v5355, %v878
        %v5364 = vmul.f32 %v5356, %v878
        %v5365 = vmul.f32 %v5357, %v878
        %v5366 = vmul.f32 %v5358, %v878
        %v5367 = vmul.f32 %v5359, %v878
        %v5368 = vmul.f32 %v5360, %v878
        %v5369 = vmul.f32 %v5361, %v878
        %v5371 = vsel %vm203, %v5291, 0
        %v5374 = vsel %vm203, %v5293, 0
        %v5377 = vsel %vm203, %v5295, 0
        %v5380 = vsel %vm203, %v5297, 0
        %5382 = vmatpush.msra.mxu0 %v5369
        %5383 = vmatpush.msra.mxu0 %v5368
        %5384 = vmatpush.msra.mxu0 %v5367
        %5385 = vmatpush.msra.mxu0 %v5366
        %5386 = vmatpush.msra.mxu0 %v5365
        %5387 = vmatpush.msra.mxu0 %v5364
        %5388 = vmatpush.msra.mxu0 %v5363
        %5389 = vmatpush.msra.mxu0 %v5362
        %5390 = vmatpush.msra.mxu0 %v4727
        %5391 = vmatpush.msra.mxu0 %v4726
        %5392 = vmatpush.msra.mxu0 %v4725
        %5393 = vmatpush.msra.mxu0 %v4724
        %5394 = vmatpush.msra.mxu0 %v4723
        %5395 = vmatpush.msra.mxu0 %v4722
        %5396 = vmatpush.msra.mxu0 %v4721
        %5397 = vmatpush.msra.mxu0 %v4720
        %5398 = vmatmul.f32.gmra.mxu0 %v5290
        %v5399 = vpop.f32.mrf.mxu0
        %v5400 = vadd.f32 0.0, %v5399
        %5401 = vmatmul.f32.gmra.mxu0 %v5292
        %v5402 = vpop.f32.mrf.mxu0
        %v5403 = vadd.f32 0.0, %v5402
        %5404 = vmatmul.f32.gmra.mxu0 %v5294
        %v5405 = vpop.f32.mrf.mxu0
        %v5406 = vadd.f32 0.0, %v5405
        %5407 = vmatmul.f32.gmra.mxu0 %v5296
        %v5408 = vpop.f32.mrf.mxu0
        %v5409 = vadd.f32 0.0, %v5408
        %5410 = vdwg.mxu0
        %5411 = vmatpush.msra.mxu0 0.0
        %5412 = vmatpush.msra.mxu0 0.0
        %5413 = vmatpush.msra.mxu0 0.0
        %5414 = vmatpush.msra.mxu0 0.0
        %5415 = vmatpush.msra.mxu0 0.0
        %5416 = vmatpush.msra.mxu0 0.0
        %5417 = vmatpush.msra.mxu0 0.0
        %5418 = vmatpush.msra.mxu0 0.0
        %5419 = vmatpush.msra.mxu0 0.0
        %5420 = vmatpush.msra.mxu0 0.0
        %5421 = vmatpush.msra.mxu0 0.0
        %5422 = vmatpush.msra.mxu0 0.0
        %5423 = vmatpush.msra.mxu0 0.0
        %5424 = vmatpush.msra.mxu0 0.0
        %5425 = vmatpush.msra.mxu0 0.0
        %5426 = vmatpush.msra.mxu0 %v917
        %5427 = vmatmul.f32.gmra.mxu0 %v5371
        %v5428 = vpop.f32.mrf.mxu0
        %v5429 = vadd.f32 %v5400, %v5428
        %5430 = vmatmul.f32.gmra.mxu0 %v5374
        %v5431 = vpop.f32.mrf.mxu0
        %v5432 = vadd.f32 %v5403, %v5431
        %5433 = vmatmul.f32.gmra.mxu0 %v5377
        %v5434 = vpop.f32.mrf.mxu0
        %v5435 = vadd.f32 %v5406, %v5434
        %5436 = vmatmul.f32.gmra.mxu0 %v5380
        %v5437 = vpop.f32.mrf.mxu0
        %v5438 = vadd.f32 %v5409, %v5437
        %5439 = vdwg.mxu0
        %v5441 = vsel %vm1309, %v5429, 0
        %v5444 = vsel %vm1309, %v5432, 0
        %v5447 = vsel %vm1309, %v5435, 0
        %v5450 = vsel %vm1309, %v5438, 0
        %5452 = vmatpush.msra.mxu0 0.0
        %5453 = vmatpush.msra.mxu0 0.0
        %5454 = vmatpush.msra.mxu0 0.0
        %5455 = vmatpush.msra.mxu0 0.0
        %5456 = vmatpush.msra.mxu0 0.0
        %5457 = vmatpush.msra.mxu0 0.0
        %5458 = vmatpush.msra.mxu0 0.0
        %5459 = vmatpush.msra.mxu0 0.0
        %5460 = vmatpush.msra.mxu0 0.0
        %5461 = vmatpush.msra.mxu0 0.0
        %5462 = vmatpush.msra.mxu0 0.0
        %5463 = vmatpush.msra.mxu0 0.0
        %5464 = vmatpush.msra.mxu0 0.0
        %5465 = vmatpush.msra.mxu0 0.0
        %5466 = vmatpush.msra.mxu0 %v5158
        %5467 = vmatpush.msra.mxu0 %v5157
        %5468 = vmatmul.f32.gmra.mxu0 %v5441
        %v5469 = vpop.f32.mrf.mxu0
        %v5470 = vadd.f32 0.0, %v5469
        %5471 = vmatmul.f32.gmra.mxu0 %v5444
        %v5472 = vpop.f32.mrf.mxu0
        %v5473 = vadd.f32 0.0, %v5472
        %5474 = vmatmul.f32.gmra.mxu0 %v5447
        %v5475 = vpop.f32.mrf.mxu0
        %v5476 = vadd.f32 0.0, %v5475
        %5477 = vmatmul.f32.gmra.mxu0 %v5450
        %v5478 = vpop.f32.mrf.mxu0
        %v5479 = vadd.f32 0.0, %v5478
        %5480 = vdwg.mxu0
        %v5482 = vsel %vm1309, %v5279, 0
        %v5485 = vsel %vm1309, %v5282, 0
        %v5488 = vsel %vm1309, %v5285, 0
        %v5491 = vsel %vm1309, %v5288, 0
        %5493 = vmatpush.msra.mxu0 0.0
        %5494 = vmatpush.msra.mxu0 0.0
        %5495 = vmatpush.msra.mxu0 0.0
        %5496 = vmatpush.msra.mxu0 0.0
        %5497 = vmatpush.msra.mxu0 0.0
        %5498 = vmatpush.msra.mxu0 0.0
        %5499 = vmatpush.msra.mxu0 0.0
        %5500 = vmatpush.msra.mxu0 0.0
        %5501 = vmatpush.msra.mxu0 0.0
        %5502 = vmatpush.msra.mxu0 0.0
        %5503 = vmatpush.msra.mxu0 0.0
        %5504 = vmatpush.msra.mxu0 0.0
        %5505 = vmatpush.msra.mxu0 0.0
        %5506 = vmatpush.msra.mxu0 0.0
        %5507 = vmatpush.msra.mxu0 %v5156
        %5508 = vmatpush.msra.mxu0 %v5155
        %5509 = vmatmul.f32.gmra.mxu0 %v5482
        %v5510 = vpop.f32.mrf.mxu0
        %v5511 = vadd.f32 %v5470, %v5510
        %5512 = vmatmul.f32.gmra.mxu0 %v5485
        %v5513 = vpop.f32.mrf.mxu0
        %v5514 = vadd.f32 %v5473, %v5513
        %5515 = vmatmul.f32.gmra.mxu0 %v5488
        %v5516 = vpop.f32.mrf.mxu0
        %v5517 = vadd.f32 %v5476, %v5516
        %5518 = vmatmul.f32.gmra.mxu0 %v5491
        %v5519 = vpop.f32.mrf.mxu0
        %v5520 = vadd.f32 %v5479, %v5519
        %5521 = vdwg.mxu0
        %5530 = vrot.lane.b32.xlu0 %v5511, 97
        %v5531 = vpop.permute.xlu0 %5530
        %5532 = vrot.lane.b32.xlu0 %v5514, 97
        %v5533 = vpop.permute.xlu0 %5532
        %5534 = vrot.lane.b32.xlu0 %v5517, 97
        %v5535 = vpop.permute.xlu0 %5534
        %5536 = vrot.lane.b32.xlu0 %v5520, 97
        %v5537 = vpop.permute.xlu0 %5536
        %5538 = vrot.lane.b32.xlu0 %v5241, 97
        %v5539 = vpop.permute.xlu0 %5538
        %5540 = vrot.lane.b32.xlu0 %v5242, 97
        %v5541 = vpop.permute.xlu0 %5540
        %5542 = vrot.lane.b32.xlu0 %v5243, 97
        %v5543 = vpop.permute.xlu0 %5542
        %5544 = vrot.lane.b32.xlu0 %v5244, 97
        %v5545 = vpop.permute.xlu0 %5544
        %5554 = vrot.lane.b32.xlu0 %v5511, 1
        %v5555 = vpop.permute.xlu0 %5554
        %5556 = vrot.lane.b32.xlu0 %v5514, 1
        %v5557 = vpop.permute.xlu0 %5556
        %5558 = vrot.lane.b32.xlu0 %v5517, 1
        %v5559 = vpop.permute.xlu0 %5558
        %5560 = vrot.lane.b32.xlu0 %v5520, 1
        %v5561 = vpop.permute.xlu0 %5560
        %5562 = vrot.lane.b32.xlu0 %v5241, 1
        %v5563 = vpop.permute.xlu0 %5562
        %5564 = vrot.lane.b32.xlu0 %v5242, 1
        %v5565 = vpop.permute.xlu0 %5564
        %5566 = vrot.lane.b32.xlu0 %v5243, 1
        %v5567 = vpop.permute.xlu0 %5566
        %5568 = vrot.lane.b32.xlu0 %v5244, 1
        %v5569 = vpop.permute.xlu0 %5568
        %v5578 = vsel %vm203, %v5531, %v5555
        %v5579 = vsel %vm203, %v5533, %v5557
        %v5580 = vsel %vm203, %v5535, %v5559
        %v5581 = vsel %vm203, %v5537, %v5561
        %v5582 = vsel %vm203, %v5539, %v5563
        %v5583 = vsel %vm203, %v5541, %v5565
        %v5584 = vsel %vm203, %v5543, %v5567
        %v5585 = vsel %vm203, %v5545, %v5569
        %v5586 = vmul.f32 %v5578, %v535
        %v5587 = vmul.f32 %v5579, %v535
        %v5588 = vmul.f32 %v5580, %v535
        %v5589 = vmul.f32 %v5581, %v535
        %v5590 = vmul.f32 %v5582, %v535
        %v5591 = vmul.f32 %v5583, %v535
        %v5592 = vmul.f32 %v5584, %v535
        %v5593 = vmul.f32 %v5585, %v535
        %5594 = vrot.lane.b32.xlu0 %v5511, 127
        %v5595 = vpop.permute.xlu0 %5594
        %5596 = vrot.lane.b32.xlu0 %v5514, 127
        %v5597 = vpop.permute.xlu0 %5596
        %5598 = vrot.lane.b32.xlu0 %v5517, 127
        %v5599 = vpop.permute.xlu0 %5598
        %5600 = vrot.lane.b32.xlu0 %v5520, 127
        %v5601 = vpop.permute.xlu0 %5600
        %5602 = vrot.lane.b32.xlu0 %v5241, 127
        %v5603 = vpop.permute.xlu0 %5602
        %5604 = vrot.lane.b32.xlu0 %v5242, 127
        %v5605 = vpop.permute.xlu0 %5604
        %5606 = vrot.lane.b32.xlu0 %v5243, 127
        %v5607 = vpop.permute.xlu0 %5606
        %5608 = vrot.lane.b32.xlu0 %v5244, 127
        %v5609 = vpop.permute.xlu0 %5608
        %5618 = vrot.lane.b32.xlu0 %v5511, 31
        %v5619 = vpop.permute.xlu0 %5618
        %5620 = vrot.lane.b32.xlu0 %v5514, 31
        %v5621 = vpop.permute.xlu0 %5620
        %5622 = vrot.lane.b32.xlu0 %v5517, 31
        %v5623 = vpop.permute.xlu0 %5622
        %5624 = vrot.lane.b32.xlu0 %v5520, 31
        %v5625 = vpop.permute.xlu0 %5624
        %5626 = vrot.lane.b32.xlu0 %v5241, 31
        %v5627 = vpop.permute.xlu0 %5626
        %5628 = vrot.lane.b32.xlu0 %v5242, 31
        %v5629 = vpop.permute.xlu0 %5628
        %5630 = vrot.lane.b32.xlu0 %v5243, 31
        %v5631 = vpop.permute.xlu0 %5630
        %5632 = vrot.lane.b32.xlu0 %v5244, 31
        %v5633 = vpop.permute.xlu0 %5632
        %v5642 = vsel %vm550, %v5595, %v5619
        %v5643 = vsel %vm550, %v5597, %v5621
        %v5644 = vsel %vm550, %v5599, %v5623
        %v5645 = vsel %vm550, %v5601, %v5625
        %v5646 = vsel %vm550, %v5603, %v5627
        %v5647 = vsel %vm550, %v5605, %v5629
        %v5648 = vsel %vm550, %v5607, %v5631
        %v5649 = vsel %vm550, %v5609, %v5633
        %v5650 = vmul.f32 %v5642, %v554
        %v5651 = vmul.f32 %v5643, %v554
        %v5652 = vmul.f32 %v5644, %v554
        %v5653 = vmul.f32 %v5645, %v554
        %v5654 = vmul.f32 %v5646, %v554
        %v5655 = vmul.f32 %v5647, %v554
        %v5656 = vmul.f32 %v5648, %v554
        %v5657 = vmul.f32 %v5649, %v554
        %v5658 = vld [vmem:[#allocation2 + $0xcc0] sm:$0xff]
        %v5659 = vld [vmem:[#allocation2 + $0xcc8] sm:$0xff]
        %v5660 = vld [vmem:[#allocation2 + $0xce0] sm:$0xff]
        %v5661 = vld [vmem:[#allocation2 + $0xce8] sm:$0xff]
        %v5662 = vld [vmem:[#allocation2 + $0xd00] sm:$0xff]
        %v5663 = vld [vmem:[#allocation2 + $0xd08] sm:$0xff]
        %v5664 = vld [vmem:[#allocation2 + $0xd20] sm:$0xff]
        %v5665 = vld [vmem:[#allocation2 + $0xd28] sm:$0xff]
        %v5667 = vsel %vm1120, %v5659, 0
        %v5670 = vsel %vm1120, %v5661, 0
        %v5673 = vsel %vm1120, %v5663, 0
        %v5676 = vsel %vm1120, %v5665, 0
        %5678 = vmatpush.msra.mxu0 %v5244
        %5679 = vmatpush.msra.mxu0 %v5243
        %5680 = vmatpush.msra.mxu0 %v5242
        %5681 = vmatpush.msra.mxu0 %v5241
        %5682 = vmatpush.msra.mxu0 %v5520
        %5683 = vmatpush.msra.mxu0 %v5517
        %5684 = vmatpush.msra.mxu0 %v5514
        %5685 = vmatpush.msra.mxu0 %v5511
        %5686 = vmatpush.msra.mxu0 %v5593
        %5687 = vmatpush.msra.mxu0 %v5592
        %5688 = vmatpush.msra.mxu0 %v5591
        %5689 = vmatpush.msra.mxu0 %v5590
        %5690 = vmatpush.msra.mxu0 %v5589
        %5691 = vmatpush.msra.mxu0 %v5588
        %5692 = vmatpush.msra.mxu0 %v5587
        %5693 = vmatpush.msra.mxu0 %v5586
        %5694 = vmatmul.f32.gmra.mxu0 %v5658
        %v5695 = vpop.f32.mrf.mxu0
        %v5696 = vadd.f32 0.0, %v5695
        %5697 = vmatmul.f32.gmra.mxu0 %v5660
        %v5698 = vpop.f32.mrf.mxu0
        %v5699 = vadd.f32 0.0, %v5698
        %5700 = vmatmul.f32.gmra.mxu0 %v5662
        %v5701 = vpop.f32.mrf.mxu0
        %v5702 = vadd.f32 0.0, %v5701
        %5703 = vmatmul.f32.gmra.mxu0 %v5664
        %v5704 = vpop.f32.mrf.mxu0
        %v5705 = vadd.f32 0.0, %v5704
        %5706 = vdwg.mxu0
        %5707 = vmatpush.msra.mxu0 0.0
        %5708 = vmatpush.msra.mxu0 0.0
        %5709 = vmatpush.msra.mxu0 0.0
        %5710 = vmatpush.msra.mxu0 0.0
        %5711 = vmatpush.msra.mxu0 0.0
        %5712 = vmatpush.msra.mxu0 0.0
        %5713 = vmatpush.msra.mxu0 0.0
        %5714 = vmatpush.msra.mxu0 %v575
        %5715 = vmatpush.msra.mxu0 %v5657
        %5716 = vmatpush.msra.mxu0 %v5656
        %5717 = vmatpush.msra.mxu0 %v5655
        %5718 = vmatpush.msra.mxu0 %v5654
        %5719 = vmatpush.msra.mxu0 %v5653
        %5720 = vmatpush.msra.mxu0 %v5652
        %5721 = vmatpush.msra.mxu0 %v5651
        %5722 = vmatpush.msra.mxu0 %v5650
        %5723 = vmatmul.f32.gmra.mxu0 %v5667
        %v5724 = vpop.f32.mrf.mxu0
        %v5725 = vadd.f32 %v5696, %v5724
        %5726 = vmatmul.f32.gmra.mxu0 %v5670
        %v5727 = vpop.f32.mrf.mxu0
        %v5728 = vadd.f32 %v5699, %v5727
        %5729 = vmatmul.f32.gmra.mxu0 %v5673
        %v5730 = vpop.f32.mrf.mxu0
        %v5731 = vadd.f32 %v5702, %v5730
        %5732 = vmatmul.f32.gmra.mxu0 %v5676
        %v5733 = vpop.f32.mrf.mxu0
        %v5734 = vadd.f32 %v5705, %v5733
        %5735 = vdwg.mxu0
        %v5736 = vmax.f32 %v5725, 0.0
        %v5737 = vmax.f32 %v5728, 0.0
        %v5738 = vmax.f32 %v5731, 0.0
        %v5739 = vmax.f32 %v5734, 0.0
        %5744 = vrot.lane.b32.xlu0 %v5736, 97
        %v5745 = vpop.permute.xlu0 %5744
        %5746 = vrot.lane.b32.xlu0 %v5737, 97
        %v5747 = vpop.permute.xlu0 %5746
        %5748 = vrot.lane.b32.xlu0 %v5738, 97
        %v5749 = vpop.permute.xlu0 %5748
        %5750 = vrot.lane.b32.xlu0 %v5739, 97
        %v5751 = vpop.permute.xlu0 %5750
        %5756 = vrot.lane.b32.xlu0 %v5736, 1
        %v5757 = vpop.permute.xlu0 %5756
        %5758 = vrot.lane.b32.xlu0 %v5737, 1
        %v5759 = vpop.permute.xlu0 %5758
        %5760 = vrot.lane.b32.xlu0 %v5738, 1
        %v5761 = vpop.permute.xlu0 %5760
        %5762 = vrot.lane.b32.xlu0 %v5739, 1
        %v5763 = vpop.permute.xlu0 %5762
        %v5768 = vsel %vm203, %v5745, %v5757
        %v5769 = vsel %vm203, %v5747, %v5759
        %v5770 = vsel %vm203, %v5749, %v5761
        %v5771 = vsel %vm203, %v5751, %v5763
        %v5772 = vmul.f32 %v5768, %v535
        %v5773 = vmul.f32 %v5769, %v535
        %v5774 = vmul.f32 %v5770, %v535
        %v5775 = vmul.f32 %v5771, %v535
        %5776 = vrot.lane.b32.xlu0 %v5736, 127
        %v5777 = vpop.permute.xlu0 %5776
        %5778 = vrot.lane.b32.xlu0 %v5737, 127
        %v5779 = vpop.permute.xlu0 %5778
        %5780 = vrot.lane.b32.xlu0 %v5738, 127
        %v5781 = vpop.permute.xlu0 %5780
        %5782 = vrot.lane.b32.xlu0 %v5739, 127
        %v5783 = vpop.permute.xlu0 %5782
        %5788 = vrot.lane.b32.xlu0 %v5736, 31
        %v5789 = vpop.permute.xlu0 %5788
        %5790 = vrot.lane.b32.xlu0 %v5737, 31
        %v5791 = vpop.permute.xlu0 %5790
        %5792 = vrot.lane.b32.xlu0 %v5738, 31
        %v5793 = vpop.permute.xlu0 %5792
        %5794 = vrot.lane.b32.xlu0 %v5739, 31
        %v5795 = vpop.permute.xlu0 %5794
        %v5800 = vsel %vm550, %v5777, %v5789
        %v5801 = vsel %vm550, %v5779, %v5791
        %v5802 = vsel %vm550, %v5781, %v5793
        %v5803 = vsel %vm550, %v5783, %v5795
        %v5804 = vmul.f32 %v5800, %v554
        %v5805 = vmul.f32 %v5801, %v554
        %v5806 = vmul.f32 %v5802, %v554
        %v5807 = vmul.f32 %v5803, %v554
        %v5808 = vld [vmem:[#allocation2 + $0xd40] sm:$0xff]
        %v5809 = vld [vmem:[#allocation2 + $0xd60] sm:$0xff]
        %v5810 = vld [vmem:[#allocation2 + $0xd80] sm:$0xff]
        %v5811 = vld [vmem:[#allocation2 + $0xda0] sm:$0xff]
        %v5813 = vsel %vm682, %v5808, 0
        %v5816 = vsel %vm682, %v5809, 0
        %v5819 = vsel %vm682, %v5810, 0
        %v5822 = vsel %vm682, %v5811, 0
        %5824 = vmatpush.msra.mxu0 0.0
        %5825 = vmatpush.msra.mxu0 0.0
        %5826 = vmatpush.msra.mxu0 0.0
        %5827 = vmatpush.msra.mxu0 %v575
        %5828 = vmatpush.msra.mxu0 %v5807
        %5829 = vmatpush.msra.mxu0 %v5806
        %5830 = vmatpush.msra.mxu0 %v5805
        %5831 = vmatpush.msra.mxu0 %v5804
        %5832 = vmatpush.msra.mxu0 %v5739
        %5833 = vmatpush.msra.mxu0 %v5738
        %5834 = vmatpush.msra.mxu0 %v5737
        %5835 = vmatpush.msra.mxu0 %v5736
        %5836 = vmatpush.msra.mxu0 %v5775
        %5837 = vmatpush.msra.mxu0 %v5774
        %5838 = vmatpush.msra.mxu0 %v5773
        %5839 = vmatpush.msra.mxu0 %v5772
        %5840 = vmatmul.f32.gmra.mxu0 %v5813
        %v5841 = vpop.f32.mrf.mxu0
        %v5842 = vadd.f32 0.0, %v5841
        %5843 = vmatmul.f32.gmra.mxu0 %v5816
        %v5844 = vpop.f32.mrf.mxu0
        %v5845 = vadd.f32 0.0, %v5844
        %5846 = vmatmul.f32.gmra.mxu0 %v5819
        %v5847 = vpop.f32.mrf.mxu0
        %v5848 = vadd.f32 0.0, %v5847
        %5849 = vmatmul.f32.gmra.mxu0 %v5822
        %v5850 = vpop.f32.mrf.mxu0
        %v5851 = vadd.f32 0.0, %v5850
        %5852 = vdwg.mxu0
        %v5853 = vmax.f32 %v5842, 0.0
        %v5854 = vmax.f32 %v5845, 0.0
        %v5855 = vmax.f32 %v5848, 0.0
        %v5856 = vmax.f32 %v5851, 0.0
        %5857 = vrot.lane.b32.xlu0 %v460, 65
        %v5858 = vpop.permute.xlu0 %5857
        %5859 = vrot.lane.b32.xlu0 %v461, 65
        %v5860 = vpop.permute.xlu0 %5859
        %5863 = vrot.lane.b32.xlu0 %v460, 1
        %v5864 = vpop.permute.xlu0 %5863
        %5865 = vrot.lane.b32.xlu0 %v461, 1
        %v5866 = vpop.permute.xlu0 %5865
        %v5869 = vsel %vm203, %v5858, %v5864
        %v5870 = vsel %vm203, %v5860, %v5866
        %v5871 = vmul.f32 %v5869, %v344
        %v5872 = vmul.f32 %v5870, %v344
        %v5873 = vmul.f32 %v476, %v355
        %v5874 = vmul.f32 %v477, %v355
        %v5875 = vld [vmem:[#allocation2 + $0x1700] sm:$0xff]
        %v5876 = vld [vmem:[#allocation2 + $0x1720] sm:$0xff]
        %v5877 = vld [vmem:[#allocation2 + $0x1740] sm:$0xff]
        %v5878 = vld [vmem:[#allocation2 + $0x1760] sm:$0xff]
        %v5880 = vsel %vm430, %v5875, 0
        %v5883 = vsel %vm430, %v5876, 0
        %v5886 = vsel %vm430, %v5877, 0
        %v5889 = vsel %vm430, %v5878, 0
        %5891 = vmatpush.msra.mxu0 0.0
        %5892 = vmatpush.msra.mxu0 0.0
        %5893 = vmatpush.msra.mxu0 0.0
        %5894 = vmatpush.msra.mxu0 0.0
        %5895 = vmatpush.msra.mxu0 0.0
        %5896 = vmatpush.msra.mxu0 0.0
        %5897 = vmatpush.msra.mxu0 0.0
        %5898 = vmatpush.msra.mxu0 0.0
        %5899 = vmatpush.msra.mxu0 0.0
        %5900 = vmatpush.msra.mxu0 %v367
        %5901 = vmatpush.msra.mxu0 %v5874
        %5902 = vmatpush.msra.mxu0 %v5873
        %5903 = vmatpush.msra.mxu0 %v461
        %5904 = vmatpush.msra.mxu0 %v460
        %5905 = vmatpush.msra.mxu0 %v5872
        %5906 = vmatpush.msra.mxu0 %v5871
        %5907 = vmatmul.f32.gmra.mxu0 %v5880
        %v5908 = vpop.f32.mrf.mxu0
        %v5909 = vadd.f32 0.0, %v5908
        %5910 = vmatmul.f32.gmra.mxu0 %v5883
        %v5911 = vpop.f32.mrf.mxu0
        %v5912 = vadd.f32 0.0, %v5911
        %5913 = vmatmul.f32.gmra.mxu0 %v5886
        %v5914 = vpop.f32.mrf.mxu0
        %v5915 = vadd.f32 0.0, %v5914
        %5916 = vmatmul.f32.gmra.mxu0 %v5889
        %v5917 = vpop.f32.mrf.mxu0
        %v5918 = vadd.f32 0.0, %v5917
        %5919 = vdwg.mxu0
        %v5921 = vsel %vm488, %v5909, 0
        %v5924 = vsel %vm488, %v5912, 0
        %v5927 = vsel %vm488, %v5915, 0
        %v5930 = vsel %vm488, %v5918, 0
        %5932 = vmatpush.msra.mxu0 0.0
        %5933 = vmatpush.msra.mxu0 0.0
        %5934 = vmatpush.msra.mxu0 0.0
        %5935 = vmatpush.msra.mxu0 0.0
        %5936 = vmatpush.msra.mxu0 0.0
        %5937 = vmatpush.msra.mxu0 0.0
        %5938 = vmatpush.msra.mxu0 0.0
        %5939 = vmatpush.msra.mxu0 0.0
        %5940 = vmatpush.msra.mxu0 %v487
        %5941 = vmatpush.msra.mxu0 %v486
        %5942 = vmatpush.msra.mxu0 %v485
        %5943 = vmatpush.msra.mxu0 %v484
        %5944 = vmatpush.msra.mxu0 %v483
        %5945 = vmatpush.msra.mxu0 %v482
        %5946 = vmatpush.msra.mxu0 %v481
        %5947 = vmatpush.msra.mxu0 %v480
        %5948 = vmatmul.f32.gmra.mxu0 %v5921
        %v5949 = vpop.f32.mrf.mxu0
        %v5950 = vadd.f32 %v5853, %v5949
        %5951 = vmatmul.f32.gmra.mxu0 %v5924
        %v5952 = vpop.f32.mrf.mxu0
        %v5953 = vadd.f32 %v5854, %v5952
        %5954 = vmatmul.f32.gmra.mxu0 %v5927
        %v5955 = vpop.f32.mrf.mxu0
        %v5956 = vadd.f32 %v5855, %v5955
        %5957 = vmatmul.f32.gmra.mxu0 %v5930
        %v5958 = vpop.f32.mrf.mxu0
        %v5959 = vadd.f32 %v5856, %v5958
        %5960 = vdwg.mxu0
        %v5961 = vmax.f32 %v5950, 0.0
        %v5962 = vmax.f32 %v5953, 0.0
        %v5963 = vmax.f32 %v5956, 0.0
        %v5964 = vmax.f32 %v5959, 0.0
        %v5965 = vld [vmem:[#allocation2 + $0x1780] ss:$0 sm:$0xff]
        %v5967 = vsel %vm5032, %v5965, 0
        %5969 = vmatpush.msra.mxu0 0.0
        %5970 = vmatpush.msra.mxu0 0.0
        %5971 = vmatpush.msra.mxu0 0.0
        %5972 = vmatpush.msra.mxu0 0.0
        %5973 = vmatpush.msra.mxu0 0.0
        %5974 = vmatpush.msra.mxu0 0.0
        %5975 = vmatpush.msra.mxu0 0.0
        %5976 = vmatpush.msra.mxu0 0.0
        %5977 = vmatpush.msra.mxu0 0.0
        %5978 = vmatpush.msra.mxu0 0.0
        %5979 = vmatpush.msra.mxu0 0.0
        %5980 = vmatpush.msra.mxu0 %v575
        %5981 = vmatpush.msra.mxu0 %v5964
        %5982 = vmatpush.msra.mxu0 %v5963
        %5983 = vmatpush.msra.mxu0 %v5962
        %5984 = vmatpush.msra.mxu0 %v5961
        %5985 = vmatmul.f32.gmra.mxu0 %v5967
        %v5986 = vpop.f32.mrf.mxu0
        %v5987 = vadd.f32 0.0, %v5986
        %5988 = vdwg.mxu0
        %v5989 = vxor.u32 %v5987, 2147483648
        %v5990 = vmul.f32 %v5989, 1.442695
        %v5991 = vpow.pop %v5990
        %v5992 = vadd.f32 %v5991, 1.0
        %v5993 = vrcp.pop %v5992
        %v5994 = vmul.f32 %v5992, %v5993
        %v5995 = vsub.f32 1.0, %v5994
        %v5996 = vmul.f32 %v5993, %v5995
        %v5997 = vadd.f32 %v5993, %v5996
        %vm5998 = vweird.f32 %v5992
        %vm5999 = vweird.f32 %v5993
        %vm6000 = vmor %vm5998, %vm5999
        %v6001 = vsel %vm6000, %v5993, %v5997
        %v6002 = vand.u32 2147483647, %v5992
        %vm6003 = vcmp.eq.f32.partialorder %v6002, 8.507059e+37
        %v6004 = vand.u32 %v5992, 2147483648
        %v6005 = vor.u32 1.1754944e-38, %v6004
        %v6006 = vsel %vm6003, %v6005, %v6001
        %v6007 = vmul.f32 1.0, %v6006
        %6009 = vrot.lane.b32.xlu0 %v6007, 97
        %v6010 = vpop.permute.xlu0 %6009
        %6012 = vrot.lane.b32.xlu0 %v6007, 1
        %v6013 = vpop.permute.xlu0 %6012
        %v6015 = vsel %vm203, %v6010, %v6013
        %v6016 = vmul.f32 %v6015, %v534
        %6017 = vrot.lane.b32.xlu0 %v6007, 127
        %v6018 = vpop.permute.xlu0 %6017
        %6020 = vrot.lane.b32.xlu0 %v6007, 31
        %v6021 = vpop.permute.xlu0 %6020
        %v6023 = vsel %vm550, %v6018, %v6021
        %v6024 = vmul.f32 %v6023, %v553
        %v6025 = vrot.slane %v6007, 7
        %v6028 = vrot.slane %v6024, 6
        %v6030 = vrot.slane %v557, 5
        %v6032 = vsel %vm219, %v6016, %v6025
        %v6033 = vsel %vm221, %v6032, %v6028
        %v6034 = vsel %vm223, %v6033, %v6030
        %v6035 = vld [vmem:[#allocation2 + $0x17a0] sm:$0xff]
        %v6036 = vld [vmem:[#allocation2 + $0x17c0] sm:$0xff]
        %v6038 = vsel %vm226, %v6035, 0
        %v6041 = vsel %vm226, %v6036, 0
        %v6044 = vsel %vm230, %v6034, 0
        %6046 = vmatpush.msra.mxu0 0.0
        %6047 = vmatpush.msra.mxu0 0.0
        %6048 = vmatpush.msra.mxu0 0.0
        %6049 = vmatpush.msra.mxu0 0.0
        %6050 = vmatpush.msra.mxu0 0.0
        %6051 = vmatpush.msra.mxu0 0.0
        %6052 = vmatpush.msra.mxu0 0.0
        %6053 = vmatpush.msra.mxu0 0.0
        %6054 = vmatpush.msra.mxu0 0.0
        %6055 = vmatpush.msra.mxu0 0.0
        %6056 = vmatpush.msra.mxu0 0.0
        %6057 = vmatpush.msra.mxu0 0.0
        %6058 = vmatpush.msra.mxu0 0.0
        %6059 = vmatpush.msra.mxu0 0.0
        %6060 = vmatpush.msra.mxu0 0.0
        %6061 = vmatpush.msra.mxu0 %v6044
        %6062 = vmatmul.f32.gmra.mxu0 %v6038
        %v6063 = vpop.f32.mrf.mxu0
        %v6064 = vadd.f32 0.0, %v6063
        %6065 = vmatmul.f32.gmra.mxu0 %v6041
        %v6066 = vpop.f32.mrf.mxu0
        %v6067 = vadd.f32 0.0, %v6066
        %6068 = vdwg.mxu0
        %v6069 = vld [vmem:[#allocation2 + $0x17e0] sm:$0xff]
        %v6070 = vld [vmem:[#allocation2 + $0x1800] sm:$0xff]
        %vm6071 = vcmask 138240
        %v6073 = vsel %vm6071, %v6069, 0
        %v6076 = vsel %vm6071, %v6070, 0
        %6078 = vmatpush.msra.mxu0 0.0
        %6079 = vmatpush.msra.mxu0 0.0
        %6080 = vmatpush.msra.mxu0 0.0
        %6081 = vmatpush.msra.mxu0 0.0
        %6082 = vmatpush.msra.mxu0 0.0
        %6083 = vmatpush.msra.mxu0 0.0
        %6084 = vmatpush.msra.mxu0 0.0
        %6085 = vmatpush.msra.mxu0 0.0
        %6086 = vmatpush.msra.mxu0 0.0
        %6087 = vmatpush.msra.mxu0 0.0
        %6088 = vmatpush.msra.mxu0 0.0
        %6089 = vmatpush.msra.mxu0 0.0
        %6090 = vmatpush.msra.mxu0 0.0
        %6091 = vmatpush.msra.mxu0 %v575
        %6092 = vmatpush.msra.mxu0 %v6067
        %6093 = vmatpush.msra.mxu0 %v6064
        %6094 = vmatmul.f32.gmra.mxu0 %v6073
        %v6095 = vpop.f32.mrf.mxu0
        %v6096 = vadd.f32 0.0, %v6095
        %6097 = vmatmul.f32.gmra.mxu0 %v6076
        %v6098 = vpop.f32.mrf.mxu0
        %v6099 = vadd.f32 0.0, %v6098
        %6100 = vdwg.mxu0
        %v6101 = vld [vmem:[#allocation2 + $0x1820] sm:$0xff]
        %v6102 = vld [vmem:[#allocation2 + $0x1840] sm:$0xff]
        %6105 = vrot.lane.b32.xlu0 %v6064, 127
        %v6106 = vpop.permute.xlu0 %6105
        %6107 = vrot.lane.b32.xlu0 %v6067, 127
        %v6108 = vpop.permute.xlu0 %6107
        %6111 = vrot.lane.b32.xlu0 %v6064, 31
        %v6112 = vpop.permute.xlu0 %6111
        %6113 = vrot.lane.b32.xlu0 %v6067, 31
        %v6114 = vpop.permute.xlu0 %6113
        %v6117 = vsel %vm550, %v6106, %v6112
        %v6118 = vsel %vm550, %v6108, %v6114
        %v6119 = vmul.f32 %v6117, %v554
        %v6120 = vmul.f32 %v6118, %v554
        %v6122 = vsel %vm5032, %v6101, 0
        %v6125 = vsel %vm5032, %v6102, 0
        %6127 = vmatpush.msra.mxu0 0.0
        %6128 = vmatpush.msra.mxu0 0.0
        %6129 = vmatpush.msra.mxu0 0.0
        %6130 = vmatpush.msra.mxu0 0.0
        %6131 = vmatpush.msra.mxu0 0.0
        %6132 = vmatpush.msra.mxu0 0.0
        %6133 = vmatpush.msra.mxu0 0.0
        %6134 = vmatpush.msra.mxu0 0.0
        %6135 = vmatpush.msra.mxu0 0.0
        %6136 = vmatpush.msra.mxu0 0.0
        %6137 = vmatpush.msra.mxu0 0.0
        %6138 = vmatpush.msra.mxu0 %v575
        %6139 = vmatpush.msra.mxu0 %v6120
        %6140 = vmatpush.msra.mxu0 %v6119
        %6141 = vmatpush.msra.mxu0 %v6067
        %6142 = vmatpush.msra.mxu0 %v6064
        %6143 = vmatmul.f32.gmra.mxu0 %v6122
        %v6144 = vpop.f32.mrf.mxu0
        %v6145 = vadd.f32 0.0, %v6144
        %6146 = vmatmul.f32.gmra.mxu0 %v6125
        %v6147 = vpop.f32.mrf.mxu0
        %v6148 = vadd.f32 0.0, %v6147
        %6149 = vdwg.mxu0
        %v6150 = vld [vmem:[#allocation4 + $0x1e8] sm:$0xff]
        %v6151 = vld [vmem:[#allocation4 + $0x1f0] sm:$0xff]
        %v6152 = vld [vmem:[#allocation4 + $0x1f8] sm:$0xff]
        %v6153 = vld [vmem:[#allocation4 + $0x200] sm:$0xff]
        %v6154 = vld [vmem:[#allocation4 + $0x208] sm:$0xff]
        %v6155 = vld [vmem:[#allocation4 + $0x210] sm:$0xff]
        %v6156 = vld [vmem:[#allocation4 + $0x218] sm:$0xff]
        %v6157 = vld [vmem:[#allocation4 + $0x220] sm:$0xff]
        %v6159 = vsel %vm768, %v6145, 0
        %v6162 = vsel %vm768, %v6148, 0
        %6164 = vmatpush.msra.mxu0 0.0
        %6165 = vmatpush.msra.mxu0 0.0
        %6166 = vmatpush.msra.mxu0 0.0
        %6167 = vmatpush.msra.mxu0 0.0
        %6168 = vmatpush.msra.mxu0 0.0
        %6169 = vmatpush.msra.mxu0 0.0
        %6170 = vmatpush.msra.mxu0 0.0
        %6171 = vmatpush.msra.mxu0 0.0
        %6172 = vmatpush.msra.mxu0 0.0
        %6173 = vmatpush.msra.mxu0 0.0
        %6174 = vmatpush.msra.mxu0 0.0
        %6175 = vmatpush.msra.mxu0 0.0
        %6176 = vmatpush.msra.mxu0 %v6157
        %6177 = vmatpush.msra.mxu0 %v6156
        %6178 = vmatpush.msra.mxu0 %v6155
        %6179 = vmatpush.msra.mxu0 %v6154
        %6180 = vmatmul.f32.gmra.mxu0 %v6159
        %v6181 = vpop.f32.mrf.mxu0
        %v6182 = vadd.f32 0.0, %v6181
        %6183 = vmatmul.f32.gmra.mxu0 %v6162
        %v6184 = vpop.f32.mrf.mxu0
        %v6185 = vadd.f32 0.0, %v6184
        %6186 = vdwg.mxu0
        %v6188 = vsel %vm768, %v6096, 0
        %v6191 = vsel %vm768, %v6099, 0
        %6193 = vmatpush.msra.mxu0 0.0
        %6194 = vmatpush.msra.mxu0 0.0
        %6195 = vmatpush.msra.mxu0 0.0
        %6196 = vmatpush.msra.mxu0 0.0
        %6197 = vmatpush.msra.mxu0 0.0
        %6198 = vmatpush.msra.mxu0 0.0
        %6199 = vmatpush.msra.mxu0 0.0
        %6200 = vmatpush.msra.mxu0 0.0
        %6201 = vmatpush.msra.mxu0 0.0
        %6202 = vmatpush.msra.mxu0 0.0
        %6203 = vmatpush.msra.mxu0 0.0
        %6204 = vmatpush.msra.mxu0 0.0
        %6205 = vmatpush.msra.mxu0 %v6153
        %6206 = vmatpush.msra.mxu0 %v6152
        %6207 = vmatpush.msra.mxu0 %v6151
        %6208 = vmatpush.msra.mxu0 %v6150
        %6209 = vmatmul.f32.gmra.mxu0 %v6188
        %v6210 = vpop.f32.mrf.mxu0
        %v6211 = vadd.f32 %v6182, %v6210
        %6212 = vmatmul.f32.gmra.mxu0 %v6191
        %v6213 = vpop.f32.mrf.mxu0
        %v6214 = vadd.f32 %v6185, %v6213
        %6215 = vdwg.mxu0
        %v6216 = vmul.f32 %v6211, %v460
        %v6217 = vmul.f32 %v6214, %v461
        %v6218 = vld [vmem:[#allocation2 + $0xdc0] sm:$0xff]
        %v6219 = vld [vmem:[#allocation2 + $0xde0] sm:$0xff]
        %v6221 = vsel %vm5032, %v6218, 0
        %v6224 = vsel %vm5032, %v6219, 0
        %6226 = vmatpush.msra.mxu0 0.0
        %6227 = vmatpush.msra.mxu0 0.0
        %6228 = vmatpush.msra.mxu0 0.0
        %6229 = vmatpush.msra.mxu0 0.0
        %6230 = vmatpush.msra.mxu0 0.0
        %6231 = vmatpush.msra.mxu0 0.0
        %6232 = vmatpush.msra.mxu0 0.0
        %6233 = vmatpush.msra.mxu0 0.0
        %6234 = vmatpush.msra.mxu0 0.0
        %6235 = vmatpush.msra.mxu0 0.0
        %6236 = vmatpush.msra.mxu0 0.0
        %6237 = vmatpush.msra.mxu0 %v575
        %6238 = vmatpush.msra.mxu0 %v5856
        %6239 = vmatpush.msra.mxu0 %v5855
        %6240 = vmatpush.msra.mxu0 %v5854
        %6241 = vmatpush.msra.mxu0 %v5853
        %6242 = vmatmul.f32.gmra.mxu0 %v6221
        %v6243 = vpop.f32.mrf.mxu0
        %v6244 = vadd.f32 0.0, %v6243
        %6245 = vmatmul.f32.gmra.mxu0 %v6224
        %v6246 = vpop.f32.mrf.mxu0
        %v6247 = vadd.f32 0.0, %v6246
        %6248 = vdwg.mxu0
        %v6249 = vld [vmem:[#allocation2 + $0xe00] sm:$0xff]
        %v6250 = vld [vmem:[#allocation2 + $0xe20] sm:$0xff]
        %6255 = vrot.lane.b32.xlu0 %v5853, 127
        %v6256 = vpop.permute.xlu0 %6255
        %6257 = vrot.lane.b32.xlu0 %v5854, 127
        %v6258 = vpop.permute.xlu0 %6257
        %6259 = vrot.lane.b32.xlu0 %v5855, 127
        %v6260 = vpop.permute.xlu0 %6259
        %6261 = vrot.lane.b32.xlu0 %v5856, 127
        %v6262 = vpop.permute.xlu0 %6261
        %6267 = vrot.lane.b32.xlu0 %v5853, 31
        %v6268 = vpop.permute.xlu0 %6267
        %6269 = vrot.lane.b32.xlu0 %v5854, 31
        %v6270 = vpop.permute.xlu0 %6269
        %6271 = vrot.lane.b32.xlu0 %v5855, 31
        %v6272 = vpop.permute.xlu0 %6271
        %6273 = vrot.lane.b32.xlu0 %v5856, 31
        %v6274 = vpop.permute.xlu0 %6273
        %v6279 = vsel %vm550, %v6256, %v6268
        %v6280 = vsel %vm550, %v6258, %v6270
        %v6281 = vsel %vm550, %v6260, %v6272
        %v6282 = vsel %vm550, %v6262, %v6274
        %v6283 = vmul.f32 %v6279, %v554
        %v6284 = vmul.f32 %v6280, %v554
        %v6285 = vmul.f32 %v6281, %v554
        %v6286 = vmul.f32 %v6282, %v554
        %v6288 = vsel %vm1120, %v6249, 0
        %v6291 = vsel %vm1120, %v6250, 0
        %6293 = vmatpush.msra.mxu0 0.0
        %6294 = vmatpush.msra.mxu0 0.0
        %6295 = vmatpush.msra.mxu0 0.0
        %6296 = vmatpush.msra.mxu0 0.0
        %6297 = vmatpush.msra.mxu0 0.0
        %6298 = vmatpush.msra.mxu0 0.0
        %6299 = vmatpush.msra.mxu0 0.0
        %6300 = vmatpush.msra.mxu0 %v575
        %6301 = vmatpush.msra.mxu0 %v6286
        %6302 = vmatpush.msra.mxu0 %v6285
        %6303 = vmatpush.msra.mxu0 %v6284
        %6304 = vmatpush.msra.mxu0 %v6283
        %6305 = vmatpush.msra.mxu0 %v5856
        %6306 = vmatpush.msra.mxu0 %v5855
        %6307 = vmatpush.msra.mxu0 %v5854
        %6308 = vmatpush.msra.mxu0 %v5853
        %6309 = vmatmul.f32.gmra.mxu0 %v6288
        %v6310 = vpop.f32.mrf.mxu0
        %v6311 = vadd.f32 0.0, %v6310
        %6312 = vmatmul.f32.gmra.mxu0 %v6291
        %v6313 = vpop.f32.mrf.mxu0
        %v6314 = vadd.f32 0.0, %v6313
        %6315 = vdwg.mxu0
        %v6317 = vsel %vm768, %v6311, 0
        %v6320 = vsel %vm768, %v6314, 0
        %6322 = vmatpush.msra.mxu0 0.0
        %6323 = vmatpush.msra.mxu0 0.0
        %6324 = vmatpush.msra.mxu0 0.0
        %6325 = vmatpush.msra.mxu0 0.0
        %6326 = vmatpush.msra.mxu0 0.0
        %6327 = vmatpush.msra.mxu0 0.0
        %6328 = vmatpush.msra.mxu0 0.0
        %6329 = vmatpush.msra.mxu0 0.0
        %6330 = vmatpush.msra.mxu0 0.0
        %6331 = vmatpush.msra.mxu0 0.0
        %6332 = vmatpush.msra.mxu0 0.0
        %6333 = vmatpush.msra.mxu0 0.0
        %6334 = vmatpush.msra.mxu0 %v6157
        %6335 = vmatpush.msra.mxu0 %v6156
        %6336 = vmatpush.msra.mxu0 %v6155
        %6337 = vmatpush.msra.mxu0 %v6154
        %6338 = vmatmul.f32.gmra.mxu0 %v6317
        %v6339 = vpop.f32.mrf.mxu0
        %v6340 = vadd.f32 0.0, %v6339
        %6341 = vmatmul.f32.gmra.mxu0 %v6320
        %v6342 = vpop.f32.mrf.mxu0
        %v6343 = vadd.f32 0.0, %v6342
        %6344 = vdwg.mxu0
        %v6346 = vsel %vm768, %v6244, 0
        %v6349 = vsel %vm768, %v6247, 0
        %6351 = vmatpush.msra.mxu0 0.0
        %6352 = vmatpush.msra.mxu0 0.0
        %6353 = vmatpush.msra.mxu0 0.0
        %6354 = vmatpush.msra.mxu0 0.0
        %6355 = vmatpush.msra.mxu0 0.0
        %6356 = vmatpush.msra.mxu0 0.0
        %6357 = vmatpush.msra.mxu0 0.0
        %6358 = vmatpush.msra.mxu0 0.0
        %6359 = vmatpush.msra.mxu0 0.0
        %6360 = vmatpush.msra.mxu0 0.0
        %6361 = vmatpush.msra.mxu0 0.0
        %6362 = vmatpush.msra.mxu0 0.0
        %6363 = vmatpush.msra.mxu0 %v6153
        %6364 = vmatpush.msra.mxu0 %v6152
        %6365 = vmatpush.msra.mxu0 %v6151
        %6366 = vmatpush.msra.mxu0 %v6150
        %6367 = vmatmul.f32.gmra.mxu0 %v6346
        %v6368 = vpop.f32.mrf.mxu0
        %v6369 = vadd.f32 %v6340, %v6368
        %6370 = vmatmul.f32.gmra.mxu0 %v6349
        %v6371 = vpop.f32.mrf.mxu0
        %v6372 = vadd.f32 %v6343, %v6371
        %6373 = vdwg.mxu0
        %6378 = vrot.lane.b32.xlu0 %v6369, 65
        %v6379 = vpop.permute.xlu0 %6378
        %6380 = vrot.lane.b32.xlu0 %v6372, 65
        %v6381 = vpop.permute.xlu0 %6380
        %6382 = vrot.lane.b32.xlu0 %v6216, 65
        %v6383 = vpop.permute.xlu0 %6382
        %6384 = vrot.lane.b32.xlu0 %v6217, 65
        %v6385 = vpop.permute.xlu0 %6384
        %6390 = vrot.lane.b32.xlu0 %v6369, 1
        %v6391 = vpop.permute.xlu0 %6390
        %6392 = vrot.lane.b32.xlu0 %v6372, 1
        %v6393 = vpop.permute.xlu0 %6392
        %6394 = vrot.lane.b32.xlu0 %v6216, 1
        %v6395 = vpop.permute.xlu0 %6394
        %6396 = vrot.lane.b32.xlu0 %v6217, 1
        %v6397 = vpop.permute.xlu0 %6396
        %v6402 = vsel %vm203, %v6379, %v6391
        %v6403 = vsel %vm203, %v6381, %v6393
        %v6404 = vsel %vm203, %v6383, %v6395
        %v6405 = vsel %vm203, %v6385, %v6397
        %v6406 = vmul.f32 %v6402, %v344
        %v6407 = vmul.f32 %v6403, %v344
        %v6408 = vmul.f32 %v6404, %v344
        %v6409 = vmul.f32 %v6405, %v344
        %6410 = vrot.lane.b32.xlu0 %v6369, 127
        %v6411 = vpop.permute.xlu0 %6410
        %6412 = vrot.lane.b32.xlu0 %v6372, 127
        %v6413 = vpop.permute.xlu0 %6412
        %6414 = vrot.lane.b32.xlu0 %v6216, 127
        %v6415 = vpop.permute.xlu0 %6414
        %6416 = vrot.lane.b32.xlu0 %v6217, 127
        %v6417 = vpop.permute.xlu0 %6416
        %6422 = vrot.lane.b32.xlu0 %v6369, 63
        %v6423 = vpop.permute.xlu0 %6422
        %6424 = vrot.lane.b32.xlu0 %v6372, 63
        %v6425 = vpop.permute.xlu0 %6424
        %6426 = vrot.lane.b32.xlu0 %v6216, 63
        %v6427 = vpop.permute.xlu0 %6426
        %6428 = vrot.lane.b32.xlu0 %v6217, 63
        %v6429 = vpop.permute.xlu0 %6428
        %v6434 = vsel %vm352, %v6411, %v6423
        %v6435 = vsel %vm352, %v6413, %v6425
        %v6436 = vsel %vm352, %v6415, %v6427
        %v6437 = vsel %vm352, %v6417, %v6429
        %v6438 = vmul.f32 %v6434, %v355
        %v6439 = vmul.f32 %v6435, %v355
        %v6440 = vmul.f32 %v6436, %v355
        %v6441 = vmul.f32 %v6437, %v355
        %v6442 = vld [vmem:[#allocation2 + $0xe40] sm:$0xff]
        %v6443 = vld [vmem:[#allocation2 + $0xe60] sm:$0xff]
        %v6445 = vsel %vm682, %v6442, 0
        %v6448 = vsel %vm682, %v6443, 0
        %6450 = vmatpush.msra.mxu0 0.0
        %6451 = vmatpush.msra.mxu0 0.0
        %6452 = vmatpush.msra.mxu0 0.0
        %6453 = vmatpush.msra.mxu0 %v367
        %6454 = vmatpush.msra.mxu0 %v6441
        %6455 = vmatpush.msra.mxu0 %v6440
        %6456 = vmatpush.msra.mxu0 %v6439
        %6457 = vmatpush.msra.mxu0 %v6438
        %6458 = vmatpush.msra.mxu0 %v6217
        %6459 = vmatpush.msra.mxu0 %v6216
        %6460 = vmatpush.msra.mxu0 %v6372
        %6461 = vmatpush.msra.mxu0 %v6369
        %6462 = vmatpush.msra.mxu0 %v6409
        %6463 = vmatpush.msra.mxu0 %v6408
        %6464 = vmatpush.msra.mxu0 %v6407
        %6465 = vmatpush.msra.mxu0 %v6406
        %6466 = vmatmul.f32.gmra.mxu0 %v6445
        %v6467 = vpop.f32.mrf.mxu0
        %v6468 = vadd.f32 0.0, %v6467
        %6469 = vmatmul.f32.gmra.mxu0 %v6448
        %v6470 = vpop.f32.mrf.mxu0
        %v6471 = vadd.f32 0.0, %v6470
        %6472 = vdwg.mxu0
        %v6473 = vmax.f32 %v6468, 0.0
        %v6474 = vmax.f32 %v6471, 0.0
        %6477 = vrot.lane.b32.xlu0 %v6473, 65
        %v6478 = vpop.permute.xlu0 %6477
        %6479 = vrot.lane.b32.xlu0 %v6474, 65
        %v6480 = vpop.permute.xlu0 %6479
        %6483 = vrot.lane.b32.xlu0 %v6473, 1
        %v6484 = vpop.permute.xlu0 %6483
        %6485 = vrot.lane.b32.xlu0 %v6474, 1
        %v6486 = vpop.permute.xlu0 %6485
        %v6489 = vsel %vm203, %v6478, %v6484
        %v6490 = vsel %vm203, %v6480, %v6486
        %v6491 = vmul.f32 %v6489, %v344
        %v6492 = vmul.f32 %v6490, %v344
        %6493 = vrot.lane.b32.xlu0 %v6473, 127
        %v6494 = vpop.permute.xlu0 %6493
        %6495 = vrot.lane.b32.xlu0 %v6474, 127
        %v6496 = vpop.permute.xlu0 %6495
        %6499 = vrot.lane.b32.xlu0 %v6473, 63
        %v6500 = vpop.permute.xlu0 %6499
        %6501 = vrot.lane.b32.xlu0 %v6474, 63
        %v6502 = vpop.permute.xlu0 %6501
        %v6505 = vsel %vm352, %v6494, %v6500
        %v6506 = vsel %vm352, %v6496, %v6502
        %v6507 = vmul.f32 %v6505, %v355
        %v6508 = vmul.f32 %v6506, %v355
        %v6509 = vld [vmem:[#allocation2 + $0xe80] sm:$0xff]
        %v6510 = vld [vmem:[#allocation2 + $0xea0] sm:$0xff]
        %v6512 = vsel %vm430, %v6509, 0
        %v6515 = vsel %vm430, %v6510, 0
        %6517 = vmatpush.msra.mxu0 0.0
        %6518 = vmatpush.msra.mxu0 0.0
        %6519 = vmatpush.msra.mxu0 0.0
        %6520 = vmatpush.msra.mxu0 0.0
        %6521 = vmatpush.msra.mxu0 0.0
        %6522 = vmatpush.msra.mxu0 0.0
        %6523 = vmatpush.msra.mxu0 0.0
        %6524 = vmatpush.msra.mxu0 0.0
        %6525 = vmatpush.msra.mxu0 0.0
        %6526 = vmatpush.msra.mxu0 %v367
        %6527 = vmatpush.msra.mxu0 %v6508
        %6528 = vmatpush.msra.mxu0 %v6507
        %6529 = vmatpush.msra.mxu0 %v6474
        %6530 = vmatpush.msra.mxu0 %v6473
        %6531 = vmatpush.msra.mxu0 %v6492
        %6532 = vmatpush.msra.mxu0 %v6491
        %6533 = vmatmul.f32.gmra.mxu0 %v6512
        %v6534 = vpop.f32.mrf.mxu0
        %v6535 = vadd.f32 0.0, %v6534
        %6536 = vmatmul.f32.gmra.mxu0 %v6515
        %v6537 = vpop.f32.mrf.mxu0
        %v6538 = vadd.f32 0.0, %v6537
        %6539 = vdwg.mxu0
        %v6540 = vmax.f32 %v6535, 0.0
        %v6541 = vmax.f32 %v6538, 0.0
        %6542 = vrot.lane.b32.xlu0 %v293, 1
        %v6543 = vpop.permute.xlu0 %6542
        %v6545 = vmul.f32 %v6543, %v259
        %v6546 = vmul.f32 %v296, %v264
        %v6547 = vld [vmem:[#allocation2 + $0x1860] sm:$0xff]
        %v6548 = vld [vmem:[#allocation2 + $0x1880] sm:$0xff]
        %v6550 = vsel %vm267, %v6547, 0
        %v6553 = vsel %vm267, %v6548, 0
        %6555 = vmatpush.msra.mxu0 0.0
        %6556 = vmatpush.msra.mxu0 0.0
        %6557 = vmatpush.msra.mxu0 0.0
        %6558 = vmatpush.msra.mxu0 0.0
        %6559 = vmatpush.msra.mxu0 0.0
        %6560 = vmatpush.msra.mxu0 0.0
        %6561 = vmatpush.msra.mxu0 0.0
        %6562 = vmatpush.msra.mxu0 0.0
        %6563 = vmatpush.msra.mxu0 0.0
        %6564 = vmatpush.msra.mxu0 0.0
        %6565 = vmatpush.msra.mxu0 0.0
        %6566 = vmatpush.msra.mxu0 0.0
        %6567 = vmatpush.msra.mxu0 %v271
        %6568 = vmatpush.msra.mxu0 %v6546
        %6569 = vmatpush.msra.mxu0 %v293
        %6570 = vmatpush.msra.mxu0 %v6545
        %6571 = vmatmul.f32.gmra.mxu0 %v6550
        %v6572 = vpop.f32.mrf.mxu0
        %v6573 = vadd.f32 0.0, %v6572
        %6574 = vmatmul.f32.gmra.mxu0 %v6553
        %v6575 = vpop.f32.mrf.mxu0
        %v6576 = vadd.f32 0.0, %v6575
        %6577 = vdwg.mxu0
        %6578 = vmatpush.msra.mxu0 %v314
        %6579 = vmatpush.msra.mxu0 %v313
        %6580 = vmatpush.msra.mxu0 %v312
        %6581 = vmatpush.msra.mxu0 %v311
        %6582 = vmatpush.msra.mxu0 %v310
        %6583 = vmatpush.msra.mxu0 %v309
        %6584 = vmatpush.msra.mxu0 %v308
        %6585 = vmatpush.msra.mxu0 %v307
        %6586 = vmatpush.msra.mxu0 %v306
        %6587 = vmatpush.msra.mxu0 %v305
        %6588 = vmatpush.msra.mxu0 %v304
        %6589 = vmatpush.msra.mxu0 %v303
        %6590 = vmatpush.msra.mxu0 %v302
        %6591 = vmatpush.msra.mxu0 %v301
        %6592 = vmatpush.msra.mxu0 %v300
        %6593 = vmatpush.msra.mxu0 %v299
        %6594 = vmatmul.f32.gmra.mxu0 %v6573
        %v6595 = vpop.f32.mrf.mxu0
        %v6596 = vadd.f32 %v6540, %v6595
        %6597 = vmatmul.f32.gmra.mxu0 %v6576
        %v6598 = vpop.f32.mrf.mxu0
        %v6599 = vadd.f32 %v6541, %v6598
        %6600 = vdwg.mxu0
        %v6601 = vmax.f32 %v6596, 0.0
        %v6602 = vmax.f32 %v6599, 0.0
        %v6603 = vld [vmem:[#allocation2 + $0x18a0] ss:$0 sm:$0xff]
        %v6605 = vsel %vm6071, %v6603, 0
        %6607 = vmatpush.msra.mxu0 0.0
        %6608 = vmatpush.msra.mxu0 0.0
        %6609 = vmatpush.msra.mxu0 0.0
        %6610 = vmatpush.msra.mxu0 0.0
        %6611 = vmatpush.msra.mxu0 0.0
        %6612 = vmatpush.msra.mxu0 0.0
        %6613 = vmatpush.msra.mxu0 0.0
        %6614 = vmatpush.msra.mxu0 0.0
        %6615 = vmatpush.msra.mxu0 0.0
        %6616 = vmatpush.msra.mxu0 0.0
        %6617 = vmatpush.msra.mxu0 0.0
        %6618 = vmatpush.msra.mxu0 0.0
        %6619 = vmatpush.msra.mxu0 0.0
        %6620 = vmatpush.msra.mxu0 %v367
        %6621 = vmatpush.msra.mxu0 %v6602
        %6622 = vmatpush.msra.mxu0 %v6601
        %6623 = vmatmul.f32.gmra.mxu0 %v6605
        %v6624 = vpop.f32.mrf.mxu0
        %v6625 = vadd.f32 0.0, %v6624
        %6626 = vdwg.mxu0
        %v6627 = vxor.u32 %v6625, 2147483648
        %v6628 = vmul.f32 %v6627, 1.442695
        %v6629 = vpow.pop %v6628
        %v6630 = vadd.f32 %v6629, 1.0
        %v6631 = vrcp.pop %v6630
        %v6632 = vmul.f32 %v6630, %v6631
        %v6633 = vsub.f32 1.0, %v6632
        %v6634 = vmul.f32 %v6631, %v6633
        %v6635 = vadd.f32 %v6631, %v6634
        %vm6636 = vweird.f32 %v6630
        %vm6637 = vweird.f32 %v6631
        %vm6638 = vmor %vm6636, %vm6637
        %v6639 = vsel %vm6638, %v6631, %v6635
        %v6640 = vand.u32 2147483647, %v6630
        %vm6641 = vcmp.eq.f32.partialorder %v6640, 8.507059e+37
        %v6642 = vand.u32 %v6630, 2147483648
        %v6643 = vor.u32 1.1754944e-38, %v6642
        %v6644 = vsel %vm6641, %v6643, %v6639
        %v6645 = vmul.f32 1.0, %v6644
        %6647 = vrot.lane.b32.xlu0 %v6645, 65
        %v6648 = vpop.permute.xlu0 %6647
        %6650 = vrot.lane.b32.xlu0 %v6645, 1
        %v6651 = vpop.permute.xlu0 %6650
        %v6653 = vsel %vm203, %v6648, %v6651
        %v6654 = vmul.f32 %v6653, %v343
        %6655 = vrot.lane.b32.xlu0 %v6645, 127
        %v6656 = vpop.permute.xlu0 %6655
        %6658 = vrot.lane.b32.xlu0 %v6645, 63
        %v6659 = vpop.permute.xlu0 %6658
        %v6661 = vsel %vm352, %v6656, %v6659
        %v6662 = vmul.f32 %v6661, %v354
        %v6663 = vrot.slane %v6645, 7
        %v6666 = vrot.slane %v6662, 6
        %v6668 = vrot.slane %v357, 5
        %v6670 = vsel %vm219, %v6654, %v6663
        %v6671 = vsel %vm221, %v6670, %v6666
        %v6672 = vsel %vm223, %v6671, %v6668
        %v6673 = vld [vmem:[#allocation2 + $0x18c0] sm:$0xff]
        %v6675 = vsel %vm226, %v6673, 0
        %v6678 = vsel %vm230, %v6672, 0
        %6680 = vmatpush.msra.mxu0 0.0
        %6681 = vmatpush.msra.mxu0 0.0
        %6682 = vmatpush.msra.mxu0 0.0
        %6683 = vmatpush.msra.mxu0 0.0
        %6684 = vmatpush.msra.mxu0 0.0
        %6685 = vmatpush.msra.mxu0 0.0
        %6686 = vmatpush.msra.mxu0 0.0
        %6687 = vmatpush.msra.mxu0 0.0
        %6688 = vmatpush.msra.mxu0 0.0
        %6689 = vmatpush.msra.mxu0 0.0
        %6690 = vmatpush.msra.mxu0 0.0
        %6691 = vmatpush.msra.mxu0 0.0
        %6692 = vmatpush.msra.mxu0 0.0
        %6693 = vmatpush.msra.mxu0 0.0
        %6694 = vmatpush.msra.mxu0 0.0
        %6695 = vmatpush.msra.mxu0 %v6678
        %6696 = vmatmul.f32.gmra.mxu0 %v6675
        %v6697 = vpop.f32.mrf.mxu0
        %v6698 = vadd.f32 0.0, %v6697
        %6699 = vdwg.mxu0
        %v6700 = vld [vmem:[#allocation2 + $0x18e0] sm:$0xff]
        %vm6701 = vcmask 72704
        %v6703 = vsel %vm6701, %v6700, 0
        %6705 = vmatpush.msra.mxu0 0.0
        %6706 = vmatpush.msra.mxu0 0.0
        %6707 = vmatpush.msra.mxu0 0.0
        %6708 = vmatpush.msra.mxu0 0.0
        %6709 = vmatpush.msra.mxu0 0.0
        %6710 = vmatpush.msra.mxu0 0.0
        %6711 = vmatpush.msra.mxu0 0.0
        %6712 = vmatpush.msra.mxu0 0.0
        %6713 = vmatpush.msra.mxu0 0.0
        %6714 = vmatpush.msra.mxu0 0.0
        %6715 = vmatpush.msra.mxu0 0.0
        %6716 = vmatpush.msra.mxu0 0.0
        %6717 = vmatpush.msra.mxu0 0.0
        %6718 = vmatpush.msra.mxu0 0.0
        %6719 = vmatpush.msra.mxu0 %v367
        %6720 = vmatpush.msra.mxu0 %v6698
        %6721 = vmatmul.f32.gmra.mxu0 %v6703
        %v6722 = vpop.f32.mrf.mxu0
        %v6723 = vadd.f32 0.0, %v6722
        %6724 = vdwg.mxu0
        %v6725 = vld [vmem:[#allocation2 + $0x1900] sm:$0xff]
        %6727 = vrot.lane.b32.xlu0 %v6698, 127
        %v6728 = vpop.permute.xlu0 %6727
        %6730 = vrot.lane.b32.xlu0 %v6698, 63
        %v6731 = vpop.permute.xlu0 %6730
        %v6733 = vsel %vm352, %v6728, %v6731
        %v6734 = vmul.f32 %v6733, %v355
        %v6736 = vsel %vm6071, %v6725, 0
        %6738 = vmatpush.msra.mxu0 0.0
        %6739 = vmatpush.msra.mxu0 0.0
        %6740 = vmatpush.msra.mxu0 0.0
        %6741 = vmatpush.msra.mxu0 0.0
        %6742 = vmatpush.msra.mxu0 0.0
        %6743 = vmatpush.msra.mxu0 0.0
        %6744 = vmatpush.msra.mxu0 0.0
        %6745 = vmatpush.msra.mxu0 0.0
        %6746 = vmatpush.msra.mxu0 0.0
        %6747 = vmatpush.msra.mxu0 0.0
        %6748 = vmatpush.msra.mxu0 0.0
        %6749 = vmatpush.msra.mxu0 0.0
        %6750 = vmatpush.msra.mxu0 0.0
        %6751 = vmatpush.msra.mxu0 %v367
        %6752 = vmatpush.msra.mxu0 %v6734
        %6753 = vmatpush.msra.mxu0 %v6698
        %6754 = vmatmul.f32.gmra.mxu0 %v6736
        %v6755 = vpop.f32.mrf.mxu0
        %v6756 = vadd.f32 0.0, %v6755
        %6757 = vdwg.mxu0
        %v6758 = vld [vmem:[#allocation4 + $0x168] sm:$0xff]
        %v6759 = vld [vmem:[#allocation4 + $0x170] sm:$0xff]
        %v6760 = vld [vmem:[#allocation4 + $0x178] sm:$0xff]
        %v6761 = vld [vmem:[#allocation4 + $0x180] sm:$0xff]
        %v6762 = vld [vmem:[#allocation4 + $0x188] sm:$0xff]
        %v6763 = vld [vmem:[#allocation4 + $0x190] sm:$0xff]
        %v6764 = vld [vmem:[#allocation4 + $0x198] sm:$0xff]
        %v6765 = vld [vmem:[#allocation4 + $0x1a0] sm:$0xff]
        %v6766 = vld [vmem:[#allocation4 + $0x1a8] sm:$0xff]
        %v6767 = vld [vmem:[#allocation4 + $0x1b0] sm:$0xff]
        %v6768 = vld [vmem:[#allocation4 + $0x1b8] sm:$0xff]
        %v6769 = vld [vmem:[#allocation4 + $0x1c0] sm:$0xff]
        %v6770 = vld [vmem:[#allocation4 + $0x1c8] sm:$0xff]
        %v6771 = vld [vmem:[#allocation4 + $0x1d0] sm:$0xff]
        %v6772 = vld [vmem:[#allocation4 + $0x1d8] sm:$0xff]
        %v6773 = vld [vmem:[#allocation4 + $0x1e0] sm:$0xff]
        %v6775 = vsel %vm488, %v6756, 0
        %6777 = vmatpush.msra.mxu0 0.0
        %6778 = vmatpush.msra.mxu0 0.0
        %6779 = vmatpush.msra.mxu0 0.0
        %6780 = vmatpush.msra.mxu0 0.0
        %6781 = vmatpush.msra.mxu0 0.0
        %6782 = vmatpush.msra.mxu0 0.0
        %6783 = vmatpush.msra.mxu0 0.0
        %6784 = vmatpush.msra.mxu0 0.0
        %6785 = vmatpush.msra.mxu0 %v6773
        %6786 = vmatpush.msra.mxu0 %v6772
        %6787 = vmatpush.msra.mxu0 %v6771
        %6788 = vmatpush.msra.mxu0 %v6770
        %6789 = vmatpush.msra.mxu0 %v6769
        %6790 = vmatpush.msra.mxu0 %v6768
        %6791 = vmatpush.msra.mxu0 %v6767
        %6792 = vmatpush.msra.mxu0 %v6766
        %6793 = vmatmul.f32.gmra.mxu0 %v6775
        %v6794 = vpop.f32.mrf.mxu0
        %v6795 = vadd.f32 0.0, %v6794
        %6796 = vdwg.mxu0
        %v6798 = vsel %vm488, %v6723, 0
        %6800 = vmatpush.msra.mxu0 0.0
        %6801 = vmatpush.msra.mxu0 0.0
        %6802 = vmatpush.msra.mxu0 0.0
        %6803 = vmatpush.msra.mxu0 0.0
        %6804 = vmatpush.msra.mxu0 0.0
        %6805 = vmatpush.msra.mxu0 0.0
        %6806 = vmatpush.msra.mxu0 0.0
        %6807 = vmatpush.msra.mxu0 0.0
        %6808 = vmatpush.msra.mxu0 %v6765
        %6809 = vmatpush.msra.mxu0 %v6764
        %6810 = vmatpush.msra.mxu0 %v6763
        %6811 = vmatpush.msra.mxu0 %v6762
        %6812 = vmatpush.msra.mxu0 %v6761
        %6813 = vmatpush.msra.mxu0 %v6760
        %6814 = vmatpush.msra.mxu0 %v6759
        %6815 = vmatpush.msra.mxu0 %v6758
        %6816 = vmatmul.f32.gmra.mxu0 %v6798
        %v6817 = vpop.f32.mrf.mxu0
        %v6818 = vadd.f32 %v6795, %v6817
        %6819 = vdwg.mxu0
        %v6820 = vmul.f32 %v6818, %v293
        %v6821 = vld [vmem:[#allocation2 + $0xec0] sm:$0xff]
        %v6823 = vsel %vm6071, %v6821, 0
        %6825 = vmatpush.msra.mxu0 0.0
        %6826 = vmatpush.msra.mxu0 0.0
        %6827 = vmatpush.msra.mxu0 0.0
        %6828 = vmatpush.msra.mxu0 0.0
        %6829 = vmatpush.msra.mxu0 0.0
        %6830 = vmatpush.msra.mxu0 0.0
        %6831 = vmatpush.msra.mxu0 0.0
        %6832 = vmatpush.msra.mxu0 0.0
        %6833 = vmatpush.msra.mxu0 0.0
        %6834 = vmatpush.msra.mxu0 0.0
        %6835 = vmatpush.msra.mxu0 0.0
        %6836 = vmatpush.msra.mxu0 0.0
        %6837 = vmatpush.msra.mxu0 0.0
        %6838 = vmatpush.msra.mxu0 %v367
        %6839 = vmatpush.msra.mxu0 %v6541
        %6840 = vmatpush.msra.mxu0 %v6540
        %6841 = vmatmul.f32.gmra.mxu0 %v6823
        %v6842 = vpop.f32.mrf.mxu0
        %v6843 = vadd.f32 0.0, %v6842
        %6844 = vdwg.mxu0
        %v6845 = vld [vmem:[#allocation2 + $0xee0] sm:$0xff]
        %6848 = vrot.lane.b32.xlu0 %v6540, 127
        %v6849 = vpop.permute.xlu0 %6848
        %6850 = vrot.lane.b32.xlu0 %v6541, 127
        %v6851 = vpop.permute.xlu0 %6850
        %6854 = vrot.lane.b32.xlu0 %v6540, 63
        %v6855 = vpop.permute.xlu0 %6854
        %6856 = vrot.lane.b32.xlu0 %v6541, 63
        %v6857 = vpop.permute.xlu0 %6856
        %v6860 = vsel %vm352, %v6849, %v6855
        %v6861 = vsel %vm352, %v6851, %v6857
        %v6862 = vmul.f32 %v6860, %v355
        %v6863 = vmul.f32 %v6861, %v355
        %v6865 = vsel %vm5032, %v6845, 0
        %6867 = vmatpush.msra.mxu0 0.0
        %6868 = vmatpush.msra.mxu0 0.0
        %6869 = vmatpush.msra.mxu0 0.0
        %6870 = vmatpush.msra.mxu0 0.0
        %6871 = vmatpush.msra.mxu0 0.0
        %6872 = vmatpush.msra.mxu0 0.0
        %6873 = vmatpush.msra.mxu0 0.0
        %6874 = vmatpush.msra.mxu0 0.0
        %6875 = vmatpush.msra.mxu0 0.0
        %6876 = vmatpush.msra.mxu0 0.0
        %6877 = vmatpush.msra.mxu0 0.0
        %6878 = vmatpush.msra.mxu0 %v367
        %6879 = vmatpush.msra.mxu0 %v6863
        %6880 = vmatpush.msra.mxu0 %v6862
        %6881 = vmatpush.msra.mxu0 %v6541
        %6882 = vmatpush.msra.mxu0 %v6540
        %6883 = vmatmul.f32.gmra.mxu0 %v6865
        %v6884 = vpop.f32.mrf.mxu0
        %v6885 = vadd.f32 0.0, %v6884
        %6886 = vdwg.mxu0
        %v6888 = vsel %vm488, %v6885, 0
        %6890 = vmatpush.msra.mxu0 0.0
        %6891 = vmatpush.msra.mxu0 0.0
        %6892 = vmatpush.msra.mxu0 0.0
        %6893 = vmatpush.msra.mxu0 0.0
        %6894 = vmatpush.msra.mxu0 0.0
        %6895 = vmatpush.msra.mxu0 0.0
        %6896 = vmatpush.msra.mxu0 0.0
        %6897 = vmatpush.msra.mxu0 0.0
        %6898 = vmatpush.msra.mxu0 %v6773
        %6899 = vmatpush.msra.mxu0 %v6772
        %6900 = vmatpush.msra.mxu0 %v6771
        %6901 = vmatpush.msra.mxu0 %v6770
        %6902 = vmatpush.msra.mxu0 %v6769
        %6903 = vmatpush.msra.mxu0 %v6768
        %6904 = vmatpush.msra.mxu0 %v6767
        %6905 = vmatpush.msra.mxu0 %v6766
        %6906 = vmatmul.f32.gmra.mxu0 %v6888
        %v6907 = vpop.f32.mrf.mxu0
        %v6908 = vadd.f32 0.0, %v6907
        %6909 = vdwg.mxu0
        %v6911 = vsel %vm488, %v6843, 0
        %6913 = vmatpush.msra.mxu0 0.0
        %6914 = vmatpush.msra.mxu0 0.0
        %6915 = vmatpush.msra.mxu0 0.0
        %6916 = vmatpush.msra.mxu0 0.0
        %6917 = vmatpush.msra.mxu0 0.0
        %6918 = vmatpush.msra.mxu0 0.0
        %6919 = vmatpush.msra.mxu0 0.0
        %6920 = vmatpush.msra.mxu0 0.0
        %6921 = vmatpush.msra.mxu0 %v6765
        %6922 = vmatpush.msra.mxu0 %v6764
        %6923 = vmatpush.msra.mxu0 %v6763
        %6924 = vmatpush.msra.mxu0 %v6762
        %6925 = vmatpush.msra.mxu0 %v6761
        %6926 = vmatpush.msra.mxu0 %v6760
        %6927 = vmatpush.msra.mxu0 %v6759
        %6928 = vmatpush.msra.mxu0 %v6758
        %6929 = vmatmul.f32.gmra.mxu0 %v6911
        %v6930 = vpop.f32.mrf.mxu0
        %v6931 = vadd.f32 %v6908, %v6930
        %6932 = vdwg.mxu0
        %6935 = vrot.lane.b32.xlu0 %v6931, 1
        %v6936 = vpop.permute.xlu0 %6935
        %6937 = vrot.lane.b32.xlu0 %v6820, 1
        %v6938 = vpop.permute.xlu0 %6937
        %v6941 = vmul.f32 %v6936, %v259
        %v6942 = vmul.f32 %v6938, %v259
        %6943 = vrot.lane.b32.xlu0 %v6931, 127
        %v6944 = vpop.permute.xlu0 %6943
        %6945 = vrot.lane.b32.xlu0 %v6820, 127
        %v6946 = vpop.permute.xlu0 %6945
        %v6949 = vmul.f32 %v6944, %v264
        %v6950 = vmul.f32 %v6946, %v264
        %v6951 = vld [vmem:[#allocation2 + $0xf00] sm:$0xff]
        %v6953 = vsel %vm430, %v6951, 0
        %6955 = vmatpush.msra.mxu0 0.0
        %6956 = vmatpush.msra.mxu0 0.0
        %6957 = vmatpush.msra.mxu0 0.0
        %6958 = vmatpush.msra.mxu0 0.0
        %6959 = vmatpush.msra.mxu0 0.0
        %6960 = vmatpush.msra.mxu0 0.0
        %6961 = vmatpush.msra.mxu0 0.0
        %6962 = vmatpush.msra.mxu0 0.0
        %6963 = vmatpush.msra.mxu0 0.0
        %6964 = vmatpush.msra.mxu0 %v271
        %6965 = vmatpush.msra.mxu0 %v6950
        %6966 = vmatpush.msra.mxu0 %v6949
        %6967 = vmatpush.msra.mxu0 %v6820
        %6968 = vmatpush.msra.mxu0 %v6931
        %6969 = vmatpush.msra.mxu0 %v6942
        %6970 = vmatpush.msra.mxu0 %v6941
        %6971 = vmatmul.f32.gmra.mxu0 %v6953
        %v6972 = vpop.f32.mrf.mxu0
        %v6973 = vadd.f32 0.0, %v6972
        %6974 = vdwg.mxu0
        %v6975 = vmax.f32 %v6973, 0.0
        %6977 = vrot.lane.b32.xlu0 %v6975, 1
        %v6978 = vpop.permute.xlu0 %6977
        %v6980 = vmul.f32 %v6978, %v259
        %6981 = vrot.lane.b32.xlu0 %v6975, 127
        %v6982 = vpop.permute.xlu0 %6981
        %v6984 = vmul.f32 %v6982, %v264
        %v6985 = vld [vmem:[#allocation2 + $0xf20] sm:$0xff]
        %v6987 = vsel %vm267, %v6985, 0
        %6989 = vmatpush.msra.mxu0 0.0
        %6990 = vmatpush.msra.mxu0 0.0
        %6991 = vmatpush.msra.mxu0 0.0
        %6992 = vmatpush.msra.mxu0 0.0
        %6993 = vmatpush.msra.mxu0 0.0
        %6994 = vmatpush.msra.mxu0 0.0
        %6995 = vmatpush.msra.mxu0 0.0
        %6996 = vmatpush.msra.mxu0 0.0
        %6997 = vmatpush.msra.mxu0 0.0
        %6998 = vmatpush.msra.mxu0 0.0
        %6999 = vmatpush.msra.mxu0 0.0
        %7000 = vmatpush.msra.mxu0 0.0
        %7001 = vmatpush.msra.mxu0 %v271
        %7002 = vmatpush.msra.mxu0 %v6984
        %7003 = vmatpush.msra.mxu0 %v6975
        %7004 = vmatpush.msra.mxu0 %v6980
        %7005 = vmatmul.f32.gmra.mxu0 %v6987
        %v7006 = vpop.f32.mrf.mxu0
        %v7007 = vadd.f32 0.0, %v7006
        %7008 = vdwg.mxu0
        %v7009 = vmax.f32 %v7007, 0.0
        %v7010 = vld [vmem:[#allocation2 + $0x1920] sm:$0xf]
        %v7012 = vsel %vm6701, %v7010, 0
        %7014 = vmatpush.msra.mxu0 0.0
        %7015 = vmatpush.msra.mxu0 0.0
        %7016 = vmatpush.msra.mxu0 0.0
        %7017 = vmatpush.msra.mxu0 0.0
        %7018 = vmatpush.msra.mxu0 0.0
        %7019 = vmatpush.msra.mxu0 0.0
        %7020 = vmatpush.msra.mxu0 0.0
        %7021 = vmatpush.msra.mxu0 0.0
        %7022 = vmatpush.msra.mxu0 0.0
        %7023 = vmatpush.msra.mxu0 0.0
        %7024 = vmatpush.msra.mxu0 0.0
        %7025 = vmatpush.msra.mxu0 0.0
        %7026 = vmatpush.msra.mxu0 0.0
        %7027 = vmatpush.msra.mxu0 0.0
        %7028 = vmatpush.msra.mxu0 %v271
        %7029 = vmatpush.msra.mxu0 %v7009
        %7030 = vmatmul.f32.gmra.mxu0 %v7012
        %v7031 = vpop.f32.mrf.mxu0
        %v7032 = vadd.f32 0.0, %v7031
        %7033 = vdwg.mxu0
        %7034 = vst [vmem:[%s196] sm:$0xf] %v7032
        %p7035 = scmp.lt.s32.totalorder %s16, 1
        %s7036 = scalar_select %p7035, %s16, 1
        %s7037 = smul.addr %s7036, 4
        %s7038 = scalar_lea.vmem %s3, %s7037
        // Predicated region
        $region41: #{run.1} parent=31 // pred_check
          %p7039 = pneg %p102
        $region42: #{run.1} parent=31 // pred_check_branch
          %7041 = sbr.rel (%p7039) target = $region44
        $region43: #{run.1} parent=31 // pred_region
          _
        $region44: #{run.1} parent=31 // pred_fallthru
          _
      $region32: #{run.1} parent=5 // pred_fallthru
        _
      %p7042 = scmp.le.s32.totalorder 2, %s11
      // Predicated region
      $region45: #{run.1} parent=5 // pred_check
        %p7043 = pneg %p7042
      $region46: #{run.1} parent=5 // pred_check_branch
        %7045 = sbr.rel (%p7043) target = $region48
      $region47: #{run.1} parent=5 // pred_region
        %s7046 = ssub.s32 %s11, 2
        // Predicated region
        $region49: #{run.1} parent=47 // pred_check
          %p7047 = pneg %p108
        $region50: #{run.1} parent=47 // pred_check_branch
          %7049 = sbr.rel (%p7047) target = $region52
        $region51: #{run.1} parent=47 // pred_region
          %p7050 = scmp.lt.s32.totalorder %s17, 1
          %s7051 = scalar_select %p7050, %s17, 1
          %s7052 = smul.addr %s7051, 4
          %s7053 = scalar_lea.vmem %s3, %s7052
        $region52: #{run.1} parent=47 // pred_fallthru
          _
      $region48: #{run.1} parent=5 // pred_fallthru
        _
    $region6: #{run.1} parent=1 // loop_footer
      %s15 = sadd.s32 1, %s11
    $region7: #{run.1} parent=1 // loop_footer_branch
      %10 = sbr.rel target = $region3
    $region8: #{run.1} parent=1 // loop_exit
      _
    %7054 = vsyncpa [#allocation3], 1
    %s7055 = scalar_lea.sflag [#allocation3], 1
    %7056 = vsyncpa %s7055, 1
    %7057 = vsyncpa [#allocation5], 1

</llo_original>
